<compile_context>
chip_gen: v6e
topology: v6e:2x2x1
jax: 0.10.0
libtpu: 0.0.40
codegen_flags: <defaults>
</compile_context>

<pallas_src>
import jax
import jax.numpy as jnp
from jax.experimental import pallas as pl
from jax.experimental.pallas import tpu as pltpu

LAYER_DIMS = [45, 1000, 800, 600, 400, 200, 100, 5]
BN_EPS = 1e-5


def _linear_nobias(h_f32, w_ref):
    # bf16 weights, f32 accumulation on the MXU.
    return jnp.dot(h_f32.astype(jnp.bfloat16), w_ref[...],
                   preferred_element_type=jnp.float32)


def _linear_bias(h_f32, w_ref, b_ref):
    return _linear_nobias(h_f32, w_ref) + b_ref[...]


def _batchnorm_train(h):
    # One-pass stats: var = E[h^2] - mean^2 (biased), PyTorch training-mode BN.
    mean = jnp.mean(h, axis=0, keepdims=True)
    mean_sq = jnp.mean(h * h, axis=0, keepdims=True)
    var = jnp.maximum(mean_sq - mean * mean, 0.0)
    return (h - mean) * jax.lax.rsqrt(var + BN_EPS)


def fixelnet_kernel(x_ref, w1, w2, w3, w4, w5, w6, b6, w7, b7, o_ref):
    h = x_ref[0].astype(jnp.float32)                       # (N, 45)

    # Linear (bias cancelled by BN) -> BatchNorm1d -> ReLU   x5
    h = jnp.maximum(_batchnorm_train(_linear_nobias(h, w1)), 0.0)
    h = jnp.maximum(_batchnorm_train(_linear_nobias(h, w2)), 0.0)
    h = jnp.maximum(_batchnorm_train(_linear_nobias(h, w3)), 0.0)
    h = jnp.maximum(_batchnorm_train(_linear_nobias(h, w4)), 0.0)
    h = jnp.maximum(_batchnorm_train(_linear_nobias(h, w5)), 0.0)

    # Linear(200,100) + bias -> ReLU
    h = jnp.maximum(_linear_bias(h, w6, b6), 0.0)

    # Final Linear(100,5) + bias
    h = _linear_bias(h, w7, b7)

    o_ref[0] = h.astype(o_ref.dtype)


def make_params(key):
    """Synthetic PyTorch-style uniform init.  Weights bf16, (in, out) layout.

    Layers 1-5: weight only (bias / BN gamma / BN beta are mathematically
    redundant under training-mode BatchNorm).  Layers 6-7: weight + bias.
    """
    flat = []
    lin_keys = jax.random.split(key, len(LAYER_DIMS) - 1)
    for i, (din, dout) in enumerate(zip(LAYER_DIMS[:-1], LAYER_DIMS[1:])):
        kw, kb = jax.random.split(lin_keys[i])
        bound = 1.0 / (din ** 0.5)
        w = jax.random.uniform(kw, (din, dout), jnp.float32, -bound, bound)
        flat.append(w.astype(jnp.bfloat16))
        if i >= 5:  # only the last two linears keep an effective bias
            b = jax.random.uniform(kb, (1, dout), jnp.float32, -bound, bound)
            flat.append(b)
    return flat


def fixelnet_forward(x, flat_params):
    """x: (N, 45) for one batch, or (K, N, 45) for K independent batches.

    With a (K, N, 45) input the kernel runs a grid over K; every weight
    BlockSpec's index_map is constant so the weights stay resident in VMEM
    across grid steps, and the axis is parallel (megacore-shardable).
    BN statistics are per-batch (each grid step == one FixelNet forward).
    """
    squeeze = (x.ndim == 2)
    if squeeze:
        x = x[None]
    k, n, din = x.shape
    assert din == LAYER_DIMS[0]
    dout = LAYER_DIMS[-1]

    in_specs = [pl.BlockSpec((1, n, din), lambda i: (i, 0, 0))]
    in_specs += [pl.BlockSpec(p.shape, lambda i: (0, 0)) for p in flat_params]
    out_specs = pl.BlockSpec((1, n, dout), lambda i: (i, 0, 0))

    out = pl.pallas_call(
        fixelnet_kernel,
        out_shape=jax.ShapeDtypeStruct((k, n, dout), jnp.float32),
        grid=(k,),
        in_specs=in_specs,
        out_specs=out_specs,
        compiler_params=pltpu.CompilerParams(
            dimension_semantics=("parallel",)),
    )(x, *flat_params)

    return out[0] if squeeze else out


# TODO(synk): BatchNorm1d running_mean / running_var updates (training-side
# bookkeeping) are not modeled; only the forward activation path is computed.

if __name__ == "__main__":
    key = jax.random.PRNGKey(0)
    kx, kp, ks = jax.random.split(key, 3)

    params = make_params(kp)

    # Single batch (matches the PyTorch module's forward exactly).
    batch = 8
    x = jax.random.normal(kx, (batch, LAYER_DIMS[0]), jnp.float32)
    out = fixelnet_forward(x, params)
    jax.block_until_ready(out)
    assert out.shape == (batch, LAYER_DIMS[-1])

    # Stacked independent batches: weights loaded once, resident across grid.
    xs = jax.random.normal(ks, (2, batch, LAYER_DIMS[0]), jnp.float32)
    outs = fixelnet_forward(xs, params)
    jax.block_until_ready(outs)
    assert outs.shape == (2, batch, LAYER_DIMS[-1])

    print("KERNEL_OK")
</pallas_src>

<mosaic_0001>
module attributes {stable_mosaic.version = 11 : i64} {
  func.func @fixelnet_kernel(%arg0: i32, %arg1: memref<1x8x45xf32, #tpu.memory_space<vmem>>, %arg2: memref<45x1000xbf16, #tpu.memory_space<vmem>>, %arg3: memref<1000x800xbf16, #tpu.memory_space<vmem>>, %arg4: memref<800x600xbf16, #tpu.memory_space<vmem>>, %arg5: memref<600x400xbf16, #tpu.memory_space<vmem>>, %arg6: memref<400x200xbf16, #tpu.memory_space<vmem>>, %arg7: memref<200x100xbf16, #tpu.memory_space<vmem>>, %arg8: memref<1x100xf32, #tpu.memory_space<vmem>>, %arg9: memref<100x5xbf16, #tpu.memory_space<vmem>>, %arg10: memref<1x5xf32, #tpu.memory_space<vmem>>, %arg11: memref<1x8x5xf32, #tpu.memory_space<vmem>>) attributes {dimension_semantics = [#tpu.dimension_semantics<parallel>], iteration_bounds = array<i64: 1>, scalar_prefetch = 0 : i64, scratch_operands = 0 : i64, tpu.core_type = #tpu.core_type<tc>, window_params = [{transform_indices = @transform_0, window_bounds = array<i64: 1, 8, 45>}, {pipeline_mode = #tpu.pipeline_mode<synchronous>, transform_indices = @transform_1, window_bounds = array<i64: 45, 1000>}, {pipeline_mode = #tpu.pipeline_mode<synchronous>, transform_indices = @transform_2, window_bounds = array<i64: 1000, 800>}, {pipeline_mode = #tpu.pipeline_mode<synchronous>, transform_indices = @transform_3, window_bounds = array<i64: 800, 600>}, {pipeline_mode = #tpu.pipeline_mode<synchronous>, transform_indices = @transform_4, window_bounds = array<i64: 600, 400>}, {pipeline_mode = #tpu.pipeline_mode<synchronous>, transform_indices = @transform_5, window_bounds = array<i64: 400, 200>}, {pipeline_mode = #tpu.pipeline_mode<synchronous>, transform_indices = @transform_6, window_bounds = array<i64: 200, 100>}, {pipeline_mode = #tpu.pipeline_mode<synchronous>, transform_indices = @transform_7, window_bounds = array<i64: 1, 100>}, {pipeline_mode = #tpu.pipeline_mode<synchronous>, transform_indices = @transform_8, window_bounds = array<i64: 100, 5>}, {pipeline_mode = #tpu.pipeline_mode<synchronous>, transform_indices = @transform_9, window_bounds = array<i64: 1, 5>}, {transform_indices = @transform_10, window_bounds = array<i64: 1, 8, 5>}]} {
    %c0 = arith.constant 0 : index
    %c0_0 = arith.constant 0 : index
    %c0_1 = arith.constant 0 : index
    %0 = vector.load %arg1[%c0, %c0_0, %c0_1] : memref<1x8x45xf32, #tpu.memory_space<vmem>>, vector<1x8x45xf32>
    %1 = vector.shape_cast %0 : vector<1x8x45xf32> to vector<8x45xf32>
    %2 = arith.truncf %1 : vector<8x45xf32> to vector<8x45xbf16>
    %c0_2 = arith.constant 0 : index
    %c0_3 = arith.constant 0 : index
    %3 = vector.load %arg2[%c0_2, %c0_3] : memref<45x1000xbf16, #tpu.memory_space<vmem>>, vector<45x1000xbf16>
    %cst = arith.constant dense<0.000000e+00> : vector<8x1000xf32>
    %4 = tpu.matmul %2, %3, %cst {dimension_numbers = #tpu.dot_dimension_numbers<[1], [0], [0], [1], [0, 0, 1, 1], [], []>} : vector<8x45xbf16>, vector<45x1000xbf16>, vector<8x1000xf32> -> vector<8x1000xf32>
    %cst_4 = arith.constant dense<0.000000e+00> : vector<1000xf32>
    %5 = vector.multi_reduction <add>, %4, %cst_4 [0] : vector<8x1000xf32> to vector<1000xf32>
    %6 = vector.shape_cast %5 : vector<1000xf32> to vector<1x1000xf32>
    %cst_5 = arith.constant 8.000000e+00 : f32
    %7 = vector.broadcast %cst_5 : f32 to vector<1x1000xf32>
    %8 = arith.divf %6, %7 : vector<1x1000xf32>
    %9 = arith.mulf %4, %4 : vector<8x1000xf32>
    %cst_6 = arith.constant dense<0.000000e+00> : vector<1000xf32>
    %10 = vector.multi_reduction <add>, %9, %cst_6 [0] : vector<8x1000xf32> to vector<1000xf32>
    %11 = vector.shape_cast %10 : vector<1000xf32> to vector<1x1000xf32>
    %cst_7 = arith.constant 8.000000e+00 : f32
    %12 = vector.broadcast %cst_7 : f32 to vector<1x1000xf32>
    %13 = arith.divf %11, %12 : vector<1x1000xf32>
    %14 = arith.mulf %8, %8 : vector<1x1000xf32>
    %15 = arith.subf %13, %14 : vector<1x1000xf32>
    %cst_8 = arith.constant 0.000000e+00 : f32
    %16 = vector.broadcast %cst_8 : f32 to vector<1x1000xf32>
    %17 = arith.maximumf %15, %16 : vector<1x1000xf32>
    %18 = vector.broadcast %8 : vector<1x1000xf32> to vector<8x1000xf32>
    %19 = arith.subf %4, %18 : vector<8x1000xf32>
    %cst_9 = arith.constant 9.99999974E-6 : f32
    %20 = vector.broadcast %cst_9 : f32 to vector<1x1000xf32>
    %21 = arith.addf %17, %20 : vector<1x1000xf32>
    %22 = math.rsqrt %21 : vector<1x1000xf32>
    %23 = vector.broadcast %22 : vector<1x1000xf32> to vector<8x1000xf32>
    %24 = arith.mulf %19, %23 : vector<8x1000xf32>
    %cst_10 = arith.constant 0.000000e+00 : f32
    %25 = vector.broadcast %cst_10 : f32 to vector<8x1000xf32>
    %26 = arith.maximumf %24, %25 : vector<8x1000xf32>
    %27 = arith.truncf %26 : vector<8x1000xf32> to vector<8x1000xbf16>
    %c0_11 = arith.constant 0 : index
    %c0_12 = arith.constant 0 : index
    %28 = vector.load %arg3[%c0_11, %c0_12] : memref<1000x800xbf16, #tpu.memory_space<vmem>>, vector<1000x800xbf16>
    %cst_13 = arith.constant dense<0.000000e+00> : vector<8x800xf32>
    %29 = tpu.matmul %27, %28, %cst_13 {dimension_numbers = #tpu.dot_dimension_numbers<[1], [0], [0], [1], [0, 0, 1, 1], [], []>} : vector<8x1000xbf16>, vector<1000x800xbf16>, vector<8x800xf32> -> vector<8x800xf32>
    %cst_14 = arith.constant dense<0.000000e+00> : vector<800xf32>
    %30 = vector.multi_reduction <add>, %29, %cst_14 [0] : vector<8x800xf32> to vector<800xf32>
    %31 = vector.shape_cast %30 : vector<800xf32> to vector<1x800xf32>
    %cst_15 = arith.constant 8.000000e+00 : f32
    %32 = vector.broadcast %cst_15 : f32 to vector<1x800xf32>
    %33 = arith.divf %31, %32 : vector<1x800xf32>
    %34 = arith.mulf %29, %29 : vector<8x800xf32>
    %cst_16 = arith.constant dense<0.000000e+00> : vector<800xf32>
    %35 = vector.multi_reduction <add>, %34, %cst_16 [0] : vector<8x800xf32> to vector<800xf32>
    %36 = vector.shape_cast %35 : vector<800xf32> to vector<1x800xf32>
    %cst_17 = arith.constant 8.000000e+00 : f32
    %37 = vector.broadcast %cst_17 : f32 to vector<1x800xf32>
    %38 = arith.divf %36, %37 : vector<1x800xf32>
    %39 = arith.mulf %33, %33 : vector<1x800xf32>
    %40 = arith.subf %38, %39 : vector<1x800xf32>
    %cst_18 = arith.constant 0.000000e+00 : f32
    %41 = vector.broadcast %cst_18 : f32 to vector<1x800xf32>
    %42 = arith.maximumf %40, %41 : vector<1x800xf32>
    %43 = vector.broadcast %33 : vector<1x800xf32> to vector<8x800xf32>
    %44 = arith.subf %29, %43 : vector<8x800xf32>
    %cst_19 = arith.constant 9.99999974E-6 : f32
    %45 = vector.broadcast %cst_19 : f32 to vector<1x800xf32>
    %46 = arith.addf %42, %45 : vector<1x800xf32>
    %47 = math.rsqrt %46 : vector<1x800xf32>
    %48 = vector.broadcast %47 : vector<1x800xf32> to vector<8x800xf32>
    %49 = arith.mulf %44, %48 : vector<8x800xf32>
    %cst_20 = arith.constant 0.000000e+00 : f32
    %50 = vector.broadcast %cst_20 : f32 to vector<8x800xf32>
    %51 = arith.maximumf %49, %50 : vector<8x800xf32>
    %52 = arith.truncf %51 : vector<8x800xf32> to vector<8x800xbf16>
    %c0_21 = arith.constant 0 : index
    %c0_22 = arith.constant 0 : index
    %53 = vector.load %arg4[%c0_21, %c0_22] : memref<800x600xbf16, #tpu.memory_space<vmem>>, vector<800x600xbf16>
    %cst_23 = arith.constant dense<0.000000e+00> : vector<8x600xf32>
    %54 = tpu.matmul %52, %53, %cst_23 {dimension_numbers = #tpu.dot_dimension_numbers<[1], [0], [0], [1], [0, 0, 1, 1], [], []>} : vector<8x800xbf16>, vector<800x600xbf16>, vector<8x600xf32> -> vector<8x600xf32>
    %cst_24 = arith.constant dense<0.000000e+00> : vector<600xf32>
    %55 = vector.multi_reduction <add>, %54, %cst_24 [0] : vector<8x600xf32> to vector<600xf32>
    %56 = vector.shape_cast %55 : vector<600xf32> to vector<1x600xf32>
    %cst_25 = arith.constant 8.000000e+00 : f32
    %57 = vector.broadcast %cst_25 : f32 to vector<1x600xf32>
    %58 = arith.divf %56, %57 : vector<1x600xf32>
    %59 = arith.mulf %54, %54 : vector<8x600xf32>
    %cst_26 = arith.constant dense<0.000000e+00> : vector<600xf32>
    %60 = vector.multi_reduction <add>, %59, %cst_26 [0] : vector<8x600xf32> to vector<600xf32>
    %61 = vector.shape_cast %60 : vector<600xf32> to vector<1x600xf32>
    %cst_27 = arith.constant 8.000000e+00 : f32
    %62 = vector.broadcast %cst_27 : f32 to vector<1x600xf32>
    %63 = arith.divf %61, %62 : vector<1x600xf32>
    %64 = arith.mulf %58, %58 : vector<1x600xf32>
    %65 = arith.subf %63, %64 : vector<1x600xf32>
    %cst_28 = arith.constant 0.000000e+00 : f32
    %66 = vector.broadcast %cst_28 : f32 to vector<1x600xf32>
    %67 = arith.maximumf %65, %66 : vector<1x600xf32>
    %68 = vector.broadcast %58 : vector<1x600xf32> to vector<8x600xf32>
    %69 = arith.subf %54, %68 : vector<8x600xf32>
    %cst_29 = arith.constant 9.99999974E-6 : f32
    %70 = vector.broadcast %cst_29 : f32 to vector<1x600xf32>
    %71 = arith.addf %67, %70 : vector<1x600xf32>
    %72 = math.rsqrt %71 : vector<1x600xf32>
    %73 = vector.broadcast %72 : vector<1x600xf32> to vector<8x600xf32>
    %74 = arith.mulf %69, %73 : vector<8x600xf32>
    %cst_30 = arith.constant 0.000000e+00 : f32
    %75 = vector.broadcast %cst_30 : f32 to vector<8x600xf32>
    %76 = arith.maximumf %74, %75 : vector<8x600xf32>
    %77 = arith.truncf %76 : vector<8x600xf32> to vector<8x600xbf16>
    %c0_31 = arith.constant 0 : index
    %c0_32 = arith.constant 0 : index
    %78 = vector.load %arg5[%c0_31, %c0_32] : memref<600x400xbf16, #tpu.memory_space<vmem>>, vector<600x400xbf16>
    %cst_33 = arith.constant dense<0.000000e+00> : vector<8x400xf32>
    %79 = tpu.matmul %77, %78, %cst_33 {dimension_numbers = #tpu.dot_dimension_numbers<[1], [0], [0], [1], [0, 0, 1, 1], [], []>} : vector<8x600xbf16>, vector<600x400xbf16>, vector<8x400xf32> -> vector<8x400xf32>
    %cst_34 = arith.constant dense<0.000000e+00> : vector<400xf32>
    %80 = vector.multi_reduction <add>, %79, %cst_34 [0] : vector<8x400xf32> to vector<400xf32>
    %81 = vector.shape_cast %80 : vector<400xf32> to vector<1x400xf32>
    %cst_35 = arith.constant 8.000000e+00 : f32
    %82 = vector.broadcast %cst_35 : f32 to vector<1x400xf32>
    %83 = arith.divf %81, %82 : vector<1x400xf32>
    %84 = arith.mulf %79, %79 : vector<8x400xf32>
    %cst_36 = arith.constant dense<0.000000e+00> : vector<400xf32>
    %85 = vector.multi_reduction <add>, %84, %cst_36 [0] : vector<8x400xf32> to vector<400xf32>
    %86 = vector.shape_cast %85 : vector<400xf32> to vector<1x400xf32>
    %cst_37 = arith.constant 8.000000e+00 : f32
    %87 = vector.broadcast %cst_37 : f32 to vector<1x400xf32>
    %88 = arith.divf %86, %87 : vector<1x400xf32>
    %89 = arith.mulf %83, %83 : vector<1x400xf32>
    %90 = arith.subf %88, %89 : vector<1x400xf32>
    %cst_38 = arith.constant 0.000000e+00 : f32
    %91 = vector.broadcast %cst_38 : f32 to vector<1x400xf32>
    %92 = arith.maximumf %90, %91 : vector<1x400xf32>
    %93 = vector.broadcast %83 : vector<1x400xf32> to vector<8x400xf32>
    %94 = arith.subf %79, %93 : vector<8x400xf32>
    %cst_39 = arith.constant 9.99999974E-6 : f32
    %95 = vector.broadcast %cst_39 : f32 to vector<1x400xf32>
    %96 = arith.addf %92, %95 : vector<1x400xf32>
    %97 = math.rsqrt %96 : vector<1x400xf32>
    %98 = vector.broadcast %97 : vector<1x400xf32> to vector<8x400xf32>
    %99 = arith.mulf %94, %98 : vector<8x400xf32>
    %cst_40 = arith.constant 0.000000e+00 : f32
    %100 = vector.broadcast %cst_40 : f32 to vector<8x400xf32>
    %101 = arith.maximumf %99, %100 : vector<8x400xf32>
    %102 = arith.truncf %101 : vector<8x400xf32> to vector<8x400xbf16>
    %c0_41 = arith.constant 0 : index
    %c0_42 = arith.constant 0 : index
    %103 = vector.load %arg6[%c0_41, %c0_42] : memref<400x200xbf16, #tpu.memory_space<vmem>>, vector<400x200xbf16>
    %cst_43 = arith.constant dense<0.000000e+00> : vector<8x200xf32>
    %104 = tpu.matmul %102, %103, %cst_43 {dimension_numbers = #tpu.dot_dimension_numbers<[1], [0], [0], [1], [0, 0, 1, 1], [], []>} : vector<8x400xbf16>, vector<400x200xbf16>, vector<8x200xf32> -> vector<8x200xf32>
    %cst_44 = arith.constant dense<0.000000e+00> : vector<200xf32>
    %105 = vector.multi_reduction <add>, %104, %cst_44 [0] : vector<8x200xf32> to vector<200xf32>
    %106 = vector.shape_cast %105 : vector<200xf32> to vector<1x200xf32>
    %cst_45 = arith.constant 8.000000e+00 : f32
    %107 = vector.broadcast %cst_45 : f32 to vector<1x200xf32>
    %108 = arith.divf %106, %107 : vector<1x200xf32>
    %109 = arith.mulf %104, %104 : vector<8x200xf32>
    %cst_46 = arith.constant dense<0.000000e+00> : vector<200xf32>
    %110 = vector.multi_reduction <add>, %109, %cst_46 [0] : vector<8x200xf32> to vector<200xf32>
    %111 = vector.shape_cast %110 : vector<200xf32> to vector<1x200xf32>
    %cst_47 = arith.constant 8.000000e+00 : f32
    %112 = vector.broadcast %cst_47 : f32 to vector<1x200xf32>
    %113 = arith.divf %111, %112 : vector<1x200xf32>
    %114 = arith.mulf %108, %108 : vector<1x200xf32>
    %115 = arith.subf %113, %114 : vector<1x200xf32>
    %cst_48 = arith.constant 0.000000e+00 : f32
    %116 = vector.broadcast %cst_48 : f32 to vector<1x200xf32>
    %117 = arith.maximumf %115, %116 : vector<1x200xf32>
    %118 = vector.broadcast %108 : vector<1x200xf32> to vector<8x200xf32>
    %119 = arith.subf %104, %118 : vector<8x200xf32>
    %cst_49 = arith.constant 9.99999974E-6 : f32
    %120 = vector.broadcast %cst_49 : f32 to vector<1x200xf32>
    %121 = arith.addf %117, %120 : vector<1x200xf32>
    %122 = math.rsqrt %121 : vector<1x200xf32>
    %123 = vector.broadcast %122 : vector<1x200xf32> to vector<8x200xf32>
    %124 = arith.mulf %119, %123 : vector<8x200xf32>
    %cst_50 = arith.constant 0.000000e+00 : f32
    %125 = vector.broadcast %cst_50 : f32 to vector<8x200xf32>
    %126 = arith.maximumf %124, %125 : vector<8x200xf32>
    %127 = arith.truncf %126 : vector<8x200xf32> to vector<8x200xbf16>
    %c0_51 = arith.constant 0 : index
    %c0_52 = arith.constant 0 : index
    %128 = vector.load %arg7[%c0_51, %c0_52] : memref<200x100xbf16, #tpu.memory_space<vmem>>, vector<200x100xbf16>
    %cst_53 = arith.constant dense<0.000000e+00> : vector<8x100xf32>
    %129 = tpu.matmul %127, %128, %cst_53 {dimension_numbers = #tpu.dot_dimension_numbers<[1], [0], [0], [1], [0, 0, 1, 1], [], []>} : vector<8x200xbf16>, vector<200x100xbf16>, vector<8x100xf32> -> vector<8x100xf32>
    %c0_54 = arith.constant 0 : index
    %c0_55 = arith.constant 0 : index
    %130 = vector.load %arg8[%c0_54, %c0_55] : memref<1x100xf32, #tpu.memory_space<vmem>>, vector<1x100xf32>
    %131 = vector.broadcast %130 : vector<1x100xf32> to vector<8x100xf32>
    %132 = arith.addf %129, %131 : vector<8x100xf32>
    %cst_56 = arith.constant 0.000000e+00 : f32
    %133 = vector.broadcast %cst_56 : f32 to vector<8x100xf32>
    %134 = arith.maximumf %132, %133 : vector<8x100xf32>
    %135 = arith.truncf %134 : vector<8x100xf32> to vector<8x100xbf16>
    %c0_57 = arith.constant 0 : index
    %c0_58 = arith.constant 0 : index
    %136 = vector.load %arg9[%c0_57, %c0_58] : memref<100x5xbf16, #tpu.memory_space<vmem>>, vector<100x5xbf16>
    %cst_59 = arith.constant dense<0.000000e+00> : vector<8x5xf32>
    %137 = tpu.matmul %135, %136, %cst_59 {dimension_numbers = #tpu.dot_dimension_numbers<[1], [0], [0], [1], [0, 0, 1, 1], [], []>} : vector<8x100xbf16>, vector<100x5xbf16>, vector<8x5xf32> -> vector<8x5xf32>
    %c0_60 = arith.constant 0 : index
    %c0_61 = arith.constant 0 : index
    %138 = vector.load %arg10[%c0_60, %c0_61] : memref<1x5xf32, #tpu.memory_space<vmem>>, vector<1x5xf32>
    %139 = vector.broadcast %138 : vector<1x5xf32> to vector<8x5xf32>
    %140 = arith.addf %137, %139 : vector<8x5xf32>
    %c0_62 = arith.constant 0 : index
    %c0_63 = arith.constant 0 : index
    %c0_64 = arith.constant 0 : index
    %141 = vector.load %arg11[%c0_62, %c0_63, %c0_64] : memref<1x8x5xf32, #tpu.memory_space<vmem>>, vector<1x8x5xf32>
    %142 = vector.shape_cast %141 : vector<1x8x5xf32> to vector<8x5xf32>
    %143 = vector.shape_cast %140 : vector<8x5xf32> to vector<1x8x5xf32>
    tpu.vector_store %arg11[%c0_62, %c0_63, %c0_64], %143 {strides = array<i32>} : memref<1x8x5xf32, #tpu.memory_space<vmem>>, vector<1x8x5xf32>,
    return
  }
  func.func @transform_0(%arg0: i32) -> (i32, i32, i32) {
    %c0_i32 = arith.constant 0 : i32
    %c0_i32_0 = arith.constant 0 : i32
    %c0_i32_1 = arith.constant 0 : i32
    return %arg0, %c0_i32, %c0_i32_0 : i32, i32, i32
  }
  func.func @transform_1(%arg0: i32) -> (i32, i32) {
    %c0_i32 = arith.constant 0 : i32
    %c0_i32_0 = arith.constant 0 : i32
    %c0_i32_1 = arith.constant 0 : i32
    return %c0_i32, %c0_i32_0 : i32, i32
  }
  func.func @transform_2(%arg0: i32) -> (i32, i32) {
    %c0_i32 = arith.constant 0 : i32
    %c0_i32_0 = arith.constant 0 : i32
    %c0_i32_1 = arith.constant 0 : i32
    return %c0_i32, %c0_i32_0 : i32, i32
  }
  func.func @transform_3(%arg0: i32) -> (i32, i32) {
    %c0_i32 = arith.constant 0 : i32
    %c0_i32_0 = arith.constant 0 : i32
    %c0_i32_1 = arith.constant 0 : i32
    return %c0_i32, %c0_i32_0 : i32, i32
  }
  func.func @transform_4(%arg0: i32) -> (i32, i32) {
    %c0_i32 = arith.constant 0 : i32
    %c0_i32_0 = arith.constant 0 : i32
    %c0_i32_1 = arith.constant 0 : i32
    return %c0_i32, %c0_i32_0 : i32, i32
  }
  func.func @transform_5(%arg0: i32) -> (i32, i32) {
    %c0_i32 = arith.constant 0 : i32
    %c0_i32_0 = arith.constant 0 : i32
    %c0_i32_1 = arith.constant 0 : i32
    return %c0_i32, %c0_i32_0 : i32, i32
  }
  func.func @transform_6(%arg0: i32) -> (i32, i32) {
    %c0_i32 = arith.constant 0 : i32
    %c0_i32_0 = arith.constant 0 : i32
    %c0_i32_1 = arith.constant 0 : i32
    return %c0_i32, %c0_i32_0 : i32, i32
  }
  func.func @transform_7(%arg0: i32) -> (i32, i32) {
    %c0_i32 = arith.constant 0 : i32
    %c0_i32_0 = arith.constant 0 : i32
    %c0_i32_1 = arith.constant 0 : i32
    return %c0_i32, %c0_i32_0 : i32, i32
  }
  func.func @transform_8(%arg0: i32) -> (i32, i32) {
    %c0_i32 = arith.constant 0 : i32
    %c0_i32_0 = arith.constant 0 : i32
    %c0_i32_1 = arith.constant 0 : i32
    return %c0_i32, %c0_i32_0 : i32, i32
  }
  func.func @transform_9(%arg0: i32) -> (i32, i32) {
    %c0_i32 = arith.constant 0 : i32
    %c0_i32_0 = arith.constant 0 : i32
    %c0_i32_1 = arith.constant 0 : i32
    return %c0_i32, %c0_i32_0 : i32, i32
  }
  func.func @transform_10(%arg0: i32) -> (i32, i32, i32) {
    %c0_i32 = arith.constant 0 : i32
    %c0_i32_0 = arith.constant 0 : i32
    %c0_i32_1 = arith.constant 0 : i32
    return %arg0, %c0_i32, %c0_i32_0 : i32, i32, i32
  }
}

</mosaic_0001>

<llo_original>
// kernel: tpu_custom_call.1
$region0: #{tpu_custom_call.1}
  #allocation0 [shape = 'u32[]', space=smem, size = 0x4, offset = 0x4, fixed_abs, tag = 'smem constant byte address 0x4 - core index']
  #allocation1 [shape = 'u32[144,128]{1,0:T(1,128)}', space=vmem, size = 0x12000, scoped, tag = 'internal scratch']
  %s0 = inlined_call_operand.vmem [shape: f32[1,8,45], index: 0, kind: input, shape index: {}]
  %s1 = inlined_call_operand.vmem [shape: bf16[45,1000], index: 1, kind: input, shape index: {}]
  %s2 = inlined_call_operand.vmem [shape: bf16[1000,800], index: 2, kind: input, shape index: {}]
  %s3 = inlined_call_operand.vmem [shape: bf16[800,600], index: 3, kind: input, shape index: {}]
  %s4 = inlined_call_operand.vmem [shape: bf16[600,400], index: 4, kind: input, shape index: {}]
  %s5 = inlined_call_operand.vmem [shape: bf16[400,200], index: 5, kind: input, shape index: {}]
  %s6 = inlined_call_operand.vmem [shape: bf16[200,100], index: 6, kind: input, shape index: {}]
  %s7 = inlined_call_operand.vmem [shape: f32[1,100], index: 7, kind: input, shape index: {}]
  %s8 = inlined_call_operand.vmem [shape: bf16[100,5], index: 8, kind: input, shape index: {}]
  %s9 = inlined_call_operand.vmem [shape: f32[1,5], index: 9, kind: input, shape index: {}]
  %s10 = inlined_call_operand.vmem [shape: f32[1,8,5], index: 10, kind: output, shape index: {}]
  %s11 = sld [smem:[#allocation0]]
  $region50: #{tpu_custom_call.1} parent=0
    _
  %s13 = ssub.s32 1, %s11
  %s14 = scalar_select 0, %s13, %s11
  // Predicated region
  $region2: #{tpu_custom_call.1} parent=0 // pred_check
    _
  $region3: #{tpu_custom_call.1} parent=0 // pred_check_branch
    %16 = sbr.rel (0) target = $region5
  $region4: #{tpu_custom_call.1} parent=0 // pred_region
    _
  $region5: #{tpu_custom_call.1} parent=0 // pred_fallthru
    _
  // Predicated region
  $region6: #{tpu_custom_call.1} parent=0 // pred_check
    _
  $region7: #{tpu_custom_call.1} parent=0 // pred_check_branch
    %18 = sbr.rel (0) target = $region9
  $region8: #{tpu_custom_call.1} parent=0 // pred_region
    _
  $region9: #{tpu_custom_call.1} parent=0 // pred_fallthru
    _
  // Predicated region
  $region10: #{tpu_custom_call.1} parent=0 // pred_check
    _
  $region11: #{tpu_custom_call.1} parent=0 // pred_check_branch
    %20 = sbr.rel (0) target = $region13
  $region12: #{tpu_custom_call.1} parent=0 // pred_region
    _
  $region13: #{tpu_custom_call.1} parent=0 // pred_fallthru
    _
  // Predicated region
  $region14: #{tpu_custom_call.1} parent=0 // pred_check
    _
  $region15: #{tpu_custom_call.1} parent=0 // pred_check_branch
    %22 = sbr.rel (0) target = $region17
  $region16: #{tpu_custom_call.1} parent=0 // pred_region
    _
  $region17: #{tpu_custom_call.1} parent=0 // pred_fallthru
    _
  // Predicated region
  $region18: #{tpu_custom_call.1} parent=0 // pred_check
    _
  $region19: #{tpu_custom_call.1} parent=0 // pred_check_branch
    %24 = sbr.rel (0) target = $region21
  $region20: #{tpu_custom_call.1} parent=0 // pred_region
    _
  $region21: #{tpu_custom_call.1} parent=0 // pred_fallthru
    _
  // Predicated region
  $region22: #{tpu_custom_call.1} parent=0 // pred_check
    _
  $region23: #{tpu_custom_call.1} parent=0 // pred_check_branch
    %26 = sbr.rel (0) target = $region25
  $region24: #{tpu_custom_call.1} parent=0 // pred_region
    _
  $region25: #{tpu_custom_call.1} parent=0 // pred_fallthru
    _
  // Predicated region
  $region26: #{tpu_custom_call.1} parent=0 // pred_check
    _
  $region27: #{tpu_custom_call.1} parent=0 // pred_check_branch
    %28 = sbr.rel (0) target = $region29
  $region28: #{tpu_custom_call.1} parent=0 // pred_region
    _
  $region29: #{tpu_custom_call.1} parent=0 // pred_fallthru
    _
  // Predicated region
  $region30: #{tpu_custom_call.1} parent=0 // pred_check
    _
  $region31: #{tpu_custom_call.1} parent=0 // pred_check_branch
    %30 = sbr.rel (0) target = $region33
  $region32: #{tpu_custom_call.1} parent=0 // pred_region
    _
  $region33: #{tpu_custom_call.1} parent=0 // pred_fallthru
    _
  // Predicated region
  $region34: #{tpu_custom_call.1} parent=0 // pred_check
    _
  $region35: #{tpu_custom_call.1} parent=0 // pred_check_branch
    %32 = sbr.rel (0) target = $region37
  $region36: #{tpu_custom_call.1} parent=0 // pred_region
    _
  $region37: #{tpu_custom_call.1} parent=0 // pred_fallthru
    _
  // Predicated region
  $region38: #{tpu_custom_call.1} parent=0 // pred_check
    _
  $region39: #{tpu_custom_call.1} parent=0 // pred_check_branch
    %34 = sbr.rel (0) target = $region41
  $region40: #{tpu_custom_call.1} parent=0 // pred_region
    _
  $region41: #{tpu_custom_call.1} parent=0 // pred_fallthru
    _
  %v36 = vld [vmem:[%s0] sm:$0xff]
  %v37 = vpack.c.bf16 %v36, %v36
  %v38 = vld [vmem:[%s1] sm:$0xff]
  %v39 = vld [vmem:[%s1 + $0x8] sm:$0xff]
  %v40 = vld [vmem:[%s1 + $0x10] sm:$0xff]
  %v41 = vld [vmem:[%s1 + $0x18] sm:$0xff]
  %v42 = vld [vmem:[%s1 + $0x20] sm:$0xff]
  %v43 = vld [vmem:[%s1 + $0x28] sm:$0xff]
  %v44 = vld [vmem:[%s1 + $0x30] sm:$0xff]
  %v45 = vld [vmem:[%s1 + $0x38] sm:$0xff]
  %v46 = vld [vmem:[%s1 + $0x40] sm:$0xff]
  %v47 = vld [vmem:[%s1 + $0x48] sm:$0xff]
  %v48 = vld [vmem:[%s1 + $0x50] sm:$0xff]
  %v49 = vld [vmem:[%s1 + $0x58] sm:$0xff]
  %v50 = vld [vmem:[%s1 + $0x60] sm:$0xff]
  %v51 = vld [vmem:[%s1 + $0x68] sm:$0xff]
  %v52 = vld [vmem:[%s1 + $0x70] sm:$0xff]
  %v53 = vld [vmem:[%s1 + $0x78] sm:$0xff]
  %v54 = vld [vmem:[%s1 + $0x80] sm:$0xff]
  %v55 = vld [vmem:[%s1 + $0x88] sm:$0xff]
  %v56 = vld [vmem:[%s1 + $0x90] sm:$0xff]
  %v57 = vld [vmem:[%s1 + $0x98] sm:$0xff]
  %v58 = vld [vmem:[%s1 + $0xa0] sm:$0x77]
  %v59 = vld [vmem:[%s1 + $0xa8] sm:$0x77]
  %v60 = vld [vmem:[%s1 + $0xb0] sm:$0x77]
  %v61 = vld [vmem:[%s1 + $0xb8] sm:$0x77]
  %v86 = vunpack.c.l.b16 %v38
  %v87 = vunpack.c.h.b16 %v38
  %v88 = vunpack.c.l.b16 %v39
  %v89 = vunpack.c.h.b16 %v39
  %v90 = vunpack.c.l.b16 %v40
  %v91 = vunpack.c.h.b16 %v40
  %v92 = vunpack.c.l.b16 %v41
  %v93 = vunpack.c.h.b16 %v41
  %v94 = vunpack.c.l.b16 %v42
  %v95 = vunpack.c.h.b16 %v42
  %v96 = vunpack.c.l.b16 %v43
  %v97 = vunpack.c.h.b16 %v43
  %v98 = vunpack.c.l.b16 %v44
  %v99 = vunpack.c.h.b16 %v44
  %v100 = vunpack.c.l.b16 %v45
  %v101 = vunpack.c.h.b16 %v45
  %v102 = vunpack.c.l.b16 %v46
  %v103 = vunpack.c.h.b16 %v46
  %v104 = vunpack.c.l.b16 %v47
  %v105 = vunpack.c.h.b16 %v47
  %v106 = vunpack.c.l.b16 %v48
  %v107 = vunpack.c.h.b16 %v48
  %v108 = vunpack.c.l.b16 %v49
  %v109 = vunpack.c.h.b16 %v49
  %v110 = vunpack.c.l.b16 %v50
  %v111 = vunpack.c.h.b16 %v50
  %v112 = vunpack.c.l.b16 %v51
  %v113 = vunpack.c.h.b16 %v51
  %v114 = vunpack.c.l.b16 %v52
  %v115 = vunpack.c.h.b16 %v52
  %v116 = vunpack.c.l.b16 %v53
  %v117 = vunpack.c.h.b16 %v53
  %v118 = vunpack.c.l.b16 %v54
  %v119 = vunpack.c.h.b16 %v54
  %v120 = vunpack.c.l.b16 %v55
  %v121 = vunpack.c.h.b16 %v55
  %v122 = vunpack.c.l.b16 %v56
  %v123 = vunpack.c.h.b16 %v56
  %v124 = vunpack.c.l.b16 %v57
  %v125 = vunpack.c.h.b16 %v57
  %v126 = vunpack.c.l.b16 %v58
  %v127 = vunpack.c.h.b16 %v58
  %v128 = vunpack.c.l.b16 %v59
  %v129 = vunpack.c.h.b16 %v59
  %v130 = vunpack.c.l.b16 %v60
  %v131 = vunpack.c.h.b16 %v60
  %v132 = vunpack.c.l.b16 %v61
  %v133 = vunpack.c.h.b16 %v61
  %v134 = vpack.c.b16 %v94, %v86
  %v135 = vpack.c.b16 %v95, %v87
  %v136 = vpack.c.b16 %v96, %v88
  %v137 = vpack.c.b16 %v97, %v89
  %v138 = vpack.c.b16 %v98, %v90
  %v139 = vpack.c.b16 %v99, %v91
  %v140 = vpack.c.b16 %v100, %v92
  %v141 = vpack.c.b16 %v101, %v93
  %v142 = vpack.c.b16 %v110, %v102
  %v143 = vpack.c.b16 %v111, %v103
  %v144 = vpack.c.b16 %v112, %v104
  %v145 = vpack.c.b16 %v113, %v105
  %v146 = vpack.c.b16 %v114, %v106
  %v147 = vpack.c.b16 %v115, %v107
  %v148 = vpack.c.b16 %v116, %v108
  %v149 = vpack.c.b16 %v117, %v109
  %v150 = vpack.c.b16 %v126, %v118
  %v151 = vpack.c.b16 %v127, %v119
  %v152 = vpack.c.b16 %v128, %v120
  %v153 = vpack.c.b16 %v129, %v121
  %v154 = vpack.c.b16 %v130, %v122
  %v155 = vpack.c.b16 %v131, %v123
  %v156 = vpack.c.b16 %v132, %v124
  %v157 = vpack.c.b16 %v133, %v125
  %vm174 = vcmask 367616
  %v176 = vsel %vm174, %v37, 0
  %vm178 = vcmask 1045504
  %vm179 = vcmask 1046528
  %v180 = vsel %vm178, 4294967295, 65535
  %v181 = vsel %vm179, %v180, 0
  %v183 = vand.u32 %v150, %v181
  %v186 = vand.u32 %v151, %v181
  %v189 = vand.u32 %v152, %v181
  %v192 = vand.u32 %v153, %v181
  %v195 = vand.u32 %v154, %v181
  %v198 = vand.u32 %v155, %v181
  %v201 = vand.u32 %v156, %v181
  %v204 = vand.u32 %v157, %v181
  %206 = vmatprep.subr.bf16.mxu0 0
  %207 = vmatpush1.bf16.msra.mxu0 0
  %208 = vmatprep.subr.bf16.mxu0 0
  %209 = vmatpush1.bf16.msra.mxu0 0
  %210 = vmatprep.subr.bf16.mxu0 0
  %211 = vmatpush1.bf16.msra.mxu0 0
  %212 = vmatprep.subr.bf16.mxu0 0
  %213 = vmatpush1.bf16.msra.mxu0 0
  %214 = vmatprep.subr.bf16.mxu0 0
  %215 = vmatpush1.bf16.msra.mxu0 0
  %216 = vmatprep.subr.bf16.mxu0 %v186
  %217 = vmatpush1.bf16.msra.mxu0 %v183
  %218 = vmatprep.subr.bf16.mxu0 %v143
  %219 = vmatpush1.bf16.msra.mxu0 %v142
  %220 = vmatprep.subr.bf16.mxu0 %v135
  %221 = vmatpush1.bf16.msra.mxu0 %v134
  %222 = vmatprep.subr.bf16.mxu0 0
  %223 = vmatpush2.bf16.msra.mxu0 0
  %224 = vmatprep.subr.bf16.mxu0 0
  %225 = vmatpush2.bf16.msra.mxu0 0
  %226 = vmatprep.subr.bf16.mxu0 0
  %227 = vmatpush2.bf16.msra.mxu0 0
  %228 = vmatprep.subr.bf16.mxu0 0
  %229 = vmatpush2.bf16.msra.mxu0 0
  %230 = vmatprep.subr.bf16.mxu0 0
  %231 = vmatpush2.bf16.msra.mxu0 0
  %232 = vmatprep.subr.bf16.mxu0 0
  %233 = vmatpush2.bf16.msra.mxu0 0
  %234 = vmatprep.subr.bf16.mxu0 0
  %235 = vmatpush2.bf16.msra.mxu0 0
  %236 = vmatprep.subr.bf16.mxu0 0
  %237 = vmatpush2.bf16.msra.mxu0 0
  %238 = vmatprep.mubr.bf16.mxu0 0
  %239 = vmatmul.mubr.bf16.gmra.mxu0 %v176
  %v240 = vpop.f32.mrf.mxu0
  %v241 = vadd.f32 0.0, %v240
  %v242 = vpop.f32.mrf.mxu0
  %v243 = vadd.f32 0.0, %v242
  %v244 = vpop.f32.mrf.mxu0
  %v245 = vpop.f32.mrf.mxu0
  %246 = vdwg.mxu0
  %247 = vmatprep.subr.bf16.mxu0 0
  %248 = vmatpush1.bf16.msra.mxu0 0
  %249 = vmatprep.subr.bf16.mxu0 0
  %250 = vmatpush1.bf16.msra.mxu0 0
  %251 = vmatprep.subr.bf16.mxu0 0
  %252 = vmatpush1.bf16.msra.mxu0 0
  %253 = vmatprep.subr.bf16.mxu0 0
  %254 = vmatpush1.bf16.msra.mxu0 0
  %255 = vmatprep.subr.bf16.mxu0 0
  %256 = vmatpush1.bf16.msra.mxu0 0
  %257 = vmatprep.subr.bf16.mxu0 %v192
  %258 = vmatpush1.bf16.msra.mxu0 %v189
  %259 = vmatprep.subr.bf16.mxu0 %v145
  %260 = vmatpush1.bf16.msra.mxu0 %v144
  %261 = vmatprep.subr.bf16.mxu0 %v137
  %262 = vmatpush1.bf16.msra.mxu0 %v136
  %263 = vmatprep.subr.bf16.mxu0 0
  %264 = vmatpush2.bf16.msra.mxu0 0
  %265 = vmatprep.subr.bf16.mxu0 0
  %266 = vmatpush2.bf16.msra.mxu0 0
  %267 = vmatprep.subr.bf16.mxu0 0
  %268 = vmatpush2.bf16.msra.mxu0 0
  %269 = vmatprep.subr.bf16.mxu0 0
  %270 = vmatpush2.bf16.msra.mxu0 0
  %271 = vmatprep.subr.bf16.mxu0 0
  %272 = vmatpush2.bf16.msra.mxu0 0
  %273 = vmatprep.subr.bf16.mxu0 0
  %274 = vmatpush2.bf16.msra.mxu0 0
  %275 = vmatprep.subr.bf16.mxu0 0
  %276 = vmatpush2.bf16.msra.mxu0 0
  %277 = vmatprep.subr.bf16.mxu0 0
  %278 = vmatpush2.bf16.msra.mxu0 0
  %279 = vmatprep.mubr.bf16.mxu0 0
  %280 = vmatmul.mubr.bf16.gmra.mxu0 %v176
  %v281 = vpop.f32.mrf.mxu0
  %v282 = vadd.f32 0.0, %v281
  %v283 = vpop.f32.mrf.mxu0
  %v284 = vadd.f32 0.0, %v283
  %v285 = vpop.f32.mrf.mxu0
  %v286 = vpop.f32.mrf.mxu0
  %287 = vdwg.mxu0
  %288 = vmatprep.subr.bf16.mxu0 0
  %289 = vmatpush1.bf16.msra.mxu0 0
  %290 = vmatprep.subr.bf16.mxu0 0
  %291 = vmatpush1.bf16.msra.mxu0 0
  %292 = vmatprep.subr.bf16.mxu0 0
  %293 = vmatpush1.bf16.msra.mxu0 0
  %294 = vmatprep.subr.bf16.mxu0 0
  %295 = vmatpush1.bf16.msra.mxu0 0
  %296 = vmatprep.subr.bf16.mxu0 0
  %297 = vmatpush1.bf16.msra.mxu0 0
  %298 = vmatprep.subr.bf16.mxu0 %v198
  %299 = vmatpush1.bf16.msra.mxu0 %v195
  %300 = vmatprep.subr.bf16.mxu0 %v147
  %301 = vmatpush1.bf16.msra.mxu0 %v146
  %302 = vmatprep.subr.bf16.mxu0 %v139
  %303 = vmatpush1.bf16.msra.mxu0 %v138
  %304 = vmatprep.subr.bf16.mxu0 0
  %305 = vmatpush2.bf16.msra.mxu0 0
  %306 = vmatprep.subr.bf16.mxu0 0
  %307 = vmatpush2.bf16.msra.mxu0 0
  %308 = vmatprep.subr.bf16.mxu0 0
  %309 = vmatpush2.bf16.msra.mxu0 0
  %310 = vmatprep.subr.bf16.mxu0 0
  %311 = vmatpush2.bf16.msra.mxu0 0
  %312 = vmatprep.subr.bf16.mxu0 0
  %313 = vmatpush2.bf16.msra.mxu0 0
  %314 = vmatprep.subr.bf16.mxu0 0
  %315 = vmatpush2.bf16.msra.mxu0 0
  %316 = vmatprep.subr.bf16.mxu0 0
  %317 = vmatpush2.bf16.msra.mxu0 0
  %318 = vmatprep.subr.bf16.mxu0 0
  %319 = vmatpush2.bf16.msra.mxu0 0
  %320 = vmatprep.mubr.bf16.mxu0 0
  %321 = vmatmul.mubr.bf16.gmra.mxu0 %v176
  %v322 = vpop.f32.mrf.mxu0
  %v323 = vadd.f32 0.0, %v322
  %v324 = vpop.f32.mrf.mxu0
  %v325 = vadd.f32 0.0, %v324
  %v326 = vpop.f32.mrf.mxu0
  %v327 = vpop.f32.mrf.mxu0
  %328 = vdwg.mxu0
  %329 = vmatprep.subr.bf16.mxu0 0
  %330 = vmatpush1.bf16.msra.mxu0 0
  %331 = vmatprep.subr.bf16.mxu0 0
  %332 = vmatpush1.bf16.msra.mxu0 0
  %333 = vmatprep.subr.bf16.mxu0 0
  %334 = vmatpush1.bf16.msra.mxu0 0
  %335 = vmatprep.subr.bf16.mxu0 0
  %336 = vmatpush1.bf16.msra.mxu0 0
  %337 = vmatprep.subr.bf16.mxu0 0
  %338 = vmatpush1.bf16.msra.mxu0 0
  %339 = vmatprep.subr.bf16.mxu0 %v204
  %340 = vmatpush1.bf16.msra.mxu0 %v201
  %341 = vmatprep.subr.bf16.mxu0 %v149
  %342 = vmatpush1.bf16.msra.mxu0 %v148
  %343 = vmatprep.subr.bf16.mxu0 %v141
  %344 = vmatpush1.bf16.msra.mxu0 %v140
  %345 = vmatprep.subr.bf16.mxu0 0
  %346 = vmatpush2.bf16.msra.mxu0 0
  %347 = vmatprep.subr.bf16.mxu0 0
  %348 = vmatpush2.bf16.msra.mxu0 0
  %349 = vmatprep.subr.bf16.mxu0 0
  %350 = vmatpush2.bf16.msra.mxu0 0
  %351 = vmatprep.subr.bf16.mxu0 0
  %352 = vmatpush2.bf16.msra.mxu0 0
  %353 = vmatprep.subr.bf16.mxu0 0
  %354 = vmatpush2.bf16.msra.mxu0 0
  %355 = vmatprep.subr.bf16.mxu0 0
  %356 = vmatpush2.bf16.msra.mxu0 0
  %357 = vmatprep.subr.bf16.mxu0 0
  %358 = vmatpush2.bf16.msra.mxu0 0
  %359 = vmatprep.subr.bf16.mxu0 0
  %360 = vmatpush2.bf16.msra.mxu0 0
  %361 = vmatprep.mubr.bf16.mxu0 0
  %362 = vmatmul.mubr.bf16.gmra.mxu0 %v176
  %v363 = vpop.f32.mrf.mxu0
  %v364 = vadd.f32 0.0, %v363
  %v365 = vpop.f32.mrf.mxu0
  %v366 = vadd.f32 0.0, %v365
  %v367 = vpop.f32.mrf.mxu0
  %v368 = vpop.f32.mrf.mxu0
  %369 = vdwg.mxu0
  %v370 = vrot.slane %v241, 4
  %v371 = vadd.f32 %v241, %v370
  %v372 = vrot.slane %v371, 2
  %v373 = vadd.f32 %v371, %v372
  %v374 = vrot.slane %v373, 1
  %v375 = vadd.f32 %v373, %v374
  %v376 = vrot.slane %v243, 4
  %v377 = vadd.f32 %v243, %v376
  %v378 = vrot.slane %v377, 2
  %v379 = vadd.f32 %v377, %v378
  %v380 = vrot.slane %v379, 1
  %v381 = vadd.f32 %v379, %v380
  %v382 = vrot.slane %v282, 4
  %v383 = vadd.f32 %v282, %v382
  %v384 = vrot.slane %v383, 2
  %v385 = vadd.f32 %v383, %v384
  %v386 = vrot.slane %v385, 1
  %v387 = vadd.f32 %v385, %v386
  %v388 = vrot.slane %v284, 4
  %v389 = vadd.f32 %v284, %v388
  %v390 = vrot.slane %v389, 2
  %v391 = vadd.f32 %v389, %v390
  %v392 = vrot.slane %v391, 1
  %v393 = vadd.f32 %v391, %v392
  %v394 = vrot.slane %v323, 4
  %v395 = vadd.f32 %v323, %v394
  %v396 = vrot.slane %v395, 2
  %v397 = vadd.f32 %v395, %v396
  %v398 = vrot.slane %v397, 1
  %v399 = vadd.f32 %v397, %v398
  %v400 = vrot.slane %v325, 4
  %v401 = vadd.f32 %v325, %v400
  %v402 = vrot.slane %v401, 2
  %v403 = vadd.f32 %v401, %v402
  %v404 = vrot.slane %v403, 1
  %v405 = vadd.f32 %v403, %v404
  %v406 = vrot.slane %v364, 4
  %v407 = vadd.f32 %v364, %v406
  %v408 = vrot.slane %v407, 2
  %v409 = vadd.f32 %v407, %v408
  %v410 = vrot.slane %v409, 1
  %v411 = vadd.f32 %v409, %v410
  %vm412 = vcmask 850944
  %v413 = vsel %vm412, %v366, 0.0
  %v414 = vrot.slane %v413, 4
  %v415 = vadd.f32 %v413, %v414
  %v416 = vrot.slane %v415, 2
  %v417 = vadd.f32 %v415, %v416
  %v418 = vrot.slane %v417, 1
  %v419 = vadd.f32 %v417, %v418
  %v420 = vrcp.pop 8.0
  %v421 = vmul.f32 %v375, %v420
  %v422 = vmul.f32 %v381, %v420
  %v423 = vmul.f32 %v387, %v420
  %v424 = vmul.f32 %v393, %v420
  %v425 = vmul.f32 %v399, %v420
  %v426 = vmul.f32 %v405, %v420
  %v427 = vmul.f32 %v411, %v420
  %v428 = vmul.f32 %v419, %v420
  %v429 = vmul.f32 %v241, %v241
  %v430 = vmul.f32 %v243, %v243
  %v431 = vmul.f32 %v282, %v282
  %v432 = vmul.f32 %v284, %v284
  %v433 = vmul.f32 %v323, %v323
  %v434 = vmul.f32 %v325, %v325
  %v435 = vmul.f32 %v364, %v364
  %v436 = vmul.f32 %v366, %v366
  %v437 = vrot.slane %v429, 4
  %v438 = vadd.f32 %v429, %v437
  %v439 = vrot.slane %v438, 2
  %v440 = vadd.f32 %v438, %v439
  %v441 = vrot.slane %v440, 1
  %v442 = vadd.f32 %v440, %v441
  %v443 = vrot.slane %v430, 4
  %v444 = vadd.f32 %v430, %v443
  %v445 = vrot.slane %v444, 2
  %v446 = vadd.f32 %v444, %v445
  %v447 = vrot.slane %v446, 1
  %v448 = vadd.f32 %v446, %v447
  %v449 = vrot.slane %v431, 4
  %v450 = vadd.f32 %v431, %v449
  %v451 = vrot.slane %v450, 2
  %v452 = vadd.f32 %v450, %v451
  %v453 = vrot.slane %v452, 1
  %v454 = vadd.f32 %v452, %v453
  %v455 = vrot.slane %v432, 4
  %v456 = vadd.f32 %v432, %v455
  %v457 = vrot.slane %v456, 2
  %v458 = vadd.f32 %v456, %v457
  %v459 = vrot.slane %v458, 1
  %v460 = vadd.f32 %v458, %v459
  %v461 = vrot.slane %v433, 4
  %v462 = vadd.f32 %v433, %v461
  %v463 = vrot.slane %v462, 2
  %v464 = vadd.f32 %v462, %v463
  %v465 = vrot.slane %v464, 1
  %v466 = vadd.f32 %v464, %v465
  %v467 = vrot.slane %v434, 4
  %v468 = vadd.f32 %v434, %v467
  %v469 = vrot.slane %v468, 2
  %v470 = vadd.f32 %v468, %v469
  %v471 = vrot.slane %v470, 1
  %v472 = vadd.f32 %v470, %v471
  %v473 = vrot.slane %v435, 4
  %v474 = vadd.f32 %v435, %v473
  %v475 = vrot.slane %v474, 2
  %v476 = vadd.f32 %v474, %v475
  %v477 = vrot.slane %v476, 1
  %v478 = vadd.f32 %v476, %v477
  %v479 = vsel %vm412, %v436, 0.0
  %v480 = vrot.slane %v479, 4
  %v481 = vadd.f32 %v479, %v480
  %v482 = vrot.slane %v481, 2
  %v483 = vadd.f32 %v481, %v482
  %v484 = vrot.slane %v483, 1
  %v485 = vadd.f32 %v483, %v484
  %v486 = vmul.f32 %v442, %v420
  %v487 = vmul.f32 %v448, %v420
  %v488 = vmul.f32 %v454, %v420
  %v489 = vmul.f32 %v460, %v420
  %v490 = vmul.f32 %v466, %v420
  %v491 = vmul.f32 %v472, %v420
  %v492 = vmul.f32 %v478, %v420
  %v493 = vmul.f32 %v485, %v420
  %v494 = vmul.f32 %v421, %v421
  %v495 = vmul.f32 %v422, %v422
  %v496 = vmul.f32 %v423, %v423
  %v497 = vmul.f32 %v424, %v424
  %v498 = vmul.f32 %v425, %v425
  %v499 = vmul.f32 %v426, %v426
  %v500 = vmul.f32 %v427, %v427
  %v501 = vmul.f32 %v428, %v428
  %v502 = vsub.f32 %v486, %v494
  %v503 = vsub.f32 %v487, %v495
  %v504 = vsub.f32 %v488, %v496
  %v505 = vsub.f32 %v489, %v497
  %v506 = vsub.f32 %v490, %v498
  %v507 = vsub.f32 %v491, %v499
  %v508 = vsub.f32 %v492, %v500
  %v509 = vsub.f32 %v493, %v501
  %v510 = vmax.f32 %v502, 0.0
  %v511 = vmax.f32 %v503, 0.0
  %v512 = vmax.f32 %v504, 0.0
  %v513 = vmax.f32 %v505, 0.0
  %v514 = vmax.f32 %v506, 0.0
  %v515 = vmax.f32 %v507, 0.0
  %v516 = vmax.f32 %v508, 0.0
  %v517 = vmax.f32 %v509, 0.0
  %v518 = vsub.f32 %v241, %v421
  %v519 = vsub.f32 %v243, %v422
  %v520 = vsub.f32 %v282, %v423
  %v521 = vsub.f32 %v284, %v424
  %v522 = vsub.f32 %v323, %v425
  %v523 = vsub.f32 %v325, %v426
  %v524 = vsub.f32 %v364, %v427
  %v525 = vsub.f32 %v366, %v428
  %v526 = vadd.f32 %v510, 1e-05
  %v527 = vadd.f32 %v511, 1e-05
  %v528 = vadd.f32 %v512, 1e-05
  %v529 = vadd.f32 %v513, 1e-05
  %v530 = vadd.f32 %v514, 1e-05
  %v531 = vadd.f32 %v515, 1e-05
  %v532 = vadd.f32 %v516, 1e-05
  %v533 = vadd.f32 %v517, 1e-05
  %v534 = vrsqrt.pop %v526
  %v535 = vrsqrt.pop %v527
  %v536 = vrsqrt.pop %v528
  %v537 = vrsqrt.pop %v529
  %v538 = vrsqrt.pop %v530
  %v539 = vrsqrt.pop %v531
  %v540 = vrsqrt.pop %v532
  %v541 = vrsqrt.pop %v533
  %v542 = vmul.f32 %v518, %v534
  %v543 = vmul.f32 %v519, %v535
  %v544 = vmul.f32 %v520, %v536
  %v545 = vmul.f32 %v521, %v537
  %v546 = vmul.f32 %v522, %v538
  %v547 = vmul.f32 %v523, %v539
  %v548 = vmul.f32 %v524, %v540
  %v549 = vmul.f32 %v525, %v541
  %v550 = vmax.f32 %v542, 0.0
  %v551 = vmax.f32 %v543, 0.0
  %v552 = vmax.f32 %v544, 0.0
  %v553 = vmax.f32 %v545, 0.0
  %v554 = vmax.f32 %v546, 0.0
  %v555 = vmax.f32 %v547, 0.0
  %v556 = vmax.f32 %v548, 0.0
  %v557 = vmax.f32 %v549, 0.0
  %v558 = vpack.c.bf16 %v550, %v550
  %v559 = vpack.c.bf16 %v551, %v551
  %v560 = vpack.c.bf16 %v552, %v552
  %v561 = vpack.c.bf16 %v553, %v553
  %v562 = vpack.c.bf16 %v554, %v554
  %v563 = vpack.c.bf16 %v555, %v555
  %v564 = vpack.c.bf16 %v556, %v556
  %v565 = vpack.c.bf16 %v557, %v557
  %v566 = vld [vmem:[%s2] sm:$0xff]
  %v567 = vld [vmem:[%s2 + $0x8] sm:$0xff]
  %v568 = vld [vmem:[%s2 + $0x10] sm:$0xff]
  %v569 = vld [vmem:[%s2 + $0x18] sm:$0xf]
  %v570 = vld [vmem:[%s2 + $0x1c] sm:$0xff]
  %v571 = vld [vmem:[%s2 + $0x24] sm:$0xff]
  %v572 = vld [vmem:[%s2 + $0x2c] sm:$0xff]
  %v573 = vld [vmem:[%s2 + $0x34] sm:$0xf]
  %v574 = vld [vmem:[%s2 + $0x38] sm:$0xff]
  %v575 = vld [vmem:[%s2 + $0x40] sm:$0xff]
  %v576 = vld [vmem:[%s2 + $0x48] sm:$0xff]
  %v577 = vld [vmem:[%s2 + $0x50] sm:$0xf]
  %v578 = vld [vmem:[%s2 + $0x54] sm:$0xff]
  %v579 = vld [vmem:[%s2 + $0x5c] sm:$0xff]
  %v580 = vld [vmem:[%s2 + $0x64] sm:$0xff]
  %v581 = vld [vmem:[%s2 + $0x6c] sm:$0xf]
  %v582 = vld [vmem:[%s2 + $0x70] sm:$0xff]
  %v583 = vld [vmem:[%s2 + $0x78] sm:$0xff]
  %v584 = vld [vmem:[%s2 + $0x80] sm:$0xff]
  %v585 = vld [vmem:[%s2 + $0x88] sm:$0xf]
  %v586 = vld [vmem:[%s2 + $0x8c] sm:$0xff]
  %v587 = vld [vmem:[%s2 + $0x94] sm:$0xff]
  %v588 = vld [vmem:[%s2 + $0x9c] sm:$0xff]
  %v589 = vld [vmem:[%s2 + $0xa4] sm:$0xf]
  %v590 = vld [vmem:[%s2 + $0xa8] sm:$0xff]
  %v591 = vld [vmem:[%s2 + $0xb0] sm:$0xff]
  %v592 = vld [vmem:[%s2 + $0xb8] sm:$0xff]
  %v593 = vld [vmem:[%s2 + $0xc0] sm:$0xf]
  %v594 = vld [vmem:[%s2 + $0xc4] sm:$0xff]
  %v595 = vld [vmem:[%s2 + $0xcc] sm:$0xff]
  %v596 = vld [vmem:[%s2 + $0xd4] sm:$0xff]
  %v597 = vld [vmem:[%s2 + $0xdc] sm:$0xf]
  %v598 = vld [vmem:[%s2 + $0xe0] sm:$0xff]
  %v599 = vld [vmem:[%s2 + $0xe8] sm:$0xff]
  %v600 = vld [vmem:[%s2 + $0xf0] sm:$0xff]
  %v601 = vld [vmem:[%s2 + $0xf8] sm:$0xf]
  %v602 = vld [vmem:[%s2 + $0xfc] sm:$0xff]
  %v603 = vld [vmem:[%s2 + $0x104] sm:$0xff]
  %v604 = vld [vmem:[%s2 + $0x10c] sm:$0xff]
  %v605 = vld [vmem:[%s2 + $0x114] sm:$0xf]
  %v606 = vld [vmem:[%s2 + $0x118] sm:$0xff]
  %v607 = vld [vmem:[%s2 + $0x120] sm:$0xff]
  %v608 = vld [vmem:[%s2 + $0x128] sm:$0xff]
  %v609 = vld [vmem:[%s2 + $0x130] sm:$0xf]
  %v610 = vld [vmem:[%s2 + $0x134] sm:$0xff]
  %v611 = vld [vmem:[%s2 + $0x13c] sm:$0xff]
  %v612 = vld [vmem:[%s2 + $0x144] sm:$0xff]
  %v613 = vld [vmem:[%s2 + $0x14c] sm:$0xf]
  %v614 = vld [vmem:[%s2 + $0x150] sm:$0xff]
  %v615 = vld [vmem:[%s2 + $0x158] sm:$0xff]
  %v616 = vld [vmem:[%s2 + $0x160] sm:$0xff]
  %v617 = vld [vmem:[%s2 + $0x168] sm:$0xf]
  %v618 = vld [vmem:[%s2 + $0x16c] sm:$0xff]
  %v619 = vld [vmem:[%s2 + $0x174] sm:$0xff]
  %v620 = vld [vmem:[%s2 + $0x17c] sm:$0xff]
  %v621 = vld [vmem:[%s2 + $0x184] sm:$0xf]
  %v622 = vld [vmem:[%s2 + $0x188] sm:$0xff]
  %v623 = vld [vmem:[%s2 + $0x190] sm:$0xff]
  %v624 = vld [vmem:[%s2 + $0x198] sm:$0xff]
  %v625 = vld [vmem:[%s2 + $0x1a0] sm:$0xf]
  %v626 = vld [vmem:[%s2 + $0x1a4] sm:$0xff]
  %v627 = vld [vmem:[%s2 + $0x1ac] sm:$0xff]
  %v628 = vld [vmem:[%s2 + $0x1b4] sm:$0xff]
  %v629 = vld [vmem:[%s2 + $0x1bc] sm:$0xf]
  %v630 = vld [vmem:[%s2 + $0x1c0] sm:$0xff]
  %v631 = vld [vmem:[%s2 + $0x1c8] sm:$0xff]
  %v632 = vld [vmem:[%s2 + $0x1d0] sm:$0xff]
  %v633 = vld [vmem:[%s2 + $0x1d8] sm:$0xf]
  %v634 = vld [vmem:[%s2 + $0x1dc] sm:$0xff]
  %v635 = vld [vmem:[%s2 + $0x1e4] sm:$0xff]
  %v636 = vld [vmem:[%s2 + $0x1ec] sm:$0xff]
  %v637 = vld [vmem:[%s2 + $0x1f4] sm:$0xf]
  %v638 = vld [vmem:[%s2 + $0x1f8] sm:$0xff]
  %v639 = vld [vmem:[%s2 + $0x200] sm:$0xff]
  %v640 = vld [vmem:[%s2 + $0x208] sm:$0xff]
  %v641 = vld [vmem:[%s2 + $0x210] sm:$0xf]
  %v642 = vld [vmem:[%s2 + $0x214] sm:$0xff]
  %v643 = vld [vmem:[%s2 + $0x21c] sm:$0xff]
  %v644 = vld [vmem:[%s2 + $0x224] sm:$0xff]
  %v645 = vld [vmem:[%s2 + $0x22c] sm:$0xf]
  %v646 = vld [vmem:[%s2 + $0x230] sm:$0xff]
  %v647 = vld [vmem:[%s2 + $0x238] sm:$0xff]
  %v648 = vld [vmem:[%s2 + $0x240] sm:$0xff]
  %v649 = vld [vmem:[%s2 + $0x248] sm:$0xf]
  %v650 = vld [vmem:[%s2 + $0x24c] sm:$0xff]
  %v651 = vld [vmem:[%s2 + $0x254] sm:$0xff]
  %v652 = vld [vmem:[%s2 + $0x25c] sm:$0xff]
  %v653 = vld [vmem:[%s2 + $0x264] sm:$0xf]
  %v654 = vld [vmem:[%s2 + $0x268] sm:$0xff]
  %v655 = vld [vmem:[%s2 + $0x270] sm:$0xff]
  %v656 = vld [vmem:[%s2 + $0x278] sm:$0xff]
  %v657 = vld [vmem:[%s2 + $0x280] sm:$0xf]
  %v658 = vld [vmem:[%s2 + $0x284] sm:$0xff]
  %v659 = vld [vmem:[%s2 + $0x28c] sm:$0xff]
  %v660 = vld [vmem:[%s2 + $0x294] sm:$0xff]
  %v661 = vld [vmem:[%s2 + $0x29c] sm:$0xf]
  %v662 = vld [vmem:[%s2 + $0x2a0] sm:$0xff]
  %v663 = vld [vmem:[%s2 + $0x2a8] sm:$0xff]
  %v664 = vld [vmem:[%s2 + $0x2b0] sm:$0xff]
  %v665 = vld [vmem:[%s2 + $0x2b8] sm:$0xf]
  %v666 = vld [vmem:[%s2 + $0x2bc] sm:$0xff]
  %v667 = vld [vmem:[%s2 + $0x2c4] sm:$0xff]
  %v668 = vld [vmem:[%s2 + $0x2cc] sm:$0xff]
  %v669 = vld [vmem:[%s2 + $0x2d4] sm:$0xf]
  %v670 = vld [vmem:[%s2 + $0x2d8] sm:$0xff]
  %v671 = vld [vmem:[%s2 + $0x2e0] sm:$0xff]
  %v672 = vld [vmem:[%s2 + $0x2e8] sm:$0xff]
  %v673 = vld [vmem:[%s2 + $0x2f0] sm:$0xf]
  %v674 = vld [vmem:[%s2 + $0x2f4] sm:$0xff]
  %v675 = vld [vmem:[%s2 + $0x2fc] sm:$0xff]
  %v676 = vld [vmem:[%s2 + $0x304] sm:$0xff]
  %v677 = vld [vmem:[%s2 + $0x30c] sm:$0xf]
  %v678 = vld [vmem:[%s2 + $0x310] sm:$0xff]
  %v679 = vld [vmem:[%s2 + $0x318] sm:$0xff]
  %v680 = vld [vmem:[%s2 + $0x320] sm:$0xff]
  %v681 = vld [vmem:[%s2 + $0x328] sm:$0xf]
  %v682 = vld [vmem:[%s2 + $0x32c] sm:$0xff]
  %v683 = vld [vmem:[%s2 + $0x334] sm:$0xff]
  %v684 = vld [vmem:[%s2 + $0x33c] sm:$0xff]
  %v685 = vld [vmem:[%s2 + $0x344] sm:$0xf]
  %v686 = vld [vmem:[%s2 + $0x348] sm:$0xff]
  %v687 = vld [vmem:[%s2 + $0x350] sm:$0xff]
  %v688 = vld [vmem:[%s2 + $0x358] sm:$0xff]
  %v689 = vld [vmem:[%s2 + $0x360] sm:$0xf]
  %v690 = vld [vmem:[%s2 + $0x364] sm:$0xff]
  %v691 = vld [vmem:[%s2 + $0x36c] sm:$0xff]
  %v692 = vld [vmem:[%s2 + $0x374] sm:$0xff]
  %v693 = vld [vmem:[%s2 + $0x37c] sm:$0xf]
  %v694 = vld [vmem:[%s2 + $0x380] sm:$0xff]
  %v695 = vld [vmem:[%s2 + $0x388] sm:$0xff]
  %v696 = vld [vmem:[%s2 + $0x390] sm:$0xff]
  %v697 = vld [vmem:[%s2 + $0x398] sm:$0xf]
  %v698 = vld [vmem:[%s2 + $0x39c] sm:$0xff]
  %v699 = vld [vmem:[%s2 + $0x3a4] sm:$0xff]
  %v700 = vld [vmem:[%s2 + $0x3ac] sm:$0xff]
  %v701 = vld [vmem:[%s2 + $0x3b4] sm:$0xf]
  %v702 = vld [vmem:[%s2 + $0x3b8] sm:$0xff]
  %v703 = vld [vmem:[%s2 + $0x3c0] sm:$0xff]
  %v704 = vld [vmem:[%s2 + $0x3c8] sm:$0xff]
  %v705 = vld [vmem:[%s2 + $0x3d0] sm:$0xf]
  %v706 = vld [vmem:[%s2 + $0x3d4] sm:$0xff]
  %v707 = vld [vmem:[%s2 + $0x3dc] sm:$0xff]
  %v708 = vld [vmem:[%s2 + $0x3e4] sm:$0xff]
  %v709 = vld [vmem:[%s2 + $0x3ec] sm:$0xf]
  %v710 = vld [vmem:[%s2 + $0x3f0] sm:$0xff]
  %v711 = vld [vmem:[%s2 + $0x3f8] sm:$0xff]
  %v712 = vld [vmem:[%s2 + $0x400] sm:$0xff]
  %v713 = vld [vmem:[%s2 + $0x408] sm:$0xf]
  %v714 = vld [vmem:[%s2 + $0x40c] sm:$0xff]
  %v715 = vld [vmem:[%s2 + $0x414] sm:$0xff]
  %v716 = vld [vmem:[%s2 + $0x41c] sm:$0xff]
  %v717 = vld [vmem:[%s2 + $0x424] sm:$0xf]
  %v718 = vld [vmem:[%s2 + $0x428] sm:$0xff]
  %v719 = vld [vmem:[%s2 + $0x430] sm:$0xff]
  %v720 = vld [vmem:[%s2 + $0x438] sm:$0xff]
  %v721 = vld [vmem:[%s2 + $0x440] sm:$0xf]
  %v722 = vld [vmem:[%s2 + $0x444] sm:$0xff]
  %v723 = vld [vmem:[%s2 + $0x44c] sm:$0xff]
  %v724 = vld [vmem:[%s2 + $0x454] sm:$0xff]
  %v725 = vld [vmem:[%s2 + $0x45c] sm:$0xf]
  %v726 = vld [vmem:[%s2 + $0x460] sm:$0xff]
  %v727 = vld [vmem:[%s2 + $0x468] sm:$0xff]
  %v728 = vld [vmem:[%s2 + $0x470] sm:$0xff]
  %v729 = vld [vmem:[%s2 + $0x478] sm:$0xf]
  %v730 = vld [vmem:[%s2 + $0x47c] sm:$0xff]
  %v731 = vld [vmem:[%s2 + $0x484] sm:$0xff]
  %v732 = vld [vmem:[%s2 + $0x48c] sm:$0xff]
  %v733 = vld [vmem:[%s2 + $0x494] sm:$0xf]
  %v734 = vld [vmem:[%s2 + $0x498] sm:$0xff]
  %v735 = vld [vmem:[%s2 + $0x4a0] sm:$0xff]
  %v736 = vld [vmem:[%s2 + $0x4a8] sm:$0xff]
  %v737 = vld [vmem:[%s2 + $0x4b0] sm:$0xf]
  %v738 = vld [vmem:[%s2 + $0x4b4] sm:$0xff]
  %v739 = vld [vmem:[%s2 + $0x4bc] sm:$0xff]
  %v740 = vld [vmem:[%s2 + $0x4c4] sm:$0xff]
  %v741 = vld [vmem:[%s2 + $0x4cc] sm:$0xf]
  %v742 = vld [vmem:[%s2 + $0x4d0] sm:$0xff]
  %v743 = vld [vmem:[%s2 + $0x4d8] sm:$0xff]
  %v744 = vld [vmem:[%s2 + $0x4e0] sm:$0xff]
  %v745 = vld [vmem:[%s2 + $0x4e8] sm:$0xf]
  %v746 = vld [vmem:[%s2 + $0x4ec] sm:$0xff]
  %v747 = vld [vmem:[%s2 + $0x4f4] sm:$0xff]
  %v748 = vld [vmem:[%s2 + $0x4fc] sm:$0xff]
  %v749 = vld [vmem:[%s2 + $0x504] sm:$0xf]
  %v750 = vld [vmem:[%s2 + $0x508] sm:$0xff]
  %v751 = vld [vmem:[%s2 + $0x510] sm:$0xff]
  %v752 = vld [vmem:[%s2 + $0x518] sm:$0xff]
  %v753 = vld [vmem:[%s2 + $0x520] sm:$0xf]
  %v754 = vld [vmem:[%s2 + $0x524] sm:$0xff]
  %v755 = vld [vmem:[%s2 + $0x52c] sm:$0xff]
  %v756 = vld [vmem:[%s2 + $0x534] sm:$0xff]
  %v757 = vld [vmem:[%s2 + $0x53c] sm:$0xf]
  %v758 = vld [vmem:[%s2 + $0x540] sm:$0xff]
  %v759 = vld [vmem:[%s2 + $0x548] sm:$0xff]
  %v760 = vld [vmem:[%s2 + $0x550] sm:$0xff]
  %v761 = vld [vmem:[%s2 + $0x558] sm:$0xf]
  %v762 = vld [vmem:[%s2 + $0x55c] sm:$0xff]
  %v763 = vld [vmem:[%s2 + $0x564] sm:$0xff]
  %v764 = vld [vmem:[%s2 + $0x56c] sm:$0xff]
  %v765 = vld [vmem:[%s2 + $0x574] sm:$0xf]
  %v766 = vld [vmem:[%s2 + $0x578] sm:$0xff]
  %v767 = vld [vmem:[%s2 + $0x580] sm:$0xff]
  %v768 = vld [vmem:[%s2 + $0x588] sm:$0xff]
  %v769 = vld [vmem:[%s2 + $0x590] sm:$0xf]
  %v770 = vld [vmem:[%s2 + $0x594] sm:$0xff]
  %v771 = vld [vmem:[%s2 + $0x59c] sm:$0xff]
  %v772 = vld [vmem:[%s2 + $0x5a4] sm:$0xff]
  %v773 = vld [vmem:[%s2 + $0x5ac] sm:$0xf]
  %v774 = vld [vmem:[%s2 + $0x5b0] sm:$0xff]
  %v775 = vld [vmem:[%s2 + $0x5b8] sm:$0xff]
  %v776 = vld [vmem:[%s2 + $0x5c0] sm:$0xff]
  %v777 = vld [vmem:[%s2 + $0x5c8] sm:$0xf]
  %v778 = vld [vmem:[%s2 + $0x5cc] sm:$0xff]
  %v779 = vld [vmem:[%s2 + $0x5d4] sm:$0xff]
  %v780 = vld [vmem:[%s2 + $0x5dc] sm:$0xff]
  %v781 = vld [vmem:[%s2 + $0x5e4] sm:$0xf]
  %v782 = vld [vmem:[%s2 + $0x5e8] sm:$0xff]
  %v783 = vld [vmem:[%s2 + $0x5f0] sm:$0xff]
  %v784 = vld [vmem:[%s2 + $0x5f8] sm:$0xff]
  %v785 = vld [vmem:[%s2 + $0x600] sm:$0xf]
  %v786 = vld [vmem:[%s2 + $0x604] sm:$0xff]
  %v787 = vld [vmem:[%s2 + $0x60c] sm:$0xff]
  %v788 = vld [vmem:[%s2 + $0x614] sm:$0xff]
  %v789 = vld [vmem:[%s2 + $0x61c] sm:$0xf]
  %v790 = vld [vmem:[%s2 + $0x620] sm:$0xff]
  %v791 = vld [vmem:[%s2 + $0x628] sm:$0xff]
  %v792 = vld [vmem:[%s2 + $0x630] sm:$0xff]
  %v793 = vld [vmem:[%s2 + $0x638] sm:$0xf]
  %v794 = vld [vmem:[%s2 + $0x63c] sm:$0xff]
  %v795 = vld [vmem:[%s2 + $0x644] sm:$0xff]
  %v796 = vld [vmem:[%s2 + $0x64c] sm:$0xff]
  %v797 = vld [vmem:[%s2 + $0x654] sm:$0xf]
  %v798 = vld [vmem:[%s2 + $0x658] sm:$0xff]
  %v799 = vld [vmem:[%s2 + $0x660] sm:$0xff]
  %v800 = vld [vmem:[%s2 + $0x668] sm:$0xff]
  %v801 = vld [vmem:[%s2 + $0x670] sm:$0xf]
  %v802 = vld [vmem:[%s2 + $0x674] sm:$0xff]
  %v803 = vld [vmem:[%s2 + $0x67c] sm:$0xff]
  %v804 = vld [vmem:[%s2 + $0x684] sm:$0xff]
  %v805 = vld [vmem:[%s2 + $0x68c] sm:$0xf]
  %v806 = vld [vmem:[%s2 + $0x690] sm:$0xff]
  %v807 = vld [vmem:[%s2 + $0x698] sm:$0xff]
  %v808 = vld [vmem:[%s2 + $0x6a0] sm:$0xff]
  %v809 = vld [vmem:[%s2 + $0x6a8] sm:$0xf]
  %v810 = vld [vmem:[%s2 + $0x6ac] sm:$0xff]
  %v811 = vld [vmem:[%s2 + $0x6b4] sm:$0xff]
  %v812 = vld [vmem:[%s2 + $0x6bc] sm:$0xff]
  %v813 = vld [vmem:[%s2 + $0x6c4] sm:$0xf]
  %v814 = vld [vmem:[%s2 + $0x6c8] sm:$0xff]
  %v815 = vld [vmem:[%s2 + $0x6d0] sm:$0xff]
  %v816 = vld [vmem:[%s2 + $0x6d8] sm:$0xff]
  %v817 = vld [vmem:[%s2 + $0x6e0] sm:$0xf]
  %v818 = vld [vmem:[%s2 + $0x6e4] sm:$0xff]
  %v819 = vld [vmem:[%s2 + $0x6ec] sm:$0xff]
  %v820 = vld [vmem:[%s2 + $0x6f4] sm:$0xff]
  %v821 = vld [vmem:[%s2 + $0x6fc] sm:$0xf]
  %v822 = vld [vmem:[%s2 + $0x700] sm:$0xff]
  %v823 = vld [vmem:[%s2 + $0x708] sm:$0xff]
  %v824 = vld [vmem:[%s2 + $0x710] sm:$0xff]
  %v825 = vld [vmem:[%s2 + $0x718] sm:$0xf]
  %v826 = vld [vmem:[%s2 + $0x71c] sm:$0xff]
  %v827 = vld [vmem:[%s2 + $0x724] sm:$0xff]
  %v828 = vld [vmem:[%s2 + $0x72c] sm:$0xff]
  %v829 = vld [vmem:[%s2 + $0x734] sm:$0xf]
  %v830 = vld [vmem:[%s2 + $0x738] sm:$0xff]
  %v831 = vld [vmem:[%s2 + $0x740] sm:$0xff]
  %v832 = vld [vmem:[%s2 + $0x748] sm:$0xff]
  %v833 = vld [vmem:[%s2 + $0x750] sm:$0xf]
  %v834 = vld [vmem:[%s2 + $0x754] sm:$0xff]
  %v835 = vld [vmem:[%s2 + $0x75c] sm:$0xff]
  %v836 = vld [vmem:[%s2 + $0x764] sm:$0xff]
  %v837 = vld [vmem:[%s2 + $0x76c] sm:$0xf]
  %v838 = vld [vmem:[%s2 + $0x770] sm:$0xff]
  %v839 = vld [vmem:[%s2 + $0x778] sm:$0xff]
  %v840 = vld [vmem:[%s2 + $0x780] sm:$0xff]
  %v841 = vld [vmem:[%s2 + $0x788] sm:$0xf]
  %v842 = vld [vmem:[%s2 + $0x78c] sm:$0xff]
  %v843 = vld [vmem:[%s2 + $0x794] sm:$0xff]
  %v844 = vld [vmem:[%s2 + $0x79c] sm:$0xff]
  %v845 = vld [vmem:[%s2 + $0x7a4] sm:$0xf]
  %v846 = vld [vmem:[%s2 + $0x7a8] sm:$0xff]
  %v847 = vld [vmem:[%s2 + $0x7b0] sm:$0xff]
  %v848 = vld [vmem:[%s2 + $0x7b8] sm:$0xff]
  %v849 = vld [vmem:[%s2 + $0x7c0] sm:$0xf]
  %v850 = vld [vmem:[%s2 + $0x7c4] sm:$0xff]
  %v851 = vld [vmem:[%s2 + $0x7cc] sm:$0xff]
  %v852 = vld [vmem:[%s2 + $0x7d4] sm:$0xff]
  %v853 = vld [vmem:[%s2 + $0x7dc] sm:$0xf]
  %v854 = vld [vmem:[%s2 + $0x7e0] sm:$0xff]
  %v855 = vld [vmem:[%s2 + $0x7e8] sm:$0xff]
  %v856 = vld [vmem:[%s2 + $0x7f0] sm:$0xff]
  %v857 = vld [vmem:[%s2 + $0x7f8] sm:$0xf]
  %v858 = vld [vmem:[%s2 + $0x7fc] sm:$0xff]
  %v859 = vld [vmem:[%s2 + $0x804] sm:$0xff]
  %v860 = vld [vmem:[%s2 + $0x80c] sm:$0xff]
  %v861 = vld [vmem:[%s2 + $0x814] sm:$0xf]
  %v862 = vld [vmem:[%s2 + $0x818] sm:$0xff]
  %v863 = vld [vmem:[%s2 + $0x820] sm:$0xff]
  %v864 = vld [vmem:[%s2 + $0x828] sm:$0xff]
  %v865 = vld [vmem:[%s2 + $0x830] sm:$0xf]
  %v866 = vld [vmem:[%s2 + $0x834] sm:$0xff]
  %v867 = vld [vmem:[%s2 + $0x83c] sm:$0xff]
  %v868 = vld [vmem:[%s2 + $0x844] sm:$0xff]
  %v869 = vld [vmem:[%s2 + $0x84c] sm:$0xf]
  %v870 = vld [vmem:[%s2 + $0x850] sm:$0xff]
  %v871 = vld [vmem:[%s2 + $0x858] sm:$0xff]
  %v872 = vld [vmem:[%s2 + $0x860] sm:$0xff]
  %v873 = vld [vmem:[%s2 + $0x868] sm:$0xf]
  %v874 = vld [vmem:[%s2 + $0x86c] sm:$0xff]
  %v875 = vld [vmem:[%s2 + $0x874] sm:$0xff]
  %v876 = vld [vmem:[%s2 + $0x87c] sm:$0xff]
  %v877 = vld [vmem:[%s2 + $0x884] sm:$0xf]
  %v878 = vld [vmem:[%s2 + $0x888] sm:$0xff]
  %v879 = vld [vmem:[%s2 + $0x890] sm:$0xff]
  %v880 = vld [vmem:[%s2 + $0x898] sm:$0xff]
  %v881 = vld [vmem:[%s2 + $0x8a0] sm:$0xf]
  %v882 = vld [vmem:[%s2 + $0x8a4] sm:$0xff]
  %v883 = vld [vmem:[%s2 + $0x8ac] sm:$0xff]
  %v884 = vld [vmem:[%s2 + $0x8b4] sm:$0xff]
  %v885 = vld [vmem:[%s2 + $0x8bc] sm:$0xf]
  %v886 = vld [vmem:[%s2 + $0x8c0] sm:$0xff]
  %v887 = vld [vmem:[%s2 + $0x8c8] sm:$0xff]
  %v888 = vld [vmem:[%s2 + $0x8d0] sm:$0xff]
  %v889 = vld [vmem:[%s2 + $0x8d8] sm:$0xf]
  %v890 = vld [vmem:[%s2 + $0x8dc] sm:$0xff]
  %v891 = vld [vmem:[%s2 + $0x8e4] sm:$0xff]
  %v892 = vld [vmem:[%s2 + $0x8ec] sm:$0xff]
  %v893 = vld [vmem:[%s2 + $0x8f4] sm:$0xf]
  %v894 = vld [vmem:[%s2 + $0x8f8] sm:$0xff]
  %v895 = vld [vmem:[%s2 + $0x900] sm:$0xff]
  %v896 = vld [vmem:[%s2 + $0x908] sm:$0xff]
  %v897 = vld [vmem:[%s2 + $0x910] sm:$0xf]
  %v898 = vld [vmem:[%s2 + $0x914] sm:$0xff]
  %v899 = vld [vmem:[%s2 + $0x91c] sm:$0xff]
  %v900 = vld [vmem:[%s2 + $0x924] sm:$0xff]
  %v901 = vld [vmem:[%s2 + $0x92c] sm:$0xf]
  %v902 = vld [vmem:[%s2 + $0x930] sm:$0xff]
  %v903 = vld [vmem:[%s2 + $0x938] sm:$0xff]
  %v904 = vld [vmem:[%s2 + $0x940] sm:$0xff]
  %v905 = vld [vmem:[%s2 + $0x948] sm:$0xf]
  %v906 = vld [vmem:[%s2 + $0x94c] sm:$0xff]
  %v907 = vld [vmem:[%s2 + $0x954] sm:$0xff]
  %v908 = vld [vmem:[%s2 + $0x95c] sm:$0xff]
  %v909 = vld [vmem:[%s2 + $0x964] sm:$0xf]
  %v910 = vld [vmem:[%s2 + $0x968] sm:$0xff]
  %v911 = vld [vmem:[%s2 + $0x970] sm:$0xff]
  %v912 = vld [vmem:[%s2 + $0x978] sm:$0xff]
  %v913 = vld [vmem:[%s2 + $0x980] sm:$0xf]
  %v914 = vld [vmem:[%s2 + $0x984] sm:$0xff]
  %v915 = vld [vmem:[%s2 + $0x98c] sm:$0xff]
  %v916 = vld [vmem:[%s2 + $0x994] sm:$0xff]
  %v917 = vld [vmem:[%s2 + $0x99c] sm:$0xf]
  %v918 = vld [vmem:[%s2 + $0x9a0] sm:$0xff]
  %v919 = vld [vmem:[%s2 + $0x9a8] sm:$0xff]
  %v920 = vld [vmem:[%s2 + $0x9b0] sm:$0xff]
  %v921 = vld [vmem:[%s2 + $0x9b8] sm:$0xf]
  %v922 = vld [vmem:[%s2 + $0x9bc] sm:$0xff]
  %v923 = vld [vmem:[%s2 + $0x9c4] sm:$0xff]
  %v924 = vld [vmem:[%s2 + $0x9cc] sm:$0xff]
  %v925 = vld [vmem:[%s2 + $0x9d4] sm:$0xf]
  %v926 = vld [vmem:[%s2 + $0x9d8] sm:$0xff]
  %v927 = vld [vmem:[%s2 + $0x9e0] sm:$0xff]
  %v928 = vld [vmem:[%s2 + $0x9e8] sm:$0xff]
  %v929 = vld [vmem:[%s2 + $0x9f0] sm:$0xf]
  %v930 = vld [vmem:[%s2 + $0x9f4] sm:$0xff]
  %v931 = vld [vmem:[%s2 + $0x9fc] sm:$0xff]
  %v932 = vld [vmem:[%s2 + $0xa04] sm:$0xff]
  %v933 = vld [vmem:[%s2 + $0xa0c] sm:$0xf]
  %v934 = vld [vmem:[%s2 + $0xa10] sm:$0xff]
  %v935 = vld [vmem:[%s2 + $0xa18] sm:$0xff]
  %v936 = vld [vmem:[%s2 + $0xa20] sm:$0xff]
  %v937 = vld [vmem:[%s2 + $0xa28] sm:$0xf]
  %v938 = vld [vmem:[%s2 + $0xa2c] sm:$0xff]
  %v939 = vld [vmem:[%s2 + $0xa34] sm:$0xff]
  %v940 = vld [vmem:[%s2 + $0xa3c] sm:$0xff]
  %v941 = vld [vmem:[%s2 + $0xa44] sm:$0xf]
  %v942 = vld [vmem:[%s2 + $0xa48] sm:$0xff]
  %v943 = vld [vmem:[%s2 + $0xa50] sm:$0xff]
  %v944 = vld [vmem:[%s2 + $0xa58] sm:$0xff]
  %v945 = vld [vmem:[%s2 + $0xa60] sm:$0xf]
  %v946 = vld [vmem:[%s2 + $0xa64] sm:$0xff]
  %v947 = vld [vmem:[%s2 + $0xa6c] sm:$0xff]
  %v948 = vld [vmem:[%s2 + $0xa74] sm:$0xff]
  %v949 = vld [vmem:[%s2 + $0xa7c] sm:$0xf]
  %v950 = vld [vmem:[%s2 + $0xa80] sm:$0xff]
  %v951 = vld [vmem:[%s2 + $0xa88] sm:$0xff]
  %v952 = vld [vmem:[%s2 + $0xa90] sm:$0xff]
  %v953 = vld [vmem:[%s2 + $0xa98] sm:$0xf]
  %v954 = vld [vmem:[%s2 + $0xa9c] sm:$0xff]
  %v955 = vld [vmem:[%s2 + $0xaa4] sm:$0xff]
  %v956 = vld [vmem:[%s2 + $0xaac] sm:$0xff]
  %v957 = vld [vmem:[%s2 + $0xab4] sm:$0xf]
  %v958 = vld [vmem:[%s2 + $0xab8] sm:$0xff]
  %v959 = vld [vmem:[%s2 + $0xac0] sm:$0xff]
  %v960 = vld [vmem:[%s2 + $0xac8] sm:$0xff]
  %v961 = vld [vmem:[%s2 + $0xad0] sm:$0xf]
  %v962 = vld [vmem:[%s2 + $0xad4] sm:$0xff]
  %v963 = vld [vmem:[%s2 + $0xadc] sm:$0xff]
  %v964 = vld [vmem:[%s2 + $0xae4] sm:$0xff]
  %v965 = vld [vmem:[%s2 + $0xaec] sm:$0xf]
  %v966 = vld [vmem:[%s2 + $0xaf0] sm:$0xff]
  %v967 = vld [vmem:[%s2 + $0xaf8] sm:$0xff]
  %v968 = vld [vmem:[%s2 + $0xb00] sm:$0xff]
  %v969 = vld [vmem:[%s2 + $0xb08] sm:$0xf]
  %v970 = vld [vmem:[%s2 + $0xb0c] sm:$0xff]
  %v971 = vld [vmem:[%s2 + $0xb14] sm:$0xff]
  %v972 = vld [vmem:[%s2 + $0xb1c] sm:$0xff]
  %v973 = vld [vmem:[%s2 + $0xb24] sm:$0xf]
  %v974 = vld [vmem:[%s2 + $0xb28] sm:$0xff]
  %v975 = vld [vmem:[%s2 + $0xb30] sm:$0xff]
  %v976 = vld [vmem:[%s2 + $0xb38] sm:$0xff]
  %v977 = vld [vmem:[%s2 + $0xb40] sm:$0xf]
  %v978 = vld [vmem:[%s2 + $0xb44] sm:$0xff]
  %v979 = vld [vmem:[%s2 + $0xb4c] sm:$0xff]
  %v980 = vld [vmem:[%s2 + $0xb54] sm:$0xff]
  %v981 = vld [vmem:[%s2 + $0xb5c] sm:$0xf]
  %v982 = vld [vmem:[%s2 + $0xb60] sm:$0xff]
  %v983 = vld [vmem:[%s2 + $0xb68] sm:$0xff]
  %v984 = vld [vmem:[%s2 + $0xb70] sm:$0xff]
  %v985 = vld [vmem:[%s2 + $0xb78] sm:$0xf]
  %v986 = vld [vmem:[%s2 + $0xb7c] sm:$0xff]
  %v987 = vld [vmem:[%s2 + $0xb84] sm:$0xff]
  %v988 = vld [vmem:[%s2 + $0xb8c] sm:$0xff]
  %v989 = vld [vmem:[%s2 + $0xb94] sm:$0xf]
  %v990 = vld [vmem:[%s2 + $0xb98] sm:$0xff]
  %v991 = vld [vmem:[%s2 + $0xba0] sm:$0xff]
  %v992 = vld [vmem:[%s2 + $0xba8] sm:$0xff]
  %v993 = vld [vmem:[%s2 + $0xbb0] sm:$0xf]
  %v994 = vld [vmem:[%s2 + $0xbb4] sm:$0xff]
  %v995 = vld [vmem:[%s2 + $0xbbc] sm:$0xff]
  %v996 = vld [vmem:[%s2 + $0xbc4] sm:$0xff]
  %v997 = vld [vmem:[%s2 + $0xbcc] sm:$0xf]
  %v998 = vld [vmem:[%s2 + $0xbd0] sm:$0xff]
  %v999 = vld [vmem:[%s2 + $0xbd8] sm:$0xff]
  %v1000 = vld [vmem:[%s2 + $0xbe0] sm:$0xff]
  %v1001 = vld [vmem:[%s2 + $0xbe8] sm:$0xf]
  %v1002 = vld [vmem:[%s2 + $0xbec] sm:$0xff]
  %v1003 = vld [vmem:[%s2 + $0xbf4] sm:$0xff]
  %v1004 = vld [vmem:[%s2 + $0xbfc] sm:$0xff]
  %v1005 = vld [vmem:[%s2 + $0xc04] sm:$0xf]
  %v1006 = vld [vmem:[%s2 + $0xc08] sm:$0xff]
  %v1007 = vld [vmem:[%s2 + $0xc10] sm:$0xff]
  %v1008 = vld [vmem:[%s2 + $0xc18] sm:$0xff]
  %v1009 = vld [vmem:[%s2 + $0xc20] sm:$0xf]
  %v1010 = vld [vmem:[%s2 + $0xc24] sm:$0xff]
  %v1011 = vld [vmem:[%s2 + $0xc2c] sm:$0xff]
  %v1012 = vld [vmem:[%s2 + $0xc34] sm:$0xff]
  %v1013 = vld [vmem:[%s2 + $0xc3c] sm:$0xf]
  %v1014 = vld [vmem:[%s2 + $0xc40] sm:$0xff]
  %v1015 = vld [vmem:[%s2 + $0xc48] sm:$0xff]
  %v1016 = vld [vmem:[%s2 + $0xc50] sm:$0xff]
  %v1017 = vld [vmem:[%s2 + $0xc58] sm:$0xf]
  %v1018 = vld [vmem:[%s2 + $0xc5c] sm:$0xff]
  %v1019 = vld [vmem:[%s2 + $0xc64] sm:$0xff]
  %v1020 = vld [vmem:[%s2 + $0xc6c] sm:$0xff]
  %v1021 = vld [vmem:[%s2 + $0xc74] sm:$0xf]
  %v1022 = vld [vmem:[%s2 + $0xc78] sm:$0xff]
  %v1023 = vld [vmem:[%s2 + $0xc80] sm:$0xff]
  %v1024 = vld [vmem:[%s2 + $0xc88] sm:$0xff]
  %v1025 = vld [vmem:[%s2 + $0xc90] sm:$0xf]
  %v1026 = vld [vmem:[%s2 + $0xc94] sm:$0xff]
  %v1027 = vld [vmem:[%s2 + $0xc9c] sm:$0xff]
  %v1028 = vld [vmem:[%s2 + $0xca4] sm:$0xff]
  %v1029 = vld [vmem:[%s2 + $0xcac] sm:$0xf]
  %v1030 = vld [vmem:[%s2 + $0xcb0] sm:$0xff]
  %v1031 = vld [vmem:[%s2 + $0xcb8] sm:$0xff]
  %v1032 = vld [vmem:[%s2 + $0xcc0] sm:$0xff]
  %v1033 = vld [vmem:[%s2 + $0xcc8] sm:$0xf]
  %v1034 = vld [vmem:[%s2 + $0xccc] sm:$0xff]
  %v1035 = vld [vmem:[%s2 + $0xcd4] sm:$0xff]
  %v1036 = vld [vmem:[%s2 + $0xcdc] sm:$0xff]
  %v1037 = vld [vmem:[%s2 + $0xce4] sm:$0xf]
  %v1038 = vld [vmem:[%s2 + $0xce8] sm:$0xff]
  %v1039 = vld [vmem:[%s2 + $0xcf0] sm:$0xff]
  %v1040 = vld [vmem:[%s2 + $0xcf8] sm:$0xff]
  %v1041 = vld [vmem:[%s2 + $0xd00] sm:$0xf]
  %v1042 = vld [vmem:[%s2 + $0xd04] sm:$0xff]
  %v1043 = vld [vmem:[%s2 + $0xd0c] sm:$0xff]
  %v1044 = vld [vmem:[%s2 + $0xd14] sm:$0xff]
  %v1045 = vld [vmem:[%s2 + $0xd1c] sm:$0xf]
  %v1046 = vld [vmem:[%s2 + $0xd20] sm:$0xff]
  %v1047 = vld [vmem:[%s2 + $0xd28] sm:$0xff]
  %v1048 = vld [vmem:[%s2 + $0xd30] sm:$0xff]
  %v1049 = vld [vmem:[%s2 + $0xd38] sm:$0xf]
  %v1050 = vld [vmem:[%s2 + $0xd3c] sm:$0xff]
  %v1051 = vld [vmem:[%s2 + $0xd44] sm:$0xff]
  %v1052 = vld [vmem:[%s2 + $0xd4c] sm:$0xff]
  %v1053 = vld [vmem:[%s2 + $0xd54] sm:$0xf]
  %v1054 = vld [vmem:[%s2 + $0xd58] sm:$0xff]
  %v1055 = vld [vmem:[%s2 + $0xd60] sm:$0xff]
  %v1056 = vld [vmem:[%s2 + $0xd68] sm:$0xff]
  %v1057 = vld [vmem:[%s2 + $0xd70] sm:$0xf]
  %v1058 = vld [vmem:[%s2 + $0xd74] sm:$0xff]
  %v1059 = vld [vmem:[%s2 + $0xd7c] sm:$0xff]
  %v1060 = vld [vmem:[%s2 + $0xd84] sm:$0xff]
  %v1061 = vld [vmem:[%s2 + $0xd8c] sm:$0xf]
  %v1062 = vld [vmem:[%s2 + $0xd90] sm:$0xff]
  %v1063 = vld [vmem:[%s2 + $0xd98] sm:$0xff]
  %v1064 = vld [vmem:[%s2 + $0xda0] sm:$0xff]
  %v1065 = vld [vmem:[%s2 + $0xda8] sm:$0xf]
  %v1566 = vunpack.c.l.b16 %v566
  %v1567 = vunpack.c.h.b16 %v566
  %v1568 = vunpack.c.l.b16 %v567
  %v1569 = vunpack.c.h.b16 %v567
  %v1570 = vunpack.c.l.b16 %v568
  %v1571 = vunpack.c.h.b16 %v568
  %v1572 = vunpack.c.l.b16 %v569
  %v1573 = vunpack.c.l.b16 %v570
  %v1574 = vunpack.c.h.b16 %v570
  %v1575 = vunpack.c.l.b16 %v571
  %v1576 = vunpack.c.h.b16 %v571
  %v1577 = vunpack.c.l.b16 %v572
  %v1578 = vunpack.c.h.b16 %v572
  %v1579 = vunpack.c.l.b16 %v573
  %v1580 = vunpack.c.l.b16 %v574
  %v1581 = vunpack.c.h.b16 %v574
  %v1582 = vunpack.c.l.b16 %v575
  %v1583 = vunpack.c.h.b16 %v575
  %v1584 = vunpack.c.l.b16 %v576
  %v1585 = vunpack.c.h.b16 %v576
  %v1586 = vunpack.c.l.b16 %v577
  %v1587 = vunpack.c.l.b16 %v578
  %v1588 = vunpack.c.h.b16 %v578
  %v1589 = vunpack.c.l.b16 %v579
  %v1590 = vunpack.c.h.b16 %v579
  %v1591 = vunpack.c.l.b16 %v580
  %v1592 = vunpack.c.h.b16 %v580
  %v1593 = vunpack.c.l.b16 %v581
  %v1594 = vunpack.c.l.b16 %v582
  %v1595 = vunpack.c.h.b16 %v582
  %v1596 = vunpack.c.l.b16 %v583
  %v1597 = vunpack.c.h.b16 %v583
  %v1598 = vunpack.c.l.b16 %v584
  %v1599 = vunpack.c.h.b16 %v584
  %v1600 = vunpack.c.l.b16 %v585
  %v1601 = vunpack.c.l.b16 %v586
  %v1602 = vunpack.c.h.b16 %v586
  %v1603 = vunpack.c.l.b16 %v587
  %v1604 = vunpack.c.h.b16 %v587
  %v1605 = vunpack.c.l.b16 %v588
  %v1606 = vunpack.c.h.b16 %v588
  %v1607 = vunpack.c.l.b16 %v589
  %v1608 = vunpack.c.l.b16 %v590
  %v1609 = vunpack.c.h.b16 %v590
  %v1610 = vunpack.c.l.b16 %v591
  %v1611 = vunpack.c.h.b16 %v591
  %v1612 = vunpack.c.l.b16 %v592
  %v1613 = vunpack.c.h.b16 %v592
  %v1614 = vunpack.c.l.b16 %v593
  %v1615 = vunpack.c.l.b16 %v594
  %v1616 = vunpack.c.h.b16 %v594
  %v1617 = vunpack.c.l.b16 %v595
  %v1618 = vunpack.c.h.b16 %v595
  %v1619 = vunpack.c.l.b16 %v596
  %v1620 = vunpack.c.h.b16 %v596
  %v1621 = vunpack.c.l.b16 %v597
  %v1622 = vunpack.c.l.b16 %v598
  %v1623 = vunpack.c.h.b16 %v598
  %v1624 = vunpack.c.l.b16 %v599
  %v1625 = vunpack.c.h.b16 %v599
  %v1626 = vunpack.c.l.b16 %v600
  %v1627 = vunpack.c.h.b16 %v600
  %v1628 = vunpack.c.l.b16 %v601
  %v1629 = vunpack.c.l.b16 %v602
  %v1630 = vunpack.c.h.b16 %v602
  %v1631 = vunpack.c.l.b16 %v603
  %v1632 = vunpack.c.h.b16 %v603
  %v1633 = vunpack.c.l.b16 %v604
  %v1634 = vunpack.c.h.b16 %v604
  %v1635 = vunpack.c.l.b16 %v605
  %v1636 = vunpack.c.l.b16 %v606
  %v1637 = vunpack.c.h.b16 %v606
  %v1638 = vunpack.c.l.b16 %v607
  %v1639 = vunpack.c.h.b16 %v607
  %v1640 = vunpack.c.l.b16 %v608
  %v1641 = vunpack.c.h.b16 %v608
  %v1642 = vunpack.c.l.b16 %v609
  %v1643 = vunpack.c.l.b16 %v610
  %v1644 = vunpack.c.h.b16 %v610
  %v1645 = vunpack.c.l.b16 %v611
  %v1646 = vunpack.c.h.b16 %v611
  %v1647 = vunpack.c.l.b16 %v612
  %v1648 = vunpack.c.h.b16 %v612
  %v1649 = vunpack.c.l.b16 %v613
  %v1650 = vunpack.c.l.b16 %v614
  %v1651 = vunpack.c.h.b16 %v614
  %v1652 = vunpack.c.l.b16 %v615
  %v1653 = vunpack.c.h.b16 %v615
  %v1654 = vunpack.c.l.b16 %v616
  %v1655 = vunpack.c.h.b16 %v616
  %v1656 = vunpack.c.l.b16 %v617
  %v1657 = vunpack.c.l.b16 %v618
  %v1658 = vunpack.c.h.b16 %v618
  %v1659 = vunpack.c.l.b16 %v619
  %v1660 = vunpack.c.h.b16 %v619
  %v1661 = vunpack.c.l.b16 %v620
  %v1662 = vunpack.c.h.b16 %v620
  %v1663 = vunpack.c.l.b16 %v621
  %v1664 = vunpack.c.l.b16 %v622
  %v1665 = vunpack.c.h.b16 %v622
  %v1666 = vunpack.c.l.b16 %v623
  %v1667 = vunpack.c.h.b16 %v623
  %v1668 = vunpack.c.l.b16 %v624
  %v1669 = vunpack.c.h.b16 %v624
  %v1670 = vunpack.c.l.b16 %v625
  %v1671 = vunpack.c.l.b16 %v626
  %v1672 = vunpack.c.h.b16 %v626
  %v1673 = vunpack.c.l.b16 %v627
  %v1674 = vunpack.c.h.b16 %v627
  %v1675 = vunpack.c.l.b16 %v628
  %v1676 = vunpack.c.h.b16 %v628
  %v1677 = vunpack.c.l.b16 %v629
  %v1678 = vunpack.c.l.b16 %v630
  %v1679 = vunpack.c.h.b16 %v630
  %v1680 = vunpack.c.l.b16 %v631
  %v1681 = vunpack.c.h.b16 %v631
  %v1682 = vunpack.c.l.b16 %v632
  %v1683 = vunpack.c.h.b16 %v632
  %v1684 = vunpack.c.l.b16 %v633
  %v1685 = vunpack.c.l.b16 %v634
  %v1686 = vunpack.c.h.b16 %v634
  %v1687 = vunpack.c.l.b16 %v635
  %v1688 = vunpack.c.h.b16 %v635
  %v1689 = vunpack.c.l.b16 %v636
  %v1690 = vunpack.c.h.b16 %v636
  %v1691 = vunpack.c.l.b16 %v637
  %v1692 = vunpack.c.l.b16 %v638
  %v1693 = vunpack.c.h.b16 %v638
  %v1694 = vunpack.c.l.b16 %v639
  %v1695 = vunpack.c.h.b16 %v639
  %v1696 = vunpack.c.l.b16 %v640
  %v1697 = vunpack.c.h.b16 %v640
  %v1698 = vunpack.c.l.b16 %v641
  %v1699 = vunpack.c.l.b16 %v642
  %v1700 = vunpack.c.h.b16 %v642
  %v1701 = vunpack.c.l.b16 %v643
  %v1702 = vunpack.c.h.b16 %v643
  %v1703 = vunpack.c.l.b16 %v644
  %v1704 = vunpack.c.h.b16 %v644
  %v1705 = vunpack.c.l.b16 %v645
  %v1706 = vunpack.c.l.b16 %v646
  %v1707 = vunpack.c.h.b16 %v646
  %v1708 = vunpack.c.l.b16 %v647
  %v1709 = vunpack.c.h.b16 %v647
  %v1710 = vunpack.c.l.b16 %v648
  %v1711 = vunpack.c.h.b16 %v648
  %v1712 = vunpack.c.l.b16 %v649
  %v1713 = vunpack.c.l.b16 %v650
  %v1714 = vunpack.c.h.b16 %v650
  %v1715 = vunpack.c.l.b16 %v651
  %v1716 = vunpack.c.h.b16 %v651
  %v1717 = vunpack.c.l.b16 %v652
  %v1718 = vunpack.c.h.b16 %v652
  %v1719 = vunpack.c.l.b16 %v653
  %v1720 = vunpack.c.l.b16 %v654
  %v1721 = vunpack.c.h.b16 %v654
  %v1722 = vunpack.c.l.b16 %v655
  %v1723 = vunpack.c.h.b16 %v655
  %v1724 = vunpack.c.l.b16 %v656
  %v1725 = vunpack.c.h.b16 %v656
  %v1726 = vunpack.c.l.b16 %v657
  %v1727 = vunpack.c.l.b16 %v658
  %v1728 = vunpack.c.h.b16 %v658
  %v1729 = vunpack.c.l.b16 %v659
  %v1730 = vunpack.c.h.b16 %v659
  %v1731 = vunpack.c.l.b16 %v660
  %v1732 = vunpack.c.h.b16 %v660
  %v1733 = vunpack.c.l.b16 %v661
  %v1734 = vunpack.c.l.b16 %v662
  %v1735 = vunpack.c.h.b16 %v662
  %v1736 = vunpack.c.l.b16 %v663
  %v1737 = vunpack.c.h.b16 %v663
  %v1738 = vunpack.c.l.b16 %v664
  %v1739 = vunpack.c.h.b16 %v664
  %v1740 = vunpack.c.l.b16 %v665
  %v1741 = vunpack.c.l.b16 %v666
  %v1742 = vunpack.c.h.b16 %v666
  %v1743 = vunpack.c.l.b16 %v667
  %v1744 = vunpack.c.h.b16 %v667
  %v1745 = vunpack.c.l.b16 %v668
  %v1746 = vunpack.c.h.b16 %v668
  %v1747 = vunpack.c.l.b16 %v669
  %v1748 = vunpack.c.l.b16 %v670
  %v1749 = vunpack.c.h.b16 %v670
  %v1750 = vunpack.c.l.b16 %v671
  %v1751 = vunpack.c.h.b16 %v671
  %v1752 = vunpack.c.l.b16 %v672
  %v1753 = vunpack.c.h.b16 %v672
  %v1754 = vunpack.c.l.b16 %v673
  %v1755 = vunpack.c.l.b16 %v674
  %v1756 = vunpack.c.h.b16 %v674
  %v1757 = vunpack.c.l.b16 %v675
  %v1758 = vunpack.c.h.b16 %v675
  %v1759 = vunpack.c.l.b16 %v676
  %v1760 = vunpack.c.h.b16 %v676
  %v1761 = vunpack.c.l.b16 %v677
  %v1762 = vunpack.c.l.b16 %v678
  %v1763 = vunpack.c.h.b16 %v678
  %v1764 = vunpack.c.l.b16 %v679
  %v1765 = vunpack.c.h.b16 %v679
  %v1766 = vunpack.c.l.b16 %v680
  %v1767 = vunpack.c.h.b16 %v680
  %v1768 = vunpack.c.l.b16 %v681
  %v1769 = vunpack.c.l.b16 %v682
  %v1770 = vunpack.c.h.b16 %v682
  %v1771 = vunpack.c.l.b16 %v683
  %v1772 = vunpack.c.h.b16 %v683
  %v1773 = vunpack.c.l.b16 %v684
  %v1774 = vunpack.c.h.b16 %v684
  %v1775 = vunpack.c.l.b16 %v685
  %v1776 = vunpack.c.l.b16 %v686
  %v1777 = vunpack.c.h.b16 %v686
  %v1778 = vunpack.c.l.b16 %v687
  %v1779 = vunpack.c.h.b16 %v687
  %v1780 = vunpack.c.l.b16 %v688
  %v1781 = vunpack.c.h.b16 %v688
  %v1782 = vunpack.c.l.b16 %v689
  %v1783 = vunpack.c.l.b16 %v690
  %v1784 = vunpack.c.h.b16 %v690
  %v1785 = vunpack.c.l.b16 %v691
  %v1786 = vunpack.c.h.b16 %v691
  %v1787 = vunpack.c.l.b16 %v692
  %v1788 = vunpack.c.h.b16 %v692
  %v1789 = vunpack.c.l.b16 %v693
  %v1790 = vunpack.c.l.b16 %v694
  %v1791 = vunpack.c.h.b16 %v694
  %v1792 = vunpack.c.l.b16 %v695
  %v1793 = vunpack.c.h.b16 %v695
  %v1794 = vunpack.c.l.b16 %v696
  %v1795 = vunpack.c.h.b16 %v696
  %v1796 = vunpack.c.l.b16 %v697
  %v1797 = vunpack.c.l.b16 %v698
  %v1798 = vunpack.c.h.b16 %v698
  %v1799 = vunpack.c.l.b16 %v699
  %v1800 = vunpack.c.h.b16 %v699
  %v1801 = vunpack.c.l.b16 %v700
  %v1802 = vunpack.c.h.b16 %v700
  %v1803 = vunpack.c.l.b16 %v701
  %v1804 = vunpack.c.l.b16 %v702
  %v1805 = vunpack.c.h.b16 %v702
  %v1806 = vunpack.c.l.b16 %v703
  %v1807 = vunpack.c.h.b16 %v703
  %v1808 = vunpack.c.l.b16 %v704
  %v1809 = vunpack.c.h.b16 %v704
  %v1810 = vunpack.c.l.b16 %v705
  %v1811 = vunpack.c.l.b16 %v706
  %v1812 = vunpack.c.h.b16 %v706
  %v1813 = vunpack.c.l.b16 %v707
  %v1814 = vunpack.c.h.b16 %v707
  %v1815 = vunpack.c.l.b16 %v708
  %v1816 = vunpack.c.h.b16 %v708
  %v1817 = vunpack.c.l.b16 %v709
  %v1818 = vunpack.c.l.b16 %v710
  %v1819 = vunpack.c.h.b16 %v710
  %v1820 = vunpack.c.l.b16 %v711
  %v1821 = vunpack.c.h.b16 %v711
  %v1822 = vunpack.c.l.b16 %v712
  %v1823 = vunpack.c.h.b16 %v712
  %v1824 = vunpack.c.l.b16 %v713
  %v1825 = vunpack.c.l.b16 %v714
  %v1826 = vunpack.c.h.b16 %v714
  %v1827 = vunpack.c.l.b16 %v715
  %v1828 = vunpack.c.h.b16 %v715
  %v1829 = vunpack.c.l.b16 %v716
  %v1830 = vunpack.c.h.b16 %v716
  %v1831 = vunpack.c.l.b16 %v717
  %v1832 = vunpack.c.l.b16 %v718
  %v1833 = vunpack.c.h.b16 %v718
  %v1834 = vunpack.c.l.b16 %v719
  %v1835 = vunpack.c.h.b16 %v719
  %v1836 = vunpack.c.l.b16 %v720
  %v1837 = vunpack.c.h.b16 %v720
  %v1838 = vunpack.c.l.b16 %v721
  %v1839 = vunpack.c.l.b16 %v722
  %v1840 = vunpack.c.h.b16 %v722
  %v1841 = vunpack.c.l.b16 %v723
  %v1842 = vunpack.c.h.b16 %v723
  %v1843 = vunpack.c.l.b16 %v724
  %v1844 = vunpack.c.h.b16 %v724
  %v1845 = vunpack.c.l.b16 %v725
  %v1846 = vunpack.c.l.b16 %v726
  %v1847 = vunpack.c.h.b16 %v726
  %v1848 = vunpack.c.l.b16 %v727
  %v1849 = vunpack.c.h.b16 %v727
  %v1850 = vunpack.c.l.b16 %v728
  %v1851 = vunpack.c.h.b16 %v728
  %v1852 = vunpack.c.l.b16 %v729
  %v1853 = vunpack.c.l.b16 %v730
  %v1854 = vunpack.c.h.b16 %v730
  %v1855 = vunpack.c.l.b16 %v731
  %v1856 = vunpack.c.h.b16 %v731
  %v1857 = vunpack.c.l.b16 %v732
  %v1858 = vunpack.c.h.b16 %v732
  %v1859 = vunpack.c.l.b16 %v733
  %v1860 = vunpack.c.l.b16 %v734
  %v1861 = vunpack.c.h.b16 %v734
  %v1862 = vunpack.c.l.b16 %v735
  %v1863 = vunpack.c.h.b16 %v735
  %v1864 = vunpack.c.l.b16 %v736
  %v1865 = vunpack.c.h.b16 %v736
  %v1866 = vunpack.c.l.b16 %v737
  %v1867 = vunpack.c.l.b16 %v738
  %v1868 = vunpack.c.h.b16 %v738
  %v1869 = vunpack.c.l.b16 %v739
  %v1870 = vunpack.c.h.b16 %v739
  %v1871 = vunpack.c.l.b16 %v740
  %v1872 = vunpack.c.h.b16 %v740
  %v1873 = vunpack.c.l.b16 %v741
  %v1874 = vunpack.c.l.b16 %v742
  %v1875 = vunpack.c.h.b16 %v742
  %v1876 = vunpack.c.l.b16 %v743
  %v1877 = vunpack.c.h.b16 %v743
  %v1878 = vunpack.c.l.b16 %v744
  %v1879 = vunpack.c.h.b16 %v744
  %v1880 = vunpack.c.l.b16 %v745
  %v1881 = vunpack.c.l.b16 %v746
  %v1882 = vunpack.c.h.b16 %v746
  %v1883 = vunpack.c.l.b16 %v747
  %v1884 = vunpack.c.h.b16 %v747
  %v1885 = vunpack.c.l.b16 %v748
  %v1886 = vunpack.c.h.b16 %v748
  %v1887 = vunpack.c.l.b16 %v749
  %v1888 = vunpack.c.l.b16 %v750
  %v1889 = vunpack.c.h.b16 %v750
  %v1890 = vunpack.c.l.b16 %v751
  %v1891 = vunpack.c.h.b16 %v751
  %v1892 = vunpack.c.l.b16 %v752
  %v1893 = vunpack.c.h.b16 %v752
  %v1894 = vunpack.c.l.b16 %v753
  %v1895 = vunpack.c.l.b16 %v754
  %v1896 = vunpack.c.h.b16 %v754
  %v1897 = vunpack.c.l.b16 %v755
  %v1898 = vunpack.c.h.b16 %v755
  %v1899 = vunpack.c.l.b16 %v756
  %v1900 = vunpack.c.h.b16 %v756
  %v1901 = vunpack.c.l.b16 %v757
  %v1902 = vunpack.c.l.b16 %v758
  %v1903 = vunpack.c.h.b16 %v758
  %v1904 = vunpack.c.l.b16 %v759
  %v1905 = vunpack.c.h.b16 %v759
  %v1906 = vunpack.c.l.b16 %v760
  %v1907 = vunpack.c.h.b16 %v760
  %v1908 = vunpack.c.l.b16 %v761
  %v1909 = vunpack.c.l.b16 %v762
  %v1910 = vunpack.c.h.b16 %v762
  %v1911 = vunpack.c.l.b16 %v763
  %v1912 = vunpack.c.h.b16 %v763
  %v1913 = vunpack.c.l.b16 %v764
  %v1914 = vunpack.c.h.b16 %v764
  %v1915 = vunpack.c.l.b16 %v765
  %v1916 = vunpack.c.l.b16 %v766
  %v1917 = vunpack.c.h.b16 %v766
  %v1918 = vunpack.c.l.b16 %v767
  %v1919 = vunpack.c.h.b16 %v767
  %v1920 = vunpack.c.l.b16 %v768
  %v1921 = vunpack.c.h.b16 %v768
  %v1922 = vunpack.c.l.b16 %v769
  %v1923 = vunpack.c.l.b16 %v770
  %v1924 = vunpack.c.h.b16 %v770
  %v1925 = vunpack.c.l.b16 %v771
  %v1926 = vunpack.c.h.b16 %v771
  %v1927 = vunpack.c.l.b16 %v772
  %v1928 = vunpack.c.h.b16 %v772
  %v1929 = vunpack.c.l.b16 %v773
  %v1930 = vunpack.c.l.b16 %v774
  %v1931 = vunpack.c.h.b16 %v774
  %v1932 = vunpack.c.l.b16 %v775
  %v1933 = vunpack.c.h.b16 %v775
  %v1934 = vunpack.c.l.b16 %v776
  %v1935 = vunpack.c.h.b16 %v776
  %v1936 = vunpack.c.l.b16 %v777
  %v1937 = vunpack.c.l.b16 %v778
  %v1938 = vunpack.c.h.b16 %v778
  %v1939 = vunpack.c.l.b16 %v779
  %v1940 = vunpack.c.h.b16 %v779
  %v1941 = vunpack.c.l.b16 %v780
  %v1942 = vunpack.c.h.b16 %v780
  %v1943 = vunpack.c.l.b16 %v781
  %v1944 = vunpack.c.l.b16 %v782
  %v1945 = vunpack.c.h.b16 %v782
  %v1946 = vunpack.c.l.b16 %v783
  %v1947 = vunpack.c.h.b16 %v783
  %v1948 = vunpack.c.l.b16 %v784
  %v1949 = vunpack.c.h.b16 %v784
  %v1950 = vunpack.c.l.b16 %v785
  %v1951 = vunpack.c.l.b16 %v786
  %v1952 = vunpack.c.h.b16 %v786
  %v1953 = vunpack.c.l.b16 %v787
  %v1954 = vunpack.c.h.b16 %v787
  %v1955 = vunpack.c.l.b16 %v788
  %v1956 = vunpack.c.h.b16 %v788
  %v1957 = vunpack.c.l.b16 %v789
  %v1958 = vunpack.c.l.b16 %v790
  %v1959 = vunpack.c.h.b16 %v790
  %v1960 = vunpack.c.l.b16 %v791
  %v1961 = vunpack.c.h.b16 %v791
  %v1962 = vunpack.c.l.b16 %v792
  %v1963 = vunpack.c.h.b16 %v792
  %v1964 = vunpack.c.l.b16 %v793
  %v1965 = vunpack.c.l.b16 %v794
  %v1966 = vunpack.c.h.b16 %v794
  %v1967 = vunpack.c.l.b16 %v795
  %v1968 = vunpack.c.h.b16 %v795
  %v1969 = vunpack.c.l.b16 %v796
  %v1970 = vunpack.c.h.b16 %v796
  %v1971 = vunpack.c.l.b16 %v797
  %v1972 = vunpack.c.l.b16 %v798
  %v1973 = vunpack.c.h.b16 %v798
  %v1974 = vunpack.c.l.b16 %v799
  %v1975 = vunpack.c.h.b16 %v799
  %v1976 = vunpack.c.l.b16 %v800
  %v1977 = vunpack.c.h.b16 %v800
  %v1978 = vunpack.c.l.b16 %v801
  %v1979 = vunpack.c.l.b16 %v802
  %v1980 = vunpack.c.h.b16 %v802
  %v1981 = vunpack.c.l.b16 %v803
  %v1982 = vunpack.c.h.b16 %v803
  %v1983 = vunpack.c.l.b16 %v804
  %v1984 = vunpack.c.h.b16 %v804
  %v1985 = vunpack.c.l.b16 %v805
  %v1986 = vunpack.c.l.b16 %v806
  %v1987 = vunpack.c.h.b16 %v806
  %v1988 = vunpack.c.l.b16 %v807
  %v1989 = vunpack.c.h.b16 %v807
  %v1990 = vunpack.c.l.b16 %v808
  %v1991 = vunpack.c.h.b16 %v808
  %v1992 = vunpack.c.l.b16 %v809
  %v1993 = vunpack.c.l.b16 %v810
  %v1994 = vunpack.c.h.b16 %v810
  %v1995 = vunpack.c.l.b16 %v811
  %v1996 = vunpack.c.h.b16 %v811
  %v1997 = vunpack.c.l.b16 %v812
  %v1998 = vunpack.c.h.b16 %v812
  %v1999 = vunpack.c.l.b16 %v813
  %v2000 = vunpack.c.l.b16 %v814
  %v2001 = vunpack.c.h.b16 %v814
  %v2002 = vunpack.c.l.b16 %v815
  %v2003 = vunpack.c.h.b16 %v815
  %v2004 = vunpack.c.l.b16 %v816
  %v2005 = vunpack.c.h.b16 %v816
  %v2006 = vunpack.c.l.b16 %v817
  %v2007 = vunpack.c.l.b16 %v818
  %v2008 = vunpack.c.h.b16 %v818
  %v2009 = vunpack.c.l.b16 %v819
  %v2010 = vunpack.c.h.b16 %v819
  %v2011 = vunpack.c.l.b16 %v820
  %v2012 = vunpack.c.h.b16 %v820
  %v2013 = vunpack.c.l.b16 %v821
  %v2014 = vunpack.c.l.b16 %v822
  %v2015 = vunpack.c.h.b16 %v822
  %v2016 = vunpack.c.l.b16 %v823
  %v2017 = vunpack.c.h.b16 %v823
  %v2018 = vunpack.c.l.b16 %v824
  %v2019 = vunpack.c.h.b16 %v824
  %v2020 = vunpack.c.l.b16 %v825
  %v2021 = vunpack.c.l.b16 %v826
  %v2022 = vunpack.c.h.b16 %v826
  %v2023 = vunpack.c.l.b16 %v827
  %v2024 = vunpack.c.h.b16 %v827
  %v2025 = vunpack.c.l.b16 %v828
  %v2026 = vunpack.c.h.b16 %v828
  %v2027 = vunpack.c.l.b16 %v829
  %v2028 = vunpack.c.l.b16 %v830
  %v2029 = vunpack.c.h.b16 %v830
  %v2030 = vunpack.c.l.b16 %v831
  %v2031 = vunpack.c.h.b16 %v831
  %v2032 = vunpack.c.l.b16 %v832
  %v2033 = vunpack.c.h.b16 %v832
  %v2034 = vunpack.c.l.b16 %v833
  %v2035 = vunpack.c.l.b16 %v834
  %v2036 = vunpack.c.h.b16 %v834
  %v2037 = vunpack.c.l.b16 %v835
  %v2038 = vunpack.c.h.b16 %v835
  %v2039 = vunpack.c.l.b16 %v836
  %v2040 = vunpack.c.h.b16 %v836
  %v2041 = vunpack.c.l.b16 %v837
  %v2042 = vunpack.c.l.b16 %v838
  %v2043 = vunpack.c.h.b16 %v838
  %v2044 = vunpack.c.l.b16 %v839
  %v2045 = vunpack.c.h.b16 %v839
  %v2046 = vunpack.c.l.b16 %v840
  %v2047 = vunpack.c.h.b16 %v840
  %v2048 = vunpack.c.l.b16 %v841
  %v2049 = vunpack.c.l.b16 %v842
  %v2050 = vunpack.c.h.b16 %v842
  %v2051 = vunpack.c.l.b16 %v843
  %v2052 = vunpack.c.h.b16 %v843
  %v2053 = vunpack.c.l.b16 %v844
  %v2054 = vunpack.c.h.b16 %v844
  %v2055 = vunpack.c.l.b16 %v845
  %v2056 = vunpack.c.l.b16 %v846
  %v2057 = vunpack.c.h.b16 %v846
  %v2058 = vunpack.c.l.b16 %v847
  %v2059 = vunpack.c.h.b16 %v847
  %v2060 = vunpack.c.l.b16 %v848
  %v2061 = vunpack.c.h.b16 %v848
  %v2062 = vunpack.c.l.b16 %v849
  %v2063 = vunpack.c.l.b16 %v850
  %v2064 = vunpack.c.h.b16 %v850
  %v2065 = vunpack.c.l.b16 %v851
  %v2066 = vunpack.c.h.b16 %v851
  %v2067 = vunpack.c.l.b16 %v852
  %v2068 = vunpack.c.h.b16 %v852
  %v2069 = vunpack.c.l.b16 %v853
  %v2070 = vunpack.c.l.b16 %v854
  %v2071 = vunpack.c.h.b16 %v854
  %v2072 = vunpack.c.l.b16 %v855
  %v2073 = vunpack.c.h.b16 %v855
  %v2074 = vunpack.c.l.b16 %v856
  %v2075 = vunpack.c.h.b16 %v856
  %v2076 = vunpack.c.l.b16 %v857
  %v2077 = vunpack.c.l.b16 %v858
  %v2078 = vunpack.c.h.b16 %v858
  %v2079 = vunpack.c.l.b16 %v859
  %v2080 = vunpack.c.h.b16 %v859
  %v2081 = vunpack.c.l.b16 %v860
  %v2082 = vunpack.c.h.b16 %v860
  %v2083 = vunpack.c.l.b16 %v861
  %v2084 = vunpack.c.l.b16 %v862
  %v2085 = vunpack.c.h.b16 %v862
  %v2086 = vunpack.c.l.b16 %v863
  %v2087 = vunpack.c.h.b16 %v863
  %v2088 = vunpack.c.l.b16 %v864
  %v2089 = vunpack.c.h.b16 %v864
  %v2090 = vunpack.c.l.b16 %v865
  %v2091 = vunpack.c.l.b16 %v866
  %v2092 = vunpack.c.h.b16 %v866
  %v2093 = vunpack.c.l.b16 %v867
  %v2094 = vunpack.c.h.b16 %v867
  %v2095 = vunpack.c.l.b16 %v868
  %v2096 = vunpack.c.h.b16 %v868
  %v2097 = vunpack.c.l.b16 %v869
  %v2098 = vunpack.c.l.b16 %v870
  %v2099 = vunpack.c.h.b16 %v870
  %v2100 = vunpack.c.l.b16 %v871
  %v2101 = vunpack.c.h.b16 %v871
  %v2102 = vunpack.c.l.b16 %v872
  %v2103 = vunpack.c.h.b16 %v872
  %v2104 = vunpack.c.l.b16 %v873
  %v2105 = vunpack.c.l.b16 %v874
  %v2106 = vunpack.c.h.b16 %v874
  %v2107 = vunpack.c.l.b16 %v875
  %v2108 = vunpack.c.h.b16 %v875
  %v2109 = vunpack.c.l.b16 %v876
  %v2110 = vunpack.c.h.b16 %v876
  %v2111 = vunpack.c.l.b16 %v877
  %v2112 = vunpack.c.l.b16 %v878
  %v2113 = vunpack.c.h.b16 %v878
  %v2114 = vunpack.c.l.b16 %v879
  %v2115 = vunpack.c.h.b16 %v879
  %v2116 = vunpack.c.l.b16 %v880
  %v2117 = vunpack.c.h.b16 %v880
  %v2118 = vunpack.c.l.b16 %v881
  %v2119 = vunpack.c.l.b16 %v882
  %v2120 = vunpack.c.h.b16 %v882
  %v2121 = vunpack.c.l.b16 %v883
  %v2122 = vunpack.c.h.b16 %v883
  %v2123 = vunpack.c.l.b16 %v884
  %v2124 = vunpack.c.h.b16 %v884
  %v2125 = vunpack.c.l.b16 %v885
  %v2126 = vunpack.c.l.b16 %v886
  %v2127 = vunpack.c.h.b16 %v886
  %v2128 = vunpack.c.l.b16 %v887
  %v2129 = vunpack.c.h.b16 %v887
  %v2130 = vunpack.c.l.b16 %v888
  %v2131 = vunpack.c.h.b16 %v888
  %v2132 = vunpack.c.l.b16 %v889
  %v2133 = vunpack.c.l.b16 %v890
  %v2134 = vunpack.c.h.b16 %v890
  %v2135 = vunpack.c.l.b16 %v891
  %v2136 = vunpack.c.h.b16 %v891
  %v2137 = vunpack.c.l.b16 %v892
  %v2138 = vunpack.c.h.b16 %v892
  %v2139 = vunpack.c.l.b16 %v893
  %v2140 = vunpack.c.l.b16 %v894
  %v2141 = vunpack.c.h.b16 %v894
  %v2142 = vunpack.c.l.b16 %v895
  %v2143 = vunpack.c.h.b16 %v895
  %v2144 = vunpack.c.l.b16 %v896
  %v2145 = vunpack.c.h.b16 %v896
  %v2146 = vunpack.c.l.b16 %v897
  %v2147 = vunpack.c.l.b16 %v898
  %v2148 = vunpack.c.h.b16 %v898
  %v2149 = vunpack.c.l.b16 %v899
  %v2150 = vunpack.c.h.b16 %v899
  %v2151 = vunpack.c.l.b16 %v900
  %v2152 = vunpack.c.h.b16 %v900
  %v2153 = vunpack.c.l.b16 %v901
  %v2154 = vunpack.c.l.b16 %v902
  %v2155 = vunpack.c.h.b16 %v902
  %v2156 = vunpack.c.l.b16 %v903
  %v2157 = vunpack.c.h.b16 %v903
  %v2158 = vunpack.c.l.b16 %v904
  %v2159 = vunpack.c.h.b16 %v904
  %v2160 = vunpack.c.l.b16 %v905
  %v2161 = vunpack.c.l.b16 %v906
  %v2162 = vunpack.c.h.b16 %v906
  %v2163 = vunpack.c.l.b16 %v907
  %v2164 = vunpack.c.h.b16 %v907
  %v2165 = vunpack.c.l.b16 %v908
  %v2166 = vunpack.c.h.b16 %v908
  %v2167 = vunpack.c.l.b16 %v909
  %v2168 = vunpack.c.l.b16 %v910
  %v2169 = vunpack.c.h.b16 %v910
  %v2170 = vunpack.c.l.b16 %v911
  %v2171 = vunpack.c.h.b16 %v911
  %v2172 = vunpack.c.l.b16 %v912
  %v2173 = vunpack.c.h.b16 %v912
  %v2174 = vunpack.c.l.b16 %v913
  %v2175 = vunpack.c.l.b16 %v914
  %v2176 = vunpack.c.h.b16 %v914
  %v2177 = vunpack.c.l.b16 %v915
  %v2178 = vunpack.c.h.b16 %v915
  %v2179 = vunpack.c.l.b16 %v916
  %v2180 = vunpack.c.h.b16 %v916
  %v2181 = vunpack.c.l.b16 %v917
  %v2182 = vunpack.c.l.b16 %v918
  %v2183 = vunpack.c.h.b16 %v918
  %v2184 = vunpack.c.l.b16 %v919
  %v2185 = vunpack.c.h.b16 %v919
  %v2186 = vunpack.c.l.b16 %v920
  %v2187 = vunpack.c.h.b16 %v920
  %v2188 = vunpack.c.l.b16 %v921
  %v2189 = vunpack.c.l.b16 %v922
  %v2190 = vunpack.c.h.b16 %v922
  %v2191 = vunpack.c.l.b16 %v923
  %v2192 = vunpack.c.h.b16 %v923
  %v2193 = vunpack.c.l.b16 %v924
  %v2194 = vunpack.c.h.b16 %v924
  %v2195 = vunpack.c.l.b16 %v925
  %v2196 = vunpack.c.l.b16 %v926
  %v2197 = vunpack.c.h.b16 %v926
  %v2198 = vunpack.c.l.b16 %v927
  %v2199 = vunpack.c.h.b16 %v927
  %v2200 = vunpack.c.l.b16 %v928
  %v2201 = vunpack.c.h.b16 %v928
  %v2202 = vunpack.c.l.b16 %v929
  %v2203 = vunpack.c.l.b16 %v930
  %v2204 = vunpack.c.h.b16 %v930
  %v2205 = vunpack.c.l.b16 %v931
  %v2206 = vunpack.c.h.b16 %v931
  %v2207 = vunpack.c.l.b16 %v932
  %v2208 = vunpack.c.h.b16 %v932
  %v2209 = vunpack.c.l.b16 %v933
  %v2210 = vunpack.c.l.b16 %v934
  %v2211 = vunpack.c.h.b16 %v934
  %v2212 = vunpack.c.l.b16 %v935
  %v2213 = vunpack.c.h.b16 %v935
  %v2214 = vunpack.c.l.b16 %v936
  %v2215 = vunpack.c.h.b16 %v936
  %v2216 = vunpack.c.l.b16 %v937
  %v2217 = vunpack.c.l.b16 %v938
  %v2218 = vunpack.c.h.b16 %v938
  %v2219 = vunpack.c.l.b16 %v939
  %v2220 = vunpack.c.h.b16 %v939
  %v2221 = vunpack.c.l.b16 %v940
  %v2222 = vunpack.c.h.b16 %v940
  %v2223 = vunpack.c.l.b16 %v941
  %v2224 = vunpack.c.l.b16 %v942
  %v2225 = vunpack.c.h.b16 %v942
  %v2226 = vunpack.c.l.b16 %v943
  %v2227 = vunpack.c.h.b16 %v943
  %v2228 = vunpack.c.l.b16 %v944
  %v2229 = vunpack.c.h.b16 %v944
  %v2230 = vunpack.c.l.b16 %v945
  %v2231 = vunpack.c.l.b16 %v946
  %v2232 = vunpack.c.h.b16 %v946
  %v2233 = vunpack.c.l.b16 %v947
  %v2234 = vunpack.c.h.b16 %v947
  %v2235 = vunpack.c.l.b16 %v948
  %v2236 = vunpack.c.h.b16 %v948
  %v2237 = vunpack.c.l.b16 %v949
  %v2238 = vunpack.c.l.b16 %v950
  %v2239 = vunpack.c.h.b16 %v950
  %v2240 = vunpack.c.l.b16 %v951
  %v2241 = vunpack.c.h.b16 %v951
  %v2242 = vunpack.c.l.b16 %v952
  %v2243 = vunpack.c.h.b16 %v952
  %v2244 = vunpack.c.l.b16 %v953
  %v2245 = vunpack.c.l.b16 %v954
  %v2246 = vunpack.c.h.b16 %v954
  %v2247 = vunpack.c.l.b16 %v955
  %v2248 = vunpack.c.h.b16 %v955
  %v2249 = vunpack.c.l.b16 %v956
  %v2250 = vunpack.c.h.b16 %v956
  %v2251 = vunpack.c.l.b16 %v957
  %v2252 = vunpack.c.l.b16 %v958
  %v2253 = vunpack.c.h.b16 %v958
  %v2254 = vunpack.c.l.b16 %v959
  %v2255 = vunpack.c.h.b16 %v959
  %v2256 = vunpack.c.l.b16 %v960
  %v2257 = vunpack.c.h.b16 %v960
  %v2258 = vunpack.c.l.b16 %v961
  %v2259 = vunpack.c.l.b16 %v962
  %v2260 = vunpack.c.h.b16 %v962
  %v2261 = vunpack.c.l.b16 %v963
  %v2262 = vunpack.c.h.b16 %v963
  %v2263 = vunpack.c.l.b16 %v964
  %v2264 = vunpack.c.h.b16 %v964
  %v2265 = vunpack.c.l.b16 %v965
  %v2266 = vunpack.c.l.b16 %v966
  %v2267 = vunpack.c.h.b16 %v966
  %v2268 = vunpack.c.l.b16 %v967
  %v2269 = vunpack.c.h.b16 %v967
  %v2270 = vunpack.c.l.b16 %v968
  %v2271 = vunpack.c.h.b16 %v968
  %v2272 = vunpack.c.l.b16 %v969
  %v2273 = vunpack.c.l.b16 %v970
  %v2274 = vunpack.c.h.b16 %v970
  %v2275 = vunpack.c.l.b16 %v971
  %v2276 = vunpack.c.h.b16 %v971
  %v2277 = vunpack.c.l.b16 %v972
  %v2278 = vunpack.c.h.b16 %v972
  %v2279 = vunpack.c.l.b16 %v973
  %v2280 = vunpack.c.l.b16 %v974
  %v2281 = vunpack.c.h.b16 %v974
  %v2282 = vunpack.c.l.b16 %v975
  %v2283 = vunpack.c.h.b16 %v975
  %v2284 = vunpack.c.l.b16 %v976
  %v2285 = vunpack.c.h.b16 %v976
  %v2286 = vunpack.c.l.b16 %v977
  %v2287 = vunpack.c.l.b16 %v978
  %v2288 = vunpack.c.h.b16 %v978
  %v2289 = vunpack.c.l.b16 %v979
  %v2290 = vunpack.c.h.b16 %v979
  %v2291 = vunpack.c.l.b16 %v980
  %v2292 = vunpack.c.h.b16 %v980
  %v2293 = vunpack.c.l.b16 %v981
  %v2294 = vunpack.c.l.b16 %v982
  %v2295 = vunpack.c.h.b16 %v982
  %v2296 = vunpack.c.l.b16 %v983
  %v2297 = vunpack.c.h.b16 %v983
  %v2298 = vunpack.c.l.b16 %v984
  %v2299 = vunpack.c.h.b16 %v984
  %v2300 = vunpack.c.l.b16 %v985
  %v2301 = vunpack.c.l.b16 %v986
  %v2302 = vunpack.c.h.b16 %v986
  %v2303 = vunpack.c.l.b16 %v987
  %v2304 = vunpack.c.h.b16 %v987
  %v2305 = vunpack.c.l.b16 %v988
  %v2306 = vunpack.c.h.b16 %v988
  %v2307 = vunpack.c.l.b16 %v989
  %v2308 = vunpack.c.l.b16 %v990
  %v2309 = vunpack.c.h.b16 %v990
  %v2310 = vunpack.c.l.b16 %v991
  %v2311 = vunpack.c.h.b16 %v991
  %v2312 = vunpack.c.l.b16 %v992
  %v2313 = vunpack.c.h.b16 %v992
  %v2314 = vunpack.c.l.b16 %v993
  %v2315 = vunpack.c.l.b16 %v994
  %v2316 = vunpack.c.h.b16 %v994
  %v2317 = vunpack.c.l.b16 %v995
  %v2318 = vunpack.c.h.b16 %v995
  %v2319 = vunpack.c.l.b16 %v996
  %v2320 = vunpack.c.h.b16 %v996
  %v2321 = vunpack.c.l.b16 %v997
  %v2322 = vunpack.c.l.b16 %v998
  %v2323 = vunpack.c.h.b16 %v998
  %v2324 = vunpack.c.l.b16 %v999
  %v2325 = vunpack.c.h.b16 %v999
  %v2326 = vunpack.c.l.b16 %v1000
  %v2327 = vunpack.c.h.b16 %v1000
  %v2328 = vunpack.c.l.b16 %v1001
  %v2329 = vunpack.c.l.b16 %v1002
  %v2330 = vunpack.c.h.b16 %v1002
  %v2331 = vunpack.c.l.b16 %v1003
  %v2332 = vunpack.c.h.b16 %v1003
  %v2333 = vunpack.c.l.b16 %v1004
  %v2334 = vunpack.c.h.b16 %v1004
  %v2335 = vunpack.c.l.b16 %v1005
  %v2336 = vunpack.c.l.b16 %v1006
  %v2337 = vunpack.c.h.b16 %v1006
  %v2338 = vunpack.c.l.b16 %v1007
  %v2339 = vunpack.c.h.b16 %v1007
  %v2340 = vunpack.c.l.b16 %v1008
  %v2341 = vunpack.c.h.b16 %v1008
  %v2342 = vunpack.c.l.b16 %v1009
  %v2343 = vunpack.c.l.b16 %v1010
  %v2344 = vunpack.c.h.b16 %v1010
  %v2345 = vunpack.c.l.b16 %v1011
  %v2346 = vunpack.c.h.b16 %v1011
  %v2347 = vunpack.c.l.b16 %v1012
  %v2348 = vunpack.c.h.b16 %v1012
  %v2349 = vunpack.c.l.b16 %v1013
  %v2350 = vunpack.c.l.b16 %v1014
  %v2351 = vunpack.c.h.b16 %v1014
  %v2352 = vunpack.c.l.b16 %v1015
  %v2353 = vunpack.c.h.b16 %v1015
  %v2354 = vunpack.c.l.b16 %v1016
  %v2355 = vunpack.c.h.b16 %v1016
  %v2356 = vunpack.c.l.b16 %v1017
  %v2357 = vunpack.c.l.b16 %v1018
  %v2358 = vunpack.c.h.b16 %v1018
  %v2359 = vunpack.c.l.b16 %v1019
  %v2360 = vunpack.c.h.b16 %v1019
  %v2361 = vunpack.c.l.b16 %v1020
  %v2362 = vunpack.c.h.b16 %v1020
  %v2363 = vunpack.c.l.b16 %v1021
  %v2364 = vunpack.c.l.b16 %v1022
  %v2365 = vunpack.c.h.b16 %v1022
  %v2366 = vunpack.c.l.b16 %v1023
  %v2367 = vunpack.c.h.b16 %v1023
  %v2368 = vunpack.c.l.b16 %v1024
  %v2369 = vunpack.c.h.b16 %v1024
  %v2370 = vunpack.c.l.b16 %v1025
  %v2371 = vunpack.c.l.b16 %v1026
  %v2372 = vunpack.c.h.b16 %v1026
  %v2373 = vunpack.c.l.b16 %v1027
  %v2374 = vunpack.c.h.b16 %v1027
  %v2375 = vunpack.c.l.b16 %v1028
  %v2376 = vunpack.c.h.b16 %v1028
  %v2377 = vunpack.c.l.b16 %v1029
  %v2378 = vunpack.c.l.b16 %v1030
  %v2379 = vunpack.c.h.b16 %v1030
  %v2380 = vunpack.c.l.b16 %v1031
  %v2381 = vunpack.c.h.b16 %v1031
  %v2382 = vunpack.c.l.b16 %v1032
  %v2383 = vunpack.c.h.b16 %v1032
  %v2384 = vunpack.c.l.b16 %v1033
  %v2385 = vunpack.c.l.b16 %v1034
  %v2386 = vunpack.c.h.b16 %v1034
  %v2387 = vunpack.c.l.b16 %v1035
  %v2388 = vunpack.c.h.b16 %v1035
  %v2389 = vunpack.c.l.b16 %v1036
  %v2390 = vunpack.c.h.b16 %v1036
  %v2391 = vunpack.c.l.b16 %v1037
  %v2392 = vunpack.c.l.b16 %v1038
  %v2393 = vunpack.c.h.b16 %v1038
  %v2394 = vunpack.c.l.b16 %v1039
  %v2395 = vunpack.c.h.b16 %v1039
  %v2396 = vunpack.c.l.b16 %v1040
  %v2397 = vunpack.c.h.b16 %v1040
  %v2398 = vunpack.c.l.b16 %v1041
  %v2399 = vunpack.c.l.b16 %v1042
  %v2400 = vunpack.c.h.b16 %v1042
  %v2401 = vunpack.c.l.b16 %v1043
  %v2402 = vunpack.c.h.b16 %v1043
  %v2403 = vunpack.c.l.b16 %v1044
  %v2404 = vunpack.c.h.b16 %v1044
  %v2405 = vunpack.c.l.b16 %v1045
  %v2406 = vunpack.c.l.b16 %v1046
  %v2407 = vunpack.c.h.b16 %v1046
  %v2408 = vunpack.c.l.b16 %v1047
  %v2409 = vunpack.c.h.b16 %v1047
  %v2410 = vunpack.c.l.b16 %v1048
  %v2411 = vunpack.c.h.b16 %v1048
  %v2412 = vunpack.c.l.b16 %v1049
  %v2413 = vunpack.c.l.b16 %v1050
  %v2414 = vunpack.c.h.b16 %v1050
  %v2415 = vunpack.c.l.b16 %v1051
  %v2416 = vunpack.c.h.b16 %v1051
  %v2417 = vunpack.c.l.b16 %v1052
  %v2418 = vunpack.c.h.b16 %v1052
  %v2419 = vunpack.c.l.b16 %v1053
  %v2420 = vunpack.c.l.b16 %v1054
  %v2421 = vunpack.c.h.b16 %v1054
  %v2422 = vunpack.c.l.b16 %v1055
  %v2423 = vunpack.c.h.b16 %v1055
  %v2424 = vunpack.c.l.b16 %v1056
  %v2425 = vunpack.c.h.b16 %v1056
  %v2426 = vunpack.c.l.b16 %v1057
  %v2427 = vunpack.c.l.b16 %v1058
  %v2428 = vunpack.c.h.b16 %v1058
  %v2429 = vunpack.c.l.b16 %v1059
  %v2430 = vunpack.c.h.b16 %v1059
  %v2431 = vunpack.c.l.b16 %v1060
  %v2432 = vunpack.c.h.b16 %v1060
  %v2433 = vunpack.c.l.b16 %v1061
  %v2434 = vunpack.c.l.b16 %v1062
  %v2435 = vunpack.c.h.b16 %v1062
  %v2436 = vunpack.c.l.b16 %v1063
  %v2437 = vunpack.c.h.b16 %v1063
  %v2438 = vunpack.c.l.b16 %v1064
  %v2439 = vunpack.c.h.b16 %v1064
  %v2440 = vunpack.c.l.b16 %v1065
  %v2441 = vpack.c.b16 %v1573, %v1566
  %v2442 = vpack.c.b16 %v1574, %v1567
  %v2443 = vpack.c.b16 %v1575, %v1568
  %v2444 = vpack.c.b16 %v1576, %v1569
  %v2445 = vpack.c.b16 %v1577, %v1570
  %v2446 = vpack.c.b16 %v1578, %v1571
  %v2447 = vpack.c.b16 %v1579, %v1572
  %v2448 = vpack.c.b16 %v1587, %v1580
  %v2449 = vpack.c.b16 %v1588, %v1581
  %v2450 = vpack.c.b16 %v1589, %v1582
  %v2451 = vpack.c.b16 %v1590, %v1583
  %v2452 = vpack.c.b16 %v1591, %v1584
  %v2453 = vpack.c.b16 %v1592, %v1585
  %v2454 = vpack.c.b16 %v1593, %v1586
  %v2455 = vpack.c.b16 %v1601, %v1594
  %v2456 = vpack.c.b16 %v1602, %v1595
  %v2457 = vpack.c.b16 %v1603, %v1596
  %v2458 = vpack.c.b16 %v1604, %v1597
  %v2459 = vpack.c.b16 %v1605, %v1598
  %v2460 = vpack.c.b16 %v1606, %v1599
  %v2461 = vpack.c.b16 %v1607, %v1600
  %v2462 = vpack.c.b16 %v1615, %v1608
  %v2463 = vpack.c.b16 %v1616, %v1609
  %v2464 = vpack.c.b16 %v1617, %v1610
  %v2465 = vpack.c.b16 %v1618, %v1611
  %v2466 = vpack.c.b16 %v1619, %v1612
  %v2467 = vpack.c.b16 %v1620, %v1613
  %v2468 = vpack.c.b16 %v1621, %v1614
  %v2469 = vpack.c.b16 %v1629, %v1622
  %v2470 = vpack.c.b16 %v1630, %v1623
  %v2471 = vpack.c.b16 %v1631, %v1624
  %v2472 = vpack.c.b16 %v1632, %v1625
  %v2473 = vpack.c.b16 %v1633, %v1626
  %v2474 = vpack.c.b16 %v1634, %v1627
  %v2475 = vpack.c.b16 %v1635, %v1628
  %v2476 = vpack.c.b16 %v1643, %v1636
  %v2477 = vpack.c.b16 %v1644, %v1637
  %v2478 = vpack.c.b16 %v1645, %v1638
  %v2479 = vpack.c.b16 %v1646, %v1639
  %v2480 = vpack.c.b16 %v1647, %v1640
  %v2481 = vpack.c.b16 %v1648, %v1641
  %v2482 = vpack.c.b16 %v1649, %v1642
  %v2483 = vpack.c.b16 %v1657, %v1650
  %v2484 = vpack.c.b16 %v1658, %v1651
  %v2485 = vpack.c.b16 %v1659, %v1652
  %v2486 = vpack.c.b16 %v1660, %v1653
  %v2487 = vpack.c.b16 %v1661, %v1654
  %v2488 = vpack.c.b16 %v1662, %v1655
  %v2489 = vpack.c.b16 %v1663, %v1656
  %v2490 = vpack.c.b16 %v1671, %v1664
  %v2491 = vpack.c.b16 %v1672, %v1665
  %v2492 = vpack.c.b16 %v1673, %v1666
  %v2493 = vpack.c.b16 %v1674, %v1667
  %v2494 = vpack.c.b16 %v1675, %v1668
  %v2495 = vpack.c.b16 %v1676, %v1669
  %v2496 = vpack.c.b16 %v1677, %v1670
  %v2497 = vpack.c.b16 %v1685, %v1678
  %v2498 = vpack.c.b16 %v1686, %v1679
  %v2499 = vpack.c.b16 %v1687, %v1680
  %v2500 = vpack.c.b16 %v1688, %v1681
  %v2501 = vpack.c.b16 %v1689, %v1682
  %v2502 = vpack.c.b16 %v1690, %v1683
  %v2503 = vpack.c.b16 %v1691, %v1684
  %v2504 = vpack.c.b16 %v1699, %v1692
  %v2505 = vpack.c.b16 %v1700, %v1693
  %v2506 = vpack.c.b16 %v1701, %v1694
  %v2507 = vpack.c.b16 %v1702, %v1695
  %v2508 = vpack.c.b16 %v1703, %v1696
  %v2509 = vpack.c.b16 %v1704, %v1697
  %v2510 = vpack.c.b16 %v1705, %v1698
  %v2511 = vpack.c.b16 %v1713, %v1706
  %v2512 = vpack.c.b16 %v1714, %v1707
  %v2513 = vpack.c.b16 %v1715, %v1708
  %v2514 = vpack.c.b16 %v1716, %v1709
  %v2515 = vpack.c.b16 %v1717, %v1710
  %v2516 = vpack.c.b16 %v1718, %v1711
  %v2517 = vpack.c.b16 %v1719, %v1712
  %v2518 = vpack.c.b16 %v1727, %v1720
  %v2519 = vpack.c.b16 %v1728, %v1721
  %v2520 = vpack.c.b16 %v1729, %v1722
  %v2521 = vpack.c.b16 %v1730, %v1723
  %v2522 = vpack.c.b16 %v1731, %v1724
  %v2523 = vpack.c.b16 %v1732, %v1725
  %v2524 = vpack.c.b16 %v1733, %v1726
  %v2525 = vpack.c.b16 %v1741, %v1734
  %v2526 = vpack.c.b16 %v1742, %v1735
  %v2527 = vpack.c.b16 %v1743, %v1736
  %v2528 = vpack.c.b16 %v1744, %v1737
  %v2529 = vpack.c.b16 %v1745, %v1738
  %v2530 = vpack.c.b16 %v1746, %v1739
  %v2531 = vpack.c.b16 %v1747, %v1740
  %v2532 = vpack.c.b16 %v1755, %v1748
  %v2533 = vpack.c.b16 %v1756, %v1749
  %v2534 = vpack.c.b16 %v1757, %v1750
  %v2535 = vpack.c.b16 %v1758, %v1751
  %v2536 = vpack.c.b16 %v1759, %v1752
  %v2537 = vpack.c.b16 %v1760, %v1753
  %v2538 = vpack.c.b16 %v1761, %v1754
  %v2539 = vpack.c.b16 %v1769, %v1762
  %v2540 = vpack.c.b16 %v1770, %v1763
  %v2541 = vpack.c.b16 %v1771, %v1764
  %v2542 = vpack.c.b16 %v1772, %v1765
  %v2543 = vpack.c.b16 %v1773, %v1766
  %v2544 = vpack.c.b16 %v1774, %v1767
  %v2545 = vpack.c.b16 %v1775, %v1768
  %v2546 = vpack.c.b16 %v1783, %v1776
  %v2547 = vpack.c.b16 %v1784, %v1777
  %v2548 = vpack.c.b16 %v1785, %v1778
  %v2549 = vpack.c.b16 %v1786, %v1779
  %v2550 = vpack.c.b16 %v1787, %v1780
  %v2551 = vpack.c.b16 %v1788, %v1781
  %v2552 = vpack.c.b16 %v1789, %v1782
  %v2553 = vpack.c.b16 %v1797, %v1790
  %v2554 = vpack.c.b16 %v1798, %v1791
  %v2555 = vpack.c.b16 %v1799, %v1792
  %v2556 = vpack.c.b16 %v1800, %v1793
  %v2557 = vpack.c.b16 %v1801, %v1794
  %v2558 = vpack.c.b16 %v1802, %v1795
  %v2559 = vpack.c.b16 %v1803, %v1796
  %v2560 = vpack.c.b16 %v1811, %v1804
  %v2561 = vpack.c.b16 %v1812, %v1805
  %v2562 = vpack.c.b16 %v1813, %v1806
  %v2563 = vpack.c.b16 %v1814, %v1807
  %v2564 = vpack.c.b16 %v1815, %v1808
  %v2565 = vpack.c.b16 %v1816, %v1809
  %v2566 = vpack.c.b16 %v1817, %v1810
  %v2567 = vpack.c.b16 %v1825, %v1818
  %v2568 = vpack.c.b16 %v1826, %v1819
  %v2569 = vpack.c.b16 %v1827, %v1820
  %v2570 = vpack.c.b16 %v1828, %v1821
  %v2571 = vpack.c.b16 %v1829, %v1822
  %v2572 = vpack.c.b16 %v1830, %v1823
  %v2573 = vpack.c.b16 %v1831, %v1824
  %v2574 = vpack.c.b16 %v1839, %v1832
  %v2575 = vpack.c.b16 %v1840, %v1833
  %v2576 = vpack.c.b16 %v1841, %v1834
  %v2577 = vpack.c.b16 %v1842, %v1835
  %v2578 = vpack.c.b16 %v1843, %v1836
  %v2579 = vpack.c.b16 %v1844, %v1837
  %v2580 = vpack.c.b16 %v1845, %v1838
  %v2581 = vpack.c.b16 %v1853, %v1846
  %v2582 = vpack.c.b16 %v1854, %v1847
  %v2583 = vpack.c.b16 %v1855, %v1848
  %v2584 = vpack.c.b16 %v1856, %v1849
  %v2585 = vpack.c.b16 %v1857, %v1850
  %v2586 = vpack.c.b16 %v1858, %v1851
  %v2587 = vpack.c.b16 %v1859, %v1852
  %v2588 = vpack.c.b16 %v1867, %v1860
  %v2589 = vpack.c.b16 %v1868, %v1861
  %v2590 = vpack.c.b16 %v1869, %v1862
  %v2591 = vpack.c.b16 %v1870, %v1863
  %v2592 = vpack.c.b16 %v1871, %v1864
  %v2593 = vpack.c.b16 %v1872, %v1865
  %v2594 = vpack.c.b16 %v1873, %v1866
  %v2595 = vpack.c.b16 %v1881, %v1874
  %v2596 = vpack.c.b16 %v1882, %v1875
  %v2597 = vpack.c.b16 %v1883, %v1876
  %v2598 = vpack.c.b16 %v1884, %v1877
  %v2599 = vpack.c.b16 %v1885, %v1878
  %v2600 = vpack.c.b16 %v1886, %v1879
  %v2601 = vpack.c.b16 %v1887, %v1880
  %v2602 = vpack.c.b16 %v1895, %v1888
  %v2603 = vpack.c.b16 %v1896, %v1889
  %v2604 = vpack.c.b16 %v1897, %v1890
  %v2605 = vpack.c.b16 %v1898, %v1891
  %v2606 = vpack.c.b16 %v1899, %v1892
  %v2607 = vpack.c.b16 %v1900, %v1893
  %v2608 = vpack.c.b16 %v1901, %v1894
  %v2609 = vpack.c.b16 %v1909, %v1902
  %v2610 = vpack.c.b16 %v1910, %v1903
  %v2611 = vpack.c.b16 %v1911, %v1904
  %v2612 = vpack.c.b16 %v1912, %v1905
  %v2613 = vpack.c.b16 %v1913, %v1906
  %v2614 = vpack.c.b16 %v1914, %v1907
  %v2615 = vpack.c.b16 %v1915, %v1908
  %v2616 = vpack.c.b16 %v1923, %v1916
  %v2617 = vpack.c.b16 %v1924, %v1917
  %v2618 = vpack.c.b16 %v1925, %v1918
  %v2619 = vpack.c.b16 %v1926, %v1919
  %v2620 = vpack.c.b16 %v1927, %v1920
  %v2621 = vpack.c.b16 %v1928, %v1921
  %v2622 = vpack.c.b16 %v1929, %v1922
  %v2623 = vpack.c.b16 %v1937, %v1930
  %v2624 = vpack.c.b16 %v1938, %v1931
  %v2625 = vpack.c.b16 %v1939, %v1932
  %v2626 = vpack.c.b16 %v1940, %v1933
  %v2627 = vpack.c.b16 %v1941, %v1934
  %v2628 = vpack.c.b16 %v1942, %v1935
  %v2629 = vpack.c.b16 %v1943, %v1936
  %v2630 = vpack.c.b16 %v1951, %v1944
  %v2631 = vpack.c.b16 %v1952, %v1945
  %v2632 = vpack.c.b16 %v1953, %v1946
  %v2633 = vpack.c.b16 %v1954, %v1947
  %v2634 = vpack.c.b16 %v1955, %v1948
  %v2635 = vpack.c.b16 %v1956, %v1949
  %v2636 = vpack.c.b16 %v1957, %v1950
  %v2637 = vpack.c.b16 %v1965, %v1958
  %v2638 = vpack.c.b16 %v1966, %v1959
  %v2639 = vpack.c.b16 %v1967, %v1960
  %v2640 = vpack.c.b16 %v1968, %v1961
  %v2641 = vpack.c.b16 %v1969, %v1962
  %v2642 = vpack.c.b16 %v1970, %v1963
  %v2643 = vpack.c.b16 %v1971, %v1964
  %v2644 = vpack.c.b16 %v1979, %v1972
  %v2645 = vpack.c.b16 %v1980, %v1973
  %v2646 = vpack.c.b16 %v1981, %v1974
  %v2647 = vpack.c.b16 %v1982, %v1975
  %v2648 = vpack.c.b16 %v1983, %v1976
  %v2649 = vpack.c.b16 %v1984, %v1977
  %v2650 = vpack.c.b16 %v1985, %v1978
  %v2651 = vpack.c.b16 %v1993, %v1986
  %v2652 = vpack.c.b16 %v1994, %v1987
  %v2653 = vpack.c.b16 %v1995, %v1988
  %v2654 = vpack.c.b16 %v1996, %v1989
  %v2655 = vpack.c.b16 %v1997, %v1990
  %v2656 = vpack.c.b16 %v1998, %v1991
  %v2657 = vpack.c.b16 %v1999, %v1992
  %v2658 = vpack.c.b16 %v2007, %v2000
  %v2659 = vpack.c.b16 %v2008, %v2001
  %v2660 = vpack.c.b16 %v2009, %v2002
  %v2661 = vpack.c.b16 %v2010, %v2003
  %v2662 = vpack.c.b16 %v2011, %v2004
  %v2663 = vpack.c.b16 %v2012, %v2005
  %v2664 = vpack.c.b16 %v2013, %v2006
  %v2665 = vpack.c.b16 %v2021, %v2014
  %v2666 = vpack.c.b16 %v2022, %v2015
  %v2667 = vpack.c.b16 %v2023, %v2016
  %v2668 = vpack.c.b16 %v2024, %v2017
  %v2669 = vpack.c.b16 %v2025, %v2018
  %v2670 = vpack.c.b16 %v2026, %v2019
  %v2671 = vpack.c.b16 %v2027, %v2020
  %v2672 = vpack.c.b16 %v2035, %v2028
  %v2673 = vpack.c.b16 %v2036, %v2029
  %v2674 = vpack.c.b16 %v2037, %v2030
  %v2675 = vpack.c.b16 %v2038, %v2031
  %v2676 = vpack.c.b16 %v2039, %v2032
  %v2677 = vpack.c.b16 %v2040, %v2033
  %v2678 = vpack.c.b16 %v2041, %v2034
  %v2679 = vpack.c.b16 %v2049, %v2042
  %v2680 = vpack.c.b16 %v2050, %v2043
  %v2681 = vpack.c.b16 %v2051, %v2044
  %v2682 = vpack.c.b16 %v2052, %v2045
  %v2683 = vpack.c.b16 %v2053, %v2046
  %v2684 = vpack.c.b16 %v2054, %v2047
  %v2685 = vpack.c.b16 %v2055, %v2048
  %v2686 = vpack.c.b16 %v2063, %v2056
  %v2687 = vpack.c.b16 %v2064, %v2057
  %v2688 = vpack.c.b16 %v2065, %v2058
  %v2689 = vpack.c.b16 %v2066, %v2059
  %v2690 = vpack.c.b16 %v2067, %v2060
  %v2691 = vpack.c.b16 %v2068, %v2061
  %v2692 = vpack.c.b16 %v2069, %v2062
  %v2693 = vpack.c.b16 %v2077, %v2070
  %v2694 = vpack.c.b16 %v2078, %v2071
  %v2695 = vpack.c.b16 %v2079, %v2072
  %v2696 = vpack.c.b16 %v2080, %v2073
  %v2697 = vpack.c.b16 %v2081, %v2074
  %v2698 = vpack.c.b16 %v2082, %v2075
  %v2699 = vpack.c.b16 %v2083, %v2076
  %v2700 = vpack.c.b16 %v2091, %v2084
  %v2701 = vpack.c.b16 %v2092, %v2085
  %v2702 = vpack.c.b16 %v2093, %v2086
  %v2703 = vpack.c.b16 %v2094, %v2087
  %v2704 = vpack.c.b16 %v2095, %v2088
  %v2705 = vpack.c.b16 %v2096, %v2089
  %v2706 = vpack.c.b16 %v2097, %v2090
  %v2707 = vpack.c.b16 %v2105, %v2098
  %v2708 = vpack.c.b16 %v2106, %v2099
  %v2709 = vpack.c.b16 %v2107, %v2100
  %v2710 = vpack.c.b16 %v2108, %v2101
  %v2711 = vpack.c.b16 %v2109, %v2102
  %v2712 = vpack.c.b16 %v2110, %v2103
  %v2713 = vpack.c.b16 %v2111, %v2104
  %v2714 = vpack.c.b16 %v2119, %v2112
  %v2715 = vpack.c.b16 %v2120, %v2113
  %v2716 = vpack.c.b16 %v2121, %v2114
  %v2717 = vpack.c.b16 %v2122, %v2115
  %v2718 = vpack.c.b16 %v2123, %v2116
  %v2719 = vpack.c.b16 %v2124, %v2117
  %v2720 = vpack.c.b16 %v2125, %v2118
  %v2721 = vpack.c.b16 %v2133, %v2126
  %v2722 = vpack.c.b16 %v2134, %v2127
  %v2723 = vpack.c.b16 %v2135, %v2128
  %v2724 = vpack.c.b16 %v2136, %v2129
  %v2725 = vpack.c.b16 %v2137, %v2130
  %v2726 = vpack.c.b16 %v2138, %v2131
  %v2727 = vpack.c.b16 %v2139, %v2132
  %v2728 = vpack.c.b16 %v2147, %v2140
  %v2729 = vpack.c.b16 %v2148, %v2141
  %v2730 = vpack.c.b16 %v2149, %v2142
  %v2731 = vpack.c.b16 %v2150, %v2143
  %v2732 = vpack.c.b16 %v2151, %v2144
  %v2733 = vpack.c.b16 %v2152, %v2145
  %v2734 = vpack.c.b16 %v2153, %v2146
  %v2735 = vpack.c.b16 %v2161, %v2154
  %v2736 = vpack.c.b16 %v2162, %v2155
  %v2737 = vpack.c.b16 %v2163, %v2156
  %v2738 = vpack.c.b16 %v2164, %v2157
  %v2739 = vpack.c.b16 %v2165, %v2158
  %v2740 = vpack.c.b16 %v2166, %v2159
  %v2741 = vpack.c.b16 %v2167, %v2160
  %v2742 = vpack.c.b16 %v2175, %v2168
  %v2743 = vpack.c.b16 %v2176, %v2169
  %v2744 = vpack.c.b16 %v2177, %v2170
  %v2745 = vpack.c.b16 %v2178, %v2171
  %v2746 = vpack.c.b16 %v2179, %v2172
  %v2747 = vpack.c.b16 %v2180, %v2173
  %v2748 = vpack.c.b16 %v2181, %v2174
  %v2749 = vpack.c.b16 %v2189, %v2182
  %v2750 = vpack.c.b16 %v2190, %v2183
  %v2751 = vpack.c.b16 %v2191, %v2184
  %v2752 = vpack.c.b16 %v2192, %v2185
  %v2753 = vpack.c.b16 %v2193, %v2186
  %v2754 = vpack.c.b16 %v2194, %v2187
  %v2755 = vpack.c.b16 %v2195, %v2188
  %v2756 = vpack.c.b16 %v2203, %v2196
  %v2757 = vpack.c.b16 %v2204, %v2197
  %v2758 = vpack.c.b16 %v2205, %v2198
  %v2759 = vpack.c.b16 %v2206, %v2199
  %v2760 = vpack.c.b16 %v2207, %v2200
  %v2761 = vpack.c.b16 %v2208, %v2201
  %v2762 = vpack.c.b16 %v2209, %v2202
  %v2763 = vpack.c.b16 %v2217, %v2210
  %v2764 = vpack.c.b16 %v2218, %v2211
  %v2765 = vpack.c.b16 %v2219, %v2212
  %v2766 = vpack.c.b16 %v2220, %v2213
  %v2767 = vpack.c.b16 %v2221, %v2214
  %v2768 = vpack.c.b16 %v2222, %v2215
  %v2769 = vpack.c.b16 %v2223, %v2216
  %v2770 = vpack.c.b16 %v2231, %v2224
  %v2771 = vpack.c.b16 %v2232, %v2225
  %v2772 = vpack.c.b16 %v2233, %v2226
  %v2773 = vpack.c.b16 %v2234, %v2227
  %v2774 = vpack.c.b16 %v2235, %v2228
  %v2775 = vpack.c.b16 %v2236, %v2229
  %v2776 = vpack.c.b16 %v2237, %v2230
  %v2777 = vpack.c.b16 %v2245, %v2238
  %v2778 = vpack.c.b16 %v2246, %v2239
  %v2779 = vpack.c.b16 %v2247, %v2240
  %v2780 = vpack.c.b16 %v2248, %v2241
  %v2781 = vpack.c.b16 %v2249, %v2242
  %v2782 = vpack.c.b16 %v2250, %v2243
  %v2783 = vpack.c.b16 %v2251, %v2244
  %v2784 = vpack.c.b16 %v2259, %v2252
  %v2785 = vpack.c.b16 %v2260, %v2253
  %v2786 = vpack.c.b16 %v2261, %v2254
  %v2787 = vpack.c.b16 %v2262, %v2255
  %v2788 = vpack.c.b16 %v2263, %v2256
  %v2789 = vpack.c.b16 %v2264, %v2257
  %v2790 = vpack.c.b16 %v2265, %v2258
  %v2791 = vpack.c.b16 %v2273, %v2266
  %v2792 = vpack.c.b16 %v2274, %v2267
  %v2793 = vpack.c.b16 %v2275, %v2268
  %v2794 = vpack.c.b16 %v2276, %v2269
  %v2795 = vpack.c.b16 %v2277, %v2270
  %v2796 = vpack.c.b16 %v2278, %v2271
  %v2797 = vpack.c.b16 %v2279, %v2272
  %v2798 = vpack.c.b16 %v2287, %v2280
  %v2799 = vpack.c.b16 %v2288, %v2281
  %v2800 = vpack.c.b16 %v2289, %v2282
  %v2801 = vpack.c.b16 %v2290, %v2283
  %v2802 = vpack.c.b16 %v2291, %v2284
  %v2803 = vpack.c.b16 %v2292, %v2285
  %v2804 = vpack.c.b16 %v2293, %v2286
  %v2805 = vpack.c.b16 %v2301, %v2294
  %v2806 = vpack.c.b16 %v2302, %v2295
  %v2807 = vpack.c.b16 %v2303, %v2296
  %v2808 = vpack.c.b16 %v2304, %v2297
  %v2809 = vpack.c.b16 %v2305, %v2298
  %v2810 = vpack.c.b16 %v2306, %v2299
  %v2811 = vpack.c.b16 %v2307, %v2300
  %v2812 = vpack.c.b16 %v2315, %v2308
  %v2813 = vpack.c.b16 %v2316, %v2309
  %v2814 = vpack.c.b16 %v2317, %v2310
  %v2815 = vpack.c.b16 %v2318, %v2311
  %v2816 = vpack.c.b16 %v2319, %v2312
  %v2817 = vpack.c.b16 %v2320, %v2313
  %v2818 = vpack.c.b16 %v2321, %v2314
  %v2819 = vpack.c.b16 %v2329, %v2322
  %v2820 = vpack.c.b16 %v2330, %v2323
  %v2821 = vpack.c.b16 %v2331, %v2324
  %v2822 = vpack.c.b16 %v2332, %v2325
  %v2823 = vpack.c.b16 %v2333, %v2326
  %v2824 = vpack.c.b16 %v2334, %v2327
  %v2825 = vpack.c.b16 %v2335, %v2328
  %v2826 = vpack.c.b16 %v2343, %v2336
  %v2827 = vpack.c.b16 %v2344, %v2337
  %v2828 = vpack.c.b16 %v2345, %v2338
  %v2829 = vpack.c.b16 %v2346, %v2339
  %v2830 = vpack.c.b16 %v2347, %v2340
  %v2831 = vpack.c.b16 %v2348, %v2341
  %v2832 = vpack.c.b16 %v2349, %v2342
  %v2833 = vpack.c.b16 %v2357, %v2350
  %v2834 = vpack.c.b16 %v2358, %v2351
  %v2835 = vpack.c.b16 %v2359, %v2352
  %v2836 = vpack.c.b16 %v2360, %v2353
  %v2837 = vpack.c.b16 %v2361, %v2354
  %v2838 = vpack.c.b16 %v2362, %v2355
  %v2839 = vpack.c.b16 %v2363, %v2356
  %v2840 = vpack.c.b16 %v2371, %v2364
  %v2841 = vpack.c.b16 %v2372, %v2365
  %v2842 = vpack.c.b16 %v2373, %v2366
  %v2843 = vpack.c.b16 %v2374, %v2367
  %v2844 = vpack.c.b16 %v2375, %v2368
  %v2845 = vpack.c.b16 %v2376, %v2369
  %v2846 = vpack.c.b16 %v2377, %v2370
  %v2847 = vpack.c.b16 %v2385, %v2378
  %v2848 = vpack.c.b16 %v2386, %v2379
  %v2849 = vpack.c.b16 %v2387, %v2380
  %v2850 = vpack.c.b16 %v2388, %v2381
  %v2851 = vpack.c.b16 %v2389, %v2382
  %v2852 = vpack.c.b16 %v2390, %v2383
  %v2853 = vpack.c.b16 %v2391, %v2384
  %v2854 = vpack.c.b16 %v2399, %v2392
  %v2855 = vpack.c.b16 %v2400, %v2393
  %v2856 = vpack.c.b16 %v2401, %v2394
  %v2857 = vpack.c.b16 %v2402, %v2395
  %v2858 = vpack.c.b16 %v2403, %v2396
  %v2859 = vpack.c.b16 %v2404, %v2397
  %v2860 = vpack.c.b16 %v2405, %v2398
  %v2861 = vpack.c.b16 %v2413, %v2406
  %v2862 = vpack.c.b16 %v2414, %v2407
  %v2863 = vpack.c.b16 %v2415, %v2408
  %v2864 = vpack.c.b16 %v2416, %v2409
  %v2865 = vpack.c.b16 %v2417, %v2410
  %v2866 = vpack.c.b16 %v2418, %v2411
  %v2867 = vpack.c.b16 %v2419, %v2412
  %v2868 = vpack.c.b16 %v2427, %v2420
  %v2869 = vpack.c.b16 %v2428, %v2421
  %v2870 = vpack.c.b16 %v2429, %v2422
  %v2871 = vpack.c.b16 %v2430, %v2423
  %v2872 = vpack.c.b16 %v2431, %v2424
  %v2873 = vpack.c.b16 %v2432, %v2425
  %v2874 = vpack.c.b16 %v2433, %v2426
  %v2875 = vpack.c.b16 %v2434, %v2434
  %v2876 = vpack.c.b16 %v2435, %v2435
  %v2877 = vpack.c.b16 %v2436, %v2436
  %v2878 = vpack.c.b16 %v2437, %v2437
  %v2879 = vpack.c.b16 %v2438, %v2438
  %v2880 = vpack.c.b16 %v2439, %v2439
  %v2881 = vpack.c.b16 %v2440, %v2440
  %v3317 = vsel %vm412, %v565, 0
  %vm3319 = vcmask 1043456
  %v3321 = vsel %vm3319, %v2875, 0
  %v3324 = vsel %vm3319, %v2876, 0
  %v3327 = vsel %vm3319, %v2877, 0
  %v3330 = vsel %vm3319, %v2878, 0
  %v3333 = vsel %vm3319, %v2879, 0
  %v3336 = vsel %vm3319, %v2880, 0
  %v3339 = vsel %vm3319, %v2881, 0
  %3341 = vmatprep.subr.bf16.mxu0 %v2491
  %3342 = vmatpush1.bf16.msra.mxu0 %v2490
  %3343 = vmatprep.subr.bf16.mxu0 %v2484
  %3344 = vmatpush1.bf16.msra.mxu0 %v2483
  %3345 = vmatprep.subr.bf16.mxu0 %v2477
  %3346 = vmatpush1.bf16.msra.mxu0 %v2476
  %3347 = vmatprep.subr.bf16.mxu0 %v2470
  %3348 = vmatpush1.bf16.msra.mxu0 %v2469
  %3349 = vmatprep.subr.bf16.mxu0 %v2463
  %3350 = vmatpush1.bf16.msra.mxu0 %v2462
  %3351 = vmatprep.subr.bf16.mxu0 %v2456
  %3352 = vmatpush1.bf16.msra.mxu0 %v2455
  %3353 = vmatprep.subr.bf16.mxu0 %v2449
  %3354 = vmatpush1.bf16.msra.mxu0 %v2448
  %3355 = vmatprep.subr.bf16.mxu0 %v2442
  %3356 = vmatpush1.bf16.msra.mxu0 %v2441
  %3357 = vmatprep.subr.bf16.mxu0 %v2547
  %3358 = vmatpush2.bf16.msra.mxu0 %v2546
  %3359 = vmatprep.subr.bf16.mxu0 %v2540
  %3360 = vmatpush2.bf16.msra.mxu0 %v2539
  %3361 = vmatprep.subr.bf16.mxu0 %v2533
  %3362 = vmatpush2.bf16.msra.mxu0 %v2532
  %3363 = vmatprep.subr.bf16.mxu0 %v2526
  %3364 = vmatpush2.bf16.msra.mxu0 %v2525
  %3365 = vmatprep.subr.bf16.mxu0 %v2519
  %3366 = vmatpush2.bf16.msra.mxu0 %v2518
  %3367 = vmatprep.subr.bf16.mxu0 %v2512
  %3368 = vmatpush2.bf16.msra.mxu0 %v2511
  %3369 = vmatprep.subr.bf16.mxu0 %v2505
  %3370 = vmatpush2.bf16.msra.mxu0 %v2504
  %3371 = vmatprep.subr.bf16.mxu0 %v2498
  %3372 = vmatpush2.bf16.msra.mxu0 %v2497
  %3373 = vmatprep.mubr.bf16.mxu0 %v559
  %3374 = vmatmul.mubr.bf16.gmra.mxu0 %v558
  %v3375 = vpop.f32.mrf.mxu0
  %v3376 = vadd.f32 0.0, %v3375
  %v3377 = vpop.f32.mrf.mxu0
  %v3378 = vadd.f32 0.0, %v3377
  %v3379 = vpop.f32.mrf.mxu0
  %v3380 = vpop.f32.mrf.mxu0
  %3381 = vdwg.mxu0
  %3382 = vmatprep.subr.bf16.mxu0 %v2603
  %3383 = vmatpush1.bf16.msra.mxu0 %v2602
  %3384 = vmatprep.subr.bf16.mxu0 %v2596
  %3385 = vmatpush1.bf16.msra.mxu0 %v2595
  %3386 = vmatprep.subr.bf16.mxu0 %v2589
  %3387 = vmatpush1.bf16.msra.mxu0 %v2588
  %3388 = vmatprep.subr.bf16.mxu0 %v2582
  %3389 = vmatpush1.bf16.msra.mxu0 %v2581
  %3390 = vmatprep.subr.bf16.mxu0 %v2575
  %3391 = vmatpush1.bf16.msra.mxu0 %v2574
  %3392 = vmatprep.subr.bf16.mxu0 %v2568
  %3393 = vmatpush1.bf16.msra.mxu0 %v2567
  %3394 = vmatprep.subr.bf16.mxu0 %v2561
  %3395 = vmatpush1.bf16.msra.mxu0 %v2560
  %3396 = vmatprep.subr.bf16.mxu0 %v2554
  %3397 = vmatpush1.bf16.msra.mxu0 %v2553
  %3398 = vmatprep.subr.bf16.mxu0 %v2659
  %3399 = vmatpush2.bf16.msra.mxu0 %v2658
  %3400 = vmatprep.subr.bf16.mxu0 %v2652
  %3401 = vmatpush2.bf16.msra.mxu0 %v2651
  %3402 = vmatprep.subr.bf16.mxu0 %v2645
  %3403 = vmatpush2.bf16.msra.mxu0 %v2644
  %3404 = vmatprep.subr.bf16.mxu0 %v2638
  %3405 = vmatpush2.bf16.msra.mxu0 %v2637
  %3406 = vmatprep.subr.bf16.mxu0 %v2631
  %3407 = vmatpush2.bf16.msra.mxu0 %v2630
  %3408 = vmatprep.subr.bf16.mxu0 %v2624
  %3409 = vmatpush2.bf16.msra.mxu0 %v2623
  %3410 = vmatprep.subr.bf16.mxu0 %v2617
  %3411 = vmatpush2.bf16.msra.mxu0 %v2616
  %3412 = vmatprep.subr.bf16.mxu0 %v2610
  %3413 = vmatpush2.bf16.msra.mxu0 %v2609
  %3414 = vmatprep.mubr.bf16.mxu0 %v561
  %3415 = vmatmul.mubr.bf16.gmra.mxu0 %v560
  %v3416 = vpop.f32.mrf.mxu0
  %v3417 = vadd.f32 %v3376, %v3416
  %v3418 = vpop.f32.mrf.mxu0
  %v3419 = vadd.f32 %v3378, %v3418
  %v3420 = vpop.f32.mrf.mxu0
  %v3421 = vpop.f32.mrf.mxu0
  %3422 = vdwg.mxu0
  %3423 = vmatprep.subr.bf16.mxu0 %v2715
  %3424 = vmatpush1.bf16.msra.mxu0 %v2714
  %3425 = vmatprep.subr.bf16.mxu0 %v2708
  %3426 = vmatpush1.bf16.msra.mxu0 %v2707
  %3427 = vmatprep.subr.bf16.mxu0 %v2701
  %3428 = vmatpush1.bf16.msra.mxu0 %v2700
  %3429 = vmatprep.subr.bf16.mxu0 %v2694
  %3430 = vmatpush1.bf16.msra.mxu0 %v2693
  %3431 = vmatprep.subr.bf16.mxu0 %v2687
  %3432 = vmatpush1.bf16.msra.mxu0 %v2686
  %3433 = vmatprep.subr.bf16.mxu0 %v2680
  %3434 = vmatpush1.bf16.msra.mxu0 %v2679
  %3435 = vmatprep.subr.bf16.mxu0 %v2673
  %3436 = vmatpush1.bf16.msra.mxu0 %v2672
  %3437 = vmatprep.subr.bf16.mxu0 %v2666
  %3438 = vmatpush1.bf16.msra.mxu0 %v2665
  %3439 = vmatprep.subr.bf16.mxu0 %v2771
  %3440 = vmatpush2.bf16.msra.mxu0 %v2770
  %3441 = vmatprep.subr.bf16.mxu0 %v2764
  %3442 = vmatpush2.bf16.msra.mxu0 %v2763
  %3443 = vmatprep.subr.bf16.mxu0 %v2757
  %3444 = vmatpush2.bf16.msra.mxu0 %v2756
  %3445 = vmatprep.subr.bf16.mxu0 %v2750
  %3446 = vmatpush2.bf16.msra.mxu0 %v2749
  %3447 = vmatprep.subr.bf16.mxu0 %v2743
  %3448 = vmatpush2.bf16.msra.mxu0 %v2742
  %3449 = vmatprep.subr.bf16.mxu0 %v2736
  %3450 = vmatpush2.bf16.msra.mxu0 %v2735
  %3451 = vmatprep.subr.bf16.mxu0 %v2729
  %3452 = vmatpush2.bf16.msra.mxu0 %v2728
  %3453 = vmatprep.subr.bf16.mxu0 %v2722
  %3454 = vmatpush2.bf16.msra.mxu0 %v2721
  %3455 = vmatprep.mubr.bf16.mxu0 %v563
  %3456 = vmatmul.mubr.bf16.gmra.mxu0 %v562
  %v3457 = vpop.f32.mrf.mxu0
  %v3458 = vadd.f32 %v3417, %v3457
  %v3459 = vpop.f32.mrf.mxu0
  %v3460 = vadd.f32 %v3419, %v3459
  %v3461 = vpop.f32.mrf.mxu0
  %v3462 = vpop.f32.mrf.mxu0
  %3463 = vdwg.mxu0
  %3464 = vmatprep.subr.bf16.mxu0 %v2827
  %3465 = vmatpush1.bf16.msra.mxu0 %v2826
  %3466 = vmatprep.subr.bf16.mxu0 %v2820
  %3467 = vmatpush1.bf16.msra.mxu0 %v2819
  %3468 = vmatprep.subr.bf16.mxu0 %v2813
  %3469 = vmatpush1.bf16.msra.mxu0 %v2812
  %3470 = vmatprep.subr.bf16.mxu0 %v2806
  %3471 = vmatpush1.bf16.msra.mxu0 %v2805
  %3472 = vmatprep.subr.bf16.mxu0 %v2799
  %3473 = vmatpush1.bf16.msra.mxu0 %v2798
  %3474 = vmatprep.subr.bf16.mxu0 %v2792
  %3475 = vmatpush1.bf16.msra.mxu0 %v2791
  %3476 = vmatprep.subr.bf16.mxu0 %v2785
  %3477 = vmatpush1.bf16.msra.mxu0 %v2784
  %3478 = vmatprep.subr.bf16.mxu0 %v2778
  %3479 = vmatpush1.bf16.msra.mxu0 %v2777
  %3480 = vmatprep.subr.bf16.mxu0 0
  %3481 = vmatpush2.bf16.msra.mxu0 0
  %3482 = vmatprep.subr.bf16.mxu0 %v3324
  %3483 = vmatpush2.bf16.msra.mxu0 %v3321
  %3484 = vmatprep.subr.bf16.mxu0 %v2869
  %3485 = vmatpush2.bf16.msra.mxu0 %v2868
  %3486 = vmatprep.subr.bf16.mxu0 %v2862
  %3487 = vmatpush2.bf16.msra.mxu0 %v2861
  %3488 = vmatprep.subr.bf16.mxu0 %v2855
  %3489 = vmatpush2.bf16.msra.mxu0 %v2854
  %3490 = vmatprep.subr.bf16.mxu0 %v2848
  %3491 = vmatpush2.bf16.msra.mxu0 %v2847
  %3492 = vmatprep.subr.bf16.mxu0 %v2841
  %3493 = vmatpush2.bf16.msra.mxu0 %v2840
  %3494 = vmatprep.subr.bf16.mxu0 %v2834
  %3495 = vmatpush2.bf16.msra.mxu0 %v2833
  %3496 = vmatprep.mubr.bf16.mxu0 %v3317
  %3497 = vmatmul.mubr.bf16.gmra.mxu0 %v564
  %v3498 = vpop.f32.mrf.mxu0
  %v3499 = vadd.f32 %v3458, %v3498
  %v3500 = vpop.f32.mrf.mxu0
  %v3501 = vadd.f32 %v3460, %v3500
  %v3502 = vpop.f32.mrf.mxu0
  %v3503 = vpop.f32.mrf.mxu0
  %3504 = vdwg.mxu0
  %3505 = vmatprep.subr.bf16.mxu0 %v2493
  %3506 = vmatpush1.bf16.msra.mxu0 %v2492
  %3507 = vmatprep.subr.bf16.mxu0 %v2486
  %3508 = vmatpush1.bf16.msra.mxu0 %v2485
  %3509 = vmatprep.subr.bf16.mxu0 %v2479
  %3510 = vmatpush1.bf16.msra.mxu0 %v2478
  %3511 = vmatprep.subr.bf16.mxu0 %v2472
  %3512 = vmatpush1.bf16.msra.mxu0 %v2471
  %3513 = vmatprep.subr.bf16.mxu0 %v2465
  %3514 = vmatpush1.bf16.msra.mxu0 %v2464
  %3515 = vmatprep.subr.bf16.mxu0 %v2458
  %3516 = vmatpush1.bf16.msra.mxu0 %v2457
  %3517 = vmatprep.subr.bf16.mxu0 %v2451
  %3518 = vmatpush1.bf16.msra.mxu0 %v2450
  %3519 = vmatprep.subr.bf16.mxu0 %v2444
  %3520 = vmatpush1.bf16.msra.mxu0 %v2443
  %3521 = vmatprep.subr.bf16.mxu0 %v2549
  %3522 = vmatpush2.bf16.msra.mxu0 %v2548
  %3523 = vmatprep.subr.bf16.mxu0 %v2542
  %3524 = vmatpush2.bf16.msra.mxu0 %v2541
  %3525 = vmatprep.subr.bf16.mxu0 %v2535
  %3526 = vmatpush2.bf16.msra.mxu0 %v2534
  %3527 = vmatprep.subr.bf16.mxu0 %v2528
  %3528 = vmatpush2.bf16.msra.mxu0 %v2527
  %3529 = vmatprep.subr.bf16.mxu0 %v2521
  %3530 = vmatpush2.bf16.msra.mxu0 %v2520
  %3531 = vmatprep.subr.bf16.mxu0 %v2514
  %3532 = vmatpush2.bf16.msra.mxu0 %v2513
  %3533 = vmatprep.subr.bf16.mxu0 %v2507
  %3534 = vmatpush2.bf16.msra.mxu0 %v2506
  %3535 = vmatprep.subr.bf16.mxu0 %v2500
  %3536 = vmatpush2.bf16.msra.mxu0 %v2499
  %3537 = vmatprep.mubr.bf16.mxu0 %v559
  %3538 = vmatmul.mubr.bf16.gmra.mxu0 %v558
  %v3539 = vpop.f32.mrf.mxu0
  %v3540 = vadd.f32 0.0, %v3539
  %v3541 = vpop.f32.mrf.mxu0
  %v3542 = vadd.f32 0.0, %v3541
  %v3543 = vpop.f32.mrf.mxu0
  %v3544 = vpop.f32.mrf.mxu0
  %3545 = vdwg.mxu0
  %3546 = vmatprep.subr.bf16.mxu0 %v2605
  %3547 = vmatpush1.bf16.msra.mxu0 %v2604
  %3548 = vmatprep.subr.bf16.mxu0 %v2598
  %3549 = vmatpush1.bf16.msra.mxu0 %v2597
  %3550 = vmatprep.subr.bf16.mxu0 %v2591
  %3551 = vmatpush1.bf16.msra.mxu0 %v2590
  %3552 = vmatprep.subr.bf16.mxu0 %v2584
  %3553 = vmatpush1.bf16.msra.mxu0 %v2583
  %3554 = vmatprep.subr.bf16.mxu0 %v2577
  %3555 = vmatpush1.bf16.msra.mxu0 %v2576
  %3556 = vmatprep.subr.bf16.mxu0 %v2570
  %3557 = vmatpush1.bf16.msra.mxu0 %v2569
  %3558 = vmatprep.subr.bf16.mxu0 %v2563
  %3559 = vmatpush1.bf16.msra.mxu0 %v2562
  %3560 = vmatprep.subr.bf16.mxu0 %v2556
  %3561 = vmatpush1.bf16.msra.mxu0 %v2555
  %3562 = vmatprep.subr.bf16.mxu0 %v2661
  %3563 = vmatpush2.bf16.msra.mxu0 %v2660
  %3564 = vmatprep.subr.bf16.mxu0 %v2654
  %3565 = vmatpush2.bf16.msra.mxu0 %v2653
  %3566 = vmatprep.subr.bf16.mxu0 %v2647
  %3567 = vmatpush2.bf16.msra.mxu0 %v2646
  %3568 = vmatprep.subr.bf16.mxu0 %v2640
  %3569 = vmatpush2.bf16.msra.mxu0 %v2639
  %3570 = vmatprep.subr.bf16.mxu0 %v2633
  %3571 = vmatpush2.bf16.msra.mxu0 %v2632
  %3572 = vmatprep.subr.bf16.mxu0 %v2626
  %3573 = vmatpush2.bf16.msra.mxu0 %v2625
  %3574 = vmatprep.subr.bf16.mxu0 %v2619
  %3575 = vmatpush2.bf16.msra.mxu0 %v2618
  %3576 = vmatprep.subr.bf16.mxu0 %v2612
  %3577 = vmatpush2.bf16.msra.mxu0 %v2611
  %3578 = vmatprep.mubr.bf16.mxu0 %v561
  %3579 = vmatmul.mubr.bf16.gmra.mxu0 %v560
  %v3580 = vpop.f32.mrf.mxu0
  %v3581 = vadd.f32 %v3540, %v3580
  %v3582 = vpop.f32.mrf.mxu0
  %v3583 = vadd.f32 %v3542, %v3582
  %v3584 = vpop.f32.mrf.mxu0
  %v3585 = vpop.f32.mrf.mxu0
  %3586 = vdwg.mxu0
  %3587 = vmatprep.subr.bf16.mxu0 %v2717
  %3588 = vmatpush1.bf16.msra.mxu0 %v2716
  %3589 = vmatprep.subr.bf16.mxu0 %v2710
  %3590 = vmatpush1.bf16.msra.mxu0 %v2709
  %3591 = vmatprep.subr.bf16.mxu0 %v2703
  %3592 = vmatpush1.bf16.msra.mxu0 %v2702
  %3593 = vmatprep.subr.bf16.mxu0 %v2696
  %3594 = vmatpush1.bf16.msra.mxu0 %v2695
  %3595 = vmatprep.subr.bf16.mxu0 %v2689
  %3596 = vmatpush1.bf16.msra.mxu0 %v2688
  %3597 = vmatprep.subr.bf16.mxu0 %v2682
  %3598 = vmatpush1.bf16.msra.mxu0 %v2681
  %3599 = vmatprep.subr.bf16.mxu0 %v2675
  %3600 = vmatpush1.bf16.msra.mxu0 %v2674
  %3601 = vmatprep.subr.bf16.mxu0 %v2668
  %3602 = vmatpush1.bf16.msra.mxu0 %v2667
  %3603 = vmatprep.subr.bf16.mxu0 %v2773
  %3604 = vmatpush2.bf16.msra.mxu0 %v2772
  %3605 = vmatprep.subr.bf16.mxu0 %v2766
  %3606 = vmatpush2.bf16.msra.mxu0 %v2765
  %3607 = vmatprep.subr.bf16.mxu0 %v2759
  %3608 = vmatpush2.bf16.msra.mxu0 %v2758
  %3609 = vmatprep.subr.bf16.mxu0 %v2752
  %3610 = vmatpush2.bf16.msra.mxu0 %v2751
  %3611 = vmatprep.subr.bf16.mxu0 %v2745
  %3612 = vmatpush2.bf16.msra.mxu0 %v2744
  %3613 = vmatprep.subr.bf16.mxu0 %v2738
  %3614 = vmatpush2.bf16.msra.mxu0 %v2737
  %3615 = vmatprep.subr.bf16.mxu0 %v2731
  %3616 = vmatpush2.bf16.msra.mxu0 %v2730
  %3617 = vmatprep.subr.bf16.mxu0 %v2724
  %3618 = vmatpush2.bf16.msra.mxu0 %v2723
  %3619 = vmatprep.mubr.bf16.mxu0 %v563
  %3620 = vmatmul.mubr.bf16.gmra.mxu0 %v562
  %v3621 = vpop.f32.mrf.mxu0
  %v3622 = vadd.f32 %v3581, %v3621
  %v3623 = vpop.f32.mrf.mxu0
  %v3624 = vadd.f32 %v3583, %v3623
  %v3625 = vpop.f32.mrf.mxu0
  %v3626 = vpop.f32.mrf.mxu0
  %3627 = vdwg.mxu0
  %3628 = vmatprep.subr.bf16.mxu0 %v2829
  %3629 = vmatpush1.bf16.msra.mxu0 %v2828
  %3630 = vmatprep.subr.bf16.mxu0 %v2822
  %3631 = vmatpush1.bf16.msra.mxu0 %v2821
  %3632 = vmatprep.subr.bf16.mxu0 %v2815
  %3633 = vmatpush1.bf16.msra.mxu0 %v2814
  %3634 = vmatprep.subr.bf16.mxu0 %v2808
  %3635 = vmatpush1.bf16.msra.mxu0 %v2807
  %3636 = vmatprep.subr.bf16.mxu0 %v2801
  %3637 = vmatpush1.bf16.msra.mxu0 %v2800
  %3638 = vmatprep.subr.bf16.mxu0 %v2794
  %3639 = vmatpush1.bf16.msra.mxu0 %v2793
  %3640 = vmatprep.subr.bf16.mxu0 %v2787
  %3641 = vmatpush1.bf16.msra.mxu0 %v2786
  %3642 = vmatprep.subr.bf16.mxu0 %v2780
  %3643 = vmatpush1.bf16.msra.mxu0 %v2779
  %3644 = vmatprep.subr.bf16.mxu0 0
  %3645 = vmatpush2.bf16.msra.mxu0 0
  %3646 = vmatprep.subr.bf16.mxu0 %v3330
  %3647 = vmatpush2.bf16.msra.mxu0 %v3327
  %3648 = vmatprep.subr.bf16.mxu0 %v2871
  %3649 = vmatpush2.bf16.msra.mxu0 %v2870
  %3650 = vmatprep.subr.bf16.mxu0 %v2864
  %3651 = vmatpush2.bf16.msra.mxu0 %v2863
  %3652 = vmatprep.subr.bf16.mxu0 %v2857
  %3653 = vmatpush2.bf16.msra.mxu0 %v2856
  %3654 = vmatprep.subr.bf16.mxu0 %v2850
  %3655 = vmatpush2.bf16.msra.mxu0 %v2849
  %3656 = vmatprep.subr.bf16.mxu0 %v2843
  %3657 = vmatpush2.bf16.msra.mxu0 %v2842
  %3658 = vmatprep.subr.bf16.mxu0 %v2836
  %3659 = vmatpush2.bf16.msra.mxu0 %v2835
  %3660 = vmatprep.mubr.bf16.mxu0 %v3317
  %3661 = vmatmul.mubr.bf16.gmra.mxu0 %v564
  %v3662 = vpop.f32.mrf.mxu0
  %v3663 = vadd.f32 %v3622, %v3662
  %v3664 = vpop.f32.mrf.mxu0
  %v3665 = vadd.f32 %v3624, %v3664
  %v3666 = vpop.f32.mrf.mxu0
  %v3667 = vpop.f32.mrf.mxu0
  %3668 = vdwg.mxu0
  %3669 = vmatprep.subr.bf16.mxu0 %v2495
  %3670 = vmatpush1.bf16.msra.mxu0 %v2494
  %3671 = vmatprep.subr.bf16.mxu0 %v2488
  %3672 = vmatpush1.bf16.msra.mxu0 %v2487
  %3673 = vmatprep.subr.bf16.mxu0 %v2481
  %3674 = vmatpush1.bf16.msra.mxu0 %v2480
  %3675 = vmatprep.subr.bf16.mxu0 %v2474
  %3676 = vmatpush1.bf16.msra.mxu0 %v2473
  %3677 = vmatprep.subr.bf16.mxu0 %v2467
  %3678 = vmatpush1.bf16.msra.mxu0 %v2466
  %3679 = vmatprep.subr.bf16.mxu0 %v2460
  %3680 = vmatpush1.bf16.msra.mxu0 %v2459
  %3681 = vmatprep.subr.bf16.mxu0 %v2453
  %3682 = vmatpush1.bf16.msra.mxu0 %v2452
  %3683 = vmatprep.subr.bf16.mxu0 %v2446
  %3684 = vmatpush1.bf16.msra.mxu0 %v2445
  %3685 = vmatprep.subr.bf16.mxu0 %v2551
  %3686 = vmatpush2.bf16.msra.mxu0 %v2550
  %3687 = vmatprep.subr.bf16.mxu0 %v2544
  %3688 = vmatpush2.bf16.msra.mxu0 %v2543
  %3689 = vmatprep.subr.bf16.mxu0 %v2537
  %3690 = vmatpush2.bf16.msra.mxu0 %v2536
  %3691 = vmatprep.subr.bf16.mxu0 %v2530
  %3692 = vmatpush2.bf16.msra.mxu0 %v2529
  %3693 = vmatprep.subr.bf16.mxu0 %v2523
  %3694 = vmatpush2.bf16.msra.mxu0 %v2522
  %3695 = vmatprep.subr.bf16.mxu0 %v2516
  %3696 = vmatpush2.bf16.msra.mxu0 %v2515
  %3697 = vmatprep.subr.bf16.mxu0 %v2509
  %3698 = vmatpush2.bf16.msra.mxu0 %v2508
  %3699 = vmatprep.subr.bf16.mxu0 %v2502
  %3700 = vmatpush2.bf16.msra.mxu0 %v2501
  %3701 = vmatprep.mubr.bf16.mxu0 %v559
  %3702 = vmatmul.mubr.bf16.gmra.mxu0 %v558
  %v3703 = vpop.f32.mrf.mxu0
  %v3704 = vadd.f32 0.0, %v3703
  %v3705 = vpop.f32.mrf.mxu0
  %v3706 = vadd.f32 0.0, %v3705
  %v3707 = vpop.f32.mrf.mxu0
  %v3708 = vpop.f32.mrf.mxu0
  %3709 = vdwg.mxu0
  %3710 = vmatprep.subr.bf16.mxu0 %v2607
  %3711 = vmatpush1.bf16.msra.mxu0 %v2606
  %3712 = vmatprep.subr.bf16.mxu0 %v2600
  %3713 = vmatpush1.bf16.msra.mxu0 %v2599
  %3714 = vmatprep.subr.bf16.mxu0 %v2593
  %3715 = vmatpush1.bf16.msra.mxu0 %v2592
  %3716 = vmatprep.subr.bf16.mxu0 %v2586
  %3717 = vmatpush1.bf16.msra.mxu0 %v2585
  %3718 = vmatprep.subr.bf16.mxu0 %v2579
  %3719 = vmatpush1.bf16.msra.mxu0 %v2578
  %3720 = vmatprep.subr.bf16.mxu0 %v2572
  %3721 = vmatpush1.bf16.msra.mxu0 %v2571
  %3722 = vmatprep.subr.bf16.mxu0 %v2565
  %3723 = vmatpush1.bf16.msra.mxu0 %v2564
  %3724 = vmatprep.subr.bf16.mxu0 %v2558
  %3725 = vmatpush1.bf16.msra.mxu0 %v2557
  %3726 = vmatprep.subr.bf16.mxu0 %v2663
  %3727 = vmatpush2.bf16.msra.mxu0 %v2662
  %3728 = vmatprep.subr.bf16.mxu0 %v2656
  %3729 = vmatpush2.bf16.msra.mxu0 %v2655
  %3730 = vmatprep.subr.bf16.mxu0 %v2649
  %3731 = vmatpush2.bf16.msra.mxu0 %v2648
  %3732 = vmatprep.subr.bf16.mxu0 %v2642
  %3733 = vmatpush2.bf16.msra.mxu0 %v2641
  %3734 = vmatprep.subr.bf16.mxu0 %v2635
  %3735 = vmatpush2.bf16.msra.mxu0 %v2634
  %3736 = vmatprep.subr.bf16.mxu0 %v2628
  %3737 = vmatpush2.bf16.msra.mxu0 %v2627
  %3738 = vmatprep.subr.bf16.mxu0 %v2621
  %3739 = vmatpush2.bf16.msra.mxu0 %v2620
  %3740 = vmatprep.subr.bf16.mxu0 %v2614
  %3741 = vmatpush2.bf16.msra.mxu0 %v2613
  %3742 = vmatprep.mubr.bf16.mxu0 %v561
  %3743 = vmatmul.mubr.bf16.gmra.mxu0 %v560
  %v3744 = vpop.f32.mrf.mxu0
  %v3745 = vadd.f32 %v3704, %v3744
  %v3746 = vpop.f32.mrf.mxu0
  %v3747 = vadd.f32 %v3706, %v3746
  %v3748 = vpop.f32.mrf.mxu0
  %v3749 = vpop.f32.mrf.mxu0
  %3750 = vdwg.mxu0
  %3751 = vmatprep.subr.bf16.mxu0 %v2719
  %3752 = vmatpush1.bf16.msra.mxu0 %v2718
  %3753 = vmatprep.subr.bf16.mxu0 %v2712
  %3754 = vmatpush1.bf16.msra.mxu0 %v2711
  %3755 = vmatprep.subr.bf16.mxu0 %v2705
  %3756 = vmatpush1.bf16.msra.mxu0 %v2704
  %3757 = vmatprep.subr.bf16.mxu0 %v2698
  %3758 = vmatpush1.bf16.msra.mxu0 %v2697
  %3759 = vmatprep.subr.bf16.mxu0 %v2691
  %3760 = vmatpush1.bf16.msra.mxu0 %v2690
  %3761 = vmatprep.subr.bf16.mxu0 %v2684
  %3762 = vmatpush1.bf16.msra.mxu0 %v2683
  %3763 = vmatprep.subr.bf16.mxu0 %v2677
  %3764 = vmatpush1.bf16.msra.mxu0 %v2676
  %3765 = vmatprep.subr.bf16.mxu0 %v2670
  %3766 = vmatpush1.bf16.msra.mxu0 %v2669
  %3767 = vmatprep.subr.bf16.mxu0 %v2775
  %3768 = vmatpush2.bf16.msra.mxu0 %v2774
  %3769 = vmatprep.subr.bf16.mxu0 %v2768
  %3770 = vmatpush2.bf16.msra.mxu0 %v2767
  %3771 = vmatprep.subr.bf16.mxu0 %v2761
  %3772 = vmatpush2.bf16.msra.mxu0 %v2760
  %3773 = vmatprep.subr.bf16.mxu0 %v2754
  %3774 = vmatpush2.bf16.msra.mxu0 %v2753
  %3775 = vmatprep.subr.bf16.mxu0 %v2747
  %3776 = vmatpush2.bf16.msra.mxu0 %v2746
  %3777 = vmatprep.subr.bf16.mxu0 %v2740
  %3778 = vmatpush2.bf16.msra.mxu0 %v2739
  %3779 = vmatprep.subr.bf16.mxu0 %v2733
  %3780 = vmatpush2.bf16.msra.mxu0 %v2732
  %3781 = vmatprep.subr.bf16.mxu0 %v2726
  %3782 = vmatpush2.bf16.msra.mxu0 %v2725
  %3783 = vmatprep.mubr.bf16.mxu0 %v563
  %3784 = vmatmul.mubr.bf16.gmra.mxu0 %v562
  %v3785 = vpop.f32.mrf.mxu0
  %v3786 = vadd.f32 %v3745, %v3785
  %v3787 = vpop.f32.mrf.mxu0
  %v3788 = vadd.f32 %v3747, %v3787
  %v3789 = vpop.f32.mrf.mxu0
  %v3790 = vpop.f32.mrf.mxu0
  %3791 = vdwg.mxu0
  %3792 = vmatprep.subr.bf16.mxu0 %v2831
  %3793 = vmatpush1.bf16.msra.mxu0 %v2830
  %3794 = vmatprep.subr.bf16.mxu0 %v2824
  %3795 = vmatpush1.bf16.msra.mxu0 %v2823
  %3796 = vmatprep.subr.bf16.mxu0 %v2817
  %3797 = vmatpush1.bf16.msra.mxu0 %v2816
  %3798 = vmatprep.subr.bf16.mxu0 %v2810
  %3799 = vmatpush1.bf16.msra.mxu0 %v2809
  %3800 = vmatprep.subr.bf16.mxu0 %v2803
  %3801 = vmatpush1.bf16.msra.mxu0 %v2802
  %3802 = vmatprep.subr.bf16.mxu0 %v2796
  %3803 = vmatpush1.bf16.msra.mxu0 %v2795
  %3804 = vmatprep.subr.bf16.mxu0 %v2789
  %3805 = vmatpush1.bf16.msra.mxu0 %v2788
  %3806 = vmatprep.subr.bf16.mxu0 %v2782
  %3807 = vmatpush1.bf16.msra.mxu0 %v2781
  %3808 = vmatprep.subr.bf16.mxu0 0
  %3809 = vmatpush2.bf16.msra.mxu0 0
  %3810 = vmatprep.subr.bf16.mxu0 %v3336
  %3811 = vmatpush2.bf16.msra.mxu0 %v3333
  %3812 = vmatprep.subr.bf16.mxu0 %v2873
  %3813 = vmatpush2.bf16.msra.mxu0 %v2872
  %3814 = vmatprep.subr.bf16.mxu0 %v2866
  %3815 = vmatpush2.bf16.msra.mxu0 %v2865
  %3816 = vmatprep.subr.bf16.mxu0 %v2859
  %3817 = vmatpush2.bf16.msra.mxu0 %v2858
  %3818 = vmatprep.subr.bf16.mxu0 %v2852
  %3819 = vmatpush2.bf16.msra.mxu0 %v2851
  %3820 = vmatprep.subr.bf16.mxu0 %v2845
  %3821 = vmatpush2.bf16.msra.mxu0 %v2844
  %3822 = vmatprep.subr.bf16.mxu0 %v2838
  %3823 = vmatpush2.bf16.msra.mxu0 %v2837
  %3824 = vmatprep.mubr.bf16.mxu0 %v3317
  %3825 = vmatmul.mubr.bf16.gmra.mxu0 %v564
  %v3826 = vpop.f32.mrf.mxu0
  %v3827 = vadd.f32 %v3786, %v3826
  %v3828 = vpop.f32.mrf.mxu0
  %v3829 = vadd.f32 %v3788, %v3828
  %v3830 = vpop.f32.mrf.mxu0
  %v3831 = vpop.f32.mrf.mxu0
  %3832 = vdwg.mxu0
  %3833 = vmatprep.subr.bf16.mxu0 0
  %3834 = vmatpush1.bf16.msra.mxu0 %v2496
  %3835 = vmatprep.subr.bf16.mxu0 0
  %3836 = vmatpush1.bf16.msra.mxu0 %v2489
  %3837 = vmatprep.subr.bf16.mxu0 0
  %3838 = vmatpush1.bf16.msra.mxu0 %v2482
  %3839 = vmatprep.subr.bf16.mxu0 0
  %3840 = vmatpush1.bf16.msra.mxu0 %v2475
  %3841 = vmatprep.subr.bf16.mxu0 0
  %3842 = vmatpush1.bf16.msra.mxu0 %v2468
  %3843 = vmatprep.subr.bf16.mxu0 0
  %3844 = vmatpush1.bf16.msra.mxu0 %v2461
  %3845 = vmatprep.subr.bf16.mxu0 0
  %3846 = vmatpush1.bf16.msra.mxu0 %v2454
  %3847 = vmatprep.subr.bf16.mxu0 0
  %3848 = vmatpush1.bf16.msra.mxu0 %v2447
  %3849 = vmatprep.subr.bf16.mxu0 0
  %3850 = vmatpush2.bf16.msra.mxu0 %v2552
  %3851 = vmatprep.subr.bf16.mxu0 0
  %3852 = vmatpush2.bf16.msra.mxu0 %v2545
  %3853 = vmatprep.subr.bf16.mxu0 0
  %3854 = vmatpush2.bf16.msra.mxu0 %v2538
  %3855 = vmatprep.subr.bf16.mxu0 0
  %3856 = vmatpush2.bf16.msra.mxu0 %v2531
  %3857 = vmatprep.subr.bf16.mxu0 0
  %3858 = vmatpush2.bf16.msra.mxu0 %v2524
  %3859 = vmatprep.subr.bf16.mxu0 0
  %3860 = vmatpush2.bf16.msra.mxu0 %v2517
  %3861 = vmatprep.subr.bf16.mxu0 0
  %3862 = vmatpush2.bf16.msra.mxu0 %v2510
  %3863 = vmatprep.subr.bf16.mxu0 0
  %3864 = vmatpush2.bf16.msra.mxu0 %v2503
  %3865 = vmatprep.mubr.bf16.mxu0 %v559
  %3866 = vmatmul.mubr.bf16.gmra.mxu0 %v558
  %v3867 = vpop.f32.mrf.mxu0
  %v3868 = vadd.f32 0.0, %v3867
  %v3869 = vpop.f32.mrf.mxu0
  %v3870 = vpop.f32.mrf.mxu0
  %v3871 = vpop.f32.mrf.mxu0
  %3872 = vdwg.mxu0
  %3873 = vmatprep.subr.bf16.mxu0 0
  %3874 = vmatpush1.bf16.msra.mxu0 %v2608
  %3875 = vmatprep.subr.bf16.mxu0 0
  %3876 = vmatpush1.bf16.msra.mxu0 %v2601
  %3877 = vmatprep.subr.bf16.mxu0 0
  %3878 = vmatpush1.bf16.msra.mxu0 %v2594
  %3879 = vmatprep.subr.bf16.mxu0 0
  %3880 = vmatpush1.bf16.msra.mxu0 %v2587
  %3881 = vmatprep.subr.bf16.mxu0 0
  %3882 = vmatpush1.bf16.msra.mxu0 %v2580
  %3883 = vmatprep.subr.bf16.mxu0 0
  %3884 = vmatpush1.bf16.msra.mxu0 %v2573
  %3885 = vmatprep.subr.bf16.mxu0 0
  %3886 = vmatpush1.bf16.msra.mxu0 %v2566
  %3887 = vmatprep.subr.bf16.mxu0 0
  %3888 = vmatpush1.bf16.msra.mxu0 %v2559
  %3889 = vmatprep.subr.bf16.mxu0 0
  %3890 = vmatpush2.bf16.msra.mxu0 %v2664
  %3891 = vmatprep.subr.bf16.mxu0 0
  %3892 = vmatpush2.bf16.msra.mxu0 %v2657
  %3893 = vmatprep.subr.bf16.mxu0 0
  %3894 = vmatpush2.bf16.msra.mxu0 %v2650
  %3895 = vmatprep.subr.bf16.mxu0 0
  %3896 = vmatpush2.bf16.msra.mxu0 %v2643
  %3897 = vmatprep.subr.bf16.mxu0 0
  %3898 = vmatpush2.bf16.msra.mxu0 %v2636
  %3899 = vmatprep.subr.bf16.mxu0 0
  %3900 = vmatpush2.bf16.msra.mxu0 %v2629
  %3901 = vmatprep.subr.bf16.mxu0 0
  %3902 = vmatpush2.bf16.msra.mxu0 %v2622
  %3903 = vmatprep.subr.bf16.mxu0 0
  %3904 = vmatpush2.bf16.msra.mxu0 %v2615
  %3905 = vmatprep.mubr.bf16.mxu0 %v561
  %3906 = vmatmul.mubr.bf16.gmra.mxu0 %v560
  %v3907 = vpop.f32.mrf.mxu0
  %v3908 = vadd.f32 %v3868, %v3907
  %v3909 = vpop.f32.mrf.mxu0
  %v3910 = vpop.f32.mrf.mxu0
  %v3911 = vpop.f32.mrf.mxu0
  %3912 = vdwg.mxu0
  %3913 = vmatprep.subr.bf16.mxu0 0
  %3914 = vmatpush1.bf16.msra.mxu0 %v2720
  %3915 = vmatprep.subr.bf16.mxu0 0
  %3916 = vmatpush1.bf16.msra.mxu0 %v2713
  %3917 = vmatprep.subr.bf16.mxu0 0
  %3918 = vmatpush1.bf16.msra.mxu0 %v2706
  %3919 = vmatprep.subr.bf16.mxu0 0
  %3920 = vmatpush1.bf16.msra.mxu0 %v2699
  %3921 = vmatprep.subr.bf16.mxu0 0
  %3922 = vmatpush1.bf16.msra.mxu0 %v2692
  %3923 = vmatprep.subr.bf16.mxu0 0
  %3924 = vmatpush1.bf16.msra.mxu0 %v2685
  %3925 = vmatprep.subr.bf16.mxu0 0
  %3926 = vmatpush1.bf16.msra.mxu0 %v2678
  %3927 = vmatprep.subr.bf16.mxu0 0
  %3928 = vmatpush1.bf16.msra.mxu0 %v2671
  %3929 = vmatprep.subr.bf16.mxu0 0
  %3930 = vmatpush2.bf16.msra.mxu0 %v2776
  %3931 = vmatprep.subr.bf16.mxu0 0
  %3932 = vmatpush2.bf16.msra.mxu0 %v2769
  %3933 = vmatprep.subr.bf16.mxu0 0
  %3934 = vmatpush2.bf16.msra.mxu0 %v2762
  %3935 = vmatprep.subr.bf16.mxu0 0
  %3936 = vmatpush2.bf16.msra.mxu0 %v2755
  %3937 = vmatprep.subr.bf16.mxu0 0
  %3938 = vmatpush2.bf16.msra.mxu0 %v2748
  %3939 = vmatprep.subr.bf16.mxu0 0
  %3940 = vmatpush2.bf16.msra.mxu0 %v2741
  %3941 = vmatprep.subr.bf16.mxu0 0
  %3942 = vmatpush2.bf16.msra.mxu0 %v2734
  %3943 = vmatprep.subr.bf16.mxu0 0
  %3944 = vmatpush2.bf16.msra.mxu0 %v2727
  %3945 = vmatprep.mubr.bf16.mxu0 %v563
  %3946 = vmatmul.mubr.bf16.gmra.mxu0 %v562
  %v3947 = vpop.f32.mrf.mxu0
  %v3948 = vadd.f32 %v3908, %v3947
  %v3949 = vpop.f32.mrf.mxu0
  %v3950 = vpop.f32.mrf.mxu0
  %v3951 = vpop.f32.mrf.mxu0
  %3952 = vdwg.mxu0
  %3953 = vmatprep.subr.bf16.mxu0 0
  %3954 = vmatpush1.bf16.msra.mxu0 %v2832
  %3955 = vmatprep.subr.bf16.mxu0 0
  %3956 = vmatpush1.bf16.msra.mxu0 %v2825
  %3957 = vmatprep.subr.bf16.mxu0 0
  %3958 = vmatpush1.bf16.msra.mxu0 %v2818
  %3959 = vmatprep.subr.bf16.mxu0 0
  %3960 = vmatpush1.bf16.msra.mxu0 %v2811
  %3961 = vmatprep.subr.bf16.mxu0 0
  %3962 = vmatpush1.bf16.msra.mxu0 %v2804
  %3963 = vmatprep.subr.bf16.mxu0 0
  %3964 = vmatpush1.bf16.msra.mxu0 %v2797
  %3965 = vmatprep.subr.bf16.mxu0 0
  %3966 = vmatpush1.bf16.msra.mxu0 %v2790
  %3967 = vmatprep.subr.bf16.mxu0 0
  %3968 = vmatpush1.bf16.msra.mxu0 %v2783
  %3969 = vmatprep.subr.bf16.mxu0 0
  %3970 = vmatpush2.bf16.msra.mxu0 0
  %3971 = vmatprep.subr.bf16.mxu0 0
  %3972 = vmatpush2.bf16.msra.mxu0 %v3339
  %3973 = vmatprep.subr.bf16.mxu0 0
  %3974 = vmatpush2.bf16.msra.mxu0 %v2874
  %3975 = vmatprep.subr.bf16.mxu0 0
  %3976 = vmatpush2.bf16.msra.mxu0 %v2867
  %3977 = vmatprep.subr.bf16.mxu0 0
  %3978 = vmatpush2.bf16.msra.mxu0 %v2860
  %3979 = vmatprep.subr.bf16.mxu0 0
  %3980 = vmatpush2.bf16.msra.mxu0 %v2853
  %3981 = vmatprep.subr.bf16.mxu0 0
  %3982 = vmatpush2.bf16.msra.mxu0 %v2846
  %3983 = vmatprep.subr.bf16.mxu0 0
  %3984 = vmatpush2.bf16.msra.mxu0 %v2839
  %3985 = vmatprep.mubr.bf16.mxu0 %v3317
  %3986 = vmatmul.mubr.bf16.gmra.mxu0 %v564
  %v3987 = vpop.f32.mrf.mxu0
  %v3988 = vadd.f32 %v3948, %v3987
  %v3989 = vpop.f32.mrf.mxu0
  %v3990 = vpop.f32.mrf.mxu0
  %v3991 = vpop.f32.mrf.mxu0
  %3992 = vdwg.mxu0
  %v3993 = vrot.slane %v3499, 4
  %v3994 = vadd.f32 %v3499, %v3993
  %v3995 = vrot.slane %v3994, 2
  %v3996 = vadd.f32 %v3994, %v3995
  %v3997 = vrot.slane %v3996, 1
  %v3998 = vadd.f32 %v3996, %v3997
  %v3999 = vrot.slane %v3501, 4
  %v4000 = vadd.f32 %v3501, %v3999
  %v4001 = vrot.slane %v4000, 2
  %v4002 = vadd.f32 %v4000, %v4001
  %v4003 = vrot.slane %v4002, 1
  %v4004 = vadd.f32 %v4002, %v4003
  %v4005 = vrot.slane %v3663, 4
  %v4006 = vadd.f32 %v3663, %v4005
  %v4007 = vrot.slane %v4006, 2
  %v4008 = vadd.f32 %v4006, %v4007
  %v4009 = vrot.slane %v4008, 1
  %v4010 = vadd.f32 %v4008, %v4009
  %v4011 = vrot.slane %v3665, 4
  %v4012 = vadd.f32 %v3665, %v4011
  %v4013 = vrot.slane %v4012, 2
  %v4014 = vadd.f32 %v4012, %v4013
  %v4015 = vrot.slane %v4014, 1
  %v4016 = vadd.f32 %v4014, %v4015
  %v4017 = vrot.slane %v3827, 4
  %v4018 = vadd.f32 %v3827, %v4017
  %v4019 = vrot.slane %v4018, 2
  %v4020 = vadd.f32 %v4018, %v4019
  %v4021 = vrot.slane %v4020, 1
  %v4022 = vadd.f32 %v4020, %v4021
  %v4023 = vrot.slane %v3829, 4
  %v4024 = vadd.f32 %v3829, %v4023
  %v4025 = vrot.slane %v4024, 2
  %v4026 = vadd.f32 %v4024, %v4025
  %v4027 = vrot.slane %v4026, 1
  %v4028 = vadd.f32 %v4026, %v4027
  %vm4029 = vcmask 261120
  %v4030 = vsel %vm4029, %v3988, 0.0
  %v4031 = vrot.slane %v4030, 4
  %v4032 = vadd.f32 %v4030, %v4031
  %v4033 = vrot.slane %v4032, 2
  %v4034 = vadd.f32 %v4032, %v4033
  %v4035 = vrot.slane %v4034, 1
  %v4036 = vadd.f32 %v4034, %v4035
  %v4037 = vmul.f32 %v3998, %v420
  %v4038 = vmul.f32 %v4004, %v420
  %v4039 = vmul.f32 %v4010, %v420
  %v4040 = vmul.f32 %v4016, %v420
  %v4041 = vmul.f32 %v4022, %v420
  %v4042 = vmul.f32 %v4028, %v420
  %v4043 = vmul.f32 %v4036, %v420
  %v4044 = vmul.f32 %v3499, %v3499
  %v4045 = vmul.f32 %v3501, %v3501
  %v4046 = vmul.f32 %v3663, %v3663
  %v4047 = vmul.f32 %v3665, %v3665
  %v4048 = vmul.f32 %v3827, %v3827
  %v4049 = vmul.f32 %v3829, %v3829
  %v4050 = vmul.f32 %v3988, %v3988
  %v4051 = vrot.slane %v4044, 4
  %v4052 = vadd.f32 %v4044, %v4051
  %v4053 = vrot.slane %v4052, 2
  %v4054 = vadd.f32 %v4052, %v4053
  %v4055 = vrot.slane %v4054, 1
  %v4056 = vadd.f32 %v4054, %v4055
  %v4057 = vrot.slane %v4045, 4
  %v4058 = vadd.f32 %v4045, %v4057
  %v4059 = vrot.slane %v4058, 2
  %v4060 = vadd.f32 %v4058, %v4059
  %v4061 = vrot.slane %v4060, 1
  %v4062 = vadd.f32 %v4060, %v4061
  %v4063 = vrot.slane %v4046, 4
  %v4064 = vadd.f32 %v4046, %v4063
  %v4065 = vrot.slane %v4064, 2
  %v4066 = vadd.f32 %v4064, %v4065
  %v4067 = vrot.slane %v4066, 1
  %v4068 = vadd.f32 %v4066, %v4067
  %v4069 = vrot.slane %v4047, 4
  %v4070 = vadd.f32 %v4047, %v4069
  %v4071 = vrot.slane %v4070, 2
  %v4072 = vadd.f32 %v4070, %v4071
  %v4073 = vrot.slane %v4072, 1
  %v4074 = vadd.f32 %v4072, %v4073
  %v4075 = vrot.slane %v4048, 4
  %v4076 = vadd.f32 %v4048, %v4075
  %v4077 = vrot.slane %v4076, 2
  %v4078 = vadd.f32 %v4076, %v4077
  %v4079 = vrot.slane %v4078, 1
  %v4080 = vadd.f32 %v4078, %v4079
  %v4081 = vrot.slane %v4049, 4
  %v4082 = vadd.f32 %v4049, %v4081
  %v4083 = vrot.slane %v4082, 2
  %v4084 = vadd.f32 %v4082, %v4083
  %v4085 = vrot.slane %v4084, 1
  %v4086 = vadd.f32 %v4084, %v4085
  %v4087 = vsel %vm4029, %v4050, 0.0
  %v4088 = vrot.slane %v4087, 4
  %v4089 = vadd.f32 %v4087, %v4088
  %v4090 = vrot.slane %v4089, 2
  %v4091 = vadd.f32 %v4089, %v4090
  %v4092 = vrot.slane %v4091, 1
  %v4093 = vadd.f32 %v4091, %v4092
  %v4094 = vmul.f32 %v4056, %v420
  %v4095 = vmul.f32 %v4062, %v420
  %v4096 = vmul.f32 %v4068, %v420
  %v4097 = vmul.f32 %v4074, %v420
  %v4098 = vmul.f32 %v4080, %v420
  %v4099 = vmul.f32 %v4086, %v420
  %v4100 = vmul.f32 %v4093, %v420
  %v4101 = vmul.f32 %v4037, %v4037
  %v4102 = vmul.f32 %v4038, %v4038
  %v4103 = vmul.f32 %v4039, %v4039
  %v4104 = vmul.f32 %v4040, %v4040
  %v4105 = vmul.f32 %v4041, %v4041
  %v4106 = vmul.f32 %v4042, %v4042
  %v4107 = vmul.f32 %v4043, %v4043
  %v4108 = vsub.f32 %v4094, %v4101
  %v4109 = vsub.f32 %v4095, %v4102
  %v4110 = vsub.f32 %v4096, %v4103
  %v4111 = vsub.f32 %v4097, %v4104
  %v4112 = vsub.f32 %v4098, %v4105
  %v4113 = vsub.f32 %v4099, %v4106
  %v4114 = vsub.f32 %v4100, %v4107
  %v4115 = vmax.f32 %v4108, 0.0
  %v4116 = vmax.f32 %v4109, 0.0
  %v4117 = vmax.f32 %v4110, 0.0
  %v4118 = vmax.f32 %v4111, 0.0
  %v4119 = vmax.f32 %v4112, 0.0
  %v4120 = vmax.f32 %v4113, 0.0
  %v4121 = vmax.f32 %v4114, 0.0
  %v4122 = vsub.f32 %v3499, %v4037
  %v4123 = vsub.f32 %v3501, %v4038
  %v4124 = vsub.f32 %v3663, %v4039
  %v4125 = vsub.f32 %v3665, %v4040
  %v4126 = vsub.f32 %v3827, %v4041
  %v4127 = vsub.f32 %v3829, %v4042
  %v4128 = vsub.f32 %v3988, %v4043
  %v4129 = vadd.f32 %v4115, 1e-05
  %v4130 = vadd.f32 %v4116, 1e-05
  %v4131 = vadd.f32 %v4117, 1e-05
  %v4132 = vadd.f32 %v4118, 1e-05
  %v4133 = vadd.f32 %v4119, 1e-05
  %v4134 = vadd.f32 %v4120, 1e-05
  %v4135 = vadd.f32 %v4121, 1e-05
  %v4136 = vrsqrt.pop %v4129
  %v4137 = vrsqrt.pop %v4130
  %v4138 = vrsqrt.pop %v4131
  %v4139 = vrsqrt.pop %v4132
  %v4140 = vrsqrt.pop %v4133
  %v4141 = vrsqrt.pop %v4134
  %v4142 = vrsqrt.pop %v4135
  %v4143 = vmul.f32 %v4122, %v4136
  %v4144 = vmul.f32 %v4123, %v4137
  %v4145 = vmul.f32 %v4124, %v4138
  %v4146 = vmul.f32 %v4125, %v4139
  %v4147 = vmul.f32 %v4126, %v4140
  %v4148 = vmul.f32 %v4127, %v4141
  %v4149 = vmul.f32 %v4128, %v4142
  %v4150 = vmax.f32 %v4143, 0.0
  %v4151 = vmax.f32 %v4144, 0.0
  %v4152 = vmax.f32 %v4145, 0.0
  %v4153 = vmax.f32 %v4146, 0.0
  %v4154 = vmax.f32 %v4147, 0.0
  %v4155 = vmax.f32 %v4148, 0.0
  %v4156 = vmax.f32 %v4149, 0.0
  %v4157 = vpack.c.bf16 %v4150, %v4150
  %v4158 = vpack.c.bf16 %v4151, %v4151
  %v4159 = vpack.c.bf16 %v4152, %v4152
  %v4160 = vpack.c.bf16 %v4153, %v4153
  %v4161 = vpack.c.bf16 %v4154, %v4154
  %v4162 = vpack.c.bf16 %v4155, %v4155
  %v4163 = vpack.c.bf16 %v4156, %v4156
  %v4164 = vld [vmem:[%s3] sm:$0xff]
  %v4165 = vld [vmem:[%s3 + $0x8] sm:$0xff]
  %v4166 = vld [vmem:[%s3 + $0x10] sm:$0xf]
  %v4167 = vld [vmem:[%s3 + $0x14] sm:$0xff]
  %v4168 = vld [vmem:[%s3 + $0x1c] sm:$0xff]
  %v4169 = vld [vmem:[%s3 + $0x24] sm:$0xf]
  %v4170 = vld [vmem:[%s3 + $0x28] sm:$0xff]
  %v4171 = vld [vmem:[%s3 + $0x30] sm:$0xff]
  %v4172 = vld [vmem:[%s3 + $0x38] sm:$0xf]
  %v4173 = vld [vmem:[%s3 + $0x3c] sm:$0xff]
  %v4174 = vld [vmem:[%s3 + $0x44] sm:$0xff]
  %v4175 = vld [vmem:[%s3 + $0x4c] sm:$0xf]
  %v4176 = vld [vmem:[%s3 + $0x50] sm:$0xff]
  %v4177 = vld [vmem:[%s3 + $0x58] sm:$0xff]
  %v4178 = vld [vmem:[%s3 + $0x60] sm:$0xf]
  %v4179 = vld [vmem:[%s3 + $0x64] sm:$0xff]
  %v4180 = vld [vmem:[%s3 + $0x6c] sm:$0xff]
  %v4181 = vld [vmem:[%s3 + $0x74] sm:$0xf]
  %v4182 = vld [vmem:[%s3 + $0x78] sm:$0xff]
  %v4183 = vld [vmem:[%s3 + $0x80] sm:$0xff]
  %v4184 = vld [vmem:[%s3 + $0x88] sm:$0xf]
  %v4185 = vld [vmem:[%s3 + $0x8c] sm:$0xff]
  %v4186 = vld [vmem:[%s3 + $0x94] sm:$0xff]
  %v4187 = vld [vmem:[%s3 + $0x9c] sm:$0xf]
  %v4188 = vld [vmem:[%s3 + $0xa0] sm:$0xff]
  %v4189 = vld [vmem:[%s3 + $0xa8] sm:$0xff]
  %v4190 = vld [vmem:[%s3 + $0xb0] sm:$0xf]
  %v4191 = vld [vmem:[%s3 + $0xb4] sm:$0xff]
  %v4192 = vld [vmem:[%s3 + $0xbc] sm:$0xff]
  %v4193 = vld [vmem:[%s3 + $0xc4] sm:$0xf]
  %v4194 = vld [vmem:[%s3 + $0xc8] sm:$0xff]
  %v4195 = vld [vmem:[%s3 + $0xd0] sm:$0xff]
  %v4196 = vld [vmem:[%s3 + $0xd8] sm:$0xf]
  %v4197 = vld [vmem:[%s3 + $0xdc] sm:$0xff]
  %v4198 = vld [vmem:[%s3 + $0xe4] sm:$0xff]
  %v4199 = vld [vmem:[%s3 + $0xec] sm:$0xf]
  %v4200 = vld [vmem:[%s3 + $0xf0] sm:$0xff]
  %v4201 = vld [vmem:[%s3 + $0xf8] sm:$0xff]
  %v4202 = vld [vmem:[%s3 + $0x100] sm:$0xf]
  %v4203 = vld [vmem:[%s3 + $0x104] sm:$0xff]
  %v4204 = vld [vmem:[%s3 + $0x10c] sm:$0xff]
  %v4205 = vld [vmem:[%s3 + $0x114] sm:$0xf]
  %v4206 = vld [vmem:[%s3 + $0x118] sm:$0xff]
  %v4207 = vld [vmem:[%s3 + $0x120] sm:$0xff]
  %v4208 = vld [vmem:[%s3 + $0x128] sm:$0xf]
  %v4209 = vld [vmem:[%s3 + $0x12c] sm:$0xff]
  %v4210 = vld [vmem:[%s3 + $0x134] sm:$0xff]
  %v4211 = vld [vmem:[%s3 + $0x13c] sm:$0xf]
  %v4212 = vld [vmem:[%s3 + $0x140] sm:$0xff]
  %v4213 = vld [vmem:[%s3 + $0x148] sm:$0xff]
  %v4214 = vld [vmem:[%s3 + $0x150] sm:$0xf]
  %v4215 = vld [vmem:[%s3 + $0x154] sm:$0xff]
  %v4216 = vld [vmem:[%s3 + $0x15c] sm:$0xff]
  %v4217 = vld [vmem:[%s3 + $0x164] sm:$0xf]
  %v4218 = vld [vmem:[%s3 + $0x168] sm:$0xff]
  %v4219 = vld [vmem:[%s3 + $0x170] sm:$0xff]
  %v4220 = vld [vmem:[%s3 + $0x178] sm:$0xf]
  %v4221 = vld [vmem:[%s3 + $0x17c] sm:$0xff]
  %v4222 = vld [vmem:[%s3 + $0x184] sm:$0xff]
  %v4223 = vld [vmem:[%s3 + $0x18c] sm:$0xf]
  %v4224 = vld [vmem:[%s3 + $0x190] sm:$0xff]
  %v4225 = vld [vmem:[%s3 + $0x198] sm:$0xff]
  %v4226 = vld [vmem:[%s3 + $0x1a0] sm:$0xf]
  %v4227 = vld [vmem:[%s3 + $0x1a4] sm:$0xff]
  %v4228 = vld [vmem:[%s3 + $0x1ac] sm:$0xff]
  %v4229 = vld [vmem:[%s3 + $0x1b4] sm:$0xf]
  %v4230 = vld [vmem:[%s3 + $0x1b8] sm:$0xff]
  %v4231 = vld [vmem:[%s3 + $0x1c0] sm:$0xff]
  %v4232 = vld [vmem:[%s3 + $0x1c8] sm:$0xf]
  %v4233 = vld [vmem:[%s3 + $0x1cc] sm:$0xff]
  %v4234 = vld [vmem:[%s3 + $0x1d4] sm:$0xff]
  %v4235 = vld [vmem:[%s3 + $0x1dc] sm:$0xf]
  %v4236 = vld [vmem:[%s3 + $0x1e0] sm:$0xff]
  %v4237 = vld [vmem:[%s3 + $0x1e8] sm:$0xff]
  %v4238 = vld [vmem:[%s3 + $0x1f0] sm:$0xf]
  %v4239 = vld [vmem:[%s3 + $0x1f4] sm:$0xff]
  %v4240 = vld [vmem:[%s3 + $0x1fc] sm:$0xff]
  %v4241 = vld [vmem:[%s3 + $0x204] sm:$0xf]
  %v4242 = vld [vmem:[%s3 + $0x208] sm:$0xff]
  %v4243 = vld [vmem:[%s3 + $0x210] sm:$0xff]
  %v4244 = vld [vmem:[%s3 + $0x218] sm:$0xf]
  %v4245 = vld [vmem:[%s3 + $0x21c] sm:$0xff]
  %v4246 = vld [vmem:[%s3 + $0x224] sm:$0xff]
  %v4247 = vld [vmem:[%s3 + $0x22c] sm:$0xf]
  %v4248 = vld [vmem:[%s3 + $0x230] sm:$0xff]
  %v4249 = vld [vmem:[%s3 + $0x238] sm:$0xff]
  %v4250 = vld [vmem:[%s3 + $0x240] sm:$0xf]
  %v4251 = vld [vmem:[%s3 + $0x244] sm:$0xff]
  %v4252 = vld [vmem:[%s3 + $0x24c] sm:$0xff]
  %v4253 = vld [vmem:[%s3 + $0x254] sm:$0xf]
  %v4254 = vld [vmem:[%s3 + $0x258] sm:$0xff]
  %v4255 = vld [vmem:[%s3 + $0x260] sm:$0xff]
  %v4256 = vld [vmem:[%s3 + $0x268] sm:$0xf]
  %v4257 = vld [vmem:[%s3 + $0x26c] sm:$0xff]
  %v4258 = vld [vmem:[%s3 + $0x274] sm:$0xff]
  %v4259 = vld [vmem:[%s3 + $0x27c] sm:$0xf]
  %v4260 = vld [vmem:[%s3 + $0x280] sm:$0xff]
  %v4261 = vld [vmem:[%s3 + $0x288] sm:$0xff]
  %v4262 = vld [vmem:[%s3 + $0x290] sm:$0xf]
  %v4263 = vld [vmem:[%s3 + $0x294] sm:$0xff]
  %v4264 = vld [vmem:[%s3 + $0x29c] sm:$0xff]
  %v4265 = vld [vmem:[%s3 + $0x2a4] sm:$0xf]
  %v4266 = vld [vmem:[%s3 + $0x2a8] sm:$0xff]
  %v4267 = vld [vmem:[%s3 + $0x2b0] sm:$0xff]
  %v4268 = vld [vmem:[%s3 + $0x2b8] sm:$0xf]
  %v4269 = vld [vmem:[%s3 + $0x2bc] sm:$0xff]
  %v4270 = vld [vmem:[%s3 + $0x2c4] sm:$0xff]
  %v4271 = vld [vmem:[%s3 + $0x2cc] sm:$0xf]
  %v4272 = vld [vmem:[%s3 + $0x2d0] sm:$0xff]
  %v4273 = vld [vmem:[%s3 + $0x2d8] sm:$0xff]
  %v4274 = vld [vmem:[%s3 + $0x2e0] sm:$0xf]
  %v4275 = vld [vmem:[%s3 + $0x2e4] sm:$0xff]
  %v4276 = vld [vmem:[%s3 + $0x2ec] sm:$0xff]
  %v4277 = vld [vmem:[%s3 + $0x2f4] sm:$0xf]
  %v4278 = vld [vmem:[%s3 + $0x2f8] sm:$0xff]
  %v4279 = vld [vmem:[%s3 + $0x300] sm:$0xff]
  %v4280 = vld [vmem:[%s3 + $0x308] sm:$0xf]
  %v4281 = vld [vmem:[%s3 + $0x30c] sm:$0xff]
  %v4282 = vld [vmem:[%s3 + $0x314] sm:$0xff]
  %v4283 = vld [vmem:[%s3 + $0x31c] sm:$0xf]
  %v4284 = vld [vmem:[%s3 + $0x320] sm:$0xff]
  %v4285 = vld [vmem:[%s3 + $0x328] sm:$0xff]
  %v4286 = vld [vmem:[%s3 + $0x330] sm:$0xf]
  %v4287 = vld [vmem:[%s3 + $0x334] sm:$0xff]
  %v4288 = vld [vmem:[%s3 + $0x33c] sm:$0xff]
  %v4289 = vld [vmem:[%s3 + $0x344] sm:$0xf]
  %v4290 = vld [vmem:[%s3 + $0x348] sm:$0xff]
  %v4291 = vld [vmem:[%s3 + $0x350] sm:$0xff]
  %v4292 = vld [vmem:[%s3 + $0x358] sm:$0xf]
  %v4293 = vld [vmem:[%s3 + $0x35c] sm:$0xff]
  %v4294 = vld [vmem:[%s3 + $0x364] sm:$0xff]
  %v4295 = vld [vmem:[%s3 + $0x36c] sm:$0xf]
  %v4296 = vld [vmem:[%s3 + $0x370] sm:$0xff]
  %v4297 = vld [vmem:[%s3 + $0x378] sm:$0xff]
  %v4298 = vld [vmem:[%s3 + $0x380] sm:$0xf]
  %v4299 = vld [vmem:[%s3 + $0x384] sm:$0xff]
  %v4300 = vld [vmem:[%s3 + $0x38c] sm:$0xff]
  %v4301 = vld [vmem:[%s3 + $0x394] sm:$0xf]
  %v4302 = vld [vmem:[%s3 + $0x398] sm:$0xff]
  %v4303 = vld [vmem:[%s3 + $0x3a0] sm:$0xff]
  %v4304 = vld [vmem:[%s3 + $0x3a8] sm:$0xf]
  %v4305 = vld [vmem:[%s3 + $0x3ac] sm:$0xff]
  %v4306 = vld [vmem:[%s3 + $0x3b4] sm:$0xff]
  %v4307 = vld [vmem:[%s3 + $0x3bc] sm:$0xf]
  %v4308 = vld [vmem:[%s3 + $0x3c0] sm:$0xff]
  %v4309 = vld [vmem:[%s3 + $0x3c8] sm:$0xff]
  %v4310 = vld [vmem:[%s3 + $0x3d0] sm:$0xf]
  %v4311 = vld [vmem:[%s3 + $0x3d4] sm:$0xff]
  %v4312 = vld [vmem:[%s3 + $0x3dc] sm:$0xff]
  %v4313 = vld [vmem:[%s3 + $0x3e4] sm:$0xf]
  %v4314 = vld [vmem:[%s3 + $0x3e8] sm:$0xff]
  %v4315 = vld [vmem:[%s3 + $0x3f0] sm:$0xff]
  %v4316 = vld [vmem:[%s3 + $0x3f8] sm:$0xf]
  %v4317 = vld [vmem:[%s3 + $0x3fc] sm:$0xff]
  %v4318 = vld [vmem:[%s3 + $0x404] sm:$0xff]
  %v4319 = vld [vmem:[%s3 + $0x40c] sm:$0xf]
  %v4320 = vld [vmem:[%s3 + $0x410] sm:$0xff]
  %v4321 = vld [vmem:[%s3 + $0x418] sm:$0xff]
  %v4322 = vld [vmem:[%s3 + $0x420] sm:$0xf]
  %v4323 = vld [vmem:[%s3 + $0x424] sm:$0xff]
  %v4324 = vld [vmem:[%s3 + $0x42c] sm:$0xff]
  %v4325 = vld [vmem:[%s3 + $0x434] sm:$0xf]
  %v4326 = vld [vmem:[%s3 + $0x438] sm:$0xff]
  %v4327 = vld [vmem:[%s3 + $0x440] sm:$0xff]
  %v4328 = vld [vmem:[%s3 + $0x448] sm:$0xf]
  %v4329 = vld [vmem:[%s3 + $0x44c] sm:$0xff]
  %v4330 = vld [vmem:[%s3 + $0x454] sm:$0xff]
  %v4331 = vld [vmem:[%s3 + $0x45c] sm:$0xf]
  %v4332 = vld [vmem:[%s3 + $0x460] sm:$0xff]
  %v4333 = vld [vmem:[%s3 + $0x468] sm:$0xff]
  %v4334 = vld [vmem:[%s3 + $0x470] sm:$0xf]
  %v4335 = vld [vmem:[%s3 + $0x474] sm:$0xff]
  %v4336 = vld [vmem:[%s3 + $0x47c] sm:$0xff]
  %v4337 = vld [vmem:[%s3 + $0x484] sm:$0xf]
  %v4338 = vld [vmem:[%s3 + $0x488] sm:$0xff]
  %v4339 = vld [vmem:[%s3 + $0x490] sm:$0xff]
  %v4340 = vld [vmem:[%s3 + $0x498] sm:$0xf]
  %v4341 = vld [vmem:[%s3 + $0x49c] sm:$0xff]
  %v4342 = vld [vmem:[%s3 + $0x4a4] sm:$0xff]
  %v4343 = vld [vmem:[%s3 + $0x4ac] sm:$0xf]
  %v4344 = vld [vmem:[%s3 + $0x4b0] sm:$0xff]
  %v4345 = vld [vmem:[%s3 + $0x4b8] sm:$0xff]
  %v4346 = vld [vmem:[%s3 + $0x4c0] sm:$0xf]
  %v4347 = vld [vmem:[%s3 + $0x4c4] sm:$0xff]
  %v4348 = vld [vmem:[%s3 + $0x4cc] sm:$0xff]
  %v4349 = vld [vmem:[%s3 + $0x4d4] sm:$0xf]
  %v4350 = vld [vmem:[%s3 + $0x4d8] sm:$0xff]
  %v4351 = vld [vmem:[%s3 + $0x4e0] sm:$0xff]
  %v4352 = vld [vmem:[%s3 + $0x4e8] sm:$0xf]
  %v4353 = vld [vmem:[%s3 + $0x4ec] sm:$0xff]
  %v4354 = vld [vmem:[%s3 + $0x4f4] sm:$0xff]
  %v4355 = vld [vmem:[%s3 + $0x4fc] sm:$0xf]
  %v4356 = vld [vmem:[%s3 + $0x500] sm:$0xff]
  %v4357 = vld [vmem:[%s3 + $0x508] sm:$0xff]
  %v4358 = vld [vmem:[%s3 + $0x510] sm:$0xf]
  %v4359 = vld [vmem:[%s3 + $0x514] sm:$0xff]
  %v4360 = vld [vmem:[%s3 + $0x51c] sm:$0xff]
  %v4361 = vld [vmem:[%s3 + $0x524] sm:$0xf]
  %v4362 = vld [vmem:[%s3 + $0x528] sm:$0xff]
  %v4363 = vld [vmem:[%s3 + $0x530] sm:$0xff]
  %v4364 = vld [vmem:[%s3 + $0x538] sm:$0xf]
  %v4365 = vld [vmem:[%s3 + $0x53c] sm:$0xff]
  %v4366 = vld [vmem:[%s3 + $0x544] sm:$0xff]
  %v4367 = vld [vmem:[%s3 + $0x54c] sm:$0xf]
  %v4368 = vld [vmem:[%s3 + $0x550] sm:$0xff]
  %v4369 = vld [vmem:[%s3 + $0x558] sm:$0xff]
  %v4370 = vld [vmem:[%s3 + $0x560] sm:$0xf]
  %v4371 = vld [vmem:[%s3 + $0x564] sm:$0xff]
  %v4372 = vld [vmem:[%s3 + $0x56c] sm:$0xff]
  %v4373 = vld [vmem:[%s3 + $0x574] sm:$0xf]
  %v4374 = vld [vmem:[%s3 + $0x578] sm:$0xff]
  %v4375 = vld [vmem:[%s3 + $0x580] sm:$0xff]
  %v4376 = vld [vmem:[%s3 + $0x588] sm:$0xf]
  %v4377 = vld [vmem:[%s3 + $0x58c] sm:$0xff]
  %v4378 = vld [vmem:[%s3 + $0x594] sm:$0xff]
  %v4379 = vld [vmem:[%s3 + $0x59c] sm:$0xf]
  %v4380 = vld [vmem:[%s3 + $0x5a0] sm:$0xff]
  %v4381 = vld [vmem:[%s3 + $0x5a8] sm:$0xff]
  %v4382 = vld [vmem:[%s3 + $0x5b0] sm:$0xf]
  %v4383 = vld [vmem:[%s3 + $0x5b4] sm:$0xff]
  %v4384 = vld [vmem:[%s3 + $0x5bc] sm:$0xff]
  %v4385 = vld [vmem:[%s3 + $0x5c4] sm:$0xf]
  %v4386 = vld [vmem:[%s3 + $0x5c8] sm:$0xff]
  %v4387 = vld [vmem:[%s3 + $0x5d0] sm:$0xff]
  %v4388 = vld [vmem:[%s3 + $0x5d8] sm:$0xf]
  %v4389 = vld [vmem:[%s3 + $0x5dc] sm:$0xff]
  %v4390 = vld [vmem:[%s3 + $0x5e4] sm:$0xff]
  %v4391 = vld [vmem:[%s3 + $0x5ec] sm:$0xf]
  %v4392 = vld [vmem:[%s3 + $0x5f0] sm:$0xff]
  %v4393 = vld [vmem:[%s3 + $0x5f8] sm:$0xff]
  %v4394 = vld [vmem:[%s3 + $0x600] sm:$0xf]
  %v4395 = vld [vmem:[%s3 + $0x604] sm:$0xff]
  %v4396 = vld [vmem:[%s3 + $0x60c] sm:$0xff]
  %v4397 = vld [vmem:[%s3 + $0x614] sm:$0xf]
  %v4398 = vld [vmem:[%s3 + $0x618] sm:$0xff]
  %v4399 = vld [vmem:[%s3 + $0x620] sm:$0xff]
  %v4400 = vld [vmem:[%s3 + $0x628] sm:$0xf]
  %v4401 = vld [vmem:[%s3 + $0x62c] sm:$0xff]
  %v4402 = vld [vmem:[%s3 + $0x634] sm:$0xff]
  %v4403 = vld [vmem:[%s3 + $0x63c] sm:$0xf]
  %v4404 = vld [vmem:[%s3 + $0x640] sm:$0xff]
  %v4405 = vld [vmem:[%s3 + $0x648] sm:$0xff]
  %v4406 = vld [vmem:[%s3 + $0x650] sm:$0xf]
  %v4407 = vld [vmem:[%s3 + $0x654] sm:$0xff]
  %v4408 = vld [vmem:[%s3 + $0x65c] sm:$0xff]
  %v4409 = vld [vmem:[%s3 + $0x664] sm:$0xf]
  %v4410 = vld [vmem:[%s3 + $0x668] sm:$0xff]
  %v4411 = vld [vmem:[%s3 + $0x670] sm:$0xff]
  %v4412 = vld [vmem:[%s3 + $0x678] sm:$0xf]
  %v4413 = vld [vmem:[%s3 + $0x67c] sm:$0xff]
  %v4414 = vld [vmem:[%s3 + $0x684] sm:$0xff]
  %v4415 = vld [vmem:[%s3 + $0x68c] sm:$0xf]
  %v4416 = vld [vmem:[%s3 + $0x690] sm:$0xff]
  %v4417 = vld [vmem:[%s3 + $0x698] sm:$0xff]
  %v4418 = vld [vmem:[%s3 + $0x6a0] sm:$0xf]
  %v4419 = vld [vmem:[%s3 + $0x6a4] sm:$0xff]
  %v4420 = vld [vmem:[%s3 + $0x6ac] sm:$0xff]
  %v4421 = vld [vmem:[%s3 + $0x6b4] sm:$0xf]
  %v4422 = vld [vmem:[%s3 + $0x6b8] sm:$0xff]
  %v4423 = vld [vmem:[%s3 + $0x6c0] sm:$0xff]
  %v4424 = vld [vmem:[%s3 + $0x6c8] sm:$0xf]
  %v4425 = vld [vmem:[%s3 + $0x6cc] sm:$0xff]
  %v4426 = vld [vmem:[%s3 + $0x6d4] sm:$0xff]
  %v4427 = vld [vmem:[%s3 + $0x6dc] sm:$0xf]
  %v4428 = vld [vmem:[%s3 + $0x6e0] sm:$0xff]
  %v4429 = vld [vmem:[%s3 + $0x6e8] sm:$0xff]
  %v4430 = vld [vmem:[%s3 + $0x6f0] sm:$0xf]
  %v4431 = vld [vmem:[%s3 + $0x6f4] sm:$0xff]
  %v4432 = vld [vmem:[%s3 + $0x6fc] sm:$0xff]
  %v4433 = vld [vmem:[%s3 + $0x704] sm:$0xf]
  %v4434 = vld [vmem:[%s3 + $0x708] sm:$0xff]
  %v4435 = vld [vmem:[%s3 + $0x710] sm:$0xff]
  %v4436 = vld [vmem:[%s3 + $0x718] sm:$0xf]
  %v4437 = vld [vmem:[%s3 + $0x71c] sm:$0xff]
  %v4438 = vld [vmem:[%s3 + $0x724] sm:$0xff]
  %v4439 = vld [vmem:[%s3 + $0x72c] sm:$0xf]
  %v4440 = vld [vmem:[%s3 + $0x730] sm:$0xff]
  %v4441 = vld [vmem:[%s3 + $0x738] sm:$0xff]
  %v4442 = vld [vmem:[%s3 + $0x740] sm:$0xf]
  %v4443 = vld [vmem:[%s3 + $0x744] sm:$0xff]
  %v4444 = vld [vmem:[%s3 + $0x74c] sm:$0xff]
  %v4445 = vld [vmem:[%s3 + $0x754] sm:$0xf]
  %v4446 = vld [vmem:[%s3 + $0x758] sm:$0xff]
  %v4447 = vld [vmem:[%s3 + $0x760] sm:$0xff]
  %v4448 = vld [vmem:[%s3 + $0x768] sm:$0xf]
  %v4449 = vld [vmem:[%s3 + $0x76c] sm:$0xff]
  %v4450 = vld [vmem:[%s3 + $0x774] sm:$0xff]
  %v4451 = vld [vmem:[%s3 + $0x77c] sm:$0xf]
  %v4452 = vld [vmem:[%s3 + $0x780] sm:$0xff]
  %v4453 = vld [vmem:[%s3 + $0x788] sm:$0xff]
  %v4454 = vld [vmem:[%s3 + $0x790] sm:$0xf]
  %v4455 = vld [vmem:[%s3 + $0x794] sm:$0xff]
  %v4456 = vld [vmem:[%s3 + $0x79c] sm:$0xff]
  %v4457 = vld [vmem:[%s3 + $0x7a4] sm:$0xf]
  %v4458 = vld [vmem:[%s3 + $0x7a8] sm:$0xff]
  %v4459 = vld [vmem:[%s3 + $0x7b0] sm:$0xff]
  %v4460 = vld [vmem:[%s3 + $0x7b8] sm:$0xf]
  %v4461 = vld [vmem:[%s3 + $0x7bc] sm:$0xff]
  %v4462 = vld [vmem:[%s3 + $0x7c4] sm:$0xff]
  %v4463 = vld [vmem:[%s3 + $0x7cc] sm:$0xf]
  %v4764 = vunpack.c.l.b16 %v4164
  %v4765 = vunpack.c.h.b16 %v4164
  %v4766 = vunpack.c.l.b16 %v4165
  %v4767 = vunpack.c.h.b16 %v4165
  %v4768 = vunpack.c.l.b16 %v4166
  %v4769 = vunpack.c.l.b16 %v4167
  %v4770 = vunpack.c.h.b16 %v4167
  %v4771 = vunpack.c.l.b16 %v4168
  %v4772 = vunpack.c.h.b16 %v4168
  %v4773 = vunpack.c.l.b16 %v4169
  %v4774 = vunpack.c.l.b16 %v4170
  %v4775 = vunpack.c.h.b16 %v4170
  %v4776 = vunpack.c.l.b16 %v4171
  %v4777 = vunpack.c.h.b16 %v4171
  %v4778 = vunpack.c.l.b16 %v4172
  %v4779 = vunpack.c.l.b16 %v4173
  %v4780 = vunpack.c.h.b16 %v4173
  %v4781 = vunpack.c.l.b16 %v4174
  %v4782 = vunpack.c.h.b16 %v4174
  %v4783 = vunpack.c.l.b16 %v4175
  %v4784 = vunpack.c.l.b16 %v4176
  %v4785 = vunpack.c.h.b16 %v4176
  %v4786 = vunpack.c.l.b16 %v4177
  %v4787 = vunpack.c.h.b16 %v4177
  %v4788 = vunpack.c.l.b16 %v4178
  %v4789 = vunpack.c.l.b16 %v4179
  %v4790 = vunpack.c.h.b16 %v4179
  %v4791 = vunpack.c.l.b16 %v4180
  %v4792 = vunpack.c.h.b16 %v4180
  %v4793 = vunpack.c.l.b16 %v4181
  %v4794 = vunpack.c.l.b16 %v4182
  %v4795 = vunpack.c.h.b16 %v4182
  %v4796 = vunpack.c.l.b16 %v4183
  %v4797 = vunpack.c.h.b16 %v4183
  %v4798 = vunpack.c.l.b16 %v4184
  %v4799 = vunpack.c.l.b16 %v4185
  %v4800 = vunpack.c.h.b16 %v4185
  %v4801 = vunpack.c.l.b16 %v4186
  %v4802 = vunpack.c.h.b16 %v4186
  %v4803 = vunpack.c.l.b16 %v4187
  %v4804 = vunpack.c.l.b16 %v4188
  %v4805 = vunpack.c.h.b16 %v4188
  %v4806 = vunpack.c.l.b16 %v4189
  %v4807 = vunpack.c.h.b16 %v4189
  %v4808 = vunpack.c.l.b16 %v4190
  %v4809 = vunpack.c.l.b16 %v4191
  %v4810 = vunpack.c.h.b16 %v4191
  %v4811 = vunpack.c.l.b16 %v4192
  %v4812 = vunpack.c.h.b16 %v4192
  %v4813 = vunpack.c.l.b16 %v4193
  %v4814 = vunpack.c.l.b16 %v4194
  %v4815 = vunpack.c.h.b16 %v4194
  %v4816 = vunpack.c.l.b16 %v4195
  %v4817 = vunpack.c.h.b16 %v4195
  %v4818 = vunpack.c.l.b16 %v4196
  %v4819 = vunpack.c.l.b16 %v4197
  %v4820 = vunpack.c.h.b16 %v4197
  %v4821 = vunpack.c.l.b16 %v4198
  %v4822 = vunpack.c.h.b16 %v4198
  %v4823 = vunpack.c.l.b16 %v4199
  %v4824 = vunpack.c.l.b16 %v4200
  %v4825 = vunpack.c.h.b16 %v4200
  %v4826 = vunpack.c.l.b16 %v4201
  %v4827 = vunpack.c.h.b16 %v4201
  %v4828 = vunpack.c.l.b16 %v4202
  %v4829 = vunpack.c.l.b16 %v4203
  %v4830 = vunpack.c.h.b16 %v4203
  %v4831 = vunpack.c.l.b16 %v4204
  %v4832 = vunpack.c.h.b16 %v4204
  %v4833 = vunpack.c.l.b16 %v4205
  %v4834 = vunpack.c.l.b16 %v4206
  %v4835 = vunpack.c.h.b16 %v4206
  %v4836 = vunpack.c.l.b16 %v4207
  %v4837 = vunpack.c.h.b16 %v4207
  %v4838 = vunpack.c.l.b16 %v4208
  %v4839 = vunpack.c.l.b16 %v4209
  %v4840 = vunpack.c.h.b16 %v4209
  %v4841 = vunpack.c.l.b16 %v4210
  %v4842 = vunpack.c.h.b16 %v4210
  %v4843 = vunpack.c.l.b16 %v4211
  %v4844 = vunpack.c.l.b16 %v4212
  %v4845 = vunpack.c.h.b16 %v4212
  %v4846 = vunpack.c.l.b16 %v4213
  %v4847 = vunpack.c.h.b16 %v4213
  %v4848 = vunpack.c.l.b16 %v4214
  %v4849 = vunpack.c.l.b16 %v4215
  %v4850 = vunpack.c.h.b16 %v4215
  %v4851 = vunpack.c.l.b16 %v4216
  %v4852 = vunpack.c.h.b16 %v4216
  %v4853 = vunpack.c.l.b16 %v4217
  %v4854 = vunpack.c.l.b16 %v4218
  %v4855 = vunpack.c.h.b16 %v4218
  %v4856 = vunpack.c.l.b16 %v4219
  %v4857 = vunpack.c.h.b16 %v4219
  %v4858 = vunpack.c.l.b16 %v4220
  %v4859 = vunpack.c.l.b16 %v4221
  %v4860 = vunpack.c.h.b16 %v4221
  %v4861 = vunpack.c.l.b16 %v4222
  %v4862 = vunpack.c.h.b16 %v4222
  %v4863 = vunpack.c.l.b16 %v4223
  %v4864 = vunpack.c.l.b16 %v4224
  %v4865 = vunpack.c.h.b16 %v4224
  %v4866 = vunpack.c.l.b16 %v4225
  %v4867 = vunpack.c.h.b16 %v4225
  %v4868 = vunpack.c.l.b16 %v4226
  %v4869 = vunpack.c.l.b16 %v4227
  %v4870 = vunpack.c.h.b16 %v4227
  %v4871 = vunpack.c.l.b16 %v4228
  %v4872 = vunpack.c.h.b16 %v4228
  %v4873 = vunpack.c.l.b16 %v4229
  %v4874 = vunpack.c.l.b16 %v4230
  %v4875 = vunpack.c.h.b16 %v4230
  %v4876 = vunpack.c.l.b16 %v4231
  %v4877 = vunpack.c.h.b16 %v4231
  %v4878 = vunpack.c.l.b16 %v4232
  %v4879 = vunpack.c.l.b16 %v4233
  %v4880 = vunpack.c.h.b16 %v4233
  %v4881 = vunpack.c.l.b16 %v4234
  %v4882 = vunpack.c.h.b16 %v4234
  %v4883 = vunpack.c.l.b16 %v4235
  %v4884 = vunpack.c.l.b16 %v4236
  %v4885 = vunpack.c.h.b16 %v4236
  %v4886 = vunpack.c.l.b16 %v4237
  %v4887 = vunpack.c.h.b16 %v4237
  %v4888 = vunpack.c.l.b16 %v4238
  %v4889 = vunpack.c.l.b16 %v4239
  %v4890 = vunpack.c.h.b16 %v4239
  %v4891 = vunpack.c.l.b16 %v4240
  %v4892 = vunpack.c.h.b16 %v4240
  %v4893 = vunpack.c.l.b16 %v4241
  %v4894 = vunpack.c.l.b16 %v4242
  %v4895 = vunpack.c.h.b16 %v4242
  %v4896 = vunpack.c.l.b16 %v4243
  %v4897 = vunpack.c.h.b16 %v4243
  %v4898 = vunpack.c.l.b16 %v4244
  %v4899 = vunpack.c.l.b16 %v4245
  %v4900 = vunpack.c.h.b16 %v4245
  %v4901 = vunpack.c.l.b16 %v4246
  %v4902 = vunpack.c.h.b16 %v4246
  %v4903 = vunpack.c.l.b16 %v4247
  %v4904 = vunpack.c.l.b16 %v4248
  %v4905 = vunpack.c.h.b16 %v4248
  %v4906 = vunpack.c.l.b16 %v4249
  %v4907 = vunpack.c.h.b16 %v4249
  %v4908 = vunpack.c.l.b16 %v4250
  %v4909 = vunpack.c.l.b16 %v4251
  %v4910 = vunpack.c.h.b16 %v4251
  %v4911 = vunpack.c.l.b16 %v4252
  %v4912 = vunpack.c.h.b16 %v4252
  %v4913 = vunpack.c.l.b16 %v4253
  %v4914 = vunpack.c.l.b16 %v4254
  %v4915 = vunpack.c.h.b16 %v4254
  %v4916 = vunpack.c.l.b16 %v4255
  %v4917 = vunpack.c.h.b16 %v4255
  %v4918 = vunpack.c.l.b16 %v4256
  %v4919 = vunpack.c.l.b16 %v4257
  %v4920 = vunpack.c.h.b16 %v4257
  %v4921 = vunpack.c.l.b16 %v4258
  %v4922 = vunpack.c.h.b16 %v4258
  %v4923 = vunpack.c.l.b16 %v4259
  %v4924 = vunpack.c.l.b16 %v4260
  %v4925 = vunpack.c.h.b16 %v4260
  %v4926 = vunpack.c.l.b16 %v4261
  %v4927 = vunpack.c.h.b16 %v4261
  %v4928 = vunpack.c.l.b16 %v4262
  %v4929 = vunpack.c.l.b16 %v4263
  %v4930 = vunpack.c.h.b16 %v4263
  %v4931 = vunpack.c.l.b16 %v4264
  %v4932 = vunpack.c.h.b16 %v4264
  %v4933 = vunpack.c.l.b16 %v4265
  %v4934 = vunpack.c.l.b16 %v4266
  %v4935 = vunpack.c.h.b16 %v4266
  %v4936 = vunpack.c.l.b16 %v4267
  %v4937 = vunpack.c.h.b16 %v4267
  %v4938 = vunpack.c.l.b16 %v4268
  %v4939 = vunpack.c.l.b16 %v4269
  %v4940 = vunpack.c.h.b16 %v4269
  %v4941 = vunpack.c.l.b16 %v4270
  %v4942 = vunpack.c.h.b16 %v4270
  %v4943 = vunpack.c.l.b16 %v4271
  %v4944 = vunpack.c.l.b16 %v4272
  %v4945 = vunpack.c.h.b16 %v4272
  %v4946 = vunpack.c.l.b16 %v4273
  %v4947 = vunpack.c.h.b16 %v4273
  %v4948 = vunpack.c.l.b16 %v4274
  %v4949 = vunpack.c.l.b16 %v4275
  %v4950 = vunpack.c.h.b16 %v4275
  %v4951 = vunpack.c.l.b16 %v4276
  %v4952 = vunpack.c.h.b16 %v4276
  %v4953 = vunpack.c.l.b16 %v4277
  %v4954 = vunpack.c.l.b16 %v4278
  %v4955 = vunpack.c.h.b16 %v4278
  %v4956 = vunpack.c.l.b16 %v4279
  %v4957 = vunpack.c.h.b16 %v4279
  %v4958 = vunpack.c.l.b16 %v4280
  %v4959 = vunpack.c.l.b16 %v4281
  %v4960 = vunpack.c.h.b16 %v4281
  %v4961 = vunpack.c.l.b16 %v4282
  %v4962 = vunpack.c.h.b16 %v4282
  %v4963 = vunpack.c.l.b16 %v4283
  %v4964 = vunpack.c.l.b16 %v4284
  %v4965 = vunpack.c.h.b16 %v4284
  %v4966 = vunpack.c.l.b16 %v4285
  %v4967 = vunpack.c.h.b16 %v4285
  %v4968 = vunpack.c.l.b16 %v4286
  %v4969 = vunpack.c.l.b16 %v4287
  %v4970 = vunpack.c.h.b16 %v4287
  %v4971 = vunpack.c.l.b16 %v4288
  %v4972 = vunpack.c.h.b16 %v4288
  %v4973 = vunpack.c.l.b16 %v4289
  %v4974 = vunpack.c.l.b16 %v4290
  %v4975 = vunpack.c.h.b16 %v4290
  %v4976 = vunpack.c.l.b16 %v4291
  %v4977 = vunpack.c.h.b16 %v4291
  %v4978 = vunpack.c.l.b16 %v4292
  %v4979 = vunpack.c.l.b16 %v4293
  %v4980 = vunpack.c.h.b16 %v4293
  %v4981 = vunpack.c.l.b16 %v4294
  %v4982 = vunpack.c.h.b16 %v4294
  %v4983 = vunpack.c.l.b16 %v4295
  %v4984 = vunpack.c.l.b16 %v4296
  %v4985 = vunpack.c.h.b16 %v4296
  %v4986 = vunpack.c.l.b16 %v4297
  %v4987 = vunpack.c.h.b16 %v4297
  %v4988 = vunpack.c.l.b16 %v4298
  %v4989 = vunpack.c.l.b16 %v4299
  %v4990 = vunpack.c.h.b16 %v4299
  %v4991 = vunpack.c.l.b16 %v4300
  %v4992 = vunpack.c.h.b16 %v4300
  %v4993 = vunpack.c.l.b16 %v4301
  %v4994 = vunpack.c.l.b16 %v4302
  %v4995 = vunpack.c.h.b16 %v4302
  %v4996 = vunpack.c.l.b16 %v4303
  %v4997 = vunpack.c.h.b16 %v4303
  %v4998 = vunpack.c.l.b16 %v4304
  %v4999 = vunpack.c.l.b16 %v4305
  %v5000 = vunpack.c.h.b16 %v4305
  %v5001 = vunpack.c.l.b16 %v4306
  %v5002 = vunpack.c.h.b16 %v4306
  %v5003 = vunpack.c.l.b16 %v4307
  %v5004 = vunpack.c.l.b16 %v4308
  %v5005 = vunpack.c.h.b16 %v4308
  %v5006 = vunpack.c.l.b16 %v4309
  %v5007 = vunpack.c.h.b16 %v4309
  %v5008 = vunpack.c.l.b16 %v4310
  %v5009 = vunpack.c.l.b16 %v4311
  %v5010 = vunpack.c.h.b16 %v4311
  %v5011 = vunpack.c.l.b16 %v4312
  %v5012 = vunpack.c.h.b16 %v4312
  %v5013 = vunpack.c.l.b16 %v4313
  %v5014 = vunpack.c.l.b16 %v4314
  %v5015 = vunpack.c.h.b16 %v4314
  %v5016 = vunpack.c.l.b16 %v4315
  %v5017 = vunpack.c.h.b16 %v4315
  %v5018 = vunpack.c.l.b16 %v4316
  %v5019 = vunpack.c.l.b16 %v4317
  %v5020 = vunpack.c.h.b16 %v4317
  %v5021 = vunpack.c.l.b16 %v4318
  %v5022 = vunpack.c.h.b16 %v4318
  %v5023 = vunpack.c.l.b16 %v4319
  %v5024 = vunpack.c.l.b16 %v4320
  %v5025 = vunpack.c.h.b16 %v4320
  %v5026 = vunpack.c.l.b16 %v4321
  %v5027 = vunpack.c.h.b16 %v4321
  %v5028 = vunpack.c.l.b16 %v4322
  %v5029 = vunpack.c.l.b16 %v4323
  %v5030 = vunpack.c.h.b16 %v4323
  %v5031 = vunpack.c.l.b16 %v4324
  %v5032 = vunpack.c.h.b16 %v4324
  %v5033 = vunpack.c.l.b16 %v4325
  %v5034 = vunpack.c.l.b16 %v4326
  %v5035 = vunpack.c.h.b16 %v4326
  %v5036 = vunpack.c.l.b16 %v4327
  %v5037 = vunpack.c.h.b16 %v4327
  %v5038 = vunpack.c.l.b16 %v4328
  %v5039 = vunpack.c.l.b16 %v4329
  %v5040 = vunpack.c.h.b16 %v4329
  %v5041 = vunpack.c.l.b16 %v4330
  %v5042 = vunpack.c.h.b16 %v4330
  %v5043 = vunpack.c.l.b16 %v4331
  %v5044 = vunpack.c.l.b16 %v4332
  %v5045 = vunpack.c.h.b16 %v4332
  %v5046 = vunpack.c.l.b16 %v4333
  %v5047 = vunpack.c.h.b16 %v4333
  %v5048 = vunpack.c.l.b16 %v4334
  %v5049 = vunpack.c.l.b16 %v4335
  %v5050 = vunpack.c.h.b16 %v4335
  %v5051 = vunpack.c.l.b16 %v4336
  %v5052 = vunpack.c.h.b16 %v4336
  %v5053 = vunpack.c.l.b16 %v4337
  %v5054 = vunpack.c.l.b16 %v4338
  %v5055 = vunpack.c.h.b16 %v4338
  %v5056 = vunpack.c.l.b16 %v4339
  %v5057 = vunpack.c.h.b16 %v4339
  %v5058 = vunpack.c.l.b16 %v4340
  %v5059 = vunpack.c.l.b16 %v4341
  %v5060 = vunpack.c.h.b16 %v4341
  %v5061 = vunpack.c.l.b16 %v4342
  %v5062 = vunpack.c.h.b16 %v4342
  %v5063 = vunpack.c.l.b16 %v4343
  %v5064 = vunpack.c.l.b16 %v4344
  %v5065 = vunpack.c.h.b16 %v4344
  %v5066 = vunpack.c.l.b16 %v4345
  %v5067 = vunpack.c.h.b16 %v4345
  %v5068 = vunpack.c.l.b16 %v4346
  %v5069 = vunpack.c.l.b16 %v4347
  %v5070 = vunpack.c.h.b16 %v4347
  %v5071 = vunpack.c.l.b16 %v4348
  %v5072 = vunpack.c.h.b16 %v4348
  %v5073 = vunpack.c.l.b16 %v4349
  %v5074 = vunpack.c.l.b16 %v4350
  %v5075 = vunpack.c.h.b16 %v4350
  %v5076 = vunpack.c.l.b16 %v4351
  %v5077 = vunpack.c.h.b16 %v4351
  %v5078 = vunpack.c.l.b16 %v4352
  %v5079 = vunpack.c.l.b16 %v4353
  %v5080 = vunpack.c.h.b16 %v4353
  %v5081 = vunpack.c.l.b16 %v4354
  %v5082 = vunpack.c.h.b16 %v4354
  %v5083 = vunpack.c.l.b16 %v4355
  %v5084 = vunpack.c.l.b16 %v4356
  %v5085 = vunpack.c.h.b16 %v4356
  %v5086 = vunpack.c.l.b16 %v4357
  %v5087 = vunpack.c.h.b16 %v4357
  %v5088 = vunpack.c.l.b16 %v4358
  %v5089 = vunpack.c.l.b16 %v4359
  %v5090 = vunpack.c.h.b16 %v4359
  %v5091 = vunpack.c.l.b16 %v4360
  %v5092 = vunpack.c.h.b16 %v4360
  %v5093 = vunpack.c.l.b16 %v4361
  %v5094 = vunpack.c.l.b16 %v4362
  %v5095 = vunpack.c.h.b16 %v4362
  %v5096 = vunpack.c.l.b16 %v4363
  %v5097 = vunpack.c.h.b16 %v4363
  %v5098 = vunpack.c.l.b16 %v4364
  %v5099 = vunpack.c.l.b16 %v4365
  %v5100 = vunpack.c.h.b16 %v4365
  %v5101 = vunpack.c.l.b16 %v4366
  %v5102 = vunpack.c.h.b16 %v4366
  %v5103 = vunpack.c.l.b16 %v4367
  %v5104 = vunpack.c.l.b16 %v4368
  %v5105 = vunpack.c.h.b16 %v4368
  %v5106 = vunpack.c.l.b16 %v4369
  %v5107 = vunpack.c.h.b16 %v4369
  %v5108 = vunpack.c.l.b16 %v4370
  %v5109 = vunpack.c.l.b16 %v4371
  %v5110 = vunpack.c.h.b16 %v4371
  %v5111 = vunpack.c.l.b16 %v4372
  %v5112 = vunpack.c.h.b16 %v4372
  %v5113 = vunpack.c.l.b16 %v4373
  %v5114 = vunpack.c.l.b16 %v4374
  %v5115 = vunpack.c.h.b16 %v4374
  %v5116 = vunpack.c.l.b16 %v4375
  %v5117 = vunpack.c.h.b16 %v4375
  %v5118 = vunpack.c.l.b16 %v4376
  %v5119 = vunpack.c.l.b16 %v4377
  %v5120 = vunpack.c.h.b16 %v4377
  %v5121 = vunpack.c.l.b16 %v4378
  %v5122 = vunpack.c.h.b16 %v4378
  %v5123 = vunpack.c.l.b16 %v4379
  %v5124 = vunpack.c.l.b16 %v4380
  %v5125 = vunpack.c.h.b16 %v4380
  %v5126 = vunpack.c.l.b16 %v4381
  %v5127 = vunpack.c.h.b16 %v4381
  %v5128 = vunpack.c.l.b16 %v4382
  %v5129 = vunpack.c.l.b16 %v4383
  %v5130 = vunpack.c.h.b16 %v4383
  %v5131 = vunpack.c.l.b16 %v4384
  %v5132 = vunpack.c.h.b16 %v4384
  %v5133 = vunpack.c.l.b16 %v4385
  %v5134 = vunpack.c.l.b16 %v4386
  %v5135 = vunpack.c.h.b16 %v4386
  %v5136 = vunpack.c.l.b16 %v4387
  %v5137 = vunpack.c.h.b16 %v4387
  %v5138 = vunpack.c.l.b16 %v4388
  %v5139 = vunpack.c.l.b16 %v4389
  %v5140 = vunpack.c.h.b16 %v4389
  %v5141 = vunpack.c.l.b16 %v4390
  %v5142 = vunpack.c.h.b16 %v4390
  %v5143 = vunpack.c.l.b16 %v4391
  %v5144 = vunpack.c.l.b16 %v4392
  %v5145 = vunpack.c.h.b16 %v4392
  %v5146 = vunpack.c.l.b16 %v4393
  %v5147 = vunpack.c.h.b16 %v4393
  %v5148 = vunpack.c.l.b16 %v4394
  %v5149 = vunpack.c.l.b16 %v4395
  %v5150 = vunpack.c.h.b16 %v4395
  %v5151 = vunpack.c.l.b16 %v4396
  %v5152 = vunpack.c.h.b16 %v4396
  %v5153 = vunpack.c.l.b16 %v4397
  %v5154 = vunpack.c.l.b16 %v4398
  %v5155 = vunpack.c.h.b16 %v4398
  %v5156 = vunpack.c.l.b16 %v4399
  %v5157 = vunpack.c.h.b16 %v4399
  %v5158 = vunpack.c.l.b16 %v4400
  %v5159 = vunpack.c.l.b16 %v4401
  %v5160 = vunpack.c.h.b16 %v4401
  %v5161 = vunpack.c.l.b16 %v4402
  %v5162 = vunpack.c.h.b16 %v4402
  %v5163 = vunpack.c.l.b16 %v4403
  %v5164 = vunpack.c.l.b16 %v4404
  %v5165 = vunpack.c.h.b16 %v4404
  %v5166 = vunpack.c.l.b16 %v4405
  %v5167 = vunpack.c.h.b16 %v4405
  %v5168 = vunpack.c.l.b16 %v4406
  %v5169 = vunpack.c.l.b16 %v4407
  %v5170 = vunpack.c.h.b16 %v4407
  %v5171 = vunpack.c.l.b16 %v4408
  %v5172 = vunpack.c.h.b16 %v4408
  %v5173 = vunpack.c.l.b16 %v4409
  %v5174 = vunpack.c.l.b16 %v4410
  %v5175 = vunpack.c.h.b16 %v4410
  %v5176 = vunpack.c.l.b16 %v4411
  %v5177 = vunpack.c.h.b16 %v4411
  %v5178 = vunpack.c.l.b16 %v4412
  %v5179 = vunpack.c.l.b16 %v4413
  %v5180 = vunpack.c.h.b16 %v4413
  %v5181 = vunpack.c.l.b16 %v4414
  %v5182 = vunpack.c.h.b16 %v4414
  %v5183 = vunpack.c.l.b16 %v4415
  %v5184 = vunpack.c.l.b16 %v4416
  %v5185 = vunpack.c.h.b16 %v4416
  %v5186 = vunpack.c.l.b16 %v4417
  %v5187 = vunpack.c.h.b16 %v4417
  %v5188 = vunpack.c.l.b16 %v4418
  %v5189 = vunpack.c.l.b16 %v4419
  %v5190 = vunpack.c.h.b16 %v4419
  %v5191 = vunpack.c.l.b16 %v4420
  %v5192 = vunpack.c.h.b16 %v4420
  %v5193 = vunpack.c.l.b16 %v4421
  %v5194 = vunpack.c.l.b16 %v4422
  %v5195 = vunpack.c.h.b16 %v4422
  %v5196 = vunpack.c.l.b16 %v4423
  %v5197 = vunpack.c.h.b16 %v4423
  %v5198 = vunpack.c.l.b16 %v4424
  %v5199 = vunpack.c.l.b16 %v4425
  %v5200 = vunpack.c.h.b16 %v4425
  %v5201 = vunpack.c.l.b16 %v4426
  %v5202 = vunpack.c.h.b16 %v4426
  %v5203 = vunpack.c.l.b16 %v4427
  %v5204 = vunpack.c.l.b16 %v4428
  %v5205 = vunpack.c.h.b16 %v4428
  %v5206 = vunpack.c.l.b16 %v4429
  %v5207 = vunpack.c.h.b16 %v4429
  %v5208 = vunpack.c.l.b16 %v4430
  %v5209 = vunpack.c.l.b16 %v4431
  %v5210 = vunpack.c.h.b16 %v4431
  %v5211 = vunpack.c.l.b16 %v4432
  %v5212 = vunpack.c.h.b16 %v4432
  %v5213 = vunpack.c.l.b16 %v4433
  %v5214 = vunpack.c.l.b16 %v4434
  %v5215 = vunpack.c.h.b16 %v4434
  %v5216 = vunpack.c.l.b16 %v4435
  %v5217 = vunpack.c.h.b16 %v4435
  %v5218 = vunpack.c.l.b16 %v4436
  %v5219 = vunpack.c.l.b16 %v4437
  %v5220 = vunpack.c.h.b16 %v4437
  %v5221 = vunpack.c.l.b16 %v4438
  %v5222 = vunpack.c.h.b16 %v4438
  %v5223 = vunpack.c.l.b16 %v4439
  %v5224 = vunpack.c.l.b16 %v4440
  %v5225 = vunpack.c.h.b16 %v4440
  %v5226 = vunpack.c.l.b16 %v4441
  %v5227 = vunpack.c.h.b16 %v4441
  %v5228 = vunpack.c.l.b16 %v4442
  %v5229 = vunpack.c.l.b16 %v4443
  %v5230 = vunpack.c.h.b16 %v4443
  %v5231 = vunpack.c.l.b16 %v4444
  %v5232 = vunpack.c.h.b16 %v4444
  %v5233 = vunpack.c.l.b16 %v4445
  %v5234 = vunpack.c.l.b16 %v4446
  %v5235 = vunpack.c.h.b16 %v4446
  %v5236 = vunpack.c.l.b16 %v4447
  %v5237 = vunpack.c.h.b16 %v4447
  %v5238 = vunpack.c.l.b16 %v4448
  %v5239 = vunpack.c.l.b16 %v4449
  %v5240 = vunpack.c.h.b16 %v4449
  %v5241 = vunpack.c.l.b16 %v4450
  %v5242 = vunpack.c.h.b16 %v4450
  %v5243 = vunpack.c.l.b16 %v4451
  %v5244 = vunpack.c.l.b16 %v4452
  %v5245 = vunpack.c.h.b16 %v4452
  %v5246 = vunpack.c.l.b16 %v4453
  %v5247 = vunpack.c.h.b16 %v4453
  %v5248 = vunpack.c.l.b16 %v4454
  %v5249 = vunpack.c.l.b16 %v4455
  %v5250 = vunpack.c.h.b16 %v4455
  %v5251 = vunpack.c.l.b16 %v4456
  %v5252 = vunpack.c.h.b16 %v4456
  %v5253 = vunpack.c.l.b16 %v4457
  %v5254 = vunpack.c.l.b16 %v4458
  %v5255 = vunpack.c.h.b16 %v4458
  %v5256 = vunpack.c.l.b16 %v4459
  %v5257 = vunpack.c.h.b16 %v4459
  %v5258 = vunpack.c.l.b16 %v4460
  %v5259 = vunpack.c.l.b16 %v4461
  %v5260 = vunpack.c.h.b16 %v4461
  %v5261 = vunpack.c.l.b16 %v4462
  %v5262 = vunpack.c.h.b16 %v4462
  %v5263 = vunpack.c.l.b16 %v4463
  %v5264 = vpack.c.b16 %v4769, %v4764
  %v5265 = vpack.c.b16 %v4770, %v4765
  %v5266 = vpack.c.b16 %v4771, %v4766
  %v5267 = vpack.c.b16 %v4772, %v4767
  %v5268 = vpack.c.b16 %v4773, %v4768
  %v5269 = vpack.c.b16 %v4779, %v4774
  %v5270 = vpack.c.b16 %v4780, %v4775
  %v5271 = vpack.c.b16 %v4781, %v4776
  %v5272 = vpack.c.b16 %v4782, %v4777
  %v5273 = vpack.c.b16 %v4783, %v4778
  %v5274 = vpack.c.b16 %v4789, %v4784
  %v5275 = vpack.c.b16 %v4790, %v4785
  %v5276 = vpack.c.b16 %v4791, %v4786
  %v5277 = vpack.c.b16 %v4792, %v4787
  %v5278 = vpack.c.b16 %v4793, %v4788
  %v5279 = vpack.c.b16 %v4799, %v4794
  %v5280 = vpack.c.b16 %v4800, %v4795
  %v5281 = vpack.c.b16 %v4801, %v4796
  %v5282 = vpack.c.b16 %v4802, %v4797
  %v5283 = vpack.c.b16 %v4803, %v4798
  %v5284 = vpack.c.b16 %v4809, %v4804
  %v5285 = vpack.c.b16 %v4810, %v4805
  %v5286 = vpack.c.b16 %v4811, %v4806
  %v5287 = vpack.c.b16 %v4812, %v4807
  %v5288 = vpack.c.b16 %v4813, %v4808
  %v5289 = vpack.c.b16 %v4819, %v4814
  %v5290 = vpack.c.b16 %v4820, %v4815
  %v5291 = vpack.c.b16 %v4821, %v4816
  %v5292 = vpack.c.b16 %v4822, %v4817
  %v5293 = vpack.c.b16 %v4823, %v4818
  %v5294 = vpack.c.b16 %v4829, %v4824
  %v5295 = vpack.c.b16 %v4830, %v4825
  %v5296 = vpack.c.b16 %v4831, %v4826
  %v5297 = vpack.c.b16 %v4832, %v4827
  %v5298 = vpack.c.b16 %v4833, %v4828
  %v5299 = vpack.c.b16 %v4839, %v4834
  %v5300 = vpack.c.b16 %v4840, %v4835
  %v5301 = vpack.c.b16 %v4841, %v4836
  %v5302 = vpack.c.b16 %v4842, %v4837
  %v5303 = vpack.c.b16 %v4843, %v4838
  %v5304 = vpack.c.b16 %v4849, %v4844
  %v5305 = vpack.c.b16 %v4850, %v4845
  %v5306 = vpack.c.b16 %v4851, %v4846
  %v5307 = vpack.c.b16 %v4852, %v4847
  %v5308 = vpack.c.b16 %v4853, %v4848
  %v5309 = vpack.c.b16 %v4859, %v4854
  %v5310 = vpack.c.b16 %v4860, %v4855
  %v5311 = vpack.c.b16 %v4861, %v4856
  %v5312 = vpack.c.b16 %v4862, %v4857
  %v5313 = vpack.c.b16 %v4863, %v4858
  %v5314 = vpack.c.b16 %v4869, %v4864
  %v5315 = vpack.c.b16 %v4870, %v4865
  %v5316 = vpack.c.b16 %v4871, %v4866
  %v5317 = vpack.c.b16 %v4872, %v4867
  %v5318 = vpack.c.b16 %v4873, %v4868
  %v5319 = vpack.c.b16 %v4879, %v4874
  %v5320 = vpack.c.b16 %v4880, %v4875
  %v5321 = vpack.c.b16 %v4881, %v4876
  %v5322 = vpack.c.b16 %v4882, %v4877
  %v5323 = vpack.c.b16 %v4883, %v4878
  %v5324 = vpack.c.b16 %v4889, %v4884
  %v5325 = vpack.c.b16 %v4890, %v4885
  %v5326 = vpack.c.b16 %v4891, %v4886
  %v5327 = vpack.c.b16 %v4892, %v4887
  %v5328 = vpack.c.b16 %v4893, %v4888
  %v5329 = vpack.c.b16 %v4899, %v4894
  %v5330 = vpack.c.b16 %v4900, %v4895
  %v5331 = vpack.c.b16 %v4901, %v4896
  %v5332 = vpack.c.b16 %v4902, %v4897
  %v5333 = vpack.c.b16 %v4903, %v4898
  %v5334 = vpack.c.b16 %v4909, %v4904
  %v5335 = vpack.c.b16 %v4910, %v4905
  %v5336 = vpack.c.b16 %v4911, %v4906
  %v5337 = vpack.c.b16 %v4912, %v4907
  %v5338 = vpack.c.b16 %v4913, %v4908
  %v5339 = vpack.c.b16 %v4919, %v4914
  %v5340 = vpack.c.b16 %v4920, %v4915
  %v5341 = vpack.c.b16 %v4921, %v4916
  %v5342 = vpack.c.b16 %v4922, %v4917
  %v5343 = vpack.c.b16 %v4923, %v4918
  %v5344 = vpack.c.b16 %v4929, %v4924
  %v5345 = vpack.c.b16 %v4930, %v4925
  %v5346 = vpack.c.b16 %v4931, %v4926
  %v5347 = vpack.c.b16 %v4932, %v4927
  %v5348 = vpack.c.b16 %v4933, %v4928
  %v5349 = vpack.c.b16 %v4939, %v4934
  %v5350 = vpack.c.b16 %v4940, %v4935
  %v5351 = vpack.c.b16 %v4941, %v4936
  %v5352 = vpack.c.b16 %v4942, %v4937
  %v5353 = vpack.c.b16 %v4943, %v4938
  %v5354 = vpack.c.b16 %v4949, %v4944
  %v5355 = vpack.c.b16 %v4950, %v4945
  %v5356 = vpack.c.b16 %v4951, %v4946
  %v5357 = vpack.c.b16 %v4952, %v4947
  %v5358 = vpack.c.b16 %v4953, %v4948
  %v5359 = vpack.c.b16 %v4959, %v4954
  %v5360 = vpack.c.b16 %v4960, %v4955
  %v5361 = vpack.c.b16 %v4961, %v4956
  %v5362 = vpack.c.b16 %v4962, %v4957
  %v5363 = vpack.c.b16 %v4963, %v4958
  %v5364 = vpack.c.b16 %v4969, %v4964
  %v5365 = vpack.c.b16 %v4970, %v4965
  %v5366 = vpack.c.b16 %v4971, %v4966
  %v5367 = vpack.c.b16 %v4972, %v4967
  %v5368 = vpack.c.b16 %v4973, %v4968
  %v5369 = vpack.c.b16 %v4979, %v4974
  %v5370 = vpack.c.b16 %v4980, %v4975
  %v5371 = vpack.c.b16 %v4981, %v4976
  %v5372 = vpack.c.b16 %v4982, %v4977
  %v5373 = vpack.c.b16 %v4983, %v4978
  %v5374 = vpack.c.b16 %v4989, %v4984
  %v5375 = vpack.c.b16 %v4990, %v4985
  %v5376 = vpack.c.b16 %v4991, %v4986
  %v5377 = vpack.c.b16 %v4992, %v4987
  %v5378 = vpack.c.b16 %v4993, %v4988
  %v5379 = vpack.c.b16 %v4999, %v4994
  %v5380 = vpack.c.b16 %v5000, %v4995
  %v5381 = vpack.c.b16 %v5001, %v4996
  %v5382 = vpack.c.b16 %v5002, %v4997
  %v5383 = vpack.c.b16 %v5003, %v4998
  %v5384 = vpack.c.b16 %v5009, %v5004
  %v5385 = vpack.c.b16 %v5010, %v5005
  %v5386 = vpack.c.b16 %v5011, %v5006
  %v5387 = vpack.c.b16 %v5012, %v5007
  %v5388 = vpack.c.b16 %v5013, %v5008
  %v5389 = vpack.c.b16 %v5019, %v5014
  %v5390 = vpack.c.b16 %v5020, %v5015
  %v5391 = vpack.c.b16 %v5021, %v5016
  %v5392 = vpack.c.b16 %v5022, %v5017
  %v5393 = vpack.c.b16 %v5023, %v5018
  %v5394 = vpack.c.b16 %v5029, %v5024
  %v5395 = vpack.c.b16 %v5030, %v5025
  %v5396 = vpack.c.b16 %v5031, %v5026
  %v5397 = vpack.c.b16 %v5032, %v5027
  %v5398 = vpack.c.b16 %v5033, %v5028
  %v5399 = vpack.c.b16 %v5039, %v5034
  %v5400 = vpack.c.b16 %v5040, %v5035
  %v5401 = vpack.c.b16 %v5041, %v5036
  %v5402 = vpack.c.b16 %v5042, %v5037
  %v5403 = vpack.c.b16 %v5043, %v5038
  %v5404 = vpack.c.b16 %v5049, %v5044
  %v5405 = vpack.c.b16 %v5050, %v5045
  %v5406 = vpack.c.b16 %v5051, %v5046
  %v5407 = vpack.c.b16 %v5052, %v5047
  %v5408 = vpack.c.b16 %v5053, %v5048
  %v5409 = vpack.c.b16 %v5059, %v5054
  %v5410 = vpack.c.b16 %v5060, %v5055
  %v5411 = vpack.c.b16 %v5061, %v5056
  %v5412 = vpack.c.b16 %v5062, %v5057
  %v5413 = vpack.c.b16 %v5063, %v5058
  %v5414 = vpack.c.b16 %v5069, %v5064
  %v5415 = vpack.c.b16 %v5070, %v5065
  %v5416 = vpack.c.b16 %v5071, %v5066
  %v5417 = vpack.c.b16 %v5072, %v5067
  %v5418 = vpack.c.b16 %v5073, %v5068
  %v5419 = vpack.c.b16 %v5079, %v5074
  %v5420 = vpack.c.b16 %v5080, %v5075
  %v5421 = vpack.c.b16 %v5081, %v5076
  %v5422 = vpack.c.b16 %v5082, %v5077
  %v5423 = vpack.c.b16 %v5083, %v5078
  %v5424 = vpack.c.b16 %v5089, %v5084
  %v5425 = vpack.c.b16 %v5090, %v5085
  %v5426 = vpack.c.b16 %v5091, %v5086
  %v5427 = vpack.c.b16 %v5092, %v5087
  %v5428 = vpack.c.b16 %v5093, %v5088
  %v5429 = vpack.c.b16 %v5099, %v5094
  %v5430 = vpack.c.b16 %v5100, %v5095
  %v5431 = vpack.c.b16 %v5101, %v5096
  %v5432 = vpack.c.b16 %v5102, %v5097
  %v5433 = vpack.c.b16 %v5103, %v5098
  %v5434 = vpack.c.b16 %v5109, %v5104
  %v5435 = vpack.c.b16 %v5110, %v5105
  %v5436 = vpack.c.b16 %v5111, %v5106
  %v5437 = vpack.c.b16 %v5112, %v5107
  %v5438 = vpack.c.b16 %v5113, %v5108
  %v5439 = vpack.c.b16 %v5119, %v5114
  %v5440 = vpack.c.b16 %v5120, %v5115
  %v5441 = vpack.c.b16 %v5121, %v5116
  %v5442 = vpack.c.b16 %v5122, %v5117
  %v5443 = vpack.c.b16 %v5123, %v5118
  %v5444 = vpack.c.b16 %v5129, %v5124
  %v5445 = vpack.c.b16 %v5130, %v5125
  %v5446 = vpack.c.b16 %v5131, %v5126
  %v5447 = vpack.c.b16 %v5132, %v5127
  %v5448 = vpack.c.b16 %v5133, %v5128
  %v5449 = vpack.c.b16 %v5139, %v5134
  %v5450 = vpack.c.b16 %v5140, %v5135
  %v5451 = vpack.c.b16 %v5141, %v5136
  %v5452 = vpack.c.b16 %v5142, %v5137
  %v5453 = vpack.c.b16 %v5143, %v5138
  %v5454 = vpack.c.b16 %v5149, %v5144
  %v5455 = vpack.c.b16 %v5150, %v5145
  %v5456 = vpack.c.b16 %v5151, %v5146
  %v5457 = vpack.c.b16 %v5152, %v5147
  %v5458 = vpack.c.b16 %v5153, %v5148
  %v5459 = vpack.c.b16 %v5159, %v5154
  %v5460 = vpack.c.b16 %v5160, %v5155
  %v5461 = vpack.c.b16 %v5161, %v5156
  %v5462 = vpack.c.b16 %v5162, %v5157
  %v5463 = vpack.c.b16 %v5163, %v5158
  %v5464 = vpack.c.b16 %v5169, %v5164
  %v5465 = vpack.c.b16 %v5170, %v5165
  %v5466 = vpack.c.b16 %v5171, %v5166
  %v5467 = vpack.c.b16 %v5172, %v5167
  %v5468 = vpack.c.b16 %v5173, %v5168
  %v5469 = vpack.c.b16 %v5179, %v5174
  %v5470 = vpack.c.b16 %v5180, %v5175
  %v5471 = vpack.c.b16 %v5181, %v5176
  %v5472 = vpack.c.b16 %v5182, %v5177
  %v5473 = vpack.c.b16 %v5183, %v5178
  %v5474 = vpack.c.b16 %v5189, %v5184
  %v5475 = vpack.c.b16 %v5190, %v5185
  %v5476 = vpack.c.b16 %v5191, %v5186
  %v5477 = vpack.c.b16 %v5192, %v5187
  %v5478 = vpack.c.b16 %v5193, %v5188
  %v5479 = vpack.c.b16 %v5199, %v5194
  %v5480 = vpack.c.b16 %v5200, %v5195
  %v5481 = vpack.c.b16 %v5201, %v5196
  %v5482 = vpack.c.b16 %v5202, %v5197
  %v5483 = vpack.c.b16 %v5203, %v5198
  %v5484 = vpack.c.b16 %v5209, %v5204
  %v5485 = vpack.c.b16 %v5210, %v5205
  %v5486 = vpack.c.b16 %v5211, %v5206
  %v5487 = vpack.c.b16 %v5212, %v5207
  %v5488 = vpack.c.b16 %v5213, %v5208
  %v5489 = vpack.c.b16 %v5219, %v5214
  %v5490 = vpack.c.b16 %v5220, %v5215
  %v5491 = vpack.c.b16 %v5221, %v5216
  %v5492 = vpack.c.b16 %v5222, %v5217
  %v5493 = vpack.c.b16 %v5223, %v5218
  %v5494 = vpack.c.b16 %v5229, %v5224
  %v5495 = vpack.c.b16 %v5230, %v5225
  %v5496 = vpack.c.b16 %v5231, %v5226
  %v5497 = vpack.c.b16 %v5232, %v5227
  %v5498 = vpack.c.b16 %v5233, %v5228
  %v5499 = vpack.c.b16 %v5239, %v5234
  %v5500 = vpack.c.b16 %v5240, %v5235
  %v5501 = vpack.c.b16 %v5241, %v5236
  %v5502 = vpack.c.b16 %v5242, %v5237
  %v5503 = vpack.c.b16 %v5243, %v5238
  %v5504 = vpack.c.b16 %v5249, %v5244
  %v5505 = vpack.c.b16 %v5250, %v5245
  %v5506 = vpack.c.b16 %v5251, %v5246
  %v5507 = vpack.c.b16 %v5252, %v5247
  %v5508 = vpack.c.b16 %v5253, %v5248
  %v5509 = vpack.c.b16 %v5259, %v5254
  %v5510 = vpack.c.b16 %v5260, %v5255
  %v5511 = vpack.c.b16 %v5261, %v5256
  %v5512 = vpack.c.b16 %v5262, %v5257
  %v5513 = vpack.c.b16 %v5263, %v5258
  %v5765 = vsel %vm4029, %v4163, 0
  %5767 = vmatprep.subr.bf16.mxu0 %v5300
  %5768 = vmatpush1.bf16.msra.mxu0 %v5299
  %5769 = vmatprep.subr.bf16.mxu0 %v5295
  %5770 = vmatpush1.bf16.msra.mxu0 %v5294
  %5771 = vmatprep.subr.bf16.mxu0 %v5290
  %5772 = vmatpush1.bf16.msra.mxu0 %v5289
  %5773 = vmatprep.subr.bf16.mxu0 %v5285
  %5774 = vmatpush1.bf16.msra.mxu0 %v5284
  %5775 = vmatprep.subr.bf16.mxu0 %v5280
  %5776 = vmatpush1.bf16.msra.mxu0 %v5279
  %5777 = vmatprep.subr.bf16.mxu0 %v5275
  %5778 = vmatpush1.bf16.msra.mxu0 %v5274
  %5779 = vmatprep.subr.bf16.mxu0 %v5270
  %5780 = vmatpush1.bf16.msra.mxu0 %v5269
  %5781 = vmatprep.subr.bf16.mxu0 %v5265
  %5782 = vmatpush1.bf16.msra.mxu0 %v5264
  %5783 = vmatprep.subr.bf16.mxu0 %v5340
  %5784 = vmatpush2.bf16.msra.mxu0 %v5339
  %5785 = vmatprep.subr.bf16.mxu0 %v5335
  %5786 = vmatpush2.bf16.msra.mxu0 %v5334
  %5787 = vmatprep.subr.bf16.mxu0 %v5330
  %5788 = vmatpush2.bf16.msra.mxu0 %v5329
  %5789 = vmatprep.subr.bf16.mxu0 %v5325
  %5790 = vmatpush2.bf16.msra.mxu0 %v5324
  %5791 = vmatprep.subr.bf16.mxu0 %v5320
  %5792 = vmatpush2.bf16.msra.mxu0 %v5319
  %5793 = vmatprep.subr.bf16.mxu0 %v5315
  %5794 = vmatpush2.bf16.msra.mxu0 %v5314
  %5795 = vmatprep.subr.bf16.mxu0 %v5310
  %5796 = vmatpush2.bf16.msra.mxu0 %v5309
  %5797 = vmatprep.subr.bf16.mxu0 %v5305
  %5798 = vmatpush2.bf16.msra.mxu0 %v5304
  %5799 = vmatprep.mubr.bf16.mxu0 %v4158
  %5800 = vmatmul.mubr.bf16.gmra.mxu0 %v4157
  %v5801 = vpop.f32.mrf.mxu0
  %v5802 = vadd.f32 0.0, %v5801
  %v5803 = vpop.f32.mrf.mxu0
  %v5804 = vadd.f32 0.0, %v5803
  %v5805 = vpop.f32.mrf.mxu0
  %v5806 = vpop.f32.mrf.mxu0
  %5807 = vdwg.mxu0
  %5808 = vmatprep.subr.bf16.mxu0 %v5380
  %5809 = vmatpush1.bf16.msra.mxu0 %v5379
  %5810 = vmatprep.subr.bf16.mxu0 %v5375
  %5811 = vmatpush1.bf16.msra.mxu0 %v5374
  %5812 = vmatprep.subr.bf16.mxu0 %v5370
  %5813 = vmatpush1.bf16.msra.mxu0 %v5369
  %5814 = vmatprep.subr.bf16.mxu0 %v5365
  %5815 = vmatpush1.bf16.msra.mxu0 %v5364
  %5816 = vmatprep.subr.bf16.mxu0 %v5360
  %5817 = vmatpush1.bf16.msra.mxu0 %v5359
  %5818 = vmatprep.subr.bf16.mxu0 %v5355
  %5819 = vmatpush1.bf16.msra.mxu0 %v5354
  %5820 = vmatprep.subr.bf16.mxu0 %v5350
  %5821 = vmatpush1.bf16.msra.mxu0 %v5349
  %5822 = vmatprep.subr.bf16.mxu0 %v5345
  %5823 = vmatpush1.bf16.msra.mxu0 %v5344
  %5824 = vmatprep.subr.bf16.mxu0 %v5420
  %5825 = vmatpush2.bf16.msra.mxu0 %v5419
  %5826 = vmatprep.subr.bf16.mxu0 %v5415
  %5827 = vmatpush2.bf16.msra.mxu0 %v5414
  %5828 = vmatprep.subr.bf16.mxu0 %v5410
  %5829 = vmatpush2.bf16.msra.mxu0 %v5409
  %5830 = vmatprep.subr.bf16.mxu0 %v5405
  %5831 = vmatpush2.bf16.msra.mxu0 %v5404
  %5832 = vmatprep.subr.bf16.mxu0 %v5400
  %5833 = vmatpush2.bf16.msra.mxu0 %v5399
  %5834 = vmatprep.subr.bf16.mxu0 %v5395
  %5835 = vmatpush2.bf16.msra.mxu0 %v5394
  %5836 = vmatprep.subr.bf16.mxu0 %v5390
  %5837 = vmatpush2.bf16.msra.mxu0 %v5389
  %5838 = vmatprep.subr.bf16.mxu0 %v5385
  %5839 = vmatpush2.bf16.msra.mxu0 %v5384
  %5840 = vmatprep.mubr.bf16.mxu0 %v4160
  %5841 = vmatmul.mubr.bf16.gmra.mxu0 %v4159
  %v5842 = vpop.f32.mrf.mxu0
  %v5843 = vadd.f32 %v5802, %v5842
  %v5844 = vpop.f32.mrf.mxu0
  %v5845 = vadd.f32 %v5804, %v5844
  %v5846 = vpop.f32.mrf.mxu0
  %v5847 = vpop.f32.mrf.mxu0
  %5848 = vdwg.mxu0
  %5849 = vmatprep.subr.bf16.mxu0 %v5460
  %5850 = vmatpush1.bf16.msra.mxu0 %v5459
  %5851 = vmatprep.subr.bf16.mxu0 %v5455
  %5852 = vmatpush1.bf16.msra.mxu0 %v5454
  %5853 = vmatprep.subr.bf16.mxu0 %v5450
  %5854 = vmatpush1.bf16.msra.mxu0 %v5449
  %5855 = vmatprep.subr.bf16.mxu0 %v5445
  %5856 = vmatpush1.bf16.msra.mxu0 %v5444
  %5857 = vmatprep.subr.bf16.mxu0 %v5440
  %5858 = vmatpush1.bf16.msra.mxu0 %v5439
  %5859 = vmatprep.subr.bf16.mxu0 %v5435
  %5860 = vmatpush1.bf16.msra.mxu0 %v5434
  %5861 = vmatprep.subr.bf16.mxu0 %v5430
  %5862 = vmatpush1.bf16.msra.mxu0 %v5429
  %5863 = vmatprep.subr.bf16.mxu0 %v5425
  %5864 = vmatpush1.bf16.msra.mxu0 %v5424
  %5865 = vmatprep.subr.bf16.mxu0 %v5500
  %5866 = vmatpush2.bf16.msra.mxu0 %v5499
  %5867 = vmatprep.subr.bf16.mxu0 %v5495
  %5868 = vmatpush2.bf16.msra.mxu0 %v5494
  %5869 = vmatprep.subr.bf16.mxu0 %v5490
  %5870 = vmatpush2.bf16.msra.mxu0 %v5489
  %5871 = vmatprep.subr.bf16.mxu0 %v5485
  %5872 = vmatpush2.bf16.msra.mxu0 %v5484
  %5873 = vmatprep.subr.bf16.mxu0 %v5480
  %5874 = vmatpush2.bf16.msra.mxu0 %v5479
  %5875 = vmatprep.subr.bf16.mxu0 %v5475
  %5876 = vmatpush2.bf16.msra.mxu0 %v5474
  %5877 = vmatprep.subr.bf16.mxu0 %v5470
  %5878 = vmatpush2.bf16.msra.mxu0 %v5469
  %5879 = vmatprep.subr.bf16.mxu0 %v5465
  %5880 = vmatpush2.bf16.msra.mxu0 %v5464
  %5881 = vmatprep.mubr.bf16.mxu0 %v4162
  %5882 = vmatmul.mubr.bf16.gmra.mxu0 %v4161
  %v5883 = vpop.f32.mrf.mxu0
  %v5884 = vadd.f32 %v5843, %v5883
  %v5885 = vpop.f32.mrf.mxu0
  %v5886 = vadd.f32 %v5845, %v5885
  %v5887 = vpop.f32.mrf.mxu0
  %v5888 = vpop.f32.mrf.mxu0
  %5889 = vdwg.mxu0
  %5890 = vmatprep.subr.bf16.mxu0 0
  %5891 = vmatpush1.bf16.msra.mxu0 0
  %5892 = vmatprep.subr.bf16.mxu0 0
  %5893 = vmatpush1.bf16.msra.mxu0 0
  %5894 = vmatprep.subr.bf16.mxu0 0
  %5895 = vmatpush1.bf16.msra.mxu0 0
  %5896 = vmatprep.subr.bf16.mxu0 0
  %5897 = vmatpush1.bf16.msra.mxu0 0
  %5898 = vmatprep.subr.bf16.mxu0 0
  %5899 = vmatpush1.bf16.msra.mxu0 0
  %5900 = vmatprep.subr.bf16.mxu0 0
  %5901 = vmatpush1.bf16.msra.mxu0 0
  %5902 = vmatprep.subr.bf16.mxu0 %v5510
  %5903 = vmatpush1.bf16.msra.mxu0 %v5509
  %5904 = vmatprep.subr.bf16.mxu0 %v5505
  %5905 = vmatpush1.bf16.msra.mxu0 %v5504
  %5906 = vmatprep.subr.bf16.mxu0 0
  %5907 = vmatpush2.bf16.msra.mxu0 0
  %5908 = vmatprep.subr.bf16.mxu0 0
  %5909 = vmatpush2.bf16.msra.mxu0 0
  %5910 = vmatprep.subr.bf16.mxu0 0
  %5911 = vmatpush2.bf16.msra.mxu0 0
  %5912 = vmatprep.subr.bf16.mxu0 0
  %5913 = vmatpush2.bf16.msra.mxu0 0
  %5914 = vmatprep.subr.bf16.mxu0 0
  %5915 = vmatpush2.bf16.msra.mxu0 0
  %5916 = vmatprep.subr.bf16.mxu0 0
  %5917 = vmatpush2.bf16.msra.mxu0 0
  %5918 = vmatprep.subr.bf16.mxu0 0
  %5919 = vmatpush2.bf16.msra.mxu0 0
  %5920 = vmatprep.subr.bf16.mxu0 0
  %5921 = vmatpush2.bf16.msra.mxu0 0
  %5922 = vmatprep.mubr.bf16.mxu0 0
  %5923 = vmatmul.mubr.bf16.gmra.mxu0 %v5765
  %v5924 = vpop.f32.mrf.mxu0
  %v5925 = vadd.f32 %v5884, %v5924
  %v5926 = vpop.f32.mrf.mxu0
  %v5927 = vadd.f32 %v5886, %v5926
  %v5928 = vpop.f32.mrf.mxu0
  %v5929 = vpop.f32.mrf.mxu0
  %5930 = vdwg.mxu0
  %5931 = vmatprep.subr.bf16.mxu0 %v5302
  %5932 = vmatpush1.bf16.msra.mxu0 %v5301
  %5933 = vmatprep.subr.bf16.mxu0 %v5297
  %5934 = vmatpush1.bf16.msra.mxu0 %v5296
  %5935 = vmatprep.subr.bf16.mxu0 %v5292
  %5936 = vmatpush1.bf16.msra.mxu0 %v5291
  %5937 = vmatprep.subr.bf16.mxu0 %v5287
  %5938 = vmatpush1.bf16.msra.mxu0 %v5286
  %5939 = vmatprep.subr.bf16.mxu0 %v5282
  %5940 = vmatpush1.bf16.msra.mxu0 %v5281
  %5941 = vmatprep.subr.bf16.mxu0 %v5277
  %5942 = vmatpush1.bf16.msra.mxu0 %v5276
  %5943 = vmatprep.subr.bf16.mxu0 %v5272
  %5944 = vmatpush1.bf16.msra.mxu0 %v5271
  %5945 = vmatprep.subr.bf16.mxu0 %v5267
  %5946 = vmatpush1.bf16.msra.mxu0 %v5266
  %5947 = vmatprep.subr.bf16.mxu0 %v5342
  %5948 = vmatpush2.bf16.msra.mxu0 %v5341
  %5949 = vmatprep.subr.bf16.mxu0 %v5337
  %5950 = vmatpush2.bf16.msra.mxu0 %v5336
  %5951 = vmatprep.subr.bf16.mxu0 %v5332
  %5952 = vmatpush2.bf16.msra.mxu0 %v5331
  %5953 = vmatprep.subr.bf16.mxu0 %v5327
  %5954 = vmatpush2.bf16.msra.mxu0 %v5326
  %5955 = vmatprep.subr.bf16.mxu0 %v5322
  %5956 = vmatpush2.bf16.msra.mxu0 %v5321
  %5957 = vmatprep.subr.bf16.mxu0 %v5317
  %5958 = vmatpush2.bf16.msra.mxu0 %v5316
  %5959 = vmatprep.subr.bf16.mxu0 %v5312
  %5960 = vmatpush2.bf16.msra.mxu0 %v5311
  %5961 = vmatprep.subr.bf16.mxu0 %v5307
  %5962 = vmatpush2.bf16.msra.mxu0 %v5306
  %5963 = vmatprep.mubr.bf16.mxu0 %v4158
  %5964 = vmatmul.mubr.bf16.gmra.mxu0 %v4157
  %v5965 = vpop.f32.mrf.mxu0
  %v5966 = vadd.f32 0.0, %v5965
  %v5967 = vpop.f32.mrf.mxu0
  %v5968 = vadd.f32 0.0, %v5967
  %v5969 = vpop.f32.mrf.mxu0
  %v5970 = vpop.f32.mrf.mxu0
  %5971 = vdwg.mxu0
  %5972 = vmatprep.subr.bf16.mxu0 %v5382
  %5973 = vmatpush1.bf16.msra.mxu0 %v5381
  %5974 = vmatprep.subr.bf16.mxu0 %v5377
  %5975 = vmatpush1.bf16.msra.mxu0 %v5376
  %5976 = vmatprep.subr.bf16.mxu0 %v5372
  %5977 = vmatpush1.bf16.msra.mxu0 %v5371
  %5978 = vmatprep.subr.bf16.mxu0 %v5367
  %5979 = vmatpush1.bf16.msra.mxu0 %v5366
  %5980 = vmatprep.subr.bf16.mxu0 %v5362
  %5981 = vmatpush1.bf16.msra.mxu0 %v5361
  %5982 = vmatprep.subr.bf16.mxu0 %v5357
  %5983 = vmatpush1.bf16.msra.mxu0 %v5356
  %5984 = vmatprep.subr.bf16.mxu0 %v5352
  %5985 = vmatpush1.bf16.msra.mxu0 %v5351
  %5986 = vmatprep.subr.bf16.mxu0 %v5347
  %5987 = vmatpush1.bf16.msra.mxu0 %v5346
  %5988 = vmatprep.subr.bf16.mxu0 %v5422
  %5989 = vmatpush2.bf16.msra.mxu0 %v5421
  %5990 = vmatprep.subr.bf16.mxu0 %v5417
  %5991 = vmatpush2.bf16.msra.mxu0 %v5416
  %5992 = vmatprep.subr.bf16.mxu0 %v5412
  %5993 = vmatpush2.bf16.msra.mxu0 %v5411
  %5994 = vmatprep.subr.bf16.mxu0 %v5407
  %5995 = vmatpush2.bf16.msra.mxu0 %v5406
  %5996 = vmatprep.subr.bf16.mxu0 %v5402
  %5997 = vmatpush2.bf16.msra.mxu0 %v5401
  %5998 = vmatprep.subr.bf16.mxu0 %v5397
  %5999 = vmatpush2.bf16.msra.mxu0 %v5396
  %6000 = vmatprep.subr.bf16.mxu0 %v5392
  %6001 = vmatpush2.bf16.msra.mxu0 %v5391
  %6002 = vmatprep.subr.bf16.mxu0 %v5387
  %6003 = vmatpush2.bf16.msra.mxu0 %v5386
  %6004 = vmatprep.mubr.bf16.mxu0 %v4160
  %6005 = vmatmul.mubr.bf16.gmra.mxu0 %v4159
  %v6006 = vpop.f32.mrf.mxu0
  %v6007 = vadd.f32 %v5966, %v6006
  %v6008 = vpop.f32.mrf.mxu0
  %v6009 = vadd.f32 %v5968, %v6008
  %v6010 = vpop.f32.mrf.mxu0
  %v6011 = vpop.f32.mrf.mxu0
  %6012 = vdwg.mxu0
  %6013 = vmatprep.subr.bf16.mxu0 %v5462
  %6014 = vmatpush1.bf16.msra.mxu0 %v5461
  %6015 = vmatprep.subr.bf16.mxu0 %v5457
  %6016 = vmatpush1.bf16.msra.mxu0 %v5456
  %6017 = vmatprep.subr.bf16.mxu0 %v5452
  %6018 = vmatpush1.bf16.msra.mxu0 %v5451
  %6019 = vmatprep.subr.bf16.mxu0 %v5447
  %6020 = vmatpush1.bf16.msra.mxu0 %v5446
  %6021 = vmatprep.subr.bf16.mxu0 %v5442
  %6022 = vmatpush1.bf16.msra.mxu0 %v5441
  %6023 = vmatprep.subr.bf16.mxu0 %v5437
  %6024 = vmatpush1.bf16.msra.mxu0 %v5436
  %6025 = vmatprep.subr.bf16.mxu0 %v5432
  %6026 = vmatpush1.bf16.msra.mxu0 %v5431
  %6027 = vmatprep.subr.bf16.mxu0 %v5427
  %6028 = vmatpush1.bf16.msra.mxu0 %v5426
  %6029 = vmatprep.subr.bf16.mxu0 %v5502
  %6030 = vmatpush2.bf16.msra.mxu0 %v5501
  %6031 = vmatprep.subr.bf16.mxu0 %v5497
  %6032 = vmatpush2.bf16.msra.mxu0 %v5496
  %6033 = vmatprep.subr.bf16.mxu0 %v5492
  %6034 = vmatpush2.bf16.msra.mxu0 %v5491
  %6035 = vmatprep.subr.bf16.mxu0 %v5487
  %6036 = vmatpush2.bf16.msra.mxu0 %v5486
  %6037 = vmatprep.subr.bf16.mxu0 %v5482
  %6038 = vmatpush2.bf16.msra.mxu0 %v5481
  %6039 = vmatprep.subr.bf16.mxu0 %v5477
  %6040 = vmatpush2.bf16.msra.mxu0 %v5476
  %6041 = vmatprep.subr.bf16.mxu0 %v5472
  %6042 = vmatpush2.bf16.msra.mxu0 %v5471
  %6043 = vmatprep.subr.bf16.mxu0 %v5467
  %6044 = vmatpush2.bf16.msra.mxu0 %v5466
  %6045 = vmatprep.mubr.bf16.mxu0 %v4162
  %6046 = vmatmul.mubr.bf16.gmra.mxu0 %v4161
  %v6047 = vpop.f32.mrf.mxu0
  %v6048 = vadd.f32 %v6007, %v6047
  %v6049 = vpop.f32.mrf.mxu0
  %v6050 = vadd.f32 %v6009, %v6049
  %v6051 = vpop.f32.mrf.mxu0
  %v6052 = vpop.f32.mrf.mxu0
  %6053 = vdwg.mxu0
  %6054 = vmatprep.subr.bf16.mxu0 0
  %6055 = vmatpush1.bf16.msra.mxu0 0
  %6056 = vmatprep.subr.bf16.mxu0 0
  %6057 = vmatpush1.bf16.msra.mxu0 0
  %6058 = vmatprep.subr.bf16.mxu0 0
  %6059 = vmatpush1.bf16.msra.mxu0 0
  %6060 = vmatprep.subr.bf16.mxu0 0
  %6061 = vmatpush1.bf16.msra.mxu0 0
  %6062 = vmatprep.subr.bf16.mxu0 0
  %6063 = vmatpush1.bf16.msra.mxu0 0
  %6064 = vmatprep.subr.bf16.mxu0 0
  %6065 = vmatpush1.bf16.msra.mxu0 0
  %6066 = vmatprep.subr.bf16.mxu0 %v5512
  %6067 = vmatpush1.bf16.msra.mxu0 %v5511
  %6068 = vmatprep.subr.bf16.mxu0 %v5507
  %6069 = vmatpush1.bf16.msra.mxu0 %v5506
  %6070 = vmatprep.subr.bf16.mxu0 0
  %6071 = vmatpush2.bf16.msra.mxu0 0
  %6072 = vmatprep.subr.bf16.mxu0 0
  %6073 = vmatpush2.bf16.msra.mxu0 0
  %6074 = vmatprep.subr.bf16.mxu0 0
  %6075 = vmatpush2.bf16.msra.mxu0 0
  %6076 = vmatprep.subr.bf16.mxu0 0
  %6077 = vmatpush2.bf16.msra.mxu0 0
  %6078 = vmatprep.subr.bf16.mxu0 0
  %6079 = vmatpush2.bf16.msra.mxu0 0
  %6080 = vmatprep.subr.bf16.mxu0 0
  %6081 = vmatpush2.bf16.msra.mxu0 0
  %6082 = vmatprep.subr.bf16.mxu0 0
  %6083 = vmatpush2.bf16.msra.mxu0 0
  %6084 = vmatprep.subr.bf16.mxu0 0
  %6085 = vmatpush2.bf16.msra.mxu0 0
  %6086 = vmatprep.mubr.bf16.mxu0 0
  %6087 = vmatmul.mubr.bf16.gmra.mxu0 %v5765
  %v6088 = vpop.f32.mrf.mxu0
  %v6089 = vadd.f32 %v6048, %v6088
  %v6090 = vpop.f32.mrf.mxu0
  %v6091 = vadd.f32 %v6050, %v6090
  %v6092 = vpop.f32.mrf.mxu0
  %v6093 = vpop.f32.mrf.mxu0
  %6094 = vdwg.mxu0
  %6095 = vmatprep.subr.bf16.mxu0 0
  %6096 = vmatpush1.bf16.msra.mxu0 %v5303
  %6097 = vmatprep.subr.bf16.mxu0 0
  %6098 = vmatpush1.bf16.msra.mxu0 %v5298
  %6099 = vmatprep.subr.bf16.mxu0 0
  %6100 = vmatpush1.bf16.msra.mxu0 %v5293
  %6101 = vmatprep.subr.bf16.mxu0 0
  %6102 = vmatpush1.bf16.msra.mxu0 %v5288
  %6103 = vmatprep.subr.bf16.mxu0 0
  %6104 = vmatpush1.bf16.msra.mxu0 %v5283
  %6105 = vmatprep.subr.bf16.mxu0 0
  %6106 = vmatpush1.bf16.msra.mxu0 %v5278
  %6107 = vmatprep.subr.bf16.mxu0 0
  %6108 = vmatpush1.bf16.msra.mxu0 %v5273
  %6109 = vmatprep.subr.bf16.mxu0 0
  %6110 = vmatpush1.bf16.msra.mxu0 %v5268
  %6111 = vmatprep.subr.bf16.mxu0 0
  %6112 = vmatpush2.bf16.msra.mxu0 %v5343
  %6113 = vmatprep.subr.bf16.mxu0 0
  %6114 = vmatpush2.bf16.msra.mxu0 %v5338
  %6115 = vmatprep.subr.bf16.mxu0 0
  %6116 = vmatpush2.bf16.msra.mxu0 %v5333
  %6117 = vmatprep.subr.bf16.mxu0 0
  %6118 = vmatpush2.bf16.msra.mxu0 %v5328
  %6119 = vmatprep.subr.bf16.mxu0 0
  %6120 = vmatpush2.bf16.msra.mxu0 %v5323
  %6121 = vmatprep.subr.bf16.mxu0 0
  %6122 = vmatpush2.bf16.msra.mxu0 %v5318
  %6123 = vmatprep.subr.bf16.mxu0 0
  %6124 = vmatpush2.bf16.msra.mxu0 %v5313
  %6125 = vmatprep.subr.bf16.mxu0 0
  %6126 = vmatpush2.bf16.msra.mxu0 %v5308
  %6127 = vmatprep.mubr.bf16.mxu0 %v4158
  %6128 = vmatmul.mubr.bf16.gmra.mxu0 %v4157
  %v6129 = vpop.f32.mrf.mxu0
  %v6130 = vadd.f32 0.0, %v6129
  %v6131 = vpop.f32.mrf.mxu0
  %v6132 = vpop.f32.mrf.mxu0
  %v6133 = vpop.f32.mrf.mxu0
  %6134 = vdwg.mxu0
  %6135 = vmatprep.subr.bf16.mxu0 0
  %6136 = vmatpush1.bf16.msra.mxu0 %v5383
  %6137 = vmatprep.subr.bf16.mxu0 0
  %6138 = vmatpush1.bf16.msra.mxu0 %v5378
  %6139 = vmatprep.subr.bf16.mxu0 0
  %6140 = vmatpush1.bf16.msra.mxu0 %v5373
  %6141 = vmatprep.subr.bf16.mxu0 0
  %6142 = vmatpush1.bf16.msra.mxu0 %v5368
  %6143 = vmatprep.subr.bf16.mxu0 0
  %6144 = vmatpush1.bf16.msra.mxu0 %v5363
  %6145 = vmatprep.subr.bf16.mxu0 0
  %6146 = vmatpush1.bf16.msra.mxu0 %v5358
  %6147 = vmatprep.subr.bf16.mxu0 0
  %6148 = vmatpush1.bf16.msra.mxu0 %v5353
  %6149 = vmatprep.subr.bf16.mxu0 0
  %6150 = vmatpush1.bf16.msra.mxu0 %v5348
  %6151 = vmatprep.subr.bf16.mxu0 0
  %6152 = vmatpush2.bf16.msra.mxu0 %v5423
  %6153 = vmatprep.subr.bf16.mxu0 0
  %6154 = vmatpush2.bf16.msra.mxu0 %v5418
  %6155 = vmatprep.subr.bf16.mxu0 0
  %6156 = vmatpush2.bf16.msra.mxu0 %v5413
  %6157 = vmatprep.subr.bf16.mxu0 0
  %6158 = vmatpush2.bf16.msra.mxu0 %v5408
  %6159 = vmatprep.subr.bf16.mxu0 0
  %6160 = vmatpush2.bf16.msra.mxu0 %v5403
  %6161 = vmatprep.subr.bf16.mxu0 0
  %6162 = vmatpush2.bf16.msra.mxu0 %v5398
  %6163 = vmatprep.subr.bf16.mxu0 0
  %6164 = vmatpush2.bf16.msra.mxu0 %v5393
  %6165 = vmatprep.subr.bf16.mxu0 0
  %6166 = vmatpush2.bf16.msra.mxu0 %v5388
  %6167 = vmatprep.mubr.bf16.mxu0 %v4160
  %6168 = vmatmul.mubr.bf16.gmra.mxu0 %v4159
  %v6169 = vpop.f32.mrf.mxu0
  %v6170 = vadd.f32 %v6130, %v6169
  %v6171 = vpop.f32.mrf.mxu0
  %v6172 = vpop.f32.mrf.mxu0
  %v6173 = vpop.f32.mrf.mxu0
  %6174 = vdwg.mxu0
  %6175 = vmatprep.subr.bf16.mxu0 0
  %6176 = vmatpush1.bf16.msra.mxu0 %v5463
  %6177 = vmatprep.subr.bf16.mxu0 0
  %6178 = vmatpush1.bf16.msra.mxu0 %v5458
  %6179 = vmatprep.subr.bf16.mxu0 0
  %6180 = vmatpush1.bf16.msra.mxu0 %v5453
  %6181 = vmatprep.subr.bf16.mxu0 0
  %6182 = vmatpush1.bf16.msra.mxu0 %v5448
  %6183 = vmatprep.subr.bf16.mxu0 0
  %6184 = vmatpush1.bf16.msra.mxu0 %v5443
  %6185 = vmatprep.subr.bf16.mxu0 0
  %6186 = vmatpush1.bf16.msra.mxu0 %v5438
  %6187 = vmatprep.subr.bf16.mxu0 0
  %6188 = vmatpush1.bf16.msra.mxu0 %v5433
  %6189 = vmatprep.subr.bf16.mxu0 0
  %6190 = vmatpush1.bf16.msra.mxu0 %v5428
  %6191 = vmatprep.subr.bf16.mxu0 0
  %6192 = vmatpush2.bf16.msra.mxu0 %v5503
  %6193 = vmatprep.subr.bf16.mxu0 0
  %6194 = vmatpush2.bf16.msra.mxu0 %v5498
  %6195 = vmatprep.subr.bf16.mxu0 0
  %6196 = vmatpush2.bf16.msra.mxu0 %v5493
  %6197 = vmatprep.subr.bf16.mxu0 0
  %6198 = vmatpush2.bf16.msra.mxu0 %v5488
  %6199 = vmatprep.subr.bf16.mxu0 0
  %6200 = vmatpush2.bf16.msra.mxu0 %v5483
  %6201 = vmatprep.subr.bf16.mxu0 0
  %6202 = vmatpush2.bf16.msra.mxu0 %v5478
  %6203 = vmatprep.subr.bf16.mxu0 0
  %6204 = vmatpush2.bf16.msra.mxu0 %v5473
  %6205 = vmatprep.subr.bf16.mxu0 0
  %6206 = vmatpush2.bf16.msra.mxu0 %v5468
  %6207 = vmatprep.mubr.bf16.mxu0 %v4162
  %6208 = vmatmul.mubr.bf16.gmra.mxu0 %v4161
  %v6209 = vpop.f32.mrf.mxu0
  %v6210 = vadd.f32 %v6170, %v6209
  %v6211 = vpop.f32.mrf.mxu0
  %v6212 = vpop.f32.mrf.mxu0
  %v6213 = vpop.f32.mrf.mxu0
  %6214 = vdwg.mxu0
  %6215 = vmatprep.subr.bf16.mxu0 0
  %6216 = vmatpush1.bf16.msra.mxu0 0
  %6217 = vmatprep.subr.bf16.mxu0 0
  %6218 = vmatpush1.bf16.msra.mxu0 0
  %6219 = vmatprep.subr.bf16.mxu0 0
  %6220 = vmatpush1.bf16.msra.mxu0 0
  %6221 = vmatprep.subr.bf16.mxu0 0
  %6222 = vmatpush1.bf16.msra.mxu0 0
  %6223 = vmatprep.subr.bf16.mxu0 0
  %6224 = vmatpush1.bf16.msra.mxu0 0
  %6225 = vmatprep.subr.bf16.mxu0 0
  %6226 = vmatpush1.bf16.msra.mxu0 0
  %6227 = vmatprep.subr.bf16.mxu0 0
  %6228 = vmatpush1.bf16.msra.mxu0 %v5513
  %6229 = vmatprep.subr.bf16.mxu0 0
  %6230 = vmatpush1.bf16.msra.mxu0 %v5508
  %6231 = vmatprep.subr.bf16.mxu0 0
  %6232 = vmatpush2.bf16.msra.mxu0 0
  %6233 = vmatprep.subr.bf16.mxu0 0
  %6234 = vmatpush2.bf16.msra.mxu0 0
  %6235 = vmatprep.subr.bf16.mxu0 0
  %6236 = vmatpush2.bf16.msra.mxu0 0
  %6237 = vmatprep.subr.bf16.mxu0 0
  %6238 = vmatpush2.bf16.msra.mxu0 0
  %6239 = vmatprep.subr.bf16.mxu0 0
  %6240 = vmatpush2.bf16.msra.mxu0 0
  %6241 = vmatprep.subr.bf16.mxu0 0
  %6242 = vmatpush2.bf16.msra.mxu0 0
  %6243 = vmatprep.subr.bf16.mxu0 0
  %6244 = vmatpush2.bf16.msra.mxu0 0
  %6245 = vmatprep.subr.bf16.mxu0 0
  %6246 = vmatpush2.bf16.msra.mxu0 0
  %6247 = vmatprep.mubr.bf16.mxu0 0
  %6248 = vmatmul.mubr.bf16.gmra.mxu0 %v5765
  %v6249 = vpop.f32.mrf.mxu0
  %v6250 = vadd.f32 %v6210, %v6249
  %v6251 = vpop.f32.mrf.mxu0
  %v6252 = vpop.f32.mrf.mxu0
  %v6253 = vpop.f32.mrf.mxu0
  %6254 = vdwg.mxu0
  %v6255 = vrot.slane %v5925, 4
  %v6256 = vadd.f32 %v5925, %v6255
  %v6257 = vrot.slane %v6256, 2
  %v6258 = vadd.f32 %v6256, %v6257
  %v6259 = vrot.slane %v6258, 1
  %v6260 = vadd.f32 %v6258, %v6259
  %v6261 = vrot.slane %v5927, 4
  %v6262 = vadd.f32 %v5927, %v6261
  %v6263 = vrot.slane %v6262, 2
  %v6264 = vadd.f32 %v6262, %v6263
  %v6265 = vrot.slane %v6264, 1
  %v6266 = vadd.f32 %v6264, %v6265
  %v6267 = vrot.slane %v6089, 4
  %v6268 = vadd.f32 %v6089, %v6267
  %v6269 = vrot.slane %v6268, 2
  %v6270 = vadd.f32 %v6268, %v6269
  %v6271 = vrot.slane %v6270, 1
  %v6272 = vadd.f32 %v6270, %v6271
  %v6273 = vrot.slane %v6091, 4
  %v6274 = vadd.f32 %v6091, %v6273
  %v6275 = vrot.slane %v6274, 2
  %v6276 = vadd.f32 %v6274, %v6275
  %v6277 = vrot.slane %v6276, 1
  %v6278 = vadd.f32 %v6276, %v6277
  %vm6279 = vcmask 719872
  %v6280 = vsel %vm6279, %v6250, 0.0
  %v6281 = vrot.slane %v6280, 4
  %v6282 = vadd.f32 %v6280, %v6281
  %v6283 = vrot.slane %v6282, 2
  %v6284 = vadd.f32 %v6282, %v6283
  %v6285 = vrot.slane %v6284, 1
  %v6286 = vadd.f32 %v6284, %v6285
  %v6287 = vmul.f32 %v6260, %v420
  %v6288 = vmul.f32 %v6266, %v420
  %v6289 = vmul.f32 %v6272, %v420
  %v6290 = vmul.f32 %v6278, %v420
  %v6291 = vmul.f32 %v6286, %v420
  %v6292 = vmul.f32 %v5925, %v5925
  %v6293 = vmul.f32 %v5927, %v5927
  %v6294 = vmul.f32 %v6089, %v6089
  %v6295 = vmul.f32 %v6091, %v6091
  %v6296 = vmul.f32 %v6250, %v6250
  %v6297 = vrot.slane %v6292, 4
  %v6298 = vadd.f32 %v6292, %v6297
  %v6299 = vrot.slane %v6298, 2
  %v6300 = vadd.f32 %v6298, %v6299
  %v6301 = vrot.slane %v6300, 1
  %v6302 = vadd.f32 %v6300, %v6301
  %v6303 = vrot.slane %v6293, 4
  %v6304 = vadd.f32 %v6293, %v6303
  %v6305 = vrot.slane %v6304, 2
  %v6306 = vadd.f32 %v6304, %v6305
  %v6307 = vrot.slane %v6306, 1
  %v6308 = vadd.f32 %v6306, %v6307
  %v6309 = vrot.slane %v6294, 4
  %v6310 = vadd.f32 %v6294, %v6309
  %v6311 = vrot.slane %v6310, 2
  %v6312 = vadd.f32 %v6310, %v6311
  %v6313 = vrot.slane %v6312, 1
  %v6314 = vadd.f32 %v6312, %v6313
  %v6315 = vrot.slane %v6295, 4
  %v6316 = vadd.f32 %v6295, %v6315
  %v6317 = vrot.slane %v6316, 2
  %v6318 = vadd.f32 %v6316, %v6317
  %v6319 = vrot.slane %v6318, 1
  %v6320 = vadd.f32 %v6318, %v6319
  %v6321 = vsel %vm6279, %v6296, 0.0
  %v6322 = vrot.slane %v6321, 4
  %v6323 = vadd.f32 %v6321, %v6322
  %v6324 = vrot.slane %v6323, 2
  %v6325 = vadd.f32 %v6323, %v6324
  %v6326 = vrot.slane %v6325, 1
  %v6327 = vadd.f32 %v6325, %v6326
  %v6328 = vmul.f32 %v6302, %v420
  %v6329 = vmul.f32 %v6308, %v420
  %v6330 = vmul.f32 %v6314, %v420
  %v6331 = vmul.f32 %v6320, %v420
  %v6332 = vmul.f32 %v6327, %v420
  %v6333 = vmul.f32 %v6287, %v6287
  %v6334 = vmul.f32 %v6288, %v6288
  %v6335 = vmul.f32 %v6289, %v6289
  %v6336 = vmul.f32 %v6290, %v6290
  %v6337 = vmul.f32 %v6291, %v6291
  %v6338 = vsub.f32 %v6328, %v6333
  %v6339 = vsub.f32 %v6329, %v6334
  %v6340 = vsub.f32 %v6330, %v6335
  %v6341 = vsub.f32 %v6331, %v6336
  %v6342 = vsub.f32 %v6332, %v6337
  %v6343 = vmax.f32 %v6338, 0.0
  %v6344 = vmax.f32 %v6339, 0.0
  %v6345 = vmax.f32 %v6340, 0.0
  %v6346 = vmax.f32 %v6341, 0.0
  %v6347 = vmax.f32 %v6342, 0.0
  %v6348 = vsub.f32 %v5925, %v6287
  %v6349 = vsub.f32 %v5927, %v6288
  %v6350 = vsub.f32 %v6089, %v6289
  %v6351 = vsub.f32 %v6091, %v6290
  %v6352 = vsub.f32 %v6250, %v6291
  %v6353 = vadd.f32 %v6343, 1e-05
  %v6354 = vadd.f32 %v6344, 1e-05
  %v6355 = vadd.f32 %v6345, 1e-05
  %v6356 = vadd.f32 %v6346, 1e-05
  %v6357 = vadd.f32 %v6347, 1e-05
  %v6358 = vrsqrt.pop %v6353
  %v6359 = vrsqrt.pop %v6354
  %v6360 = vrsqrt.pop %v6355
  %v6361 = vrsqrt.pop %v6356
  %v6362 = vrsqrt.pop %v6357
  %v6363 = vmul.f32 %v6348, %v6358
  %v6364 = vmul.f32 %v6349, %v6359
  %v6365 = vmul.f32 %v6350, %v6360
  %v6366 = vmul.f32 %v6351, %v6361
  %v6367 = vmul.f32 %v6352, %v6362
  %v6368 = vmax.f32 %v6363, 0.0
  %v6369 = vmax.f32 %v6364, 0.0
  %v6370 = vmax.f32 %v6365, 0.0
  %v6371 = vmax.f32 %v6366, 0.0
  %v6372 = vmax.f32 %v6367, 0.0
  %v6373 = vpack.c.bf16 %v6368, %v6368
  %v6374 = vpack.c.bf16 %v6369, %v6369
  %v6375 = vpack.c.bf16 %v6370, %v6370
  %v6376 = vpack.c.bf16 %v6371, %v6371
  %v6377 = vpack.c.bf16 %v6372, %v6372
  %v6378 = vld [vmem:[%s4] sm:$0xff]
  %v6379 = vld [vmem:[%s4 + $0x8] sm:$0xff]
  %v6380 = vld [vmem:[%s4 + $0x10] sm:$0xff]
  %v6381 = vld [vmem:[%s4 + $0x18] sm:$0xff]
  %v6382 = vld [vmem:[%s4 + $0x20] sm:$0xff]
  %v6383 = vld [vmem:[%s4 + $0x28] sm:$0xff]
  %v6384 = vld [vmem:[%s4 + $0x30] sm:$0xff]
  %v6385 = vld [vmem:[%s4 + $0x38] sm:$0xff]
  %v6386 = vld [vmem:[%s4 + $0x40] sm:$0xff]
  %v6387 = vld [vmem:[%s4 + $0x48] sm:$0xff]
  %v6388 = vld [vmem:[%s4 + $0x50] sm:$0xff]
  %v6389 = vld [vmem:[%s4 + $0x58] sm:$0xff]
  %v6390 = vld [vmem:[%s4 + $0x60] sm:$0xff]
  %v6391 = vld [vmem:[%s4 + $0x68] sm:$0xff]
  %v6392 = vld [vmem:[%s4 + $0x70] sm:$0xff]
  %v6393 = vld [vmem:[%s4 + $0x78] sm:$0xff]
  %v6394 = vld [vmem:[%s4 + $0x80] sm:$0xff]
  %v6395 = vld [vmem:[%s4 + $0x88] sm:$0xff]
  %v6396 = vld [vmem:[%s4 + $0x90] sm:$0xff]
  %v6397 = vld [vmem:[%s4 + $0x98] sm:$0xff]
  %v6398 = vld [vmem:[%s4 + $0xa0] sm:$0xff]
  %v6399 = vld [vmem:[%s4 + $0xa8] sm:$0xff]
  %v6400 = vld [vmem:[%s4 + $0xb0] sm:$0xff]
  %v6401 = vld [vmem:[%s4 + $0xb8] sm:$0xff]
  %v6402 = vld [vmem:[%s4 + $0xc0] sm:$0xff]
  %v6403 = vld [vmem:[%s4 + $0xc8] sm:$0xff]
  %v6404 = vld [vmem:[%s4 + $0xd0] sm:$0xff]
  %v6405 = vld [vmem:[%s4 + $0xd8] sm:$0xff]
  %v6406 = vld [vmem:[%s4 + $0xe0] sm:$0xff]
  %v6407 = vld [vmem:[%s4 + $0xe8] sm:$0xff]
  %v6408 = vld [vmem:[%s4 + $0xf0] sm:$0xff]
  %v6409 = vld [vmem:[%s4 + $0xf8] sm:$0xff]
  %v6410 = vld [vmem:[%s4 + $0x100] sm:$0xff]
  %v6411 = vld [vmem:[%s4 + $0x108] sm:$0xff]
  %v6412 = vld [vmem:[%s4 + $0x110] sm:$0xff]
  %v6413 = vld [vmem:[%s4 + $0x118] sm:$0xff]
  %v6414 = vld [vmem:[%s4 + $0x120] sm:$0xff]
  %v6415 = vld [vmem:[%s4 + $0x128] sm:$0xff]
  %v6416 = vld [vmem:[%s4 + $0x130] sm:$0xff]
  %v6417 = vld [vmem:[%s4 + $0x138] sm:$0xff]
  %v6418 = vld [vmem:[%s4 + $0x140] sm:$0xff]
  %v6419 = vld [vmem:[%s4 + $0x148] sm:$0xff]
  %v6420 = vld [vmem:[%s4 + $0x150] sm:$0xff]
  %v6421 = vld [vmem:[%s4 + $0x158] sm:$0xff]
  %v6422 = vld [vmem:[%s4 + $0x160] sm:$0xff]
  %v6423 = vld [vmem:[%s4 + $0x168] sm:$0xff]
  %v6424 = vld [vmem:[%s4 + $0x170] sm:$0xff]
  %v6425 = vld [vmem:[%s4 + $0x178] sm:$0xff]
  %v6426 = vld [vmem:[%s4 + $0x180] sm:$0xff]
  %v6427 = vld [vmem:[%s4 + $0x188] sm:$0xff]
  %v6428 = vld [vmem:[%s4 + $0x190] sm:$0xff]
  %v6429 = vld [vmem:[%s4 + $0x198] sm:$0xff]
  %v6430 = vld [vmem:[%s4 + $0x1a0] sm:$0xff]
  %v6431 = vld [vmem:[%s4 + $0x1a8] sm:$0xff]
  %v6432 = vld [vmem:[%s4 + $0x1b0] sm:$0xff]
  %v6433 = vld [vmem:[%s4 + $0x1b8] sm:$0xff]
  %v6434 = vld [vmem:[%s4 + $0x1c0] sm:$0xff]
  %v6435 = vld [vmem:[%s4 + $0x1c8] sm:$0xff]
  %v6436 = vld [vmem:[%s4 + $0x1d0] sm:$0xff]
  %v6437 = vld [vmem:[%s4 + $0x1d8] sm:$0xff]
  %v6438 = vld [vmem:[%s4 + $0x1e0] sm:$0xff]
  %v6439 = vld [vmem:[%s4 + $0x1e8] sm:$0xff]
  %v6440 = vld [vmem:[%s4 + $0x1f0] sm:$0xff]
  %v6441 = vld [vmem:[%s4 + $0x1f8] sm:$0xff]
  %v6442 = vld [vmem:[%s4 + $0x200] sm:$0xff]
  %v6443 = vld [vmem:[%s4 + $0x208] sm:$0xff]
  %v6444 = vld [vmem:[%s4 + $0x210] sm:$0xff]
  %v6445 = vld [vmem:[%s4 + $0x218] sm:$0xff]
  %v6446 = vld [vmem:[%s4 + $0x220] sm:$0xff]
  %v6447 = vld [vmem:[%s4 + $0x228] sm:$0xff]
  %v6448 = vld [vmem:[%s4 + $0x230] sm:$0xff]
  %v6449 = vld [vmem:[%s4 + $0x238] sm:$0xff]
  %v6450 = vld [vmem:[%s4 + $0x240] sm:$0xff]
  %v6451 = vld [vmem:[%s4 + $0x248] sm:$0xff]
  %v6452 = vld [vmem:[%s4 + $0x250] sm:$0xff]
  %v6453 = vld [vmem:[%s4 + $0x258] sm:$0xff]
  %v6454 = vld [vmem:[%s4 + $0x260] sm:$0xff]
  %v6455 = vld [vmem:[%s4 + $0x268] sm:$0xff]
  %v6456 = vld [vmem:[%s4 + $0x270] sm:$0xff]
  %v6457 = vld [vmem:[%s4 + $0x278] sm:$0xff]
  %v6458 = vld [vmem:[%s4 + $0x280] sm:$0xff]
  %v6459 = vld [vmem:[%s4 + $0x288] sm:$0xff]
  %v6460 = vld [vmem:[%s4 + $0x290] sm:$0xff]
  %v6461 = vld [vmem:[%s4 + $0x298] sm:$0xff]
  %v6462 = vld [vmem:[%s4 + $0x2a0] sm:$0xff]
  %v6463 = vld [vmem:[%s4 + $0x2a8] sm:$0xff]
  %v6464 = vld [vmem:[%s4 + $0x2b0] sm:$0xff]
  %v6465 = vld [vmem:[%s4 + $0x2b8] sm:$0xff]
  %v6466 = vld [vmem:[%s4 + $0x2c0] sm:$0xff]
  %v6467 = vld [vmem:[%s4 + $0x2c8] sm:$0xff]
  %v6468 = vld [vmem:[%s4 + $0x2d0] sm:$0xff]
  %v6469 = vld [vmem:[%s4 + $0x2d8] sm:$0xff]
  %v6470 = vld [vmem:[%s4 + $0x2e0] sm:$0xff]
  %v6471 = vld [vmem:[%s4 + $0x2e8] sm:$0xff]
  %v6472 = vld [vmem:[%s4 + $0x2f0] sm:$0xff]
  %v6473 = vld [vmem:[%s4 + $0x2f8] sm:$0xff]
  %v6474 = vld [vmem:[%s4 + $0x300] sm:$0xff]
  %v6475 = vld [vmem:[%s4 + $0x308] sm:$0xff]
  %v6476 = vld [vmem:[%s4 + $0x310] sm:$0xff]
  %v6477 = vld [vmem:[%s4 + $0x318] sm:$0xff]
  %v6478 = vld [vmem:[%s4 + $0x320] sm:$0xff]
  %v6479 = vld [vmem:[%s4 + $0x328] sm:$0xff]
  %v6480 = vld [vmem:[%s4 + $0x330] sm:$0xff]
  %v6481 = vld [vmem:[%s4 + $0x338] sm:$0xff]
  %v6482 = vld [vmem:[%s4 + $0x340] sm:$0xff]
  %v6483 = vld [vmem:[%s4 + $0x348] sm:$0xff]
  %v6484 = vld [vmem:[%s4 + $0x350] sm:$0xff]
  %v6485 = vld [vmem:[%s4 + $0x358] sm:$0xff]
  %v6486 = vld [vmem:[%s4 + $0x360] sm:$0xff]
  %v6487 = vld [vmem:[%s4 + $0x368] sm:$0xff]
  %v6488 = vld [vmem:[%s4 + $0x370] sm:$0xff]
  %v6489 = vld [vmem:[%s4 + $0x378] sm:$0xff]
  %v6490 = vld [vmem:[%s4 + $0x380] sm:$0xff]
  %v6491 = vld [vmem:[%s4 + $0x388] sm:$0xff]
  %v6492 = vld [vmem:[%s4 + $0x390] sm:$0xff]
  %v6493 = vld [vmem:[%s4 + $0x398] sm:$0xff]
  %v6494 = vld [vmem:[%s4 + $0x3a0] sm:$0xff]
  %v6495 = vld [vmem:[%s4 + $0x3a8] sm:$0xff]
  %v6496 = vld [vmem:[%s4 + $0x3b0] sm:$0xff]
  %v6497 = vld [vmem:[%s4 + $0x3b8] sm:$0xff]
  %v6498 = vld [vmem:[%s4 + $0x3c0] sm:$0xff]
  %v6499 = vld [vmem:[%s4 + $0x3c8] sm:$0xff]
  %v6500 = vld [vmem:[%s4 + $0x3d0] sm:$0xff]
  %v6501 = vld [vmem:[%s4 + $0x3d8] sm:$0xff]
  %v6502 = vld [vmem:[%s4 + $0x3e0] sm:$0xff]
  %v6503 = vld [vmem:[%s4 + $0x3e8] sm:$0xff]
  %v6504 = vld [vmem:[%s4 + $0x3f0] sm:$0xff]
  %v6505 = vld [vmem:[%s4 + $0x3f8] sm:$0xff]
  %v6506 = vld [vmem:[%s4 + $0x400] sm:$0xff]
  %v6507 = vld [vmem:[%s4 + $0x408] sm:$0xff]
  %v6508 = vld [vmem:[%s4 + $0x410] sm:$0xff]
  %v6509 = vld [vmem:[%s4 + $0x418] sm:$0xff]
  %v6510 = vld [vmem:[%s4 + $0x420] sm:$0xff]
  %v6511 = vld [vmem:[%s4 + $0x428] sm:$0xff]
  %v6512 = vld [vmem:[%s4 + $0x430] sm:$0xff]
  %v6513 = vld [vmem:[%s4 + $0x438] sm:$0xff]
  %v6514 = vld [vmem:[%s4 + $0x440] sm:$0xff]
  %v6515 = vld [vmem:[%s4 + $0x448] sm:$0xff]
  %v6516 = vld [vmem:[%s4 + $0x450] sm:$0xff]
  %v6517 = vld [vmem:[%s4 + $0x458] sm:$0xff]
  %v6518 = vld [vmem:[%s4 + $0x460] sm:$0xff]
  %v6519 = vld [vmem:[%s4 + $0x468] sm:$0xff]
  %v6520 = vld [vmem:[%s4 + $0x470] sm:$0xff]
  %v6521 = vld [vmem:[%s4 + $0x478] sm:$0xff]
  %v6522 = vld [vmem:[%s4 + $0x480] sm:$0xff]
  %v6523 = vld [vmem:[%s4 + $0x488] sm:$0xff]
  %v6524 = vld [vmem:[%s4 + $0x490] sm:$0xff]
  %v6525 = vld [vmem:[%s4 + $0x498] sm:$0xff]
  %v6526 = vld [vmem:[%s4 + $0x4a0] sm:$0xff]
  %v6527 = vld [vmem:[%s4 + $0x4a8] sm:$0xff]
  %v6678 = vunpack.c.l.b16 %v6378
  %v6679 = vunpack.c.h.b16 %v6378
  %v6680 = vunpack.c.l.b16 %v6379
  %v6681 = vunpack.c.h.b16 %v6379
  %v6682 = vunpack.c.l.b16 %v6380
  %v6683 = vunpack.c.h.b16 %v6380
  %v6684 = vunpack.c.l.b16 %v6381
  %v6685 = vunpack.c.h.b16 %v6381
  %v6686 = vunpack.c.l.b16 %v6382
  %v6687 = vunpack.c.h.b16 %v6382
  %v6688 = vunpack.c.l.b16 %v6383
  %v6689 = vunpack.c.h.b16 %v6383
  %v6690 = vunpack.c.l.b16 %v6384
  %v6691 = vunpack.c.h.b16 %v6384
  %v6692 = vunpack.c.l.b16 %v6385
  %v6693 = vunpack.c.h.b16 %v6385
  %v6694 = vunpack.c.l.b16 %v6386
  %v6695 = vunpack.c.h.b16 %v6386
  %v6696 = vunpack.c.l.b16 %v6387
  %v6697 = vunpack.c.h.b16 %v6387
  %v6698 = vunpack.c.l.b16 %v6388
  %v6699 = vunpack.c.h.b16 %v6388
  %v6700 = vunpack.c.l.b16 %v6389
  %v6701 = vunpack.c.h.b16 %v6389
  %v6702 = vunpack.c.l.b16 %v6390
  %v6703 = vunpack.c.h.b16 %v6390
  %v6704 = vunpack.c.l.b16 %v6391
  %v6705 = vunpack.c.h.b16 %v6391
  %v6706 = vunpack.c.l.b16 %v6392
  %v6707 = vunpack.c.h.b16 %v6392
  %v6708 = vunpack.c.l.b16 %v6393
  %v6709 = vunpack.c.h.b16 %v6393
  %v6710 = vunpack.c.l.b16 %v6394
  %v6711 = vunpack.c.h.b16 %v6394
  %v6712 = vunpack.c.l.b16 %v6395
  %v6713 = vunpack.c.h.b16 %v6395
  %v6714 = vunpack.c.l.b16 %v6396
  %v6715 = vunpack.c.h.b16 %v6396
  %v6716 = vunpack.c.l.b16 %v6397
  %v6717 = vunpack.c.h.b16 %v6397
  %v6718 = vunpack.c.l.b16 %v6398
  %v6719 = vunpack.c.h.b16 %v6398
  %v6720 = vunpack.c.l.b16 %v6399
  %v6721 = vunpack.c.h.b16 %v6399
  %v6722 = vunpack.c.l.b16 %v6400
  %v6723 = vunpack.c.h.b16 %v6400
  %v6724 = vunpack.c.l.b16 %v6401
  %v6725 = vunpack.c.h.b16 %v6401
  %v6726 = vunpack.c.l.b16 %v6402
  %v6727 = vunpack.c.h.b16 %v6402
  %v6728 = vunpack.c.l.b16 %v6403
  %v6729 = vunpack.c.h.b16 %v6403
  %v6730 = vunpack.c.l.b16 %v6404
  %v6731 = vunpack.c.h.b16 %v6404
  %v6732 = vunpack.c.l.b16 %v6405
  %v6733 = vunpack.c.h.b16 %v6405
  %v6734 = vunpack.c.l.b16 %v6406
  %v6735 = vunpack.c.h.b16 %v6406
  %v6736 = vunpack.c.l.b16 %v6407
  %v6737 = vunpack.c.h.b16 %v6407
  %v6738 = vunpack.c.l.b16 %v6408
  %v6739 = vunpack.c.h.b16 %v6408
  %v6740 = vunpack.c.l.b16 %v6409
  %v6741 = vunpack.c.h.b16 %v6409
  %v6742 = vunpack.c.l.b16 %v6410
  %v6743 = vunpack.c.h.b16 %v6410
  %v6744 = vunpack.c.l.b16 %v6411
  %v6745 = vunpack.c.h.b16 %v6411
  %v6746 = vunpack.c.l.b16 %v6412
  %v6747 = vunpack.c.h.b16 %v6412
  %v6748 = vunpack.c.l.b16 %v6413
  %v6749 = vunpack.c.h.b16 %v6413
  %v6750 = vunpack.c.l.b16 %v6414
  %v6751 = vunpack.c.h.b16 %v6414
  %v6752 = vunpack.c.l.b16 %v6415
  %v6753 = vunpack.c.h.b16 %v6415
  %v6754 = vunpack.c.l.b16 %v6416
  %v6755 = vunpack.c.h.b16 %v6416
  %v6756 = vunpack.c.l.b16 %v6417
  %v6757 = vunpack.c.h.b16 %v6417
  %v6758 = vunpack.c.l.b16 %v6418
  %v6759 = vunpack.c.h.b16 %v6418
  %v6760 = vunpack.c.l.b16 %v6419
  %v6761 = vunpack.c.h.b16 %v6419
  %v6762 = vunpack.c.l.b16 %v6420
  %v6763 = vunpack.c.h.b16 %v6420
  %v6764 = vunpack.c.l.b16 %v6421
  %v6765 = vunpack.c.h.b16 %v6421
  %v6766 = vunpack.c.l.b16 %v6422
  %v6767 = vunpack.c.h.b16 %v6422
  %v6768 = vunpack.c.l.b16 %v6423
  %v6769 = vunpack.c.h.b16 %v6423
  %v6770 = vunpack.c.l.b16 %v6424
  %v6771 = vunpack.c.h.b16 %v6424
  %v6772 = vunpack.c.l.b16 %v6425
  %v6773 = vunpack.c.h.b16 %v6425
  %v6774 = vunpack.c.l.b16 %v6426
  %v6775 = vunpack.c.h.b16 %v6426
  %v6776 = vunpack.c.l.b16 %v6427
  %v6777 = vunpack.c.h.b16 %v6427
  %v6778 = vunpack.c.l.b16 %v6428
  %v6779 = vunpack.c.h.b16 %v6428
  %v6780 = vunpack.c.l.b16 %v6429
  %v6781 = vunpack.c.h.b16 %v6429
  %v6782 = vunpack.c.l.b16 %v6430
  %v6783 = vunpack.c.h.b16 %v6430
  %v6784 = vunpack.c.l.b16 %v6431
  %v6785 = vunpack.c.h.b16 %v6431
  %v6786 = vunpack.c.l.b16 %v6432
  %v6787 = vunpack.c.h.b16 %v6432
  %v6788 = vunpack.c.l.b16 %v6433
  %v6789 = vunpack.c.h.b16 %v6433
  %v6790 = vunpack.c.l.b16 %v6434
  %v6791 = vunpack.c.h.b16 %v6434
  %v6792 = vunpack.c.l.b16 %v6435
  %v6793 = vunpack.c.h.b16 %v6435
  %v6794 = vunpack.c.l.b16 %v6436
  %v6795 = vunpack.c.h.b16 %v6436
  %v6796 = vunpack.c.l.b16 %v6437
  %v6797 = vunpack.c.h.b16 %v6437
  %v6798 = vunpack.c.l.b16 %v6438
  %v6799 = vunpack.c.h.b16 %v6438
  %v6800 = vunpack.c.l.b16 %v6439
  %v6801 = vunpack.c.h.b16 %v6439
  %v6802 = vunpack.c.l.b16 %v6440
  %v6803 = vunpack.c.h.b16 %v6440
  %v6804 = vunpack.c.l.b16 %v6441
  %v6805 = vunpack.c.h.b16 %v6441
  %v6806 = vunpack.c.l.b16 %v6442
  %v6807 = vunpack.c.h.b16 %v6442
  %v6808 = vunpack.c.l.b16 %v6443
  %v6809 = vunpack.c.h.b16 %v6443
  %v6810 = vunpack.c.l.b16 %v6444
  %v6811 = vunpack.c.h.b16 %v6444
  %v6812 = vunpack.c.l.b16 %v6445
  %v6813 = vunpack.c.h.b16 %v6445
  %v6814 = vunpack.c.l.b16 %v6446
  %v6815 = vunpack.c.h.b16 %v6446
  %v6816 = vunpack.c.l.b16 %v6447
  %v6817 = vunpack.c.h.b16 %v6447
  %v6818 = vunpack.c.l.b16 %v6448
  %v6819 = vunpack.c.h.b16 %v6448
  %v6820 = vunpack.c.l.b16 %v6449
  %v6821 = vunpack.c.h.b16 %v6449
  %v6822 = vunpack.c.l.b16 %v6450
  %v6823 = vunpack.c.h.b16 %v6450
  %v6824 = vunpack.c.l.b16 %v6451
  %v6825 = vunpack.c.h.b16 %v6451
  %v6826 = vunpack.c.l.b16 %v6452
  %v6827 = vunpack.c.h.b16 %v6452
  %v6828 = vunpack.c.l.b16 %v6453
  %v6829 = vunpack.c.h.b16 %v6453
  %v6830 = vunpack.c.l.b16 %v6454
  %v6831 = vunpack.c.h.b16 %v6454
  %v6832 = vunpack.c.l.b16 %v6455
  %v6833 = vunpack.c.h.b16 %v6455
  %v6834 = vunpack.c.l.b16 %v6456
  %v6835 = vunpack.c.h.b16 %v6456
  %v6836 = vunpack.c.l.b16 %v6457
  %v6837 = vunpack.c.h.b16 %v6457
  %v6838 = vunpack.c.l.b16 %v6458
  %v6839 = vunpack.c.h.b16 %v6458
  %v6840 = vunpack.c.l.b16 %v6459
  %v6841 = vunpack.c.h.b16 %v6459
  %v6842 = vunpack.c.l.b16 %v6460
  %v6843 = vunpack.c.h.b16 %v6460
  %v6844 = vunpack.c.l.b16 %v6461
  %v6845 = vunpack.c.h.b16 %v6461
  %v6846 = vunpack.c.l.b16 %v6462
  %v6847 = vunpack.c.h.b16 %v6462
  %v6848 = vunpack.c.l.b16 %v6463
  %v6849 = vunpack.c.h.b16 %v6463
  %v6850 = vunpack.c.l.b16 %v6464
  %v6851 = vunpack.c.h.b16 %v6464
  %v6852 = vunpack.c.l.b16 %v6465
  %v6853 = vunpack.c.h.b16 %v6465
  %v6854 = vunpack.c.l.b16 %v6466
  %v6855 = vunpack.c.h.b16 %v6466
  %v6856 = vunpack.c.l.b16 %v6467
  %v6857 = vunpack.c.h.b16 %v6467
  %v6858 = vunpack.c.l.b16 %v6468
  %v6859 = vunpack.c.h.b16 %v6468
  %v6860 = vunpack.c.l.b16 %v6469
  %v6861 = vunpack.c.h.b16 %v6469
  %v6862 = vunpack.c.l.b16 %v6470
  %v6863 = vunpack.c.h.b16 %v6470
  %v6864 = vunpack.c.l.b16 %v6471
  %v6865 = vunpack.c.h.b16 %v6471
  %v6866 = vunpack.c.l.b16 %v6472
  %v6867 = vunpack.c.h.b16 %v6472
  %v6868 = vunpack.c.l.b16 %v6473
  %v6869 = vunpack.c.h.b16 %v6473
  %v6870 = vunpack.c.l.b16 %v6474
  %v6871 = vunpack.c.h.b16 %v6474
  %v6872 = vunpack.c.l.b16 %v6475
  %v6873 = vunpack.c.h.b16 %v6475
  %v6874 = vunpack.c.l.b16 %v6476
  %v6875 = vunpack.c.h.b16 %v6476
  %v6876 = vunpack.c.l.b16 %v6477
  %v6877 = vunpack.c.h.b16 %v6477
  %v6878 = vunpack.c.l.b16 %v6478
  %v6879 = vunpack.c.h.b16 %v6478
  %v6880 = vunpack.c.l.b16 %v6479
  %v6881 = vunpack.c.h.b16 %v6479
  %v6882 = vunpack.c.l.b16 %v6480
  %v6883 = vunpack.c.h.b16 %v6480
  %v6884 = vunpack.c.l.b16 %v6481
  %v6885 = vunpack.c.h.b16 %v6481
  %v6886 = vunpack.c.l.b16 %v6482
  %v6887 = vunpack.c.h.b16 %v6482
  %v6888 = vunpack.c.l.b16 %v6483
  %v6889 = vunpack.c.h.b16 %v6483
  %v6890 = vunpack.c.l.b16 %v6484
  %v6891 = vunpack.c.h.b16 %v6484
  %v6892 = vunpack.c.l.b16 %v6485
  %v6893 = vunpack.c.h.b16 %v6485
  %v6894 = vunpack.c.l.b16 %v6486
  %v6895 = vunpack.c.h.b16 %v6486
  %v6896 = vunpack.c.l.b16 %v6487
  %v6897 = vunpack.c.h.b16 %v6487
  %v6898 = vunpack.c.l.b16 %v6488
  %v6899 = vunpack.c.h.b16 %v6488
  %v6900 = vunpack.c.l.b16 %v6489
  %v6901 = vunpack.c.h.b16 %v6489
  %v6902 = vunpack.c.l.b16 %v6490
  %v6903 = vunpack.c.h.b16 %v6490
  %v6904 = vunpack.c.l.b16 %v6491
  %v6905 = vunpack.c.h.b16 %v6491
  %v6906 = vunpack.c.l.b16 %v6492
  %v6907 = vunpack.c.h.b16 %v6492
  %v6908 = vunpack.c.l.b16 %v6493
  %v6909 = vunpack.c.h.b16 %v6493
  %v6910 = vunpack.c.l.b16 %v6494
  %v6911 = vunpack.c.h.b16 %v6494
  %v6912 = vunpack.c.l.b16 %v6495
  %v6913 = vunpack.c.h.b16 %v6495
  %v6914 = vunpack.c.l.b16 %v6496
  %v6915 = vunpack.c.h.b16 %v6496
  %v6916 = vunpack.c.l.b16 %v6497
  %v6917 = vunpack.c.h.b16 %v6497
  %v6918 = vunpack.c.l.b16 %v6498
  %v6919 = vunpack.c.h.b16 %v6498
  %v6920 = vunpack.c.l.b16 %v6499
  %v6921 = vunpack.c.h.b16 %v6499
  %v6922 = vunpack.c.l.b16 %v6500
  %v6923 = vunpack.c.h.b16 %v6500
  %v6924 = vunpack.c.l.b16 %v6501
  %v6925 = vunpack.c.h.b16 %v6501
  %v6926 = vunpack.c.l.b16 %v6502
  %v6927 = vunpack.c.h.b16 %v6502
  %v6928 = vunpack.c.l.b16 %v6503
  %v6929 = vunpack.c.h.b16 %v6503
  %v6930 = vunpack.c.l.b16 %v6504
  %v6931 = vunpack.c.h.b16 %v6504
  %v6932 = vunpack.c.l.b16 %v6505
  %v6933 = vunpack.c.h.b16 %v6505
  %v6934 = vunpack.c.l.b16 %v6506
  %v6935 = vunpack.c.h.b16 %v6506
  %v6936 = vunpack.c.l.b16 %v6507
  %v6937 = vunpack.c.h.b16 %v6507
  %v6938 = vunpack.c.l.b16 %v6508
  %v6939 = vunpack.c.h.b16 %v6508
  %v6940 = vunpack.c.l.b16 %v6509
  %v6941 = vunpack.c.h.b16 %v6509
  %v6942 = vunpack.c.l.b16 %v6510
  %v6943 = vunpack.c.h.b16 %v6510
  %v6944 = vunpack.c.l.b16 %v6511
  %v6945 = vunpack.c.h.b16 %v6511
  %v6946 = vunpack.c.l.b16 %v6512
  %v6947 = vunpack.c.h.b16 %v6512
  %v6948 = vunpack.c.l.b16 %v6513
  %v6949 = vunpack.c.h.b16 %v6513
  %v6950 = vunpack.c.l.b16 %v6514
  %v6951 = vunpack.c.h.b16 %v6514
  %v6952 = vunpack.c.l.b16 %v6515
  %v6953 = vunpack.c.h.b16 %v6515
  %v6954 = vunpack.c.l.b16 %v6516
  %v6955 = vunpack.c.h.b16 %v6516
  %v6956 = vunpack.c.l.b16 %v6517
  %v6957 = vunpack.c.h.b16 %v6517
  %v6958 = vunpack.c.l.b16 %v6518
  %v6959 = vunpack.c.h.b16 %v6518
  %v6960 = vunpack.c.l.b16 %v6519
  %v6961 = vunpack.c.h.b16 %v6519
  %v6962 = vunpack.c.l.b16 %v6520
  %v6963 = vunpack.c.h.b16 %v6520
  %v6964 = vunpack.c.l.b16 %v6521
  %v6965 = vunpack.c.h.b16 %v6521
  %v6966 = vunpack.c.l.b16 %v6522
  %v6967 = vunpack.c.h.b16 %v6522
  %v6968 = vunpack.c.l.b16 %v6523
  %v6969 = vunpack.c.h.b16 %v6523
  %v6970 = vunpack.c.l.b16 %v6524
  %v6971 = vunpack.c.h.b16 %v6524
  %v6972 = vunpack.c.l.b16 %v6525
  %v6973 = vunpack.c.h.b16 %v6525
  %v6974 = vunpack.c.l.b16 %v6526
  %v6975 = vunpack.c.h.b16 %v6526
  %v6976 = vunpack.c.l.b16 %v6527
  %v6977 = vunpack.c.h.b16 %v6527
  %v6978 = vpack.c.b16 %v6682, %v6678
  %v6979 = vpack.c.b16 %v6683, %v6679
  %v6980 = vpack.c.b16 %v6684, %v6680
  %v6981 = vpack.c.b16 %v6685, %v6681
  %v6982 = vpack.c.b16 %v6690, %v6686
  %v6983 = vpack.c.b16 %v6691, %v6687
  %v6984 = vpack.c.b16 %v6692, %v6688
  %v6985 = vpack.c.b16 %v6693, %v6689
  %v6986 = vpack.c.b16 %v6698, %v6694
  %v6987 = vpack.c.b16 %v6699, %v6695
  %v6988 = vpack.c.b16 %v6700, %v6696
  %v6989 = vpack.c.b16 %v6701, %v6697
  %v6990 = vpack.c.b16 %v6706, %v6702
  %v6991 = vpack.c.b16 %v6707, %v6703
  %v6992 = vpack.c.b16 %v6708, %v6704
  %v6993 = vpack.c.b16 %v6709, %v6705
  %v6994 = vpack.c.b16 %v6714, %v6710
  %v6995 = vpack.c.b16 %v6715, %v6711
  %v6996 = vpack.c.b16 %v6716, %v6712
  %v6997 = vpack.c.b16 %v6717, %v6713
  %v6998 = vpack.c.b16 %v6722, %v6718
  %v6999 = vpack.c.b16 %v6723, %v6719
  %v7000 = vpack.c.b16 %v6724, %v6720
  %v7001 = vpack.c.b16 %v6725, %v6721
  %v7002 = vpack.c.b16 %v6730, %v6726
  %v7003 = vpack.c.b16 %v6731, %v6727
  %v7004 = vpack.c.b16 %v6732, %v6728
  %v7005 = vpack.c.b16 %v6733, %v6729
  %v7006 = vpack.c.b16 %v6738, %v6734
  %v7007 = vpack.c.b16 %v6739, %v6735
  %v7008 = vpack.c.b16 %v6740, %v6736
  %v7009 = vpack.c.b16 %v6741, %v6737
  %v7010 = vpack.c.b16 %v6746, %v6742
  %v7011 = vpack.c.b16 %v6747, %v6743
  %v7012 = vpack.c.b16 %v6748, %v6744
  %v7013 = vpack.c.b16 %v6749, %v6745
  %v7014 = vpack.c.b16 %v6754, %v6750
  %v7015 = vpack.c.b16 %v6755, %v6751
  %v7016 = vpack.c.b16 %v6756, %v6752
  %v7017 = vpack.c.b16 %v6757, %v6753
  %v7018 = vpack.c.b16 %v6762, %v6758
  %v7019 = vpack.c.b16 %v6763, %v6759
  %v7020 = vpack.c.b16 %v6764, %v6760
  %v7021 = vpack.c.b16 %v6765, %v6761
  %v7022 = vpack.c.b16 %v6770, %v6766
  %v7023 = vpack.c.b16 %v6771, %v6767
  %v7024 = vpack.c.b16 %v6772, %v6768
  %v7025 = vpack.c.b16 %v6773, %v6769
  %v7026 = vpack.c.b16 %v6778, %v6774
  %v7027 = vpack.c.b16 %v6779, %v6775
  %v7028 = vpack.c.b16 %v6780, %v6776
  %v7029 = vpack.c.b16 %v6781, %v6777
  %v7030 = vpack.c.b16 %v6786, %v6782
  %v7031 = vpack.c.b16 %v6787, %v6783
  %v7032 = vpack.c.b16 %v6788, %v6784
  %v7033 = vpack.c.b16 %v6789, %v6785
  %v7034 = vpack.c.b16 %v6794, %v6790
  %v7035 = vpack.c.b16 %v6795, %v6791
  %v7036 = vpack.c.b16 %v6796, %v6792
  %v7037 = vpack.c.b16 %v6797, %v6793
  %v7038 = vpack.c.b16 %v6802, %v6798
  %v7039 = vpack.c.b16 %v6803, %v6799
  %v7040 = vpack.c.b16 %v6804, %v6800
  %v7041 = vpack.c.b16 %v6805, %v6801
  %v7042 = vpack.c.b16 %v6810, %v6806
  %v7043 = vpack.c.b16 %v6811, %v6807
  %v7044 = vpack.c.b16 %v6812, %v6808
  %v7045 = vpack.c.b16 %v6813, %v6809
  %v7046 = vpack.c.b16 %v6818, %v6814
  %v7047 = vpack.c.b16 %v6819, %v6815
  %v7048 = vpack.c.b16 %v6820, %v6816
  %v7049 = vpack.c.b16 %v6821, %v6817
  %v7050 = vpack.c.b16 %v6826, %v6822
  %v7051 = vpack.c.b16 %v6827, %v6823
  %v7052 = vpack.c.b16 %v6828, %v6824
  %v7053 = vpack.c.b16 %v6829, %v6825
  %v7054 = vpack.c.b16 %v6834, %v6830
  %v7055 = vpack.c.b16 %v6835, %v6831
  %v7056 = vpack.c.b16 %v6836, %v6832
  %v7057 = vpack.c.b16 %v6837, %v6833
  %v7058 = vpack.c.b16 %v6842, %v6838
  %v7059 = vpack.c.b16 %v6843, %v6839
  %v7060 = vpack.c.b16 %v6844, %v6840
  %v7061 = vpack.c.b16 %v6845, %v6841
  %v7062 = vpack.c.b16 %v6850, %v6846
  %v7063 = vpack.c.b16 %v6851, %v6847
  %v7064 = vpack.c.b16 %v6852, %v6848
  %v7065 = vpack.c.b16 %v6853, %v6849
  %v7066 = vpack.c.b16 %v6858, %v6854
  %v7067 = vpack.c.b16 %v6859, %v6855
  %v7068 = vpack.c.b16 %v6860, %v6856
  %v7069 = vpack.c.b16 %v6861, %v6857
  %v7070 = vpack.c.b16 %v6866, %v6862
  %v7071 = vpack.c.b16 %v6867, %v6863
  %v7072 = vpack.c.b16 %v6868, %v6864
  %v7073 = vpack.c.b16 %v6869, %v6865
  %v7074 = vpack.c.b16 %v6874, %v6870
  %v7075 = vpack.c.b16 %v6875, %v6871
  %v7076 = vpack.c.b16 %v6876, %v6872
  %v7077 = vpack.c.b16 %v6877, %v6873
  %v7078 = vpack.c.b16 %v6882, %v6878
  %v7079 = vpack.c.b16 %v6883, %v6879
  %v7080 = vpack.c.b16 %v6884, %v6880
  %v7081 = vpack.c.b16 %v6885, %v6881
  %v7082 = vpack.c.b16 %v6890, %v6886
  %v7083 = vpack.c.b16 %v6891, %v6887
  %v7084 = vpack.c.b16 %v6892, %v6888
  %v7085 = vpack.c.b16 %v6893, %v6889
  %v7086 = vpack.c.b16 %v6898, %v6894
  %v7087 = vpack.c.b16 %v6899, %v6895
  %v7088 = vpack.c.b16 %v6900, %v6896
  %v7089 = vpack.c.b16 %v6901, %v6897
  %v7090 = vpack.c.b16 %v6906, %v6902
  %v7091 = vpack.c.b16 %v6907, %v6903
  %v7092 = vpack.c.b16 %v6908, %v6904
  %v7093 = vpack.c.b16 %v6909, %v6905
  %v7094 = vpack.c.b16 %v6914, %v6910
  %v7095 = vpack.c.b16 %v6915, %v6911
  %v7096 = vpack.c.b16 %v6916, %v6912
  %v7097 = vpack.c.b16 %v6917, %v6913
  %v7098 = vpack.c.b16 %v6922, %v6918
  %v7099 = vpack.c.b16 %v6923, %v6919
  %v7100 = vpack.c.b16 %v6924, %v6920
  %v7101 = vpack.c.b16 %v6925, %v6921
  %v7102 = vpack.c.b16 %v6930, %v6926
  %v7103 = vpack.c.b16 %v6931, %v6927
  %v7104 = vpack.c.b16 %v6932, %v6928
  %v7105 = vpack.c.b16 %v6933, %v6929
  %v7106 = vpack.c.b16 %v6938, %v6934
  %v7107 = vpack.c.b16 %v6939, %v6935
  %v7108 = vpack.c.b16 %v6940, %v6936
  %v7109 = vpack.c.b16 %v6941, %v6937
  %v7110 = vpack.c.b16 %v6946, %v6942
  %v7111 = vpack.c.b16 %v6947, %v6943
  %v7112 = vpack.c.b16 %v6948, %v6944
  %v7113 = vpack.c.b16 %v6949, %v6945
  %v7114 = vpack.c.b16 %v6954, %v6950
  %v7115 = vpack.c.b16 %v6955, %v6951
  %v7116 = vpack.c.b16 %v6956, %v6952
  %v7117 = vpack.c.b16 %v6957, %v6953
  %v7118 = vpack.c.b16 %v6962, %v6958
  %v7119 = vpack.c.b16 %v6963, %v6959
  %v7120 = vpack.c.b16 %v6964, %v6960
  %v7121 = vpack.c.b16 %v6965, %v6961
  %v7122 = vpack.c.b16 %v6970, %v6966
  %v7123 = vpack.c.b16 %v6971, %v6967
  %v7124 = vpack.c.b16 %v6972, %v6968
  %v7125 = vpack.c.b16 %v6973, %v6969
  %v7126 = vpack.c.b16 %v6974, %v6974
  %v7127 = vpack.c.b16 %v6975, %v6975
  %v7128 = vpack.c.b16 %v6976, %v6976
  %v7129 = vpack.c.b16 %v6977, %v6977
  %v7279 = vsel %vm6279, %v6377, 0
  %v7282 = vsel %vm3319, %v7126, 0
  %v7285 = vsel %vm3319, %v7127, 0
  %v7288 = vsel %vm3319, %v7128, 0
  %v7291 = vsel %vm3319, %v7129, 0
  %7293 = vmatprep.subr.bf16.mxu0 %v7007
  %7294 = vmatpush1.bf16.msra.mxu0 %v7006
  %7295 = vmatprep.subr.bf16.mxu0 %v7003
  %7296 = vmatpush1.bf16.msra.mxu0 %v7002
  %7297 = vmatprep.subr.bf16.mxu0 %v6999
  %7298 = vmatpush1.bf16.msra.mxu0 %v6998
  %7299 = vmatprep.subr.bf16.mxu0 %v6995
  %7300 = vmatpush1.bf16.msra.mxu0 %v6994
  %7301 = vmatprep.subr.bf16.mxu0 %v6991
  %7302 = vmatpush1.bf16.msra.mxu0 %v6990
  %7303 = vmatprep.subr.bf16.mxu0 %v6987
  %7304 = vmatpush1.bf16.msra.mxu0 %v6986
  %7305 = vmatprep.subr.bf16.mxu0 %v6983
  %7306 = vmatpush1.bf16.msra.mxu0 %v6982
  %7307 = vmatprep.subr.bf16.mxu0 %v6979
  %7308 = vmatpush1.bf16.msra.mxu0 %v6978
  %7309 = vmatprep.subr.bf16.mxu0 %v7039
  %7310 = vmatpush2.bf16.msra.mxu0 %v7038
  %7311 = vmatprep.subr.bf16.mxu0 %v7035
  %7312 = vmatpush2.bf16.msra.mxu0 %v7034
  %7313 = vmatprep.subr.bf16.mxu0 %v7031
  %7314 = vmatpush2.bf16.msra.mxu0 %v7030
  %7315 = vmatprep.subr.bf16.mxu0 %v7027
  %7316 = vmatpush2.bf16.msra.mxu0 %v7026
  %7317 = vmatprep.subr.bf16.mxu0 %v7023
  %7318 = vmatpush2.bf16.msra.mxu0 %v7022
  %7319 = vmatprep.subr.bf16.mxu0 %v7019
  %7320 = vmatpush2.bf16.msra.mxu0 %v7018
  %7321 = vmatprep.subr.bf16.mxu0 %v7015
  %7322 = vmatpush2.bf16.msra.mxu0 %v7014
  %7323 = vmatprep.subr.bf16.mxu0 %v7011
  %7324 = vmatpush2.bf16.msra.mxu0 %v7010
  %7325 = vmatprep.mubr.bf16.mxu0 %v6374
  %7326 = vmatmul.mubr.bf16.gmra.mxu0 %v6373
  %v7327 = vpop.f32.mrf.mxu0
  %v7328 = vadd.f32 0.0, %v7327
  %v7329 = vpop.f32.mrf.mxu0
  %v7330 = vadd.f32 0.0, %v7329
  %v7331 = vpop.f32.mrf.mxu0
  %v7332 = vpop.f32.mrf.mxu0
  %7333 = vdwg.mxu0
  %7334 = vmatprep.subr.bf16.mxu0 %v7071
  %7335 = vmatpush1.bf16.msra.mxu0 %v7070
  %7336 = vmatprep.subr.bf16.mxu0 %v7067
  %7337 = vmatpush1.bf16.msra.mxu0 %v7066
  %7338 = vmatprep.subr.bf16.mxu0 %v7063
  %7339 = vmatpush1.bf16.msra.mxu0 %v7062
  %7340 = vmatprep.subr.bf16.mxu0 %v7059
  %7341 = vmatpush1.bf16.msra.mxu0 %v7058
  %7342 = vmatprep.subr.bf16.mxu0 %v7055
  %7343 = vmatpush1.bf16.msra.mxu0 %v7054
  %7344 = vmatprep.subr.bf16.mxu0 %v7051
  %7345 = vmatpush1.bf16.msra.mxu0 %v7050
  %7346 = vmatprep.subr.bf16.mxu0 %v7047
  %7347 = vmatpush1.bf16.msra.mxu0 %v7046
  %7348 = vmatprep.subr.bf16.mxu0 %v7043
  %7349 = vmatpush1.bf16.msra.mxu0 %v7042
  %7350 = vmatprep.subr.bf16.mxu0 %v7103
  %7351 = vmatpush2.bf16.msra.mxu0 %v7102
  %7352 = vmatprep.subr.bf16.mxu0 %v7099
  %7353 = vmatpush2.bf16.msra.mxu0 %v7098
  %7354 = vmatprep.subr.bf16.mxu0 %v7095
  %7355 = vmatpush2.bf16.msra.mxu0 %v7094
  %7356 = vmatprep.subr.bf16.mxu0 %v7091
  %7357 = vmatpush2.bf16.msra.mxu0 %v7090
  %7358 = vmatprep.subr.bf16.mxu0 %v7087
  %7359 = vmatpush2.bf16.msra.mxu0 %v7086
  %7360 = vmatprep.subr.bf16.mxu0 %v7083
  %7361 = vmatpush2.bf16.msra.mxu0 %v7082
  %7362 = vmatprep.subr.bf16.mxu0 %v7079
  %7363 = vmatpush2.bf16.msra.mxu0 %v7078
  %7364 = vmatprep.subr.bf16.mxu0 %v7075
  %7365 = vmatpush2.bf16.msra.mxu0 %v7074
  %7366 = vmatprep.mubr.bf16.mxu0 %v6376
  %7367 = vmatmul.mubr.bf16.gmra.mxu0 %v6375
  %v7368 = vpop.f32.mrf.mxu0
  %v7369 = vadd.f32 %v7328, %v7368
  %v7370 = vpop.f32.mrf.mxu0
  %v7371 = vadd.f32 %v7330, %v7370
  %v7372 = vpop.f32.mrf.mxu0
  %v7373 = vpop.f32.mrf.mxu0
  %7374 = vdwg.mxu0
  %7375 = vmatprep.subr.bf16.mxu0 0
  %7376 = vmatpush1.bf16.msra.mxu0 0
  %7377 = vmatprep.subr.bf16.mxu0 0
  %7378 = vmatpush1.bf16.msra.mxu0 0
  %7379 = vmatprep.subr.bf16.mxu0 %v7285
  %7380 = vmatpush1.bf16.msra.mxu0 %v7282
  %7381 = vmatprep.subr.bf16.mxu0 %v7123
  %7382 = vmatpush1.bf16.msra.mxu0 %v7122
  %7383 = vmatprep.subr.bf16.mxu0 %v7119
  %7384 = vmatpush1.bf16.msra.mxu0 %v7118
  %7385 = vmatprep.subr.bf16.mxu0 %v7115
  %7386 = vmatpush1.bf16.msra.mxu0 %v7114
  %7387 = vmatprep.subr.bf16.mxu0 %v7111
  %7388 = vmatpush1.bf16.msra.mxu0 %v7110
  %7389 = vmatprep.subr.bf16.mxu0 %v7107
  %7390 = vmatpush1.bf16.msra.mxu0 %v7106
  %7391 = vmatprep.subr.bf16.mxu0 0
  %7392 = vmatpush2.bf16.msra.mxu0 0
  %7393 = vmatprep.subr.bf16.mxu0 0
  %7394 = vmatpush2.bf16.msra.mxu0 0
  %7395 = vmatprep.subr.bf16.mxu0 0
  %7396 = vmatpush2.bf16.msra.mxu0 0
  %7397 = vmatprep.subr.bf16.mxu0 0
  %7398 = vmatpush2.bf16.msra.mxu0 0
  %7399 = vmatprep.subr.bf16.mxu0 0
  %7400 = vmatpush2.bf16.msra.mxu0 0
  %7401 = vmatprep.subr.bf16.mxu0 0
  %7402 = vmatpush2.bf16.msra.mxu0 0
  %7403 = vmatprep.subr.bf16.mxu0 0
  %7404 = vmatpush2.bf16.msra.mxu0 0
  %7405 = vmatprep.subr.bf16.mxu0 0
  %7406 = vmatpush2.bf16.msra.mxu0 0
  %7407 = vmatprep.mubr.bf16.mxu0 0
  %7408 = vmatmul.mubr.bf16.gmra.mxu0 %v7279
  %v7409 = vpop.f32.mrf.mxu0
  %v7410 = vadd.f32 %v7369, %v7409
  %v7411 = vpop.f32.mrf.mxu0
  %v7412 = vadd.f32 %v7371, %v7411
  %v7413 = vpop.f32.mrf.mxu0
  %v7414 = vpop.f32.mrf.mxu0
  %7415 = vdwg.mxu0
  %7416 = vmatprep.subr.bf16.mxu0 %v7009
  %7417 = vmatpush1.bf16.msra.mxu0 %v7008
  %7418 = vmatprep.subr.bf16.mxu0 %v7005
  %7419 = vmatpush1.bf16.msra.mxu0 %v7004
  %7420 = vmatprep.subr.bf16.mxu0 %v7001
  %7421 = vmatpush1.bf16.msra.mxu0 %v7000
  %7422 = vmatprep.subr.bf16.mxu0 %v6997
  %7423 = vmatpush1.bf16.msra.mxu0 %v6996
  %7424 = vmatprep.subr.bf16.mxu0 %v6993
  %7425 = vmatpush1.bf16.msra.mxu0 %v6992
  %7426 = vmatprep.subr.bf16.mxu0 %v6989
  %7427 = vmatpush1.bf16.msra.mxu0 %v6988
  %7428 = vmatprep.subr.bf16.mxu0 %v6985
  %7429 = vmatpush1.bf16.msra.mxu0 %v6984
  %7430 = vmatprep.subr.bf16.mxu0 %v6981
  %7431 = vmatpush1.bf16.msra.mxu0 %v6980
  %7432 = vmatprep.subr.bf16.mxu0 %v7041
  %7433 = vmatpush2.bf16.msra.mxu0 %v7040
  %7434 = vmatprep.subr.bf16.mxu0 %v7037
  %7435 = vmatpush2.bf16.msra.mxu0 %v7036
  %7436 = vmatprep.subr.bf16.mxu0 %v7033
  %7437 = vmatpush2.bf16.msra.mxu0 %v7032
  %7438 = vmatprep.subr.bf16.mxu0 %v7029
  %7439 = vmatpush2.bf16.msra.mxu0 %v7028
  %7440 = vmatprep.subr.bf16.mxu0 %v7025
  %7441 = vmatpush2.bf16.msra.mxu0 %v7024
  %7442 = vmatprep.subr.bf16.mxu0 %v7021
  %7443 = vmatpush2.bf16.msra.mxu0 %v7020
  %7444 = vmatprep.subr.bf16.mxu0 %v7017
  %7445 = vmatpush2.bf16.msra.mxu0 %v7016
  %7446 = vmatprep.subr.bf16.mxu0 %v7013
  %7447 = vmatpush2.bf16.msra.mxu0 %v7012
  %7448 = vmatprep.mubr.bf16.mxu0 %v6374
  %7449 = vmatmul.mubr.bf16.gmra.mxu0 %v6373
  %v7450 = vpop.f32.mrf.mxu0
  %v7451 = vadd.f32 0.0, %v7450
  %v7452 = vpop.f32.mrf.mxu0
  %v7453 = vadd.f32 0.0, %v7452
  %v7454 = vpop.f32.mrf.mxu0
  %v7455 = vpop.f32.mrf.mxu0
  %7456 = vdwg.mxu0
  %7457 = vmatprep.subr.bf16.mxu0 %v7073
  %7458 = vmatpush1.bf16.msra.mxu0 %v7072
  %7459 = vmatprep.subr.bf16.mxu0 %v7069
  %7460 = vmatpush1.bf16.msra.mxu0 %v7068
  %7461 = vmatprep.subr.bf16.mxu0 %v7065
  %7462 = vmatpush1.bf16.msra.mxu0 %v7064
  %7463 = vmatprep.subr.bf16.mxu0 %v7061
  %7464 = vmatpush1.bf16.msra.mxu0 %v7060
  %7465 = vmatprep.subr.bf16.mxu0 %v7057
  %7466 = vmatpush1.bf16.msra.mxu0 %v7056
  %7467 = vmatprep.subr.bf16.mxu0 %v7053
  %7468 = vmatpush1.bf16.msra.mxu0 %v7052
  %7469 = vmatprep.subr.bf16.mxu0 %v7049
  %7470 = vmatpush1.bf16.msra.mxu0 %v7048
  %7471 = vmatprep.subr.bf16.mxu0 %v7045
  %7472 = vmatpush1.bf16.msra.mxu0 %v7044
  %7473 = vmatprep.subr.bf16.mxu0 %v7105
  %7474 = vmatpush2.bf16.msra.mxu0 %v7104
  %7475 = vmatprep.subr.bf16.mxu0 %v7101
  %7476 = vmatpush2.bf16.msra.mxu0 %v7100
  %7477 = vmatprep.subr.bf16.mxu0 %v7097
  %7478 = vmatpush2.bf16.msra.mxu0 %v7096
  %7479 = vmatprep.subr.bf16.mxu0 %v7093
  %7480 = vmatpush2.bf16.msra.mxu0 %v7092
  %7481 = vmatprep.subr.bf16.mxu0 %v7089
  %7482 = vmatpush2.bf16.msra.mxu0 %v7088
  %7483 = vmatprep.subr.bf16.mxu0 %v7085
  %7484 = vmatpush2.bf16.msra.mxu0 %v7084
  %7485 = vmatprep.subr.bf16.mxu0 %v7081
  %7486 = vmatpush2.bf16.msra.mxu0 %v7080
  %7487 = vmatprep.subr.bf16.mxu0 %v7077
  %7488 = vmatpush2.bf16.msra.mxu0 %v7076
  %7489 = vmatprep.mubr.bf16.mxu0 %v6376
  %7490 = vmatmul.mubr.bf16.gmra.mxu0 %v6375
  %v7491 = vpop.f32.mrf.mxu0
  %v7492 = vadd.f32 %v7451, %v7491
  %v7493 = vpop.f32.mrf.mxu0
  %v7494 = vadd.f32 %v7453, %v7493
  %v7495 = vpop.f32.mrf.mxu0
  %v7496 = vpop.f32.mrf.mxu0
  %7497 = vdwg.mxu0
  %7498 = vmatprep.subr.bf16.mxu0 0
  %7499 = vmatpush1.bf16.msra.mxu0 0
  %7500 = vmatprep.subr.bf16.mxu0 0
  %7501 = vmatpush1.bf16.msra.mxu0 0
  %7502 = vmatprep.subr.bf16.mxu0 %v7291
  %7503 = vmatpush1.bf16.msra.mxu0 %v7288
  %7504 = vmatprep.subr.bf16.mxu0 %v7125
  %7505 = vmatpush1.bf16.msra.mxu0 %v7124
  %7506 = vmatprep.subr.bf16.mxu0 %v7121
  %7507 = vmatpush1.bf16.msra.mxu0 %v7120
  %7508 = vmatprep.subr.bf16.mxu0 %v7117
  %7509 = vmatpush1.bf16.msra.mxu0 %v7116
  %7510 = vmatprep.subr.bf16.mxu0 %v7113
  %7511 = vmatpush1.bf16.msra.mxu0 %v7112
  %7512 = vmatprep.subr.bf16.mxu0 %v7109
  %7513 = vmatpush1.bf16.msra.mxu0 %v7108
  %7514 = vmatprep.subr.bf16.mxu0 0
  %7515 = vmatpush2.bf16.msra.mxu0 0
  %7516 = vmatprep.subr.bf16.mxu0 0
  %7517 = vmatpush2.bf16.msra.mxu0 0
  %7518 = vmatprep.subr.bf16.mxu0 0
  %7519 = vmatpush2.bf16.msra.mxu0 0
  %7520 = vmatprep.subr.bf16.mxu0 0
  %7521 = vmatpush2.bf16.msra.mxu0 0
  %7522 = vmatprep.subr.bf16.mxu0 0
  %7523 = vmatpush2.bf16.msra.mxu0 0
  %7524 = vmatprep.subr.bf16.mxu0 0
  %7525 = vmatpush2.bf16.msra.mxu0 0
  %7526 = vmatprep.subr.bf16.mxu0 0
  %7527 = vmatpush2.bf16.msra.mxu0 0
  %7528 = vmatprep.subr.bf16.mxu0 0
  %7529 = vmatpush2.bf16.msra.mxu0 0
  %7530 = vmatprep.mubr.bf16.mxu0 0
  %7531 = vmatmul.mubr.bf16.gmra.mxu0 %v7279
  %v7532 = vpop.f32.mrf.mxu0
  %v7533 = vadd.f32 %v7492, %v7532
  %v7534 = vpop.f32.mrf.mxu0
  %v7535 = vadd.f32 %v7494, %v7534
  %v7536 = vpop.f32.mrf.mxu0
  %v7537 = vpop.f32.mrf.mxu0
  %7538 = vdwg.mxu0
  %v7539 = vrot.slane %v7410, 4
  %v7540 = vadd.f32 %v7410, %v7539
  %v7541 = vrot.slane %v7540, 2
  %v7542 = vadd.f32 %v7540, %v7541
  %v7543 = vrot.slane %v7542, 1
  %v7544 = vadd.f32 %v7542, %v7543
  %v7545 = vrot.slane %v7412, 4
  %v7546 = vadd.f32 %v7412, %v7545
  %v7547 = vrot.slane %v7546, 2
  %v7548 = vadd.f32 %v7546, %v7547
  %v7549 = vrot.slane %v7548, 1
  %v7550 = vadd.f32 %v7548, %v7549
  %v7551 = vrot.slane %v7533, 4
  %v7552 = vadd.f32 %v7533, %v7551
  %v7553 = vrot.slane %v7552, 2
  %v7554 = vadd.f32 %v7552, %v7553
  %v7555 = vrot.slane %v7554, 1
  %v7556 = vadd.f32 %v7554, %v7555
  %vm7557 = vcmask 130048
  %v7558 = vsel %vm7557, %v7535, 0.0
  %v7559 = vrot.slane %v7558, 4
  %v7560 = vadd.f32 %v7558, %v7559
  %v7561 = vrot.slane %v7560, 2
  %v7562 = vadd.f32 %v7560, %v7561
  %v7563 = vrot.slane %v7562, 1
  %v7564 = vadd.f32 %v7562, %v7563
  %v7565 = vmul.f32 %v7544, %v420
  %v7566 = vmul.f32 %v7550, %v420
  %v7567 = vmul.f32 %v7556, %v420
  %v7568 = vmul.f32 %v7564, %v420
  %v7569 = vmul.f32 %v7410, %v7410
  %v7570 = vmul.f32 %v7412, %v7412
  %v7571 = vmul.f32 %v7533, %v7533
  %v7572 = vmul.f32 %v7535, %v7535
  %v7573 = vrot.slane %v7569, 4
  %v7574 = vadd.f32 %v7569, %v7573
  %v7575 = vrot.slane %v7574, 2
  %v7576 = vadd.f32 %v7574, %v7575
  %v7577 = vrot.slane %v7576, 1
  %v7578 = vadd.f32 %v7576, %v7577
  %v7579 = vrot.slane %v7570, 4
  %v7580 = vadd.f32 %v7570, %v7579
  %v7581 = vrot.slane %v7580, 2
  %v7582 = vadd.f32 %v7580, %v7581
  %v7583 = vrot.slane %v7582, 1
  %v7584 = vadd.f32 %v7582, %v7583
  %v7585 = vrot.slane %v7571, 4
  %v7586 = vadd.f32 %v7571, %v7585
  %v7587 = vrot.slane %v7586, 2
  %v7588 = vadd.f32 %v7586, %v7587
  %v7589 = vrot.slane %v7588, 1
  %v7590 = vadd.f32 %v7588, %v7589
  %v7591 = vsel %vm7557, %v7572, 0.0
  %v7592 = vrot.slane %v7591, 4
  %v7593 = vadd.f32 %v7591, %v7592
  %v7594 = vrot.slane %v7593, 2
  %v7595 = vadd.f32 %v7593, %v7594
  %v7596 = vrot.slane %v7595, 1
  %v7597 = vadd.f32 %v7595, %v7596
  %v7598 = vmul.f32 %v7578, %v420
  %v7599 = vmul.f32 %v7584, %v420
  %v7600 = vmul.f32 %v7590, %v420
  %v7601 = vmul.f32 %v7597, %v420
  %v7602 = vmul.f32 %v7565, %v7565
  %v7603 = vmul.f32 %v7566, %v7566
  %v7604 = vmul.f32 %v7567, %v7567
  %v7605 = vmul.f32 %v7568, %v7568
  %v7606 = vsub.f32 %v7598, %v7602
  %v7607 = vsub.f32 %v7599, %v7603
  %v7608 = vsub.f32 %v7600, %v7604
  %v7609 = vsub.f32 %v7601, %v7605
  %v7610 = vmax.f32 %v7606, 0.0
  %v7611 = vmax.f32 %v7607, 0.0
  %v7612 = vmax.f32 %v7608, 0.0
  %v7613 = vmax.f32 %v7609, 0.0
  %v7614 = vsub.f32 %v7410, %v7565
  %v7615 = vsub.f32 %v7412, %v7566
  %v7616 = vsub.f32 %v7533, %v7567
  %v7617 = vsub.f32 %v7535, %v7568
  %v7618 = vadd.f32 %v7610, 1e-05
  %v7619 = vadd.f32 %v7611, 1e-05
  %v7620 = vadd.f32 %v7612, 1e-05
  %v7621 = vadd.f32 %v7613, 1e-05
  %v7622 = vrsqrt.pop %v7618
  %v7623 = vrsqrt.pop %v7619
  %v7624 = vrsqrt.pop %v7620
  %v7625 = vrsqrt.pop %v7621
  %v7626 = vmul.f32 %v7614, %v7622
  %v7627 = vmul.f32 %v7615, %v7623
  %v7628 = vmul.f32 %v7616, %v7624
  %v7629 = vmul.f32 %v7617, %v7625
  %v7630 = vmax.f32 %v7626, 0.0
  %v7631 = vmax.f32 %v7627, 0.0
  %v7632 = vmax.f32 %v7628, 0.0
  %v7633 = vmax.f32 %v7629, 0.0
  %v7634 = vpack.c.bf16 %v7630, %v7630
  %v7635 = vpack.c.bf16 %v7631, %v7631
  %v7636 = vpack.c.bf16 %v7632, %v7632
  %v7637 = vpack.c.bf16 %v7633, %v7633
  %v7638 = vld [vmem:[%s5] sm:$0xff]
  %v7639 = vld [vmem:[%s5 + $0x8] sm:$0xff]
  %v7640 = vld [vmem:[%s5 + $0x10] sm:$0xff]
  %v7641 = vld [vmem:[%s5 + $0x18] sm:$0xff]
  %v7642 = vld [vmem:[%s5 + $0x20] sm:$0xff]
  %v7643 = vld [vmem:[%s5 + $0x28] sm:$0xff]
  %v7644 = vld [vmem:[%s5 + $0x30] sm:$0xff]
  %v7645 = vld [vmem:[%s5 + $0x38] sm:$0xff]
  %v7646 = vld [vmem:[%s5 + $0x40] sm:$0xff]
  %v7647 = vld [vmem:[%s5 + $0x48] sm:$0xff]
  %v7648 = vld [vmem:[%s5 + $0x50] sm:$0xff]
  %v7649 = vld [vmem:[%s5 + $0x58] sm:$0xff]
  %v7650 = vld [vmem:[%s5 + $0x60] sm:$0xff]
  %v7651 = vld [vmem:[%s5 + $0x68] sm:$0xff]
  %v7652 = vld [vmem:[%s5 + $0x70] sm:$0xff]
  %v7653 = vld [vmem:[%s5 + $0x78] sm:$0xff]
  %v7654 = vld [vmem:[%s5 + $0x80] sm:$0xff]
  %v7655 = vld [vmem:[%s5 + $0x88] sm:$0xff]
  %v7656 = vld [vmem:[%s5 + $0x90] sm:$0xff]
  %v7657 = vld [vmem:[%s5 + $0x98] sm:$0xff]
  %v7658 = vld [vmem:[%s5 + $0xa0] sm:$0xff]
  %v7659 = vld [vmem:[%s5 + $0xa8] sm:$0xff]
  %v7660 = vld [vmem:[%s5 + $0xb0] sm:$0xff]
  %v7661 = vld [vmem:[%s5 + $0xb8] sm:$0xff]
  %v7662 = vld [vmem:[%s5 + $0xc0] sm:$0xff]
  %v7663 = vld [vmem:[%s5 + $0xc8] sm:$0xff]
  %v7664 = vld [vmem:[%s5 + $0xd0] sm:$0xff]
  %v7665 = vld [vmem:[%s5 + $0xd8] sm:$0xff]
  %v7666 = vld [vmem:[%s5 + $0xe0] sm:$0xff]
  %v7667 = vld [vmem:[%s5 + $0xe8] sm:$0xff]
  %v7668 = vld [vmem:[%s5 + $0xf0] sm:$0xff]
  %v7669 = vld [vmem:[%s5 + $0xf8] sm:$0xff]
  %v7670 = vld [vmem:[%s5 + $0x100] sm:$0xff]
  %v7671 = vld [vmem:[%s5 + $0x108] sm:$0xff]
  %v7672 = vld [vmem:[%s5 + $0x110] sm:$0xff]
  %v7673 = vld [vmem:[%s5 + $0x118] sm:$0xff]
  %v7674 = vld [vmem:[%s5 + $0x120] sm:$0xff]
  %v7675 = vld [vmem:[%s5 + $0x128] sm:$0xff]
  %v7676 = vld [vmem:[%s5 + $0x130] sm:$0xff]
  %v7677 = vld [vmem:[%s5 + $0x138] sm:$0xff]
  %v7678 = vld [vmem:[%s5 + $0x140] sm:$0xff]
  %v7679 = vld [vmem:[%s5 + $0x148] sm:$0xff]
  %v7680 = vld [vmem:[%s5 + $0x150] sm:$0xff]
  %v7681 = vld [vmem:[%s5 + $0x158] sm:$0xff]
  %v7682 = vld [vmem:[%s5 + $0x160] sm:$0xff]
  %v7683 = vld [vmem:[%s5 + $0x168] sm:$0xff]
  %v7684 = vld [vmem:[%s5 + $0x170] sm:$0xff]
  %v7685 = vld [vmem:[%s5 + $0x178] sm:$0xff]
  %v7686 = vld [vmem:[%s5 + $0x180] sm:$0xff]
  %v7687 = vld [vmem:[%s5 + $0x188] sm:$0xff]
  %v7738 = vunpack.c.l.b16 %v7638
  %v7739 = vunpack.c.h.b16 %v7638
  %v7740 = vunpack.c.l.b16 %v7639
  %v7741 = vunpack.c.h.b16 %v7639
  %v7742 = vunpack.c.l.b16 %v7640
  %v7743 = vunpack.c.h.b16 %v7640
  %v7744 = vunpack.c.l.b16 %v7641
  %v7745 = vunpack.c.h.b16 %v7641
  %v7746 = vunpack.c.l.b16 %v7642
  %v7747 = vunpack.c.h.b16 %v7642
  %v7748 = vunpack.c.l.b16 %v7643
  %v7749 = vunpack.c.h.b16 %v7643
  %v7750 = vunpack.c.l.b16 %v7644
  %v7751 = vunpack.c.h.b16 %v7644
  %v7752 = vunpack.c.l.b16 %v7645
  %v7753 = vunpack.c.h.b16 %v7645
  %v7754 = vunpack.c.l.b16 %v7646
  %v7755 = vunpack.c.h.b16 %v7646
  %v7756 = vunpack.c.l.b16 %v7647
  %v7757 = vunpack.c.h.b16 %v7647
  %v7758 = vunpack.c.l.b16 %v7648
  %v7759 = vunpack.c.h.b16 %v7648
  %v7760 = vunpack.c.l.b16 %v7649
  %v7761 = vunpack.c.h.b16 %v7649
  %v7762 = vunpack.c.l.b16 %v7650
  %v7763 = vunpack.c.h.b16 %v7650
  %v7764 = vunpack.c.l.b16 %v7651
  %v7765 = vunpack.c.h.b16 %v7651
  %v7766 = vunpack.c.l.b16 %v7652
  %v7767 = vunpack.c.h.b16 %v7652
  %v7768 = vunpack.c.l.b16 %v7653
  %v7769 = vunpack.c.h.b16 %v7653
  %v7770 = vunpack.c.l.b16 %v7654
  %v7771 = vunpack.c.h.b16 %v7654
  %v7772 = vunpack.c.l.b16 %v7655
  %v7773 = vunpack.c.h.b16 %v7655
  %v7774 = vunpack.c.l.b16 %v7656
  %v7775 = vunpack.c.h.b16 %v7656
  %v7776 = vunpack.c.l.b16 %v7657
  %v7777 = vunpack.c.h.b16 %v7657
  %v7778 = vunpack.c.l.b16 %v7658
  %v7779 = vunpack.c.h.b16 %v7658
  %v7780 = vunpack.c.l.b16 %v7659
  %v7781 = vunpack.c.h.b16 %v7659
  %v7782 = vunpack.c.l.b16 %v7660
  %v7783 = vunpack.c.h.b16 %v7660
  %v7784 = vunpack.c.l.b16 %v7661
  %v7785 = vunpack.c.h.b16 %v7661
  %v7786 = vunpack.c.l.b16 %v7662
  %v7787 = vunpack.c.h.b16 %v7662
  %v7788 = vunpack.c.l.b16 %v7663
  %v7789 = vunpack.c.h.b16 %v7663
  %v7790 = vunpack.c.l.b16 %v7664
  %v7791 = vunpack.c.h.b16 %v7664
  %v7792 = vunpack.c.l.b16 %v7665
  %v7793 = vunpack.c.h.b16 %v7665
  %v7794 = vunpack.c.l.b16 %v7666
  %v7795 = vunpack.c.h.b16 %v7666
  %v7796 = vunpack.c.l.b16 %v7667
  %v7797 = vunpack.c.h.b16 %v7667
  %v7798 = vunpack.c.l.b16 %v7668
  %v7799 = vunpack.c.h.b16 %v7668
  %v7800 = vunpack.c.l.b16 %v7669
  %v7801 = vunpack.c.h.b16 %v7669
  %v7802 = vunpack.c.l.b16 %v7670
  %v7803 = vunpack.c.h.b16 %v7670
  %v7804 = vunpack.c.l.b16 %v7671
  %v7805 = vunpack.c.h.b16 %v7671
  %v7806 = vunpack.c.l.b16 %v7672
  %v7807 = vunpack.c.h.b16 %v7672
  %v7808 = vunpack.c.l.b16 %v7673
  %v7809 = vunpack.c.h.b16 %v7673
  %v7810 = vunpack.c.l.b16 %v7674
  %v7811 = vunpack.c.h.b16 %v7674
  %v7812 = vunpack.c.l.b16 %v7675
  %v7813 = vunpack.c.h.b16 %v7675
  %v7814 = vunpack.c.l.b16 %v7676
  %v7815 = vunpack.c.h.b16 %v7676
  %v7816 = vunpack.c.l.b16 %v7677
  %v7817 = vunpack.c.h.b16 %v7677
  %v7818 = vunpack.c.l.b16 %v7678
  %v7819 = vunpack.c.h.b16 %v7678
  %v7820 = vunpack.c.l.b16 %v7679
  %v7821 = vunpack.c.h.b16 %v7679
  %v7822 = vunpack.c.l.b16 %v7680
  %v7823 = vunpack.c.h.b16 %v7680
  %v7824 = vunpack.c.l.b16 %v7681
  %v7825 = vunpack.c.h.b16 %v7681
  %v7826 = vunpack.c.l.b16 %v7682
  %v7827 = vunpack.c.h.b16 %v7682
  %v7828 = vunpack.c.l.b16 %v7683
  %v7829 = vunpack.c.h.b16 %v7683
  %v7830 = vunpack.c.l.b16 %v7684
  %v7831 = vunpack.c.h.b16 %v7684
  %v7832 = vunpack.c.l.b16 %v7685
  %v7833 = vunpack.c.h.b16 %v7685
  %v7834 = vunpack.c.l.b16 %v7686
  %v7835 = vunpack.c.h.b16 %v7686
  %v7836 = vunpack.c.l.b16 %v7687
  %v7837 = vunpack.c.h.b16 %v7687
  %v7838 = vpack.c.b16 %v7740, %v7738
  %v7839 = vpack.c.b16 %v7741, %v7739
  %v7840 = vpack.c.b16 %v7744, %v7742
  %v7841 = vpack.c.b16 %v7745, %v7743
  %v7842 = vpack.c.b16 %v7748, %v7746
  %v7843 = vpack.c.b16 %v7749, %v7747
  %v7844 = vpack.c.b16 %v7752, %v7750
  %v7845 = vpack.c.b16 %v7753, %v7751
  %v7846 = vpack.c.b16 %v7756, %v7754
  %v7847 = vpack.c.b16 %v7757, %v7755
  %v7848 = vpack.c.b16 %v7760, %v7758
  %v7849 = vpack.c.b16 %v7761, %v7759
  %v7850 = vpack.c.b16 %v7764, %v7762
  %v7851 = vpack.c.b16 %v7765, %v7763
  %v7852 = vpack.c.b16 %v7768, %v7766
  %v7853 = vpack.c.b16 %v7769, %v7767
  %v7854 = vpack.c.b16 %v7772, %v7770
  %v7855 = vpack.c.b16 %v7773, %v7771
  %v7856 = vpack.c.b16 %v7776, %v7774
  %v7857 = vpack.c.b16 %v7777, %v7775
  %v7858 = vpack.c.b16 %v7780, %v7778
  %v7859 = vpack.c.b16 %v7781, %v7779
  %v7860 = vpack.c.b16 %v7784, %v7782
  %v7861 = vpack.c.b16 %v7785, %v7783
  %v7862 = vpack.c.b16 %v7788, %v7786
  %v7863 = vpack.c.b16 %v7789, %v7787
  %v7864 = vpack.c.b16 %v7792, %v7790
  %v7865 = vpack.c.b16 %v7793, %v7791
  %v7866 = vpack.c.b16 %v7796, %v7794
  %v7867 = vpack.c.b16 %v7797, %v7795
  %v7868 = vpack.c.b16 %v7800, %v7798
  %v7869 = vpack.c.b16 %v7801, %v7799
  %v7870 = vpack.c.b16 %v7804, %v7802
  %v7871 = vpack.c.b16 %v7805, %v7803
  %v7872 = vpack.c.b16 %v7808, %v7806
  %v7873 = vpack.c.b16 %v7809, %v7807
  %v7874 = vpack.c.b16 %v7812, %v7810
  %v7875 = vpack.c.b16 %v7813, %v7811
  %v7876 = vpack.c.b16 %v7816, %v7814
  %v7877 = vpack.c.b16 %v7817, %v7815
  %v7878 = vpack.c.b16 %v7820, %v7818
  %v7879 = vpack.c.b16 %v7821, %v7819
  %v7880 = vpack.c.b16 %v7824, %v7822
  %v7881 = vpack.c.b16 %v7825, %v7823
  %v7882 = vpack.c.b16 %v7828, %v7826
  %v7883 = vpack.c.b16 %v7829, %v7827
  %v7884 = vpack.c.b16 %v7832, %v7830
  %v7885 = vpack.c.b16 %v7833, %v7831
  %v7886 = vpack.c.b16 %v7836, %v7834
  %v7887 = vpack.c.b16 %v7837, %v7835
  %v7939 = vsel %vm7557, %v7637, 0
  %7941 = vmatprep.subr.bf16.mxu0 %v7853
  %7942 = vmatpush1.bf16.msra.mxu0 %v7852
  %7943 = vmatprep.subr.bf16.mxu0 %v7851
  %7944 = vmatpush1.bf16.msra.mxu0 %v7850
  %7945 = vmatprep.subr.bf16.mxu0 %v7849
  %7946 = vmatpush1.bf16.msra.mxu0 %v7848
  %7947 = vmatprep.subr.bf16.mxu0 %v7847
  %7948 = vmatpush1.bf16.msra.mxu0 %v7846
  %7949 = vmatprep.subr.bf16.mxu0 %v7845
  %7950 = vmatpush1.bf16.msra.mxu0 %v7844
  %7951 = vmatprep.subr.bf16.mxu0 %v7843
  %7952 = vmatpush1.bf16.msra.mxu0 %v7842
  %7953 = vmatprep.subr.bf16.mxu0 %v7841
  %7954 = vmatpush1.bf16.msra.mxu0 %v7840
  %7955 = vmatprep.subr.bf16.mxu0 %v7839
  %7956 = vmatpush1.bf16.msra.mxu0 %v7838
  %7957 = vmatprep.subr.bf16.mxu0 %v7869
  %7958 = vmatpush2.bf16.msra.mxu0 %v7868
  %7959 = vmatprep.subr.bf16.mxu0 %v7867
  %7960 = vmatpush2.bf16.msra.mxu0 %v7866
  %7961 = vmatprep.subr.bf16.mxu0 %v7865
  %7962 = vmatpush2.bf16.msra.mxu0 %v7864
  %7963 = vmatprep.subr.bf16.mxu0 %v7863
  %7964 = vmatpush2.bf16.msra.mxu0 %v7862
  %7965 = vmatprep.subr.bf16.mxu0 %v7861
  %7966 = vmatpush2.bf16.msra.mxu0 %v7860
  %7967 = vmatprep.subr.bf16.mxu0 %v7859
  %7968 = vmatpush2.bf16.msra.mxu0 %v7858
  %7969 = vmatprep.subr.bf16.mxu0 %v7857
  %7970 = vmatpush2.bf16.msra.mxu0 %v7856
  %7971 = vmatprep.subr.bf16.mxu0 %v7855
  %7972 = vmatpush2.bf16.msra.mxu0 %v7854
  %7973 = vmatprep.mubr.bf16.mxu0 %v7635
  %7974 = vmatmul.mubr.bf16.gmra.mxu0 %v7634
  %v7975 = vpop.f32.mrf.mxu0
  %v7976 = vadd.f32 0.0, %v7975
  %v7977 = vpop.f32.mrf.mxu0
  %v7978 = vadd.f32 0.0, %v7977
  %v7979 = vpop.f32.mrf.mxu0
  %v7980 = vpop.f32.mrf.mxu0
  %7981 = vdwg.mxu0
  %7982 = vmatprep.subr.bf16.mxu0 %v7885
  %7983 = vmatpush1.bf16.msra.mxu0 %v7884
  %7984 = vmatprep.subr.bf16.mxu0 %v7883
  %7985 = vmatpush1.bf16.msra.mxu0 %v7882
  %7986 = vmatprep.subr.bf16.mxu0 %v7881
  %7987 = vmatpush1.bf16.msra.mxu0 %v7880
  %7988 = vmatprep.subr.bf16.mxu0 %v7879
  %7989 = vmatpush1.bf16.msra.mxu0 %v7878
  %7990 = vmatprep.subr.bf16.mxu0 %v7877
  %7991 = vmatpush1.bf16.msra.mxu0 %v7876
  %7992 = vmatprep.subr.bf16.mxu0 %v7875
  %7993 = vmatpush1.bf16.msra.mxu0 %v7874
  %7994 = vmatprep.subr.bf16.mxu0 %v7873
  %7995 = vmatpush1.bf16.msra.mxu0 %v7872
  %7996 = vmatprep.subr.bf16.mxu0 %v7871
  %7997 = vmatpush1.bf16.msra.mxu0 %v7870
  %7998 = vmatprep.subr.bf16.mxu0 0
  %7999 = vmatpush2.bf16.msra.mxu0 0
  %8000 = vmatprep.subr.bf16.mxu0 0
  %8001 = vmatpush2.bf16.msra.mxu0 0
  %8002 = vmatprep.subr.bf16.mxu0 0
  %8003 = vmatpush2.bf16.msra.mxu0 0
  %8004 = vmatprep.subr.bf16.mxu0 0
  %8005 = vmatpush2.bf16.msra.mxu0 0
  %8006 = vmatprep.subr.bf16.mxu0 0
  %8007 = vmatpush2.bf16.msra.mxu0 0
  %8008 = vmatprep.subr.bf16.mxu0 0
  %8009 = vmatpush2.bf16.msra.mxu0 0
  %8010 = vmatprep.subr.bf16.mxu0 0
  %8011 = vmatpush2.bf16.msra.mxu0 0
  %8012 = vmatprep.subr.bf16.mxu0 %v7887
  %8013 = vmatpush2.bf16.msra.mxu0 %v7886
  %8014 = vmatprep.mubr.bf16.mxu0 %v7939
  %8015 = vmatmul.mubr.bf16.gmra.mxu0 %v7636
  %v8016 = vpop.f32.mrf.mxu0
  %v8017 = vadd.f32 %v7976, %v8016
  %v8018 = vpop.f32.mrf.mxu0
  %v8019 = vadd.f32 %v7978, %v8018
  %v8020 = vpop.f32.mrf.mxu0
  %v8021 = vpop.f32.mrf.mxu0
  %8022 = vdwg.mxu0
  %v8023 = vrot.slane %v8017, 4
  %v8024 = vadd.f32 %v8017, %v8023
  %v8025 = vrot.slane %v8024, 2
  %v8026 = vadd.f32 %v8024, %v8025
  %v8027 = vrot.slane %v8026, 1
  %v8028 = vadd.f32 %v8026, %v8027
  %vm8029 = vcmask 588800
  %v8030 = vsel %vm8029, %v8019, 0.0
  %v8031 = vrot.slane %v8030, 4
  %v8032 = vadd.f32 %v8030, %v8031
  %v8033 = vrot.slane %v8032, 2
  %v8034 = vadd.f32 %v8032, %v8033
  %v8035 = vrot.slane %v8034, 1
  %v8036 = vadd.f32 %v8034, %v8035
  %v8037 = vmul.f32 %v8028, %v420
  %v8038 = vmul.f32 %v8036, %v420
  %v8039 = vmul.f32 %v8017, %v8017
  %v8040 = vmul.f32 %v8019, %v8019
  %v8041 = vrot.slane %v8039, 4
  %v8042 = vadd.f32 %v8039, %v8041
  %v8043 = vrot.slane %v8042, 2
  %v8044 = vadd.f32 %v8042, %v8043
  %v8045 = vrot.slane %v8044, 1
  %v8046 = vadd.f32 %v8044, %v8045
  %v8047 = vsel %vm8029, %v8040, 0.0
  %v8048 = vrot.slane %v8047, 4
  %v8049 = vadd.f32 %v8047, %v8048
  %v8050 = vrot.slane %v8049, 2
  %v8051 = vadd.f32 %v8049, %v8050
  %v8052 = vrot.slane %v8051, 1
  %v8053 = vadd.f32 %v8051, %v8052
  %v8054 = vmul.f32 %v8046, %v420
  %v8055 = vmul.f32 %v8053, %v420
  %v8056 = vmul.f32 %v8037, %v8037
  %v8057 = vmul.f32 %v8038, %v8038
  %v8058 = vsub.f32 %v8054, %v8056
  %v8059 = vsub.f32 %v8055, %v8057
  %v8060 = vmax.f32 %v8058, 0.0
  %v8061 = vmax.f32 %v8059, 0.0
  %v8062 = vsub.f32 %v8017, %v8037
  %v8063 = vsub.f32 %v8019, %v8038
  %v8064 = vadd.f32 %v8060, 1e-05
  %v8065 = vadd.f32 %v8061, 1e-05
  %v8066 = vrsqrt.pop %v8064
  %v8067 = vrsqrt.pop %v8065
  %v8068 = vmul.f32 %v8062, %v8066
  %v8069 = vmul.f32 %v8063, %v8067
  %v8070 = vmax.f32 %v8068, 0.0
  %v8071 = vmax.f32 %v8069, 0.0
  %v8072 = vpack.c.bf16 %v8070, %v8070
  %v8073 = vpack.c.bf16 %v8071, %v8071
  %v8074 = vld [vmem:[%s6] sm:$0xf]
  %v8075 = vld [vmem:[%s6 + $0x4] sm:$0xf]
  %v8076 = vld [vmem:[%s6 + $0x8] sm:$0xf]
  %v8077 = vld [vmem:[%s6 + $0xc] sm:$0xf]
  %v8078 = vld [vmem:[%s6 + $0x10] sm:$0xf]
  %v8079 = vld [vmem:[%s6 + $0x14] sm:$0xf]
  %v8080 = vld [vmem:[%s6 + $0x18] sm:$0xf]
  %v8081 = vld [vmem:[%s6 + $0x1c] sm:$0xf]
  %v8082 = vld [vmem:[%s6 + $0x20] sm:$0xf]
  %v8083 = vld [vmem:[%s6 + $0x24] sm:$0xf]
  %v8084 = vld [vmem:[%s6 + $0x28] sm:$0xf]
  %v8085 = vld [vmem:[%s6 + $0x2c] sm:$0xf]
  %v8086 = vld [vmem:[%s6 + $0x30] sm:$0xf]
  %v8087 = vld [vmem:[%s6 + $0x34] sm:$0xf]
  %v8088 = vld [vmem:[%s6 + $0x38] sm:$0xf]
  %v8089 = vld [vmem:[%s6 + $0x3c] sm:$0xf]
  %v8090 = vld [vmem:[%s6 + $0x40] sm:$0xf]
  %v8091 = vld [vmem:[%s6 + $0x44] sm:$0xf]
  %v8092 = vld [vmem:[%s6 + $0x48] sm:$0xf]
  %v8093 = vld [vmem:[%s6 + $0x4c] sm:$0xf]
  %v8094 = vld [vmem:[%s6 + $0x50] sm:$0xf]
  %v8095 = vld [vmem:[%s6 + $0x54] sm:$0xf]
  %v8096 = vld [vmem:[%s6 + $0x58] sm:$0xf]
  %v8097 = vld [vmem:[%s6 + $0x5c] sm:$0xf]
  %v8098 = vld [vmem:[%s6 + $0x60] sm:$0xf]
  %v8099 = vld [vmem:[%s7] sm:$0x1]
  %v8101 = vlaneseq
  %v8102 = vshrl.u32 %v8101, 7
  %v8103 = vsub.s32 0, %v8102
  %v8104 = vrot.slane %v8099, %v8103
  %v8131 = vunpack.c.l.b16 %v8074
  %v8132 = vunpack.c.l.b16 %v8075
  %v8133 = vunpack.c.l.b16 %v8076
  %v8134 = vunpack.c.l.b16 %v8077
  %v8135 = vunpack.c.l.b16 %v8078
  %v8136 = vunpack.c.l.b16 %v8079
  %v8137 = vunpack.c.l.b16 %v8080
  %v8138 = vunpack.c.l.b16 %v8081
  %v8139 = vunpack.c.l.b16 %v8082
  %v8140 = vunpack.c.l.b16 %v8083
  %v8141 = vunpack.c.l.b16 %v8084
  %v8142 = vunpack.c.l.b16 %v8085
  %v8143 = vunpack.c.l.b16 %v8086
  %v8144 = vunpack.c.l.b16 %v8087
  %v8145 = vunpack.c.l.b16 %v8088
  %v8146 = vunpack.c.l.b16 %v8089
  %v8147 = vunpack.c.l.b16 %v8090
  %v8148 = vunpack.c.l.b16 %v8091
  %v8149 = vunpack.c.l.b16 %v8092
  %v8150 = vunpack.c.l.b16 %v8093
  %v8151 = vunpack.c.l.b16 %v8094
  %v8152 = vunpack.c.l.b16 %v8095
  %v8153 = vunpack.c.l.b16 %v8096
  %v8154 = vunpack.c.l.b16 %v8097
  %v8155 = vunpack.c.l.b16 %v8098
  %v8156 = vpack.c.b16 %v8132, %v8131
  %v8157 = vpack.c.b16 %v8134, %v8133
  %v8158 = vpack.c.b16 %v8136, %v8135
  %v8159 = vpack.c.b16 %v8138, %v8137
  %v8160 = vpack.c.b16 %v8140, %v8139
  %v8161 = vpack.c.b16 %v8142, %v8141
  %v8162 = vpack.c.b16 %v8144, %v8143
  %v8163 = vpack.c.b16 %v8146, %v8145
  %v8164 = vpack.c.b16 %v8148, %v8147
  %v8165 = vpack.c.b16 %v8150, %v8149
  %v8166 = vpack.c.b16 %v8152, %v8151
  %v8167 = vpack.c.b16 %v8154, %v8153
  %v8168 = vpack.c.b16 %v8155, %v8155
  %v8182 = vsel %vm8029, %v8073, 0
  %v8185 = vsel %vm3319, %v8168, 0
  %8187 = vmatprep.subr.bf16.mxu0 0
  %8188 = vmatpush1.bf16.msra.mxu0 %v8163
  %8189 = vmatprep.subr.bf16.mxu0 0
  %8190 = vmatpush1.bf16.msra.mxu0 %v8162
  %8191 = vmatprep.subr.bf16.mxu0 0
  %8192 = vmatpush1.bf16.msra.mxu0 %v8161
  %8193 = vmatprep.subr.bf16.mxu0 0
  %8194 = vmatpush1.bf16.msra.mxu0 %v8160
  %8195 = vmatprep.subr.bf16.mxu0 0
  %8196 = vmatpush1.bf16.msra.mxu0 %v8159
  %8197 = vmatprep.subr.bf16.mxu0 0
  %8198 = vmatpush1.bf16.msra.mxu0 %v8158
  %8199 = vmatprep.subr.bf16.mxu0 0
  %8200 = vmatpush1.bf16.msra.mxu0 %v8157
  %8201 = vmatprep.subr.bf16.mxu0 0
  %8202 = vmatpush1.bf16.msra.mxu0 %v8156
  %8203 = vmatprep.subr.bf16.mxu0 0
  %8204 = vmatpush2.bf16.msra.mxu0 0
  %8205 = vmatprep.subr.bf16.mxu0 0
  %8206 = vmatpush2.bf16.msra.mxu0 0
  %8207 = vmatprep.subr.bf16.mxu0 0
  %8208 = vmatpush2.bf16.msra.mxu0 0
  %8209 = vmatprep.subr.bf16.mxu0 0
  %8210 = vmatpush2.bf16.msra.mxu0 %v8185
  %8211 = vmatprep.subr.bf16.mxu0 0
  %8212 = vmatpush2.bf16.msra.mxu0 %v8167
  %8213 = vmatprep.subr.bf16.mxu0 0
  %8214 = vmatpush2.bf16.msra.mxu0 %v8166
  %8215 = vmatprep.subr.bf16.mxu0 0
  %8216 = vmatpush2.bf16.msra.mxu0 %v8165
  %8217 = vmatprep.subr.bf16.mxu0 0
  %8218 = vmatpush2.bf16.msra.mxu0 %v8164
  %8219 = vmatprep.mubr.bf16.mxu0 %v8182
  %8220 = vmatmul.mubr.bf16.gmra.mxu0 %v8072
  %v8221 = vpop.f32.mrf.mxu0
  %v8222 = vadd.f32 %v8104, %v8221
  %v8223 = vpop.f32.mrf.mxu0
  %v8224 = vpop.f32.mrf.mxu0
  %v8225 = vpop.f32.mrf.mxu0
  %8226 = vdwg.mxu0
  %v8227 = vmax.f32 %v8222, 0.0
  %v8228 = vpack.c.bf16 %v8227, %v8227
  %v8229 = vld [vmem:[%s8] sm:$0xf]
  %v8230 = vld [vmem:[%s8 + $0x4] sm:$0xf]
  %v8231 = vld [vmem:[%s8 + $0x8] sm:$0xf]
  %v8232 = vld [vmem:[%s8 + $0xc] sm:$0xf]
  %v8233 = vld [vmem:[%s8 + $0x10] sm:$0xf]
  %v8234 = vld [vmem:[%s8 + $0x14] sm:$0xf]
  %v8235 = vld [vmem:[%s8 + $0x18] sm:$0xf]
  %v8236 = vld [vmem:[%s8 + $0x1c] sm:$0xf]
  %v8237 = vld [vmem:[%s8 + $0x20] sm:$0xf]
  %v8238 = vld [vmem:[%s8 + $0x24] sm:$0xf]
  %v8239 = vld [vmem:[%s8 + $0x28] sm:$0xf]
  %v8240 = vld [vmem:[%s8 + $0x2c] sm:$0xf]
  %v8241 = vld [vmem:[%s8 + $0x30] sm:$0x3]
  %v8242 = vld [vmem:[%s9] sm:$0x1]
  %v8244 = vlaneseq
  %v8245 = vshrl.u32 %v8244, 7
  %v8246 = vsub.s32 0, %v8245
  %v8247 = vrot.slane %v8242, %v8246
  %v8262 = vunpack.c.l.b16 %v8229
  %v8263 = vunpack.c.l.b16 %v8230
  %v8264 = vunpack.c.l.b16 %v8231
  %v8265 = vunpack.c.l.b16 %v8232
  %v8266 = vunpack.c.l.b16 %v8233
  %v8267 = vunpack.c.l.b16 %v8234
  %v8268 = vunpack.c.l.b16 %v8235
  %v8269 = vunpack.c.l.b16 %v8236
  %v8270 = vunpack.c.l.b16 %v8237
  %v8271 = vunpack.c.l.b16 %v8238
  %v8272 = vunpack.c.l.b16 %v8239
  %v8273 = vunpack.c.l.b16 %v8240
  %v8274 = vunpack.c.l.b16 %v8241
  %v8275 = vpack.c.b16 %v8263, %v8262
  %v8276 = vpack.c.b16 %v8265, %v8264
  %v8277 = vpack.c.b16 %v8267, %v8266
  %v8278 = vpack.c.b16 %v8269, %v8268
  %v8279 = vpack.c.b16 %v8271, %v8270
  %v8280 = vpack.c.b16 %v8273, %v8272
  %v8281 = vpack.c.b16 %v8274, %v8274
  %vm8288 = vcmask 818176
  %v8290 = vsel %vm8288, %v8228, 0
  %vm8292 = vcmask 1041408
  %v8294 = vsel %vm8292, %v8281, 0
  %8296 = vmatprep.subr.bf16.mxu0 0
  %8297 = vmatpush1.bf16.msra.mxu0 0
  %8298 = vmatprep.subr.bf16.mxu0 0
  %8299 = vmatpush1.bf16.msra.mxu0 %v8294
  %8300 = vmatprep.subr.bf16.mxu0 0
  %8301 = vmatpush1.bf16.msra.mxu0 %v8280
  %8302 = vmatprep.subr.bf16.mxu0 0
  %8303 = vmatpush1.bf16.msra.mxu0 %v8279
  %8304 = vmatprep.subr.bf16.mxu0 0
  %8305 = vmatpush1.bf16.msra.mxu0 %v8278
  %8306 = vmatprep.subr.bf16.mxu0 0
  %8307 = vmatpush1.bf16.msra.mxu0 %v8277
  %8308 = vmatprep.subr.bf16.mxu0 0
  %8309 = vmatpush1.bf16.msra.mxu0 %v8276
  %8310 = vmatprep.subr.bf16.mxu0 0
  %8311 = vmatpush1.bf16.msra.mxu0 %v8275
  %8312 = vmatprep.subr.bf16.mxu0 0
  %8313 = vmatpush2.bf16.msra.mxu0 0
  %8314 = vmatprep.subr.bf16.mxu0 0
  %8315 = vmatpush2.bf16.msra.mxu0 0
  %8316 = vmatprep.subr.bf16.mxu0 0
  %8317 = vmatpush2.bf16.msra.mxu0 0
  %8318 = vmatprep.subr.bf16.mxu0 0
  %8319 = vmatpush2.bf16.msra.mxu0 0
  %8320 = vmatprep.subr.bf16.mxu0 0
  %8321 = vmatpush2.bf16.msra.mxu0 0
  %8322 = vmatprep.subr.bf16.mxu0 0
  %8323 = vmatpush2.bf16.msra.mxu0 0
  %8324 = vmatprep.subr.bf16.mxu0 0
  %8325 = vmatpush2.bf16.msra.mxu0 0
  %8326 = vmatprep.subr.bf16.mxu0 0
  %8327 = vmatpush2.bf16.msra.mxu0 0
  %8328 = vmatprep.mubr.bf16.mxu0 0
  %8329 = vmatmul.mubr.bf16.gmra.mxu0 %v8290
  %v8330 = vpop.f32.mrf.mxu0
  %v8331 = vadd.f32 %v8247, %v8330
  %v8332 = vpop.f32.mrf.mxu0
  %v8333 = vpop.f32.mrf.mxu0
  %v8334 = vpop.f32.mrf.mxu0
  %8335 = vdwg.mxu0
  %vm8336 = vcmask 39936
  %8337 = vst.msk [vmem:[%s10] sm:$0xff] %vm8336, %v8331
  // Predicated region
  $region42: #{tpu_custom_call.1} parent=0 // pred_check
    _
  $region43: #{tpu_custom_call.1} parent=0 // pred_check_branch
    %8339 = sbr.rel (0) target = $region45
  $region44: #{tpu_custom_call.1} parent=0 // pred_region
    _
  $region45: #{tpu_custom_call.1} parent=0 // pred_fallthru
    _
  // Predicated region
  $region46: #{tpu_custom_call.1} parent=0 // pred_check
    _
  $region47: #{tpu_custom_call.1} parent=0 // pred_check_branch
    %8341 = sbr.rel (0) target = $region49
  $region48: #{tpu_custom_call.1} parent=0 // pred_region
    _
  $region49: #{tpu_custom_call.1} parent=0 // pred_fallthru
    _

</llo_original>
